<compile_context>
chip_gen: v6e
topology: v6e:2x2x1
jax: 0.10.0
libtpu: 0.0.40
codegen_flags: <defaults>
</compile_context>

<pallas_src>
import jax
import jax.numpy as jnp
from jax import lax
from jax.experimental import pallas as pl
from jax.experimental.pallas import tpu as pltpu


def _layer_norm_fm(v, gamma, beta, eps=1e-5):
    """LayerNorm over the feature (sublane) axis of a feature-major (H, TB) tile."""
    mu = jnp.mean(v, axis=0, keepdims=True)
    var = jnp.mean((v - mu) ** 2, axis=0, keepdims=True)
    return (v - mu) * lax.rsqrt(var + eps) * gamma + beta


def _encoder_kernel(ids_ref, dur_ref, emb_ref, wx_ref, wh_ref, b_ref,
                    gamma_ref, beta_ref, out_ref, seq_a, seq_b):
    T, _, TB = ids_ref.shape          # time, 1, batch-tile (lanes)
    V, H, _ = emb_ref.shape           # vocab, hidden (sublanes), 1
    L = wx_ref.shape[0]

    # ---- Embedding (feature-major): emb[t, :, b] = table[ids[t, b]] ++ dur ----
    # V-step select-accumulate on the VPU in the native layout; avoids the
    # lanes->sublanes relayout and the MXU-hostile K=V one-hot matmul.
    ids = ids_ref[...]                                     # (T, 1, TB) int32
    dur = dur_ref[...]                                     # (T, 1, TB) f32
    emb = jnp.zeros((T, H, TB), jnp.float32)
    for v in range(V):                                     # V is small & static
        emb = emb + jnp.where(ids == v, emb_ref[v][None], 0.0)
    row = lax.broadcasted_iota(jnp.int32, (H, TB), 0)
    dur_mask = (row == H - 1).astype(jnp.float32)[None]    # (1, H, TB)
    emb = emb + dur * dur_mask                             # duration -> last feature row
    seq_a[...] = emb

    gamma = gamma_ref[...]                                 # (H, 1)
    beta = beta_ref[...]
    bufs = (seq_a, seq_b)                                  # ping-pong between layers
    h_outs, c_outs = [], []

    for l in range(L):                                     # static layer unroll
        src = bufs[l % 2]
        dst = bufs[(l + 1) % 2]
        wx = wx_ref[l]                                     # (4H, H), PyTorch orientation
        wh = wh_ref[l]                                     # (4H, H)
        bias = jnp.broadcast_to(b_ref[l], (4 * H, TB))     # hoisted out of the time loop
        h = jnp.zeros((H, TB), jnp.float32)                # carried in vregs
        c = jnp.zeros((H, TB), jnp.float32)

        for t in range(T):                                 # full static time unroll
            x_t = src[t]                                   # (H, TB)
            gates = (jnp.dot(wx, x_t, preferred_element_type=jnp.float32)
                     + jnp.dot(wh, h, preferred_element_type=jnp.float32)
                     + bias)                               # (4H, TB), lane-dense
            i_g = jax.nn.sigmoid(gates[0 * H:1 * H])       # sublane-aligned slices
            f_g = jax.nn.sigmoid(gates[1 * H:2 * H])
            g_g = jnp.tanh(gates[2 * H:3 * H])
            o_g = jax.nn.sigmoid(gates[3 * H:4 * H])
            c = f_g * c + i_g * g_g
            h = o_g * jnp.tanh(c)
            if l + 1 < L:
                dst[t] = h                                 # feed next layer (skipped for last)

        h_outs.append(_layer_norm_fm(h, gamma, beta))
        c_outs.append(_layer_norm_fm(c, gamma, beta))

    # [h_0..h_{L-1}, c_0..c_{L-1}] stacked along the feature axis -> (2*L*H, TB).
    out_ref[...] = jnp.concatenate(h_outs + c_outs, axis=0).astype(out_ref.dtype)


def _round_up(x, m):
    return ((x + m - 1) // m) * m


def encoder_forward(x, params):
    """x: (B, T, 2) float32; channel 0 = activity index (float-coded), 1 = duration."""
    B, T, _ = x.shape
    emb_w = params["emb"]                          # (V, H-1)
    V, Hm1 = emb_w.shape
    H = Hm1 + 1
    L = params["wx"].shape[0]
    out_dim = 2 * L * H

    # Batch tile lives on the LANE axis: 128-wide when possible; >1 grid step for
    # large B so both TensorCores (v7x) / megacore can work in parallel.
    TB = 128 if B > 128 else _round_up(B, 8)
    B_pad = _round_up(B, TB)

    ids = x[..., 0].astype(jnp.int32)              # (B, T)
    dur = x[..., 1].astype(jnp.float32)            # (B, T)
    # time-major, batch-on-lanes (wrapper-side layout plumbing, not compute)
    ids_tm = jnp.zeros((T, 1, B_pad), jnp.int32).at[:, 0, :B].set(ids.T)
    dur_tm = jnp.zeros((T, 1, B_pad), jnp.float32).at[:, 0, :B].set(dur.T)

    # Embedding table as (V, H, 1): features on sublanes; last feature row is the
    # (zero) duration slot.
    emb_aug = jnp.concatenate([emb_w, jnp.zeros((V, 1), emb_w.dtype)], axis=1)
    emb_fm = emb_aug.astype(jnp.float32)[:, :, None]        # (V, H, 1)

    grid = (B_pad // TB,)

    hidden_fm = pl.pallas_call(
        _encoder_kernel,
        out_shape=jax.ShapeDtypeStruct((out_dim, B_pad), jnp.float32),
        grid=grid,
        in_specs=[
            pl.BlockSpec((T, 1, TB), lambda i: (0, 0, i)),        # activity ids
            pl.BlockSpec((T, 1, TB), lambda i: (0, 0, i)),        # durations
            pl.BlockSpec((V, H, 1), lambda i: (0, 0, 0)),         # embedding table (resident)
            pl.BlockSpec((L, 4 * H, H), lambda i: (0, 0, 0)),     # W_ih (PyTorch (4H,H) layout)
            pl.BlockSpec((L, 4 * H, H), lambda i: (0, 0, 0)),     # W_hh
            pl.BlockSpec((L, 4 * H, 1), lambda i: (0, 0, 0)),     # b_ih + b_hh
            pl.BlockSpec((H, 1), lambda i: (0, 0)),               # LayerNorm gamma
            pl.BlockSpec((H, 1), lambda i: (0, 0)),               # LayerNorm beta
        ],
        out_specs=pl.BlockSpec((out_dim, TB), lambda i: (0, i)),
        scratch_shapes=[
            pltpu.VMEM((T, H, TB), jnp.float32),    # layer-input sequence  (ping)
            pltpu.VMEM((T, H, TB), jnp.float32),    # layer-output sequence (pong)
        ],
        compiler_params=pltpu.CompilerParams(
            dimension_semantics=("parallel",)),
    )(ids_tm, dur_tm, emb_fm, params["wx"], params["wh"], params["b"],
      params["gamma"], params["beta"])

    # (2*L*H, B_pad) -> (B, 2*L*H): layout plumbing in the wrapper.
    return hidden_fm.T[:B]


def init_params(key, input_size, hidden_size, num_layers):
    """Synthetic weights in PyTorch orientation: W_* are (L, 4H, H), gate order i,f,g,o."""
    H = hidden_size
    ks = jax.random.split(key, 7)
    bound = 1.0 / jnp.sqrt(float(H))
    emb = 0.1 * jax.random.normal(ks[0], (input_size, H - 1), jnp.float32)
    wx = jax.random.uniform(ks[1], (num_layers, 4 * H, H), jnp.float32, -bound, bound)
    wh = jax.random.uniform(ks[2], (num_layers, 4 * H, H), jnp.float32, -bound, bound)
    b_ih = jax.random.uniform(ks[3], (num_layers, 4 * H, 1), jnp.float32, -bound, bound)
    b_hh = jax.random.uniform(ks[4], (num_layers, 4 * H, 1), jnp.float32, -bound, bound)
    gamma = 1.0 + 0.1 * jax.random.normal(ks[5], (H, 1), jnp.float32)
    beta = 0.1 * jax.random.normal(ks[6], (H, 1), jnp.float32)
    return {"emb": emb, "wx": wx, "wh": wh, "b": b_ih + b_hh,
            "gamma": gamma, "beta": beta}


def reference_forward(x, params):
    """Pure-JAX reference matching the kernel (and the PyTorch module) semantics."""
    ids = x[..., 0].astype(jnp.int32)
    dur = x[..., 1][..., None]
    emb = jnp.take(params["emb"], ids, axis=0)               # (B, T, H-1)
    seq = jnp.concatenate([emb, dur], axis=-1)               # (B, T, H)
    B, T, H = seq.shape
    L = params["wx"].shape[0]
    hp = lax.Precision.HIGHEST

    inp = jnp.swapaxes(seq, 0, 1)                            # (T, B, H)
    h_fin, c_fin = [], []
    for l in range(L):
        wx, wh = params["wx"][l], params["wh"][l]            # (4H, H)
        b = params["b"][l][:, 0]                             # (4H,)

        def step(carry, x_t, wx=wx, wh=wh, b=b):
            h, c = carry
            gates = (jnp.dot(x_t, wx.T, precision=hp)
                     + jnp.dot(h, wh.T, precision=hp) + b)
            i = jax.nn.sigmoid(gates[:, 0:H])
            f = jax.nn.sigmoid(gates[:, H:2 * H])
            g = jnp.tanh(gates[:, 2 * H:3 * H])
            o = jax.nn.sigmoid(gates[:, 3 * H:4 * H])
            c_new = f * c + i * g
            h_new = o * jnp.tanh(c_new)
            return (h_new, c_new), h_new

        init = (jnp.zeros((B, H), jnp.float32), jnp.zeros((B, H), jnp.float32))
        (hf, cf), outs = lax.scan(step, init, inp)
        inp = outs
        h_fin.append(hf)
        c_fin.append(cf)

    gamma = params["gamma"][:, 0]
    beta = params["beta"][:, 0]

    def ln(v):
        mu = jnp.mean(v, axis=-1, keepdims=True)
        var = jnp.mean((v - mu) ** 2, axis=-1, keepdims=True)
        return (v - mu) * lax.rsqrt(var + 1e-5) * gamma + beta

    return jnp.concatenate([ln(h) for h in h_fin] + [ln(c) for c in c_fin], axis=-1)


if __name__ == "__main__":
    key = jax.random.PRNGKey(0)
    k_a, k_d, k_p = jax.random.split(key, 3)

    batch, seq_len, input_size, hidden_size, num_layers = 2, 8, 6, 32, 2

    acts = jax.random.randint(k_a, (batch, seq_len), 0, input_size)
    durs = jax.random.uniform(k_d, (batch, seq_len), jnp.float32)
    x = jnp.stack([acts.astype(jnp.float32), durs], axis=-1)   # (B, T, 2)

    params = init_params(k_p, input_size, hidden_size, num_layers)

    hidden = encoder_forward(x, params)
    jax.block_until_ready(hidden)

    ref = reference_forward(x, params)
    assert hidden.shape == (batch, 2 * num_layers * hidden_size), hidden.shape
    err = float(jnp.max(jnp.abs(hidden - ref)))
    assert jnp.allclose(hidden, ref, atol=1e-3, rtol=1e-3), f"max abs err {err}"

    print("KERNEL_OK")
</pallas_src>

<mosaic_0001>
module attributes {stable_mosaic.version = 11 : i64} {
  func.func @_encoder_kernel(%arg0: i32, %arg1: memref<8x1x8xi32, #tpu.memory_space<vmem>>, %arg2: memref<8x1x8xf32, #tpu.memory_space<vmem>>, %arg3: memref<6x32x1xf32, #tpu.memory_space<vmem>>, %arg4: memref<2x128x32xf32, #tpu.memory_space<vmem>>, %arg5: memref<2x128x32xf32, #tpu.memory_space<vmem>>, %arg6: memref<2x128x1xf32, #tpu.memory_space<vmem>>, %arg7: memref<32x1xf32, #tpu.memory_space<vmem>>, %arg8: memref<32x1xf32, #tpu.memory_space<vmem>>, %arg9: memref<128x8xf32, #tpu.memory_space<vmem>>, %arg10: memref<8x32x8xf32, #tpu.memory_space<vmem>>, %arg11: memref<8x32x8xf32, #tpu.memory_space<vmem>>) attributes {dimension_semantics = [#tpu.dimension_semantics<parallel>], iteration_bounds = array<i64: 1>, scalar_prefetch = 0 : i64, scratch_operands = 2 : i64, tpu.core_type = #tpu.core_type<tc>, window_params = [{transform_indices = @transform_0, window_bounds = array<i64: 8, 1, 8>}, {transform_indices = @transform_1, window_bounds = array<i64: 8, 1, 8>}, {pipeline_mode = #tpu.pipeline_mode<synchronous>, transform_indices = @transform_2, window_bounds = array<i64: 6, 32, 1>}, {pipeline_mode = #tpu.pipeline_mode<synchronous>, transform_indices = @transform_3, window_bounds = array<i64: 2, 128, 32>}, {pipeline_mode = #tpu.pipeline_mode<synchronous>, transform_indices = @transform_4, window_bounds = array<i64: 2, 128, 32>}, {pipeline_mode = #tpu.pipeline_mode<synchronous>, transform_indices = @transform_5, window_bounds = array<i64: 2, 128, 1>}, {pipeline_mode = #tpu.pipeline_mode<synchronous>, transform_indices = @transform_6, window_bounds = array<i64: 32, 1>}, {pipeline_mode = #tpu.pipeline_mode<synchronous>, transform_indices = @transform_7, window_bounds = array<i64: 32, 1>}, {transform_indices = @transform_8, window_bounds = array<i64: 128, 8>}]} {
    %c0 = arith.constant 0 : index
    %c0_0 = arith.constant 0 : index
    %c0_1 = arith.constant 0 : index
    %0 = vector.load %arg1[%c0, %c0_0, %c0_1] : memref<8x1x8xi32, #tpu.memory_space<vmem>>, vector<8x1x8xi32>
    %c0_2 = arith.constant 0 : index
    %c0_3 = arith.constant 0 : index
    %c0_4 = arith.constant 0 : index
    %1 = vector.load %arg2[%c0_2, %c0_3, %c0_4] : memref<8x1x8xf32, #tpu.memory_space<vmem>>, vector<8x1x8xf32>
    %cst = arith.constant 0.000000e+00 : f32
    %2 = vector.broadcast %cst : f32 to vector<8x32x8xf32>
    %c0_i32 = arith.constant 0 : i32
    %3 = vector.broadcast %c0_i32 : i32 to vector<8x1x8xi32>
    %4 = arith.cmpi eq, %0, %3 : vector<8x1x8xi32>
    %c0_5 = arith.constant 0 : index
    %c0_6 = arith.constant 0 : index
    %c0_7 = arith.constant 0 : index
    %5 = vector.load %arg3[%c0_5, %c0_6, %c0_7] : memref<6x32x1xf32, #tpu.memory_space<vmem>>, vector<1x32x1xf32>
    %6 = vector.shape_cast %5 : vector<1x32x1xf32> to vector<32x1xf32>
    %7 = vector.shape_cast %6 : vector<32x1xf32> to vector<1x32x1xf32>
    %cst_8 = arith.constant 0.000000e+00 : f32
    %8 = vector.shape_cast %4 : vector<8x1x8xi1> to vector<8x1x8xi1>
    %9 = vector.broadcast %8 : vector<8x1x8xi1> to vector<8x32x8xi1>
    %10 = vector.shape_cast %7 : vector<1x32x1xf32> to vector<1x32x1xf32>
    %11 = vector.broadcast %10 : vector<1x32x1xf32> to vector<8x32x8xf32>
    %12 = vector.broadcast %cst_8 : f32 to vector<8x32x8xf32>
    %13 = arith.select %9, %11, %12 : vector<8x32x8xi1>, vector<8x32x8xf32>
    %14 = arith.addf %2, %13 : vector<8x32x8xf32>
    %c1_i32 = arith.constant 1 : i32
    %15 = vector.broadcast %c1_i32 : i32 to vector<8x1x8xi32>
    %16 = arith.cmpi eq, %0, %15 : vector<8x1x8xi32>
    %c1 = arith.constant 1 : index
    %c0_9 = arith.constant 0 : index
    %c0_10 = arith.constant 0 : index
    %17 = vector.load %arg3[%c1, %c0_9, %c0_10] : memref<6x32x1xf32, #tpu.memory_space<vmem>>, vector<1x32x1xf32>
    %18 = vector.shape_cast %17 : vector<1x32x1xf32> to vector<32x1xf32>
    %19 = vector.shape_cast %18 : vector<32x1xf32> to vector<1x32x1xf32>
    %cst_11 = arith.constant 0.000000e+00 : f32
    %20 = vector.shape_cast %16 : vector<8x1x8xi1> to vector<8x1x8xi1>
    %21 = vector.broadcast %20 : vector<8x1x8xi1> to vector<8x32x8xi1>
    %22 = vector.shape_cast %19 : vector<1x32x1xf32> to vector<1x32x1xf32>
    %23 = vector.broadcast %22 : vector<1x32x1xf32> to vector<8x32x8xf32>
    %24 = vector.broadcast %cst_11 : f32 to vector<8x32x8xf32>
    %25 = arith.select %21, %23, %24 : vector<8x32x8xi1>, vector<8x32x8xf32>
    %26 = arith.addf %14, %25 : vector<8x32x8xf32>
    %c2_i32 = arith.constant 2 : i32
    %27 = vector.broadcast %c2_i32 : i32 to vector<8x1x8xi32>
    %28 = arith.cmpi eq, %0, %27 : vector<8x1x8xi32>
    %c2 = arith.constant 2 : index
    %c0_12 = arith.constant 0 : index
    %c0_13 = arith.constant 0 : index
    %29 = vector.load %arg3[%c2, %c0_12, %c0_13] : memref<6x32x1xf32, #tpu.memory_space<vmem>>, vector<1x32x1xf32>
    %30 = vector.shape_cast %29 : vector<1x32x1xf32> to vector<32x1xf32>
    %31 = vector.shape_cast %30 : vector<32x1xf32> to vector<1x32x1xf32>
    %cst_14 = arith.constant 0.000000e+00 : f32
    %32 = vector.shape_cast %28 : vector<8x1x8xi1> to vector<8x1x8xi1>
    %33 = vector.broadcast %32 : vector<8x1x8xi1> to vector<8x32x8xi1>
    %34 = vector.shape_cast %31 : vector<1x32x1xf32> to vector<1x32x1xf32>
    %35 = vector.broadcast %34 : vector<1x32x1xf32> to vector<8x32x8xf32>
    %36 = vector.broadcast %cst_14 : f32 to vector<8x32x8xf32>
    %37 = arith.select %33, %35, %36 : vector<8x32x8xi1>, vector<8x32x8xf32>
    %38 = arith.addf %26, %37 : vector<8x32x8xf32>
    %c3_i32 = arith.constant 3 : i32
    %39 = vector.broadcast %c3_i32 : i32 to vector<8x1x8xi32>
    %40 = arith.cmpi eq, %0, %39 : vector<8x1x8xi32>
    %c3 = arith.constant 3 : index
    %c0_15 = arith.constant 0 : index
    %c0_16 = arith.constant 0 : index
    %41 = vector.load %arg3[%c3, %c0_15, %c0_16] : memref<6x32x1xf32, #tpu.memory_space<vmem>>, vector<1x32x1xf32>
    %42 = vector.shape_cast %41 : vector<1x32x1xf32> to vector<32x1xf32>
    %43 = vector.shape_cast %42 : vector<32x1xf32> to vector<1x32x1xf32>
    %cst_17 = arith.constant 0.000000e+00 : f32
    %44 = vector.shape_cast %40 : vector<8x1x8xi1> to vector<8x1x8xi1>
    %45 = vector.broadcast %44 : vector<8x1x8xi1> to vector<8x32x8xi1>
    %46 = vector.shape_cast %43 : vector<1x32x1xf32> to vector<1x32x1xf32>
    %47 = vector.broadcast %46 : vector<1x32x1xf32> to vector<8x32x8xf32>
    %48 = vector.broadcast %cst_17 : f32 to vector<8x32x8xf32>
    %49 = arith.select %45, %47, %48 : vector<8x32x8xi1>, vector<8x32x8xf32>
    %50 = arith.addf %38, %49 : vector<8x32x8xf32>
    %c4_i32 = arith.constant 4 : i32
    %51 = vector.broadcast %c4_i32 : i32 to vector<8x1x8xi32>
    %52 = arith.cmpi eq, %0, %51 : vector<8x1x8xi32>
    %c4 = arith.constant 4 : index
    %c0_18 = arith.constant 0 : index
    %c0_19 = arith.constant 0 : index
    %53 = vector.load %arg3[%c4, %c0_18, %c0_19] : memref<6x32x1xf32, #tpu.memory_space<vmem>>, vector<1x32x1xf32>
    %54 = vector.shape_cast %53 : vector<1x32x1xf32> to vector<32x1xf32>
    %55 = vector.shape_cast %54 : vector<32x1xf32> to vector<1x32x1xf32>
    %cst_20 = arith.constant 0.000000e+00 : f32
    %56 = vector.shape_cast %52 : vector<8x1x8xi1> to vector<8x1x8xi1>
    %57 = vector.broadcast %56 : vector<8x1x8xi1> to vector<8x32x8xi1>
    %58 = vector.shape_cast %55 : vector<1x32x1xf32> to vector<1x32x1xf32>
    %59 = vector.broadcast %58 : vector<1x32x1xf32> to vector<8x32x8xf32>
    %60 = vector.broadcast %cst_20 : f32 to vector<8x32x8xf32>
    %61 = arith.select %57, %59, %60 : vector<8x32x8xi1>, vector<8x32x8xf32>
    %62 = arith.addf %50, %61 : vector<8x32x8xf32>
    %c5_i32 = arith.constant 5 : i32
    %63 = vector.broadcast %c5_i32 : i32 to vector<8x1x8xi32>
    %64 = arith.cmpi eq, %0, %63 : vector<8x1x8xi32>
    %c5 = arith.constant 5 : index
    %c0_21 = arith.constant 0 : index
    %c0_22 = arith.constant 0 : index
    %65 = vector.load %arg3[%c5, %c0_21, %c0_22] : memref<6x32x1xf32, #tpu.memory_space<vmem>>, vector<1x32x1xf32>
    %66 = vector.shape_cast %65 : vector<1x32x1xf32> to vector<32x1xf32>
    %67 = vector.shape_cast %66 : vector<32x1xf32> to vector<1x32x1xf32>
    %cst_23 = arith.constant 0.000000e+00 : f32
    %68 = vector.shape_cast %64 : vector<8x1x8xi1> to vector<8x1x8xi1>
    %69 = vector.broadcast %68 : vector<8x1x8xi1> to vector<8x32x8xi1>
    %70 = vector.shape_cast %67 : vector<1x32x1xf32> to vector<1x32x1xf32>
    %71 = vector.broadcast %70 : vector<1x32x1xf32> to vector<8x32x8xf32>
    %72 = vector.broadcast %cst_23 : f32 to vector<8x32x8xf32>
    %73 = arith.select %69, %71, %72 : vector<8x32x8xi1>, vector<8x32x8xf32>
    %74 = arith.addf %62, %73 : vector<8x32x8xf32>
    %75 = tpu.iota {dimensions = array<i32: 0>} : vector<32x8xi32>
    %c31_i32 = arith.constant 31 : i32
    %76 = vector.broadcast %c31_i32 : i32 to vector<32x8xi32>
    %77 = arith.cmpi eq, %75, %76 : vector<32x8xi32>
    %78 = arith.extui %77 : vector<32x8xi1> to vector<32x8xi32>
    %79 = arith.sitofp %78 : vector<32x8xi32> to vector<32x8xf32>
    %80 = vector.shape_cast %79 : vector<32x8xf32> to vector<1x32x8xf32>
    %81 = vector.broadcast %1 : vector<8x1x8xf32> to vector<8x32x8xf32>
    %82 = vector.broadcast %80 : vector<1x32x8xf32> to vector<8x32x8xf32>
    %83 = arith.mulf %81, %82 : vector<8x32x8xf32>
    %84 = arith.addf %74, %83 : vector<8x32x8xf32>
    %c0_24 = arith.constant 0 : index
    %c0_25 = arith.constant 0 : index
    %c0_26 = arith.constant 0 : index
    %85 = vector.load %arg10[%c0_24, %c0_25, %c0_26] : memref<8x32x8xf32, #tpu.memory_space<vmem>>, vector<8x32x8xf32>
    tpu.vector_store %arg10[%c0_24, %c0_25, %c0_26], %84 {strides = array<i32>} : memref<8x32x8xf32, #tpu.memory_space<vmem>>, vector<8x32x8xf32>,
    %c0_27 = arith.constant 0 : index
    %c0_28 = arith.constant 0 : index
    %86 = vector.load %arg7[%c0_27, %c0_28] : memref<32x1xf32, #tpu.memory_space<vmem>>, vector<32x1xf32>
    %c0_29 = arith.constant 0 : index
    %c0_30 = arith.constant 0 : index
    %87 = vector.load %arg8[%c0_29, %c0_30] : memref<32x1xf32, #tpu.memory_space<vmem>>, vector<32x1xf32>
    %c0_31 = arith.constant 0 : index
    %c0_32 = arith.constant 0 : index
    %c0_33 = arith.constant 0 : index
    %88 = vector.load %arg4[%c0_31, %c0_32, %c0_33] : memref<2x128x32xf32, #tpu.memory_space<vmem>>, vector<1x128x32xf32>
    %89 = vector.shape_cast %88 : vector<1x128x32xf32> to vector<128x32xf32>
    %c0_34 = arith.constant 0 : index
    %c0_35 = arith.constant 0 : index
    %c0_36 = arith.constant 0 : index
    %90 = vector.load %arg5[%c0_34, %c0_35, %c0_36] : memref<2x128x32xf32, #tpu.memory_space<vmem>>, vector<1x128x32xf32>
    %91 = vector.shape_cast %90 : vector<1x128x32xf32> to vector<128x32xf32>
    %c0_37 = arith.constant 0 : index
    %c0_38 = arith.constant 0 : index
    %c0_39 = arith.constant 0 : index
    %92 = vector.load %arg6[%c0_37, %c0_38, %c0_39] : memref<2x128x1xf32, #tpu.memory_space<vmem>>, vector<1x128x1xf32>
    %93 = vector.shape_cast %92 : vector<1x128x1xf32> to vector<128x1xf32>
    %94 = vector.shape_cast %93 : vector<128x1xf32> to vector<128x1xf32>
    %95 = vector.broadcast %94 : vector<128x1xf32> to vector<128x8xf32>
    %cst_40 = arith.constant 0.000000e+00 : f32
    %96 = vector.broadcast %cst_40 : f32 to vector<32x8xf32>
    %cst_41 = arith.constant 0.000000e+00 : f32
    %97 = vector.broadcast %cst_41 : f32 to vector<32x8xf32>
    %c0_42 = arith.constant 0 : index
    %c0_43 = arith.constant 0 : index
    %c0_44 = arith.constant 0 : index
    %98 = vector.load %arg10[%c0_42, %c0_43, %c0_44] : memref<8x32x8xf32, #tpu.memory_space<vmem>>, vector<1x32x8xf32>
    %99 = vector.shape_cast %98 : vector<1x32x8xf32> to vector<32x8xf32>
    %cst_45 = arith.constant dense<0.000000e+00> : vector<128x8xf32>
    %100 = tpu.matmul %89, %99, %cst_45 {dimension_numbers = #tpu.dot_dimension_numbers<[1], [0], [0], [1], [0, 0, 1, 1], [], []>} : vector<128x32xf32>, vector<32x8xf32>, vector<128x8xf32> -> vector<128x8xf32>
    %cst_46 = arith.constant dense<0.000000e+00> : vector<128x8xf32>
    %101 = tpu.matmul %91, %96, %cst_46 {dimension_numbers = #tpu.dot_dimension_numbers<[1], [0], [0], [1], [0, 0, 1, 1], [], []>} : vector<128x32xf32>, vector<32x8xf32>, vector<128x8xf32> -> vector<128x8xf32>
    %102 = arith.addf %100, %101 : vector<128x8xf32>
    %103 = arith.addf %102, %95 : vector<128x8xf32>
    %104 = vector.extract_strided_slice %103 {offsets = [0, 0], sizes = [32, 8], strides = [1, 1]} : vector<128x8xf32> to vector<32x8xf32>
    %105 = arith.negf %104 : vector<32x8xf32>
    %106 = math.exp %105 : vector<32x8xf32>
    %cst_47 = arith.constant 1.000000e+00 : f32
    %107 = vector.broadcast %cst_47 : f32 to vector<32x8xf32>
    %108 = arith.addf %107, %106 : vector<32x8xf32>
    %109 = arith.divf %107, %108 : vector<32x8xf32>
    %110 = vector.extract_strided_slice %103 {offsets = [32, 0], sizes = [32, 8], strides = [1, 1]} : vector<128x8xf32> to vector<32x8xf32>
    %111 = arith.negf %110 : vector<32x8xf32>
    %112 = math.exp %111 : vector<32x8xf32>
    %cst_48 = arith.constant 1.000000e+00 : f32
    %113 = vector.broadcast %cst_48 : f32 to vector<32x8xf32>
    %114 = arith.addf %113, %112 : vector<32x8xf32>
    %115 = arith.divf %113, %114 : vector<32x8xf32>
    %116 = vector.extract_strided_slice %103 {offsets = [64, 0], sizes = [32, 8], strides = [1, 1]} : vector<128x8xf32> to vector<32x8xf32>
    %117 = math.tanh %116 : vector<32x8xf32>
    %118 = vector.extract_strided_slice %103 {offsets = [96, 0], sizes = [32, 8], strides = [1, 1]} : vector<128x8xf32> to vector<32x8xf32>
    %119 = arith.negf %118 : vector<32x8xf32>
    %120 = math.exp %119 : vector<32x8xf32>
    %cst_49 = arith.constant 1.000000e+00 : f32
    %121 = vector.broadcast %cst_49 : f32 to vector<32x8xf32>
    %122 = arith.addf %121, %120 : vector<32x8xf32>
    %123 = arith.divf %121, %122 : vector<32x8xf32>
    %124 = arith.mulf %115, %97 : vector<32x8xf32>
    %125 = arith.mulf %109, %117 : vector<32x8xf32>
    %126 = arith.addf %124, %125 : vector<32x8xf32>
    %127 = math.tanh %126 : vector<32x8xf32>
    %128 = arith.mulf %123, %127 : vector<32x8xf32>
    %c0_50 = arith.constant 0 : index
    %c0_51 = arith.constant 0 : index
    %c0_52 = arith.constant 0 : index
    %129 = vector.load %arg11[%c0_50, %c0_51, %c0_52] : memref<8x32x8xf32, #tpu.memory_space<vmem>>, vector<1x32x8xf32>
    %130 = vector.shape_cast %129 : vector<1x32x8xf32> to vector<32x8xf32>
    %131 = vector.shape_cast %128 : vector<32x8xf32> to vector<1x32x8xf32>
    tpu.vector_store %arg11[%c0_50, %c0_51, %c0_52], %131 {strides = array<i32>} : memref<8x32x8xf32, #tpu.memory_space<vmem>>, vector<1x32x8xf32>,
    %c1_53 = arith.constant 1 : index
    %c0_54 = arith.constant 0 : index
    %c0_55 = arith.constant 0 : index
    %132 = vector.load %arg10[%c1_53, %c0_54, %c0_55] : memref<8x32x8xf32, #tpu.memory_space<vmem>>, vector<1x32x8xf32>
    %133 = vector.shape_cast %132 : vector<1x32x8xf32> to vector<32x8xf32>
    %cst_56 = arith.constant dense<0.000000e+00> : vector<128x8xf32>
    %134 = tpu.matmul %89, %133, %cst_56 {dimension_numbers = #tpu.dot_dimension_numbers<[1], [0], [0], [1], [0, 0, 1, 1], [], []>} : vector<128x32xf32>, vector<32x8xf32>, vector<128x8xf32> -> vector<128x8xf32>
    %cst_57 = arith.constant dense<0.000000e+00> : vector<128x8xf32>
    %135 = tpu.matmul %91, %128, %cst_57 {dimension_numbers = #tpu.dot_dimension_numbers<[1], [0], [0], [1], [0, 0, 1, 1], [], []>} : vector<128x32xf32>, vector<32x8xf32>, vector<128x8xf32> -> vector<128x8xf32>
    %136 = arith.addf %134, %135 : vector<128x8xf32>
    %137 = arith.addf %136, %95 : vector<128x8xf32>
    %138 = vector.extract_strided_slice %137 {offsets = [0, 0], sizes = [32, 8], strides = [1, 1]} : vector<128x8xf32> to vector<32x8xf32>
    %139 = arith.negf %138 : vector<32x8xf32>
    %140 = math.exp %139 : vector<32x8xf32>
    %cst_58 = arith.constant 1.000000e+00 : f32
    %141 = vector.broadcast %cst_58 : f32 to vector<32x8xf32>
    %142 = arith.addf %141, %140 : vector<32x8xf32>
    %143 = arith.divf %141, %142 : vector<32x8xf32>
    %144 = vector.extract_strided_slice %137 {offsets = [32, 0], sizes = [32, 8], strides = [1, 1]} : vector<128x8xf32> to vector<32x8xf32>
    %145 = arith.negf %144 : vector<32x8xf32>
    %146 = math.exp %145 : vector<32x8xf32>
    %cst_59 = arith.constant 1.000000e+00 : f32
    %147 = vector.broadcast %cst_59 : f32 to vector<32x8xf32>
    %148 = arith.addf %147, %146 : vector<32x8xf32>
    %149 = arith.divf %147, %148 : vector<32x8xf32>
    %150 = vector.extract_strided_slice %137 {offsets = [64, 0], sizes = [32, 8], strides = [1, 1]} : vector<128x8xf32> to vector<32x8xf32>
    %151 = math.tanh %150 : vector<32x8xf32>
    %152 = vector.extract_strided_slice %137 {offsets = [96, 0], sizes = [32, 8], strides = [1, 1]} : vector<128x8xf32> to vector<32x8xf32>
    %153 = arith.negf %152 : vector<32x8xf32>
    %154 = math.exp %153 : vector<32x8xf32>
    %cst_60 = arith.constant 1.000000e+00 : f32
    %155 = vector.broadcast %cst_60 : f32 to vector<32x8xf32>
    %156 = arith.addf %155, %154 : vector<32x8xf32>
    %157 = arith.divf %155, %156 : vector<32x8xf32>
    %158 = arith.mulf %149, %126 : vector<32x8xf32>
    %159 = arith.mulf %143, %151 : vector<32x8xf32>
    %160 = arith.addf %158, %159 : vector<32x8xf32>
    %161 = math.tanh %160 : vector<32x8xf32>
    %162 = arith.mulf %157, %161 : vector<32x8xf32>
    %c1_61 = arith.constant 1 : index
    %c0_62 = arith.constant 0 : index
    %c0_63 = arith.constant 0 : index
    %163 = vector.load %arg11[%c1_61, %c0_62, %c0_63] : memref<8x32x8xf32, #tpu.memory_space<vmem>>, vector<1x32x8xf32>
    %164 = vector.shape_cast %163 : vector<1x32x8xf32> to vector<32x8xf32>
    %165 = vector.shape_cast %162 : vector<32x8xf32> to vector<1x32x8xf32>
    tpu.vector_store %arg11[%c1_61, %c0_62, %c0_63], %165 {strides = array<i32>} : memref<8x32x8xf32, #tpu.memory_space<vmem>>, vector<1x32x8xf32>,
    %c2_64 = arith.constant 2 : index
    %c0_65 = arith.constant 0 : index
    %c0_66 = arith.constant 0 : index
    %166 = vector.load %arg10[%c2_64, %c0_65, %c0_66] : memref<8x32x8xf32, #tpu.memory_space<vmem>>, vector<1x32x8xf32>
    %167 = vector.shape_cast %166 : vector<1x32x8xf32> to vector<32x8xf32>
    %cst_67 = arith.constant dense<0.000000e+00> : vector<128x8xf32>
    %168 = tpu.matmul %89, %167, %cst_67 {dimension_numbers = #tpu.dot_dimension_numbers<[1], [0], [0], [1], [0, 0, 1, 1], [], []>} : vector<128x32xf32>, vector<32x8xf32>, vector<128x8xf32> -> vector<128x8xf32>
    %cst_68 = arith.constant dense<0.000000e+00> : vector<128x8xf32>
    %169 = tpu.matmul %91, %162, %cst_68 {dimension_numbers = #tpu.dot_dimension_numbers<[1], [0], [0], [1], [0, 0, 1, 1], [], []>} : vector<128x32xf32>, vector<32x8xf32>, vector<128x8xf32> -> vector<128x8xf32>
    %170 = arith.addf %168, %169 : vector<128x8xf32>
    %171 = arith.addf %170, %95 : vector<128x8xf32>
    %172 = vector.extract_strided_slice %171 {offsets = [0, 0], sizes = [32, 8], strides = [1, 1]} : vector<128x8xf32> to vector<32x8xf32>
    %173 = arith.negf %172 : vector<32x8xf32>
    %174 = math.exp %173 : vector<32x8xf32>
    %cst_69 = arith.constant 1.000000e+00 : f32
    %175 = vector.broadcast %cst_69 : f32 to vector<32x8xf32>
    %176 = arith.addf %175, %174 : vector<32x8xf32>
    %177 = arith.divf %175, %176 : vector<32x8xf32>
    %178 = vector.extract_strided_slice %171 {offsets = [32, 0], sizes = [32, 8], strides = [1, 1]} : vector<128x8xf32> to vector<32x8xf32>
    %179 = arith.negf %178 : vector<32x8xf32>
    %180 = math.exp %179 : vector<32x8xf32>
    %cst_70 = arith.constant 1.000000e+00 : f32
    %181 = vector.broadcast %cst_70 : f32 to vector<32x8xf32>
    %182 = arith.addf %181, %180 : vector<32x8xf32>
    %183 = arith.divf %181, %182 : vector<32x8xf32>
    %184 = vector.extract_strided_slice %171 {offsets = [64, 0], sizes = [32, 8], strides = [1, 1]} : vector<128x8xf32> to vector<32x8xf32>
    %185 = math.tanh %184 : vector<32x8xf32>
    %186 = vector.extract_strided_slice %171 {offsets = [96, 0], sizes = [32, 8], strides = [1, 1]} : vector<128x8xf32> to vector<32x8xf32>
    %187 = arith.negf %186 : vector<32x8xf32>
    %188 = math.exp %187 : vector<32x8xf32>
    %cst_71 = arith.constant 1.000000e+00 : f32
    %189 = vector.broadcast %cst_71 : f32 to vector<32x8xf32>
    %190 = arith.addf %189, %188 : vector<32x8xf32>
    %191 = arith.divf %189, %190 : vector<32x8xf32>
    %192 = arith.mulf %183, %160 : vector<32x8xf32>
    %193 = arith.mulf %177, %185 : vector<32x8xf32>
    %194 = arith.addf %192, %193 : vector<32x8xf32>
    %195 = math.tanh %194 : vector<32x8xf32>
    %196 = arith.mulf %191, %195 : vector<32x8xf32>
    %c2_72 = arith.constant 2 : index
    %c0_73 = arith.constant 0 : index
    %c0_74 = arith.constant 0 : index
    %197 = vector.load %arg11[%c2_72, %c0_73, %c0_74] : memref<8x32x8xf32, #tpu.memory_space<vmem>>, vector<1x32x8xf32>
    %198 = vector.shape_cast %197 : vector<1x32x8xf32> to vector<32x8xf32>
    %199 = vector.shape_cast %196 : vector<32x8xf32> to vector<1x32x8xf32>
    tpu.vector_store %arg11[%c2_72, %c0_73, %c0_74], %199 {strides = array<i32>} : memref<8x32x8xf32, #tpu.memory_space<vmem>>, vector<1x32x8xf32>,
    %c3_75 = arith.constant 3 : index
    %c0_76 = arith.constant 0 : index
    %c0_77 = arith.constant 0 : index
    %200 = vector.load %arg10[%c3_75, %c0_76, %c0_77] : memref<8x32x8xf32, #tpu.memory_space<vmem>>, vector<1x32x8xf32>
    %201 = vector.shape_cast %200 : vector<1x32x8xf32> to vector<32x8xf32>
    %cst_78 = arith.constant dense<0.000000e+00> : vector<128x8xf32>
    %202 = tpu.matmul %89, %201, %cst_78 {dimension_numbers = #tpu.dot_dimension_numbers<[1], [0], [0], [1], [0, 0, 1, 1], [], []>} : vector<128x32xf32>, vector<32x8xf32>, vector<128x8xf32> -> vector<128x8xf32>
    %cst_79 = arith.constant dense<0.000000e+00> : vector<128x8xf32>
    %203 = tpu.matmul %91, %196, %cst_79 {dimension_numbers = #tpu.dot_dimension_numbers<[1], [0], [0], [1], [0, 0, 1, 1], [], []>} : vector<128x32xf32>, vector<32x8xf32>, vector<128x8xf32> -> vector<128x8xf32>
    %204 = arith.addf %202, %203 : vector<128x8xf32>
    %205 = arith.addf %204, %95 : vector<128x8xf32>
    %206 = vector.extract_strided_slice %205 {offsets = [0, 0], sizes = [32, 8], strides = [1, 1]} : vector<128x8xf32> to vector<32x8xf32>
    %207 = arith.negf %206 : vector<32x8xf32>
    %208 = math.exp %207 : vector<32x8xf32>
    %cst_80 = arith.constant 1.000000e+00 : f32
    %209 = vector.broadcast %cst_80 : f32 to vector<32x8xf32>
    %210 = arith.addf %209, %208 : vector<32x8xf32>
    %211 = arith.divf %209, %210 : vector<32x8xf32>
    %212 = vector.extract_strided_slice %205 {offsets = [32, 0], sizes = [32, 8], strides = [1, 1]} : vector<128x8xf32> to vector<32x8xf32>
    %213 = arith.negf %212 : vector<32x8xf32>
    %214 = math.exp %213 : vector<32x8xf32>
    %cst_81 = arith.constant 1.000000e+00 : f32
    %215 = vector.broadcast %cst_81 : f32 to vector<32x8xf32>
    %216 = arith.addf %215, %214 : vector<32x8xf32>
    %217 = arith.divf %215, %216 : vector<32x8xf32>
    %218 = vector.extract_strided_slice %205 {offsets = [64, 0], sizes = [32, 8], strides = [1, 1]} : vector<128x8xf32> to vector<32x8xf32>
    %219 = math.tanh %218 : vector<32x8xf32>
    %220 = vector.extract_strided_slice %205 {offsets = [96, 0], sizes = [32, 8], strides = [1, 1]} : vector<128x8xf32> to vector<32x8xf32>
    %221 = arith.negf %220 : vector<32x8xf32>
    %222 = math.exp %221 : vector<32x8xf32>
    %cst_82 = arith.constant 1.000000e+00 : f32
    %223 = vector.broadcast %cst_82 : f32 to vector<32x8xf32>
    %224 = arith.addf %223, %222 : vector<32x8xf32>
    %225 = arith.divf %223, %224 : vector<32x8xf32>
    %226 = arith.mulf %217, %194 : vector<32x8xf32>
    %227 = arith.mulf %211, %219 : vector<32x8xf32>
    %228 = arith.addf %226, %227 : vector<32x8xf32>
    %229 = math.tanh %228 : vector<32x8xf32>
    %230 = arith.mulf %225, %229 : vector<32x8xf32>
    %c3_83 = arith.constant 3 : index
    %c0_84 = arith.constant 0 : index
    %c0_85 = arith.constant 0 : index
    %231 = vector.load %arg11[%c3_83, %c0_84, %c0_85] : memref<8x32x8xf32, #tpu.memory_space<vmem>>, vector<1x32x8xf32>
    %232 = vector.shape_cast %231 : vector<1x32x8xf32> to vector<32x8xf32>
    %233 = vector.shape_cast %230 : vector<32x8xf32> to vector<1x32x8xf32>
    tpu.vector_store %arg11[%c3_83, %c0_84, %c0_85], %233 {strides = array<i32>} : memref<8x32x8xf32, #tpu.memory_space<vmem>>, vector<1x32x8xf32>,
    %c4_86 = arith.constant 4 : index
    %c0_87 = arith.constant 0 : index
    %c0_88 = arith.constant 0 : index
    %234 = vector.load %arg10[%c4_86, %c0_87, %c0_88] : memref<8x32x8xf32, #tpu.memory_space<vmem>>, vector<1x32x8xf32>
    %235 = vector.shape_cast %234 : vector<1x32x8xf32> to vector<32x8xf32>
    %cst_89 = arith.constant dense<0.000000e+00> : vector<128x8xf32>
    %236 = tpu.matmul %89, %235, %cst_89 {dimension_numbers = #tpu.dot_dimension_numbers<[1], [0], [0], [1], [0, 0, 1, 1], [], []>} : vector<128x32xf32>, vector<32x8xf32>, vector<128x8xf32> -> vector<128x8xf32>
    %cst_90 = arith.constant dense<0.000000e+00> : vector<128x8xf32>
    %237 = tpu.matmul %91, %230, %cst_90 {dimension_numbers = #tpu.dot_dimension_numbers<[1], [0], [0], [1], [0, 0, 1, 1], [], []>} : vector<128x32xf32>, vector<32x8xf32>, vector<128x8xf32> -> vector<128x8xf32>
    %238 = arith.addf %236, %237 : vector<128x8xf32>
    %239 = arith.addf %238, %95 : vector<128x8xf32>
    %240 = vector.extract_strided_slice %239 {offsets = [0, 0], sizes = [32, 8], strides = [1, 1]} : vector<128x8xf32> to vector<32x8xf32>
    %241 = arith.negf %240 : vector<32x8xf32>
    %242 = math.exp %241 : vector<32x8xf32>
    %cst_91 = arith.constant 1.000000e+00 : f32
    %243 = vector.broadcast %cst_91 : f32 to vector<32x8xf32>
    %244 = arith.addf %243, %242 : vector<32x8xf32>
    %245 = arith.divf %243, %244 : vector<32x8xf32>
    %246 = vector.extract_strided_slice %239 {offsets = [32, 0], sizes = [32, 8], strides = [1, 1]} : vector<128x8xf32> to vector<32x8xf32>
    %247 = arith.negf %246 : vector<32x8xf32>
    %248 = math.exp %247 : vector<32x8xf32>
    %cst_92 = arith.constant 1.000000e+00 : f32
    %249 = vector.broadcast %cst_92 : f32 to vector<32x8xf32>
    %250 = arith.addf %249, %248 : vector<32x8xf32>
    %251 = arith.divf %249, %250 : vector<32x8xf32>
    %252 = vector.extract_strided_slice %239 {offsets = [64, 0], sizes = [32, 8], strides = [1, 1]} : vector<128x8xf32> to vector<32x8xf32>
    %253 = math.tanh %252 : vector<32x8xf32>
    %254 = vector.extract_strided_slice %239 {offsets = [96, 0], sizes = [32, 8], strides = [1, 1]} : vector<128x8xf32> to vector<32x8xf32>
    %255 = arith.negf %254 : vector<32x8xf32>
    %256 = math.exp %255 : vector<32x8xf32>
    %cst_93 = arith.constant 1.000000e+00 : f32
    %257 = vector.broadcast %cst_93 : f32 to vector<32x8xf32>
    %258 = arith.addf %257, %256 : vector<32x8xf32>
    %259 = arith.divf %257, %258 : vector<32x8xf32>
    %260 = arith.mulf %251, %228 : vector<32x8xf32>
    %261 = arith.mulf %245, %253 : vector<32x8xf32>
    %262 = arith.addf %260, %261 : vector<32x8xf32>
    %263 = math.tanh %262 : vector<32x8xf32>
    %264 = arith.mulf %259, %263 : vector<32x8xf32>
    %c4_94 = arith.constant 4 : index
    %c0_95 = arith.constant 0 : index
    %c0_96 = arith.constant 0 : index
    %265 = vector.load %arg11[%c4_94, %c0_95, %c0_96] : memref<8x32x8xf32, #tpu.memory_space<vmem>>, vector<1x32x8xf32>
    %266 = vector.shape_cast %265 : vector<1x32x8xf32> to vector<32x8xf32>
    %267 = vector.shape_cast %264 : vector<32x8xf32> to vector<1x32x8xf32>
    tpu.vector_store %arg11[%c4_94, %c0_95, %c0_96], %267 {strides = array<i32>} : memref<8x32x8xf32, #tpu.memory_space<vmem>>, vector<1x32x8xf32>,
    %c5_97 = arith.constant 5 : index
    %c0_98 = arith.constant 0 : index
    %c0_99 = arith.constant 0 : index
    %268 = vector.load %arg10[%c5_97, %c0_98, %c0_99] : memref<8x32x8xf32, #tpu.memory_space<vmem>>, vector<1x32x8xf32>
    %269 = vector.shape_cast %268 : vector<1x32x8xf32> to vector<32x8xf32>
    %cst_100 = arith.constant dense<0.000000e+00> : vector<128x8xf32>
    %270 = tpu.matmul %89, %269, %cst_100 {dimension_numbers = #tpu.dot_dimension_numbers<[1], [0], [0], [1], [0, 0, 1, 1], [], []>} : vector<128x32xf32>, vector<32x8xf32>, vector<128x8xf32> -> vector<128x8xf32>
    %cst_101 = arith.constant dense<0.000000e+00> : vector<128x8xf32>
    %271 = tpu.matmul %91, %264, %cst_101 {dimension_numbers = #tpu.dot_dimension_numbers<[1], [0], [0], [1], [0, 0, 1, 1], [], []>} : vector<128x32xf32>, vector<32x8xf32>, vector<128x8xf32> -> vector<128x8xf32>
    %272 = arith.addf %270, %271 : vector<128x8xf32>
    %273 = arith.addf %272, %95 : vector<128x8xf32>
    %274 = vector.extract_strided_slice %273 {offsets = [0, 0], sizes = [32, 8], strides = [1, 1]} : vector<128x8xf32> to vector<32x8xf32>
    %275 = arith.negf %274 : vector<32x8xf32>
    %276 = math.exp %275 : vector<32x8xf32>
    %cst_102 = arith.constant 1.000000e+00 : f32
    %277 = vector.broadcast %cst_102 : f32 to vector<32x8xf32>
    %278 = arith.addf %277, %276 : vector<32x8xf32>
    %279 = arith.divf %277, %278 : vector<32x8xf32>
    %280 = vector.extract_strided_slice %273 {offsets = [32, 0], sizes = [32, 8], strides = [1, 1]} : vector<128x8xf32> to vector<32x8xf32>
    %281 = arith.negf %280 : vector<32x8xf32>
    %282 = math.exp %281 : vector<32x8xf32>
    %cst_103 = arith.constant 1.000000e+00 : f32
    %283 = vector.broadcast %cst_103 : f32 to vector<32x8xf32>
    %284 = arith.addf %283, %282 : vector<32x8xf32>
    %285 = arith.divf %283, %284 : vector<32x8xf32>
    %286 = vector.extract_strided_slice %273 {offsets = [64, 0], sizes = [32, 8], strides = [1, 1]} : vector<128x8xf32> to vector<32x8xf32>
    %287 = math.tanh %286 : vector<32x8xf32>
    %288 = vector.extract_strided_slice %273 {offsets = [96, 0], sizes = [32, 8], strides = [1, 1]} : vector<128x8xf32> to vector<32x8xf32>
    %289 = arith.negf %288 : vector<32x8xf32>
    %290 = math.exp %289 : vector<32x8xf32>
    %cst_104 = arith.constant 1.000000e+00 : f32
    %291 = vector.broadcast %cst_104 : f32 to vector<32x8xf32>
    %292 = arith.addf %291, %290 : vector<32x8xf32>
    %293 = arith.divf %291, %292 : vector<32x8xf32>
    %294 = arith.mulf %285, %262 : vector<32x8xf32>
    %295 = arith.mulf %279, %287 : vector<32x8xf32>
    %296 = arith.addf %294, %295 : vector<32x8xf32>
    %297 = math.tanh %296 : vector<32x8xf32>
    %298 = arith.mulf %293, %297 : vector<32x8xf32>
    %c5_105 = arith.constant 5 : index
    %c0_106 = arith.constant 0 : index
    %c0_107 = arith.constant 0 : index
    %299 = vector.load %arg11[%c5_105, %c0_106, %c0_107] : memref<8x32x8xf32, #tpu.memory_space<vmem>>, vector<1x32x8xf32>
    %300 = vector.shape_cast %299 : vector<1x32x8xf32> to vector<32x8xf32>
    %301 = vector.shape_cast %298 : vector<32x8xf32> to vector<1x32x8xf32>
    tpu.vector_store %arg11[%c5_105, %c0_106, %c0_107], %301 {strides = array<i32>} : memref<8x32x8xf32, #tpu.memory_space<vmem>>, vector<1x32x8xf32>,
    %c6 = arith.constant 6 : index
    %c0_108 = arith.constant 0 : index
    %c0_109 = arith.constant 0 : index
    %302 = vector.load %arg10[%c6, %c0_108, %c0_109] : memref<8x32x8xf32, #tpu.memory_space<vmem>>, vector<1x32x8xf32>
    %303 = vector.shape_cast %302 : vector<1x32x8xf32> to vector<32x8xf32>
    %cst_110 = arith.constant dense<0.000000e+00> : vector<128x8xf32>
    %304 = tpu.matmul %89, %303, %cst_110 {dimension_numbers = #tpu.dot_dimension_numbers<[1], [0], [0], [1], [0, 0, 1, 1], [], []>} : vector<128x32xf32>, vector<32x8xf32>, vector<128x8xf32> -> vector<128x8xf32>
    %cst_111 = arith.constant dense<0.000000e+00> : vector<128x8xf32>
    %305 = tpu.matmul %91, %298, %cst_111 {dimension_numbers = #tpu.dot_dimension_numbers<[1], [0], [0], [1], [0, 0, 1, 1], [], []>} : vector<128x32xf32>, vector<32x8xf32>, vector<128x8xf32> -> vector<128x8xf32>
    %306 = arith.addf %304, %305 : vector<128x8xf32>
    %307 = arith.addf %306, %95 : vector<128x8xf32>
    %308 = vector.extract_strided_slice %307 {offsets = [0, 0], sizes = [32, 8], strides = [1, 1]} : vector<128x8xf32> to vector<32x8xf32>
    %309 = arith.negf %308 : vector<32x8xf32>
    %310 = math.exp %309 : vector<32x8xf32>
    %cst_112 = arith.constant 1.000000e+00 : f32
    %311 = vector.broadcast %cst_112 : f32 to vector<32x8xf32>
    %312 = arith.addf %311, %310 : vector<32x8xf32>
    %313 = arith.divf %311, %312 : vector<32x8xf32>
    %314 = vector.extract_strided_slice %307 {offsets = [32, 0], sizes = [32, 8], strides = [1, 1]} : vector<128x8xf32> to vector<32x8xf32>
    %315 = arith.negf %314 : vector<32x8xf32>
    %316 = math.exp %315 : vector<32x8xf32>
    %cst_113 = arith.constant 1.000000e+00 : f32
    %317 = vector.broadcast %cst_113 : f32 to vector<32x8xf32>
    %318 = arith.addf %317, %316 : vector<32x8xf32>
    %319 = arith.divf %317, %318 : vector<32x8xf32>
    %320 = vector.extract_strided_slice %307 {offsets = [64, 0], sizes = [32, 8], strides = [1, 1]} : vector<128x8xf32> to vector<32x8xf32>
    %321 = math.tanh %320 : vector<32x8xf32>
    %322 = vector.extract_strided_slice %307 {offsets = [96, 0], sizes = [32, 8], strides = [1, 1]} : vector<128x8xf32> to vector<32x8xf32>
    %323 = arith.negf %322 : vector<32x8xf32>
    %324 = math.exp %323 : vector<32x8xf32>
    %cst_114 = arith.constant 1.000000e+00 : f32
    %325 = vector.broadcast %cst_114 : f32 to vector<32x8xf32>
    %326 = arith.addf %325, %324 : vector<32x8xf32>
    %327 = arith.divf %325, %326 : vector<32x8xf32>
    %328 = arith.mulf %319, %296 : vector<32x8xf32>
    %329 = arith.mulf %313, %321 : vector<32x8xf32>
    %330 = arith.addf %328, %329 : vector<32x8xf32>
    %331 = math.tanh %330 : vector<32x8xf32>
    %332 = arith.mulf %327, %331 : vector<32x8xf32>
    %c6_115 = arith.constant 6 : index
    %c0_116 = arith.constant 0 : index
    %c0_117 = arith.constant 0 : index
    %333 = vector.load %arg11[%c6_115, %c0_116, %c0_117] : memref<8x32x8xf32, #tpu.memory_space<vmem>>, vector<1x32x8xf32>
    %334 = vector.shape_cast %333 : vector<1x32x8xf32> to vector<32x8xf32>
    %335 = vector.shape_cast %332 : vector<32x8xf32> to vector<1x32x8xf32>
    tpu.vector_store %arg11[%c6_115, %c0_116, %c0_117], %335 {strides = array<i32>} : memref<8x32x8xf32, #tpu.memory_space<vmem>>, vector<1x32x8xf32>,
    %c7 = arith.constant 7 : index
    %c0_118 = arith.constant 0 : index
    %c0_119 = arith.constant 0 : index
    %336 = vector.load %arg10[%c7, %c0_118, %c0_119] : memref<8x32x8xf32, #tpu.memory_space<vmem>>, vector<1x32x8xf32>
    %337 = vector.shape_cast %336 : vector<1x32x8xf32> to vector<32x8xf32>
    %cst_120 = arith.constant dense<0.000000e+00> : vector<128x8xf32>
    %338 = tpu.matmul %89, %337, %cst_120 {dimension_numbers = #tpu.dot_dimension_numbers<[1], [0], [0], [1], [0, 0, 1, 1], [], []>} : vector<128x32xf32>, vector<32x8xf32>, vector<128x8xf32> -> vector<128x8xf32>
    %cst_121 = arith.constant dense<0.000000e+00> : vector<128x8xf32>
    %339 = tpu.matmul %91, %332, %cst_121 {dimension_numbers = #tpu.dot_dimension_numbers<[1], [0], [0], [1], [0, 0, 1, 1], [], []>} : vector<128x32xf32>, vector<32x8xf32>, vector<128x8xf32> -> vector<128x8xf32>
    %340 = arith.addf %338, %339 : vector<128x8xf32>
    %341 = arith.addf %340, %95 : vector<128x8xf32>
    %342 = vector.extract_strided_slice %341 {offsets = [0, 0], sizes = [32, 8], strides = [1, 1]} : vector<128x8xf32> to vector<32x8xf32>
    %343 = arith.negf %342 : vector<32x8xf32>
    %344 = math.exp %343 : vector<32x8xf32>
    %cst_122 = arith.constant 1.000000e+00 : f32
    %345 = vector.broadcast %cst_122 : f32 to vector<32x8xf32>
    %346 = arith.addf %345, %344 : vector<32x8xf32>
    %347 = arith.divf %345, %346 : vector<32x8xf32>
    %348 = vector.extract_strided_slice %341 {offsets = [32, 0], sizes = [32, 8], strides = [1, 1]} : vector<128x8xf32> to vector<32x8xf32>
    %349 = arith.negf %348 : vector<32x8xf32>
    %350 = math.exp %349 : vector<32x8xf32>
    %cst_123 = arith.constant 1.000000e+00 : f32
    %351 = vector.broadcast %cst_123 : f32 to vector<32x8xf32>
    %352 = arith.addf %351, %350 : vector<32x8xf32>
    %353 = arith.divf %351, %352 : vector<32x8xf32>
    %354 = vector.extract_strided_slice %341 {offsets = [64, 0], sizes = [32, 8], strides = [1, 1]} : vector<128x8xf32> to vector<32x8xf32>
    %355 = math.tanh %354 : vector<32x8xf32>
    %356 = vector.extract_strided_slice %341 {offsets = [96, 0], sizes = [32, 8], strides = [1, 1]} : vector<128x8xf32> to vector<32x8xf32>
    %357 = arith.negf %356 : vector<32x8xf32>
    %358 = math.exp %357 : vector<32x8xf32>
    %cst_124 = arith.constant 1.000000e+00 : f32
    %359 = vector.broadcast %cst_124 : f32 to vector<32x8xf32>
    %360 = arith.addf %359, %358 : vector<32x8xf32>
    %361 = arith.divf %359, %360 : vector<32x8xf32>
    %362 = arith.mulf %353, %330 : vector<32x8xf32>
    %363 = arith.mulf %347, %355 : vector<32x8xf32>
    %364 = arith.addf %362, %363 : vector<32x8xf32>
    %365 = math.tanh %364 : vector<32x8xf32>
    %366 = arith.mulf %361, %365 : vector<32x8xf32>
    %c7_125 = arith.constant 7 : index
    %c0_126 = arith.constant 0 : index
    %c0_127 = arith.constant 0 : index
    %367 = vector.load %arg11[%c7_125, %c0_126, %c0_127] : memref<8x32x8xf32, #tpu.memory_space<vmem>>, vector<1x32x8xf32>
    %368 = vector.shape_cast %367 : vector<1x32x8xf32> to vector<32x8xf32>
    %369 = vector.shape_cast %366 : vector<32x8xf32> to vector<1x32x8xf32>
    tpu.vector_store %arg11[%c7_125, %c0_126, %c0_127], %369 {strides = array<i32>} : memref<8x32x8xf32, #tpu.memory_space<vmem>>, vector<1x32x8xf32>,
    %cst_128 = arith.constant dense<0.000000e+00> : vector<8xf32>
    %370 = vector.multi_reduction <add>, %366, %cst_128 [0] : vector<32x8xf32> to vector<8xf32>
    %371 = vector.shape_cast %370 : vector<8xf32> to vector<1x8xf32>
    %cst_129 = arith.constant 3.200000e+01 : f32
    %372 = vector.broadcast %cst_129 : f32 to vector<1x8xf32>
    %373 = arith.divf %371, %372 : vector<1x8xf32>
    %374 = vector.broadcast %373 : vector<1x8xf32> to vector<32x8xf32>
    %375 = arith.subf %366, %374 : vector<32x8xf32>
    %376 = arith.mulf %375, %375 : vector<32x8xf32>
    %cst_130 = arith.constant dense<0.000000e+00> : vector<8xf32>
    %377 = vector.multi_reduction <add>, %376, %cst_130 [0] : vector<32x8xf32> to vector<8xf32>
    %378 = vector.shape_cast %377 : vector<8xf32> to vector<1x8xf32>
    %cst_131 = arith.constant 3.200000e+01 : f32
    %379 = vector.broadcast %cst_131 : f32 to vector<1x8xf32>
    %380 = arith.divf %378, %379 : vector<1x8xf32>
    %381 = vector.broadcast %373 : vector<1x8xf32> to vector<32x8xf32>
    %382 = arith.subf %366, %381 : vector<32x8xf32>
    %cst_132 = arith.constant 9.99999974E-6 : f32
    %383 = vector.broadcast %cst_132 : f32 to vector<1x8xf32>
    %384 = arith.addf %380, %383 : vector<1x8xf32>
    %385 = math.rsqrt %384 : vector<1x8xf32>
    %386 = vector.broadcast %385 : vector<1x8xf32> to vector<32x8xf32>
    %387 = arith.mulf %382, %386 : vector<32x8xf32>
    %388 = vector.broadcast %86 : vector<32x1xf32> to vector<32x8xf32>
    %389 = arith.mulf %387, %388 : vector<32x8xf32>
    %390 = vector.broadcast %87 : vector<32x1xf32> to vector<32x8xf32>
    %391 = arith.addf %389, %390 : vector<32x8xf32>
    %cst_133 = arith.constant dense<0.000000e+00> : vector<8xf32>
    %392 = vector.multi_reduction <add>, %364, %cst_133 [0] : vector<32x8xf32> to vector<8xf32>
    %393 = vector.shape_cast %392 : vector<8xf32> to vector<1x8xf32>
    %cst_134 = arith.constant 3.200000e+01 : f32
    %394 = vector.broadcast %cst_134 : f32 to vector<1x8xf32>
    %395 = arith.divf %393, %394 : vector<1x8xf32>
    %396 = vector.broadcast %395 : vector<1x8xf32> to vector<32x8xf32>
    %397 = arith.subf %364, %396 : vector<32x8xf32>
    %398 = arith.mulf %397, %397 : vector<32x8xf32>
    %cst_135 = arith.constant dense<0.000000e+00> : vector<8xf32>
    %399 = vector.multi_reduction <add>, %398, %cst_135 [0] : vector<32x8xf32> to vector<8xf32>
    %400 = vector.shape_cast %399 : vector<8xf32> to vector<1x8xf32>
    %cst_136 = arith.constant 3.200000e+01 : f32
    %401 = vector.broadcast %cst_136 : f32 to vector<1x8xf32>
    %402 = arith.divf %400, %401 : vector<1x8xf32>
    %403 = vector.broadcast %395 : vector<1x8xf32> to vector<32x8xf32>
    %404 = arith.subf %364, %403 : vector<32x8xf32>
    %cst_137 = arith.constant 9.99999974E-6 : f32
    %405 = vector.broadcast %cst_137 : f32 to vector<1x8xf32>
    %406 = arith.addf %402, %405 : vector<1x8xf32>
    %407 = math.rsqrt %406 : vector<1x8xf32>
    %408 = vector.broadcast %407 : vector<1x8xf32> to vector<32x8xf32>
    %409 = arith.mulf %404, %408 : vector<32x8xf32>
    %410 = vector.broadcast %86 : vector<32x1xf32> to vector<32x8xf32>
    %411 = arith.mulf %409, %410 : vector<32x8xf32>
    %412 = vector.broadcast %87 : vector<32x1xf32> to vector<32x8xf32>
    %413 = arith.addf %411, %412 : vector<32x8xf32>
    %c1_138 = arith.constant 1 : index
    %c0_139 = arith.constant 0 : index
    %c0_140 = arith.constant 0 : index
    %414 = vector.load %arg4[%c1_138, %c0_139, %c0_140] : memref<2x128x32xf32, #tpu.memory_space<vmem>>, vector<1x128x32xf32>
    %415 = vector.shape_cast %414 : vector<1x128x32xf32> to vector<128x32xf32>
    %c1_141 = arith.constant 1 : index
    %c0_142 = arith.constant 0 : index
    %c0_143 = arith.constant 0 : index
    %416 = vector.load %arg5[%c1_141, %c0_142, %c0_143] : memref<2x128x32xf32, #tpu.memory_space<vmem>>, vector<1x128x32xf32>
    %417 = vector.shape_cast %416 : vector<1x128x32xf32> to vector<128x32xf32>
    %c1_144 = arith.constant 1 : index
    %c0_145 = arith.constant 0 : index
    %c0_146 = arith.constant 0 : index
    %418 = vector.load %arg6[%c1_144, %c0_145, %c0_146] : memref<2x128x1xf32, #tpu.memory_space<vmem>>, vector<1x128x1xf32>
    %419 = vector.shape_cast %418 : vector<1x128x1xf32> to vector<128x1xf32>
    %420 = vector.shape_cast %419 : vector<128x1xf32> to vector<128x1xf32>
    %421 = vector.broadcast %420 : vector<128x1xf32> to vector<128x8xf32>
    %cst_147 = arith.constant 0.000000e+00 : f32
    %422 = vector.broadcast %cst_147 : f32 to vector<32x8xf32>
    %cst_148 = arith.constant 0.000000e+00 : f32
    %423 = vector.broadcast %cst_148 : f32 to vector<32x8xf32>
    %c0_149 = arith.constant 0 : index
    %c0_150 = arith.constant 0 : index
    %c0_151 = arith.constant 0 : index
    %424 = vector.load %arg11[%c0_149, %c0_150, %c0_151] : memref<8x32x8xf32, #tpu.memory_space<vmem>>, vector<1x32x8xf32>
    %425 = vector.shape_cast %424 : vector<1x32x8xf32> to vector<32x8xf32>
    %cst_152 = arith.constant dense<0.000000e+00> : vector<128x8xf32>
    %426 = tpu.matmul %415, %425, %cst_152 {dimension_numbers = #tpu.dot_dimension_numbers<[1], [0], [0], [1], [0, 0, 1, 1], [], []>} : vector<128x32xf32>, vector<32x8xf32>, vector<128x8xf32> -> vector<128x8xf32>
    %cst_153 = arith.constant dense<0.000000e+00> : vector<128x8xf32>
    %427 = tpu.matmul %417, %422, %cst_153 {dimension_numbers = #tpu.dot_dimension_numbers<[1], [0], [0], [1], [0, 0, 1, 1], [], []>} : vector<128x32xf32>, vector<32x8xf32>, vector<128x8xf32> -> vector<128x8xf32>
    %428 = arith.addf %426, %427 : vector<128x8xf32>
    %429 = arith.addf %428, %421 : vector<128x8xf32>
    %430 = vector.extract_strided_slice %429 {offsets = [0, 0], sizes = [32, 8], strides = [1, 1]} : vector<128x8xf32> to vector<32x8xf32>
    %431 = arith.negf %430 : vector<32x8xf32>
    %432 = math.exp %431 : vector<32x8xf32>
    %cst_154 = arith.constant 1.000000e+00 : f32
    %433 = vector.broadcast %cst_154 : f32 to vector<32x8xf32>
    %434 = arith.addf %433, %432 : vector<32x8xf32>
    %435 = arith.divf %433, %434 : vector<32x8xf32>
    %436 = vector.extract_strided_slice %429 {offsets = [32, 0], sizes = [32, 8], strides = [1, 1]} : vector<128x8xf32> to vector<32x8xf32>
    %437 = arith.negf %436 : vector<32x8xf32>
    %438 = math.exp %437 : vector<32x8xf32>
    %cst_155 = arith.constant 1.000000e+00 : f32
    %439 = vector.broadcast %cst_155 : f32 to vector<32x8xf32>
    %440 = arith.addf %439, %438 : vector<32x8xf32>
    %441 = arith.divf %439, %440 : vector<32x8xf32>
    %442 = vector.extract_strided_slice %429 {offsets = [64, 0], sizes = [32, 8], strides = [1, 1]} : vector<128x8xf32> to vector<32x8xf32>
    %443 = math.tanh %442 : vector<32x8xf32>
    %444 = vector.extract_strided_slice %429 {offsets = [96, 0], sizes = [32, 8], strides = [1, 1]} : vector<128x8xf32> to vector<32x8xf32>
    %445 = arith.negf %444 : vector<32x8xf32>
    %446 = math.exp %445 : vector<32x8xf32>
    %cst_156 = arith.constant 1.000000e+00 : f32
    %447 = vector.broadcast %cst_156 : f32 to vector<32x8xf32>
    %448 = arith.addf %447, %446 : vector<32x8xf32>
    %449 = arith.divf %447, %448 : vector<32x8xf32>
    %450 = arith.mulf %441, %423 : vector<32x8xf32>
    %451 = arith.mulf %435, %443 : vector<32x8xf32>
    %452 = arith.addf %450, %451 : vector<32x8xf32>
    %453 = math.tanh %452 : vector<32x8xf32>
    %454 = arith.mulf %449, %453 : vector<32x8xf32>
    %c1_157 = arith.constant 1 : index
    %c0_158 = arith.constant 0 : index
    %c0_159 = arith.constant 0 : index
    %455 = vector.load %arg11[%c1_157, %c0_158, %c0_159] : memref<8x32x8xf32, #tpu.memory_space<vmem>>, vector<1x32x8xf32>
    %456 = vector.shape_cast %455 : vector<1x32x8xf32> to vector<32x8xf32>
    %cst_160 = arith.constant dense<0.000000e+00> : vector<128x8xf32>
    %457 = tpu.matmul %415, %456, %cst_160 {dimension_numbers = #tpu.dot_dimension_numbers<[1], [0], [0], [1], [0, 0, 1, 1], [], []>} : vector<128x32xf32>, vector<32x8xf32>, vector<128x8xf32> -> vector<128x8xf32>
    %cst_161 = arith.constant dense<0.000000e+00> : vector<128x8xf32>
    %458 = tpu.matmul %417, %454, %cst_161 {dimension_numbers = #tpu.dot_dimension_numbers<[1], [0], [0], [1], [0, 0, 1, 1], [], []>} : vector<128x32xf32>, vector<32x8xf32>, vector<128x8xf32> -> vector<128x8xf32>
    %459 = arith.addf %457, %458 : vector<128x8xf32>
    %460 = arith.addf %459, %421 : vector<128x8xf32>
    %461 = vector.extract_strided_slice %460 {offsets = [0, 0], sizes = [32, 8], strides = [1, 1]} : vector<128x8xf32> to vector<32x8xf32>
    %462 = arith.negf %461 : vector<32x8xf32>
    %463 = math.exp %462 : vector<32x8xf32>
    %cst_162 = arith.constant 1.000000e+00 : f32
    %464 = vector.broadcast %cst_162 : f32 to vector<32x8xf32>
    %465 = arith.addf %464, %463 : vector<32x8xf32>
    %466 = arith.divf %464, %465 : vector<32x8xf32>
    %467 = vector.extract_strided_slice %460 {offsets = [32, 0], sizes = [32, 8], strides = [1, 1]} : vector<128x8xf32> to vector<32x8xf32>
    %468 = arith.negf %467 : vector<32x8xf32>
    %469 = math.exp %468 : vector<32x8xf32>
    %cst_163 = arith.constant 1.000000e+00 : f32
    %470 = vector.broadcast %cst_163 : f32 to vector<32x8xf32>
    %471 = arith.addf %470, %469 : vector<32x8xf32>
    %472 = arith.divf %470, %471 : vector<32x8xf32>
    %473 = vector.extract_strided_slice %460 {offsets = [64, 0], sizes = [32, 8], strides = [1, 1]} : vector<128x8xf32> to vector<32x8xf32>
    %474 = math.tanh %473 : vector<32x8xf32>
    %475 = vector.extract_strided_slice %460 {offsets = [96, 0], sizes = [32, 8], strides = [1, 1]} : vector<128x8xf32> to vector<32x8xf32>
    %476 = arith.negf %475 : vector<32x8xf32>
    %477 = math.exp %476 : vector<32x8xf32>
    %cst_164 = arith.constant 1.000000e+00 : f32
    %478 = vector.broadcast %cst_164 : f32 to vector<32x8xf32>
    %479 = arith.addf %478, %477 : vector<32x8xf32>
    %480 = arith.divf %478, %479 : vector<32x8xf32>
    %481 = arith.mulf %472, %452 : vector<32x8xf32>
    %482 = arith.mulf %466, %474 : vector<32x8xf32>
    %483 = arith.addf %481, %482 : vector<32x8xf32>
    %484 = math.tanh %483 : vector<32x8xf32>
    %485 = arith.mulf %480, %484 : vector<32x8xf32>
    %c2_165 = arith.constant 2 : index
    %c0_166 = arith.constant 0 : index
    %c0_167 = arith.constant 0 : index
    %486 = vector.load %arg11[%c2_165, %c0_166, %c0_167] : memref<8x32x8xf32, #tpu.memory_space<vmem>>, vector<1x32x8xf32>
    %487 = vector.shape_cast %486 : vector<1x32x8xf32> to vector<32x8xf32>
    %cst_168 = arith.constant dense<0.000000e+00> : vector<128x8xf32>
    %488 = tpu.matmul %415, %487, %cst_168 {dimension_numbers = #tpu.dot_dimension_numbers<[1], [0], [0], [1], [0, 0, 1, 1], [], []>} : vector<128x32xf32>, vector<32x8xf32>, vector<128x8xf32> -> vector<128x8xf32>
    %cst_169 = arith.constant dense<0.000000e+00> : vector<128x8xf32>
    %489 = tpu.matmul %417, %485, %cst_169 {dimension_numbers = #tpu.dot_dimension_numbers<[1], [0], [0], [1], [0, 0, 1, 1], [], []>} : vector<128x32xf32>, vector<32x8xf32>, vector<128x8xf32> -> vector<128x8xf32>
    %490 = arith.addf %488, %489 : vector<128x8xf32>
    %491 = arith.addf %490, %421 : vector<128x8xf32>
    %492 = vector.extract_strided_slice %491 {offsets = [0, 0], sizes = [32, 8], strides = [1, 1]} : vector<128x8xf32> to vector<32x8xf32>
    %493 = arith.negf %492 : vector<32x8xf32>
    %494 = math.exp %493 : vector<32x8xf32>
    %cst_170 = arith.constant 1.000000e+00 : f32
    %495 = vector.broadcast %cst_170 : f32 to vector<32x8xf32>
    %496 = arith.addf %495, %494 : vector<32x8xf32>
    %497 = arith.divf %495, %496 : vector<32x8xf32>
    %498 = vector.extract_strided_slice %491 {offsets = [32, 0], sizes = [32, 8], strides = [1, 1]} : vector<128x8xf32> to vector<32x8xf32>
    %499 = arith.negf %498 : vector<32x8xf32>
    %500 = math.exp %499 : vector<32x8xf32>
    %cst_171 = arith.constant 1.000000e+00 : f32
    %501 = vector.broadcast %cst_171 : f32 to vector<32x8xf32>
    %502 = arith.addf %501, %500 : vector<32x8xf32>
    %503 = arith.divf %501, %502 : vector<32x8xf32>
    %504 = vector.extract_strided_slice %491 {offsets = [64, 0], sizes = [32, 8], strides = [1, 1]} : vector<128x8xf32> to vector<32x8xf32>
    %505 = math.tanh %504 : vector<32x8xf32>
    %506 = vector.extract_strided_slice %491 {offsets = [96, 0], sizes = [32, 8], strides = [1, 1]} : vector<128x8xf32> to vector<32x8xf32>
    %507 = arith.negf %506 : vector<32x8xf32>
    %508 = math.exp %507 : vector<32x8xf32>
    %cst_172 = arith.constant 1.000000e+00 : f32
    %509 = vector.broadcast %cst_172 : f32 to vector<32x8xf32>
    %510 = arith.addf %509, %508 : vector<32x8xf32>
    %511 = arith.divf %509, %510 : vector<32x8xf32>
    %512 = arith.mulf %503, %483 : vector<32x8xf32>
    %513 = arith.mulf %497, %505 : vector<32x8xf32>
    %514 = arith.addf %512, %513 : vector<32x8xf32>
    %515 = math.tanh %514 : vector<32x8xf32>
    %516 = arith.mulf %511, %515 : vector<32x8xf32>
    %c3_173 = arith.constant 3 : index
    %c0_174 = arith.constant 0 : index
    %c0_175 = arith.constant 0 : index
    %517 = vector.load %arg11[%c3_173, %c0_174, %c0_175] : memref<8x32x8xf32, #tpu.memory_space<vmem>>, vector<1x32x8xf32>
    %518 = vector.shape_cast %517 : vector<1x32x8xf32> to vector<32x8xf32>
    %cst_176 = arith.constant dense<0.000000e+00> : vector<128x8xf32>
    %519 = tpu.matmul %415, %518, %cst_176 {dimension_numbers = #tpu.dot_dimension_numbers<[1], [0], [0], [1], [0, 0, 1, 1], [], []>} : vector<128x32xf32>, vector<32x8xf32>, vector<128x8xf32> -> vector<128x8xf32>
    %cst_177 = arith.constant dense<0.000000e+00> : vector<128x8xf32>
    %520 = tpu.matmul %417, %516, %cst_177 {dimension_numbers = #tpu.dot_dimension_numbers<[1], [0], [0], [1], [0, 0, 1, 1], [], []>} : vector<128x32xf32>, vector<32x8xf32>, vector<128x8xf32> -> vector<128x8xf32>
    %521 = arith.addf %519, %520 : vector<128x8xf32>
    %522 = arith.addf %521, %421 : vector<128x8xf32>
    %523 = vector.extract_strided_slice %522 {offsets = [0, 0], sizes = [32, 8], strides = [1, 1]} : vector<128x8xf32> to vector<32x8xf32>
    %524 = arith.negf %523 : vector<32x8xf32>
    %525 = math.exp %524 : vector<32x8xf32>
    %cst_178 = arith.constant 1.000000e+00 : f32
    %526 = vector.broadcast %cst_178 : f32 to vector<32x8xf32>
    %527 = arith.addf %526, %525 : vector<32x8xf32>
    %528 = arith.divf %526, %527 : vector<32x8xf32>
    %529 = vector.extract_strided_slice %522 {offsets = [32, 0], sizes = [32, 8], strides = [1, 1]} : vector<128x8xf32> to vector<32x8xf32>
    %530 = arith.negf %529 : vector<32x8xf32>
    %531 = math.exp %530 : vector<32x8xf32>
    %cst_179 = arith.constant 1.000000e+00 : f32
    %532 = vector.broadcast %cst_179 : f32 to vector<32x8xf32>
    %533 = arith.addf %532, %531 : vector<32x8xf32>
    %534 = arith.divf %532, %533 : vector<32x8xf32>
    %535 = vector.extract_strided_slice %522 {offsets = [64, 0], sizes = [32, 8], strides = [1, 1]} : vector<128x8xf32> to vector<32x8xf32>
    %536 = math.tanh %535 : vector<32x8xf32>
    %537 = vector.extract_strided_slice %522 {offsets = [96, 0], sizes = [32, 8], strides = [1, 1]} : vector<128x8xf32> to vector<32x8xf32>
    %538 = arith.negf %537 : vector<32x8xf32>
    %539 = math.exp %538 : vector<32x8xf32>
    %cst_180 = arith.constant 1.000000e+00 : f32
    %540 = vector.broadcast %cst_180 : f32 to vector<32x8xf32>
    %541 = arith.addf %540, %539 : vector<32x8xf32>
    %542 = arith.divf %540, %541 : vector<32x8xf32>
    %543 = arith.mulf %534, %514 : vector<32x8xf32>
    %544 = arith.mulf %528, %536 : vector<32x8xf32>
    %545 = arith.addf %543, %544 : vector<32x8xf32>
    %546 = math.tanh %545 : vector<32x8xf32>
    %547 = arith.mulf %542, %546 : vector<32x8xf32>
    %c4_181 = arith.constant 4 : index
    %c0_182 = arith.constant 0 : index
    %c0_183 = arith.constant 0 : index
    %548 = vector.load %arg11[%c4_181, %c0_182, %c0_183] : memref<8x32x8xf32, #tpu.memory_space<vmem>>, vector<1x32x8xf32>
    %549 = vector.shape_cast %548 : vector<1x32x8xf32> to vector<32x8xf32>
    %cst_184 = arith.constant dense<0.000000e+00> : vector<128x8xf32>
    %550 = tpu.matmul %415, %549, %cst_184 {dimension_numbers = #tpu.dot_dimension_numbers<[1], [0], [0], [1], [0, 0, 1, 1], [], []>} : vector<128x32xf32>, vector<32x8xf32>, vector<128x8xf32> -> vector<128x8xf32>
    %cst_185 = arith.constant dense<0.000000e+00> : vector<128x8xf32>
    %551 = tpu.matmul %417, %547, %cst_185 {dimension_numbers = #tpu.dot_dimension_numbers<[1], [0], [0], [1], [0, 0, 1, 1], [], []>} : vector<128x32xf32>, vector<32x8xf32>, vector<128x8xf32> -> vector<128x8xf32>
    %552 = arith.addf %550, %551 : vector<128x8xf32>
    %553 = arith.addf %552, %421 : vector<128x8xf32>
    %554 = vector.extract_strided_slice %553 {offsets = [0, 0], sizes = [32, 8], strides = [1, 1]} : vector<128x8xf32> to vector<32x8xf32>
    %555 = arith.negf %554 : vector<32x8xf32>
    %556 = math.exp %555 : vector<32x8xf32>
    %cst_186 = arith.constant 1.000000e+00 : f32
    %557 = vector.broadcast %cst_186 : f32 to vector<32x8xf32>
    %558 = arith.addf %557, %556 : vector<32x8xf32>
    %559 = arith.divf %557, %558 : vector<32x8xf32>
    %560 = vector.extract_strided_slice %553 {offsets = [32, 0], sizes = [32, 8], strides = [1, 1]} : vector<128x8xf32> to vector<32x8xf32>
    %561 = arith.negf %560 : vector<32x8xf32>
    %562 = math.exp %561 : vector<32x8xf32>
    %cst_187 = arith.constant 1.000000e+00 : f32
    %563 = vector.broadcast %cst_187 : f32 to vector<32x8xf32>
    %564 = arith.addf %563, %562 : vector<32x8xf32>
    %565 = arith.divf %563, %564 : vector<32x8xf32>
    %566 = vector.extract_strided_slice %553 {offsets = [64, 0], sizes = [32, 8], strides = [1, 1]} : vector<128x8xf32> to vector<32x8xf32>
    %567 = math.tanh %566 : vector<32x8xf32>
    %568 = vector.extract_strided_slice %553 {offsets = [96, 0], sizes = [32, 8], strides = [1, 1]} : vector<128x8xf32> to vector<32x8xf32>
    %569 = arith.negf %568 : vector<32x8xf32>
    %570 = math.exp %569 : vector<32x8xf32>
    %cst_188 = arith.constant 1.000000e+00 : f32
    %571 = vector.broadcast %cst_188 : f32 to vector<32x8xf32>
    %572 = arith.addf %571, %570 : vector<32x8xf32>
    %573 = arith.divf %571, %572 : vector<32x8xf32>
    %574 = arith.mulf %565, %545 : vector<32x8xf32>
    %575 = arith.mulf %559, %567 : vector<32x8xf32>
    %576 = arith.addf %574, %575 : vector<32x8xf32>
    %577 = math.tanh %576 : vector<32x8xf32>
    %578 = arith.mulf %573, %577 : vector<32x8xf32>
    %c5_189 = arith.constant 5 : index
    %c0_190 = arith.constant 0 : index
    %c0_191 = arith.constant 0 : index
    %579 = vector.load %arg11[%c5_189, %c0_190, %c0_191] : memref<8x32x8xf32, #tpu.memory_space<vmem>>, vector<1x32x8xf32>
    %580 = vector.shape_cast %579 : vector<1x32x8xf32> to vector<32x8xf32>
    %cst_192 = arith.constant dense<0.000000e+00> : vector<128x8xf32>
    %581 = tpu.matmul %415, %580, %cst_192 {dimension_numbers = #tpu.dot_dimension_numbers<[1], [0], [0], [1], [0, 0, 1, 1], [], []>} : vector<128x32xf32>, vector<32x8xf32>, vector<128x8xf32> -> vector<128x8xf32>
    %cst_193 = arith.constant dense<0.000000e+00> : vector<128x8xf32>
    %582 = tpu.matmul %417, %578, %cst_193 {dimension_numbers = #tpu.dot_dimension_numbers<[1], [0], [0], [1], [0, 0, 1, 1], [], []>} : vector<128x32xf32>, vector<32x8xf32>, vector<128x8xf32> -> vector<128x8xf32>
    %583 = arith.addf %581, %582 : vector<128x8xf32>
    %584 = arith.addf %583, %421 : vector<128x8xf32>
    %585 = vector.extract_strided_slice %584 {offsets = [0, 0], sizes = [32, 8], strides = [1, 1]} : vector<128x8xf32> to vector<32x8xf32>
    %586 = arith.negf %585 : vector<32x8xf32>
    %587 = math.exp %586 : vector<32x8xf32>
    %cst_194 = arith.constant 1.000000e+00 : f32
    %588 = vector.broadcast %cst_194 : f32 to vector<32x8xf32>
    %589 = arith.addf %588, %587 : vector<32x8xf32>
    %590 = arith.divf %588, %589 : vector<32x8xf32>
    %591 = vector.extract_strided_slice %584 {offsets = [32, 0], sizes = [32, 8], strides = [1, 1]} : vector<128x8xf32> to vector<32x8xf32>
    %592 = arith.negf %591 : vector<32x8xf32>
    %593 = math.exp %592 : vector<32x8xf32>
    %cst_195 = arith.constant 1.000000e+00 : f32
    %594 = vector.broadcast %cst_195 : f32 to vector<32x8xf32>
    %595 = arith.addf %594, %593 : vector<32x8xf32>
    %596 = arith.divf %594, %595 : vector<32x8xf32>
    %597 = vector.extract_strided_slice %584 {offsets = [64, 0], sizes = [32, 8], strides = [1, 1]} : vector<128x8xf32> to vector<32x8xf32>
    %598 = math.tanh %597 : vector<32x8xf32>
    %599 = vector.extract_strided_slice %584 {offsets = [96, 0], sizes = [32, 8], strides = [1, 1]} : vector<128x8xf32> to vector<32x8xf32>
    %600 = arith.negf %599 : vector<32x8xf32>
    %601 = math.exp %600 : vector<32x8xf32>
    %cst_196 = arith.constant 1.000000e+00 : f32
    %602 = vector.broadcast %cst_196 : f32 to vector<32x8xf32>
    %603 = arith.addf %602, %601 : vector<32x8xf32>
    %604 = arith.divf %602, %603 : vector<32x8xf32>
    %605 = arith.mulf %596, %576 : vector<32x8xf32>
    %606 = arith.mulf %590, %598 : vector<32x8xf32>
    %607 = arith.addf %605, %606 : vector<32x8xf32>
    %608 = math.tanh %607 : vector<32x8xf32>
    %609 = arith.mulf %604, %608 : vector<32x8xf32>
    %c6_197 = arith.constant 6 : index
    %c0_198 = arith.constant 0 : index
    %c0_199 = arith.constant 0 : index
    %610 = vector.load %arg11[%c6_197, %c0_198, %c0_199] : memref<8x32x8xf32, #tpu.memory_space<vmem>>, vector<1x32x8xf32>
    %611 = vector.shape_cast %610 : vector<1x32x8xf32> to vector<32x8xf32>
    %cst_200 = arith.constant dense<0.000000e+00> : vector<128x8xf32>
    %612 = tpu.matmul %415, %611, %cst_200 {dimension_numbers = #tpu.dot_dimension_numbers<[1], [0], [0], [1], [0, 0, 1, 1], [], []>} : vector<128x32xf32>, vector<32x8xf32>, vector<128x8xf32> -> vector<128x8xf32>
    %cst_201 = arith.constant dense<0.000000e+00> : vector<128x8xf32>
    %613 = tpu.matmul %417, %609, %cst_201 {dimension_numbers = #tpu.dot_dimension_numbers<[1], [0], [0], [1], [0, 0, 1, 1], [], []>} : vector<128x32xf32>, vector<32x8xf32>, vector<128x8xf32> -> vector<128x8xf32>
    %614 = arith.addf %612, %613 : vector<128x8xf32>
    %615 = arith.addf %614, %421 : vector<128x8xf32>
    %616 = vector.extract_strided_slice %615 {offsets = [0, 0], sizes = [32, 8], strides = [1, 1]} : vector<128x8xf32> to vector<32x8xf32>
    %617 = arith.negf %616 : vector<32x8xf32>
    %618 = math.exp %617 : vector<32x8xf32>
    %cst_202 = arith.constant 1.000000e+00 : f32
    %619 = vector.broadcast %cst_202 : f32 to vector<32x8xf32>
    %620 = arith.addf %619, %618 : vector<32x8xf32>
    %621 = arith.divf %619, %620 : vector<32x8xf32>
    %622 = vector.extract_strided_slice %615 {offsets = [32, 0], sizes = [32, 8], strides = [1, 1]} : vector<128x8xf32> to vector<32x8xf32>
    %623 = arith.negf %622 : vector<32x8xf32>
    %624 = math.exp %623 : vector<32x8xf32>
    %cst_203 = arith.constant 1.000000e+00 : f32
    %625 = vector.broadcast %cst_203 : f32 to vector<32x8xf32>
    %626 = arith.addf %625, %624 : vector<32x8xf32>
    %627 = arith.divf %625, %626 : vector<32x8xf32>
    %628 = vector.extract_strided_slice %615 {offsets = [64, 0], sizes = [32, 8], strides = [1, 1]} : vector<128x8xf32> to vector<32x8xf32>
    %629 = math.tanh %628 : vector<32x8xf32>
    %630 = vector.extract_strided_slice %615 {offsets = [96, 0], sizes = [32, 8], strides = [1, 1]} : vector<128x8xf32> to vector<32x8xf32>
    %631 = arith.negf %630 : vector<32x8xf32>
    %632 = math.exp %631 : vector<32x8xf32>
    %cst_204 = arith.constant 1.000000e+00 : f32
    %633 = vector.broadcast %cst_204 : f32 to vector<32x8xf32>
    %634 = arith.addf %633, %632 : vector<32x8xf32>
    %635 = arith.divf %633, %634 : vector<32x8xf32>
    %636 = arith.mulf %627, %607 : vector<32x8xf32>
    %637 = arith.mulf %621, %629 : vector<32x8xf32>
    %638 = arith.addf %636, %637 : vector<32x8xf32>
    %639 = math.tanh %638 : vector<32x8xf32>
    %640 = arith.mulf %635, %639 : vector<32x8xf32>
    %c7_205 = arith.constant 7 : index
    %c0_206 = arith.constant 0 : index
    %c0_207 = arith.constant 0 : index
    %641 = vector.load %arg11[%c7_205, %c0_206, %c0_207] : memref<8x32x8xf32, #tpu.memory_space<vmem>>, vector<1x32x8xf32>
    %642 = vector.shape_cast %641 : vector<1x32x8xf32> to vector<32x8xf32>
    %cst_208 = arith.constant dense<0.000000e+00> : vector<128x8xf32>
    %643 = tpu.matmul %415, %642, %cst_208 {dimension_numbers = #tpu.dot_dimension_numbers<[1], [0], [0], [1], [0, 0, 1, 1], [], []>} : vector<128x32xf32>, vector<32x8xf32>, vector<128x8xf32> -> vector<128x8xf32>
    %cst_209 = arith.constant dense<0.000000e+00> : vector<128x8xf32>
    %644 = tpu.matmul %417, %640, %cst_209 {dimension_numbers = #tpu.dot_dimension_numbers<[1], [0], [0], [1], [0, 0, 1, 1], [], []>} : vector<128x32xf32>, vector<32x8xf32>, vector<128x8xf32> -> vector<128x8xf32>
    %645 = arith.addf %643, %644 : vector<128x8xf32>
    %646 = arith.addf %645, %421 : vector<128x8xf32>
    %647 = vector.extract_strided_slice %646 {offsets = [0, 0], sizes = [32, 8], strides = [1, 1]} : vector<128x8xf32> to vector<32x8xf32>
    %648 = arith.negf %647 : vector<32x8xf32>
    %649 = math.exp %648 : vector<32x8xf32>
    %cst_210 = arith.constant 1.000000e+00 : f32
    %650 = vector.broadcast %cst_210 : f32 to vector<32x8xf32>
    %651 = arith.addf %650, %649 : vector<32x8xf32>
    %652 = arith.divf %650, %651 : vector<32x8xf32>
    %653 = vector.extract_strided_slice %646 {offsets = [32, 0], sizes = [32, 8], strides = [1, 1]} : vector<128x8xf32> to vector<32x8xf32>
    %654 = arith.negf %653 : vector<32x8xf32>
    %655 = math.exp %654 : vector<32x8xf32>
    %cst_211 = arith.constant 1.000000e+00 : f32
    %656 = vector.broadcast %cst_211 : f32 to vector<32x8xf32>
    %657 = arith.addf %656, %655 : vector<32x8xf32>
    %658 = arith.divf %656, %657 : vector<32x8xf32>
    %659 = vector.extract_strided_slice %646 {offsets = [64, 0], sizes = [32, 8], strides = [1, 1]} : vector<128x8xf32> to vector<32x8xf32>
    %660 = math.tanh %659 : vector<32x8xf32>
    %661 = vector.extract_strided_slice %646 {offsets = [96, 0], sizes = [32, 8], strides = [1, 1]} : vector<128x8xf32> to vector<32x8xf32>
    %662 = arith.negf %661 : vector<32x8xf32>
    %663 = math.exp %662 : vector<32x8xf32>
    %cst_212 = arith.constant 1.000000e+00 : f32
    %664 = vector.broadcast %cst_212 : f32 to vector<32x8xf32>
    %665 = arith.addf %664, %663 : vector<32x8xf32>
    %666 = arith.divf %664, %665 : vector<32x8xf32>
    %667 = arith.mulf %658, %638 : vector<32x8xf32>
    %668 = arith.mulf %652, %660 : vector<32x8xf32>
    %669 = arith.addf %667, %668 : vector<32x8xf32>
    %670 = math.tanh %669 : vector<32x8xf32>
    %671 = arith.mulf %666, %670 : vector<32x8xf32>
    %cst_213 = arith.constant dense<0.000000e+00> : vector<8xf32>
    %672 = vector.multi_reduction <add>, %671, %cst_213 [0] : vector<32x8xf32> to vector<8xf32>
    %673 = vector.shape_cast %672 : vector<8xf32> to vector<1x8xf32>
    %cst_214 = arith.constant 3.200000e+01 : f32
    %674 = vector.broadcast %cst_214 : f32 to vector<1x8xf32>
    %675 = arith.divf %673, %674 : vector<1x8xf32>
    %676 = vector.broadcast %675 : vector<1x8xf32> to vector<32x8xf32>
    %677 = arith.subf %671, %676 : vector<32x8xf32>
    %678 = arith.mulf %677, %677 : vector<32x8xf32>
    %cst_215 = arith.constant dense<0.000000e+00> : vector<8xf32>
    %679 = vector.multi_reduction <add>, %678, %cst_215 [0] : vector<32x8xf32> to vector<8xf32>
    %680 = vector.shape_cast %679 : vector<8xf32> to vector<1x8xf32>
    %cst_216 = arith.constant 3.200000e+01 : f32
    %681 = vector.broadcast %cst_216 : f32 to vector<1x8xf32>
    %682 = arith.divf %680, %681 : vector<1x8xf32>
    %683 = vector.broadcast %675 : vector<1x8xf32> to vector<32x8xf32>
    %684 = arith.subf %671, %683 : vector<32x8xf32>
    %cst_217 = arith.constant 9.99999974E-6 : f32
    %685 = vector.broadcast %cst_217 : f32 to vector<1x8xf32>
    %686 = arith.addf %682, %685 : vector<1x8xf32>
    %687 = math.rsqrt %686 : vector<1x8xf32>
    %688 = vector.broadcast %687 : vector<1x8xf32> to vector<32x8xf32>
    %689 = arith.mulf %684, %688 : vector<32x8xf32>
    %690 = vector.broadcast %86 : vector<32x1xf32> to vector<32x8xf32>
    %691 = arith.mulf %689, %690 : vector<32x8xf32>
    %692 = vector.broadcast %87 : vector<32x1xf32> to vector<32x8xf32>
    %693 = arith.addf %691, %692 : vector<32x8xf32>
    %cst_218 = arith.constant dense<0.000000e+00> : vector<8xf32>
    %694 = vector.multi_reduction <add>, %669, %cst_218 [0] : vector<32x8xf32> to vector<8xf32>
    %695 = vector.shape_cast %694 : vector<8xf32> to vector<1x8xf32>
    %cst_219 = arith.constant 3.200000e+01 : f32
    %696 = vector.broadcast %cst_219 : f32 to vector<1x8xf32>
    %697 = arith.divf %695, %696 : vector<1x8xf32>
    %698 = vector.broadcast %697 : vector<1x8xf32> to vector<32x8xf32>
    %699 = arith.subf %669, %698 : vector<32x8xf32>
    %700 = arith.mulf %699, %699 : vector<32x8xf32>
    %cst_220 = arith.constant dense<0.000000e+00> : vector<8xf32>
    %701 = vector.multi_reduction <add>, %700, %cst_220 [0] : vector<32x8xf32> to vector<8xf32>
    %702 = vector.shape_cast %701 : vector<8xf32> to vector<1x8xf32>
    %cst_221 = arith.constant 3.200000e+01 : f32
    %703 = vector.broadcast %cst_221 : f32 to vector<1x8xf32>
    %704 = arith.divf %702, %703 : vector<1x8xf32>
    %705 = vector.broadcast %697 : vector<1x8xf32> to vector<32x8xf32>
    %706 = arith.subf %669, %705 : vector<32x8xf32>
    %cst_222 = arith.constant 9.99999974E-6 : f32
    %707 = vector.broadcast %cst_222 : f32 to vector<1x8xf32>
    %708 = arith.addf %704, %707 : vector<1x8xf32>
    %709 = math.rsqrt %708 : vector<1x8xf32>
    %710 = vector.broadcast %709 : vector<1x8xf32> to vector<32x8xf32>
    %711 = arith.mulf %706, %710 : vector<32x8xf32>
    %712 = vector.broadcast %86 : vector<32x1xf32> to vector<32x8xf32>
    %713 = arith.mulf %711, %712 : vector<32x8xf32>
    %714 = vector.broadcast %87 : vector<32x1xf32> to vector<32x8xf32>
    %715 = arith.addf %713, %714 : vector<32x8xf32>
    %716 = tpu.concatenate %391, %693, %413, %715 in 0 : vector<32x8xf32>, vector<32x8xf32>, vector<32x8xf32>, vector<32x8xf32> -> vector<128x8xf32>
    %c0_223 = arith.constant 0 : index
    %c0_224 = arith.constant 0 : index
    %717 = vector.load %arg9[%c0_223, %c0_224] : memref<128x8xf32, #tpu.memory_space<vmem>>, vector<128x8xf32>
    tpu.vector_store %arg9[%c0_223, %c0_224], %716 {strides = array<i32>} : memref<128x8xf32, #tpu.memory_space<vmem>>, vector<128x8xf32>,
    return
  }
  func.func @transform_0(%arg0: i32) -> (i32, i32, i32) {
    %c0_i32 = arith.constant 0 : i32
    %c0_i32_0 = arith.constant 0 : i32
    %c0_i32_1 = arith.constant 0 : i32
    return %c0_i32, %c0_i32_0, %arg0 : i32, i32, i32
  }
  func.func @transform_1(%arg0: i32) -> (i32, i32, i32) {
    %c0_i32 = arith.constant 0 : i32
    %c0_i32_0 = arith.constant 0 : i32
    %c0_i32_1 = arith.constant 0 : i32
    return %c0_i32, %c0_i32_0, %arg0 : i32, i32, i32
  }
  func.func @transform_2(%arg0: i32) -> (i32, i32, i32) {
    %c0_i32 = arith.constant 0 : i32
    %c0_i32_0 = arith.constant 0 : i32
    %c0_i32_1 = arith.constant 0 : i32
    %c0_i32_2 = arith.constant 0 : i32
    return %c0_i32, %c0_i32_0, %c0_i32_1 : i32, i32, i32
  }
  func.func @transform_3(%arg0: i32) -> (i32, i32, i32) {
    %c0_i32 = arith.constant 0 : i32
    %c0_i32_0 = arith.constant 0 : i32
    %c0_i32_1 = arith.constant 0 : i32
    %c0_i32_2 = arith.constant 0 : i32
    return %c0_i32, %c0_i32_0, %c0_i32_1 : i32, i32, i32
  }
  func.func @transform_4(%arg0: i32) -> (i32, i32, i32) {
    %c0_i32 = arith.constant 0 : i32
    %c0_i32_0 = arith.constant 0 : i32
    %c0_i32_1 = arith.constant 0 : i32
    %c0_i32_2 = arith.constant 0 : i32
    return %c0_i32, %c0_i32_0, %c0_i32_1 : i32, i32, i32
  }
  func.func @transform_5(%arg0: i32) -> (i32, i32, i32) {
    %c0_i32 = arith.constant 0 : i32
    %c0_i32_0 = arith.constant 0 : i32
    %c0_i32_1 = arith.constant 0 : i32
    %c0_i32_2 = arith.constant 0 : i32
    return %c0_i32, %c0_i32_0, %c0_i32_1 : i32, i32, i32
  }
  func.func @transform_6(%arg0: i32) -> (i32, i32) {
    %c0_i32 = arith.constant 0 : i32
    %c0_i32_0 = arith.constant 0 : i32
    %c0_i32_1 = arith.constant 0 : i32
    return %c0_i32, %c0_i32_0 : i32, i32
  }
  func.func @transform_7(%arg0: i32) -> (i32, i32) {
    %c0_i32 = arith.constant 0 : i32
    %c0_i32_0 = arith.constant 0 : i32
    %c0_i32_1 = arith.constant 0 : i32
    return %c0_i32, %c0_i32_0 : i32, i32
  }
  func.func @transform_8(%arg0: i32) -> (i32, i32) {
    %c0_i32 = arith.constant 0 : i32
    %c0_i32_0 = arith.constant 0 : i32
    return %c0_i32, %arg0 : i32, i32
  }
}

</mosaic_0001>

<llo_original>
// kernel: tpu_custom_call.1
$region0: #{tpu_custom_call.1}
  #allocation0 [shape = 'u32[]', space=smem, size = 0x4, offset = 0x4, fixed_abs, tag = 'smem constant byte address 0x4 - core index']
  #allocation1 [shape = 'u32[144,128]{1,0:T(1,128)}', space=vmem, size = 0x12000, scoped, tag = 'internal scratch']
  #allocation2 [shape = 'f32[8,32,8]{2,1,0:T(8,128)}', space=vmem, size = 0x20000, scoped, tag = 'scratch operand']
  #allocation3 [shape = 'f32[8,32,8]{2,1,0:T(8,128)}', space=vmem, size = 0x20000, scoped, tag = 'scratch operand']
  %s0 = inlined_call_operand.vmem [shape: s32[8,1,8], index: 0, kind: input, shape index: {}]
  %s1 = inlined_call_operand.vmem [shape: f32[8,1,8], index: 1, kind: input, shape index: {}]
  %s2 = inlined_call_operand.vmem [shape: f32[6,32,1], index: 2, kind: input, shape index: {}]
  %s3 = inlined_call_operand.vmem [shape: f32[2,128,32], index: 3, kind: input, shape index: {}]
  %s4 = inlined_call_operand.vmem [shape: f32[2,128,32], index: 4, kind: input, shape index: {}]
  %s5 = inlined_call_operand.vmem [shape: f32[2,128,1], index: 5, kind: input, shape index: {}]
  %s6 = inlined_call_operand.vmem [shape: f32[32,1], index: 6, kind: input, shape index: {}]
  %s7 = inlined_call_operand.vmem [shape: f32[32,1], index: 7, kind: input, shape index: {}]
  %s8 = inlined_call_operand.vmem [shape: f32[128,8], index: 8, kind: output, shape index: {}]
  %s9 = sld [smem:[#allocation0]]
  $region42: #{tpu_custom_call.1} parent=0
    _
  %s11 = ssub.s32 1, %s9
  %s12 = scalar_select 0, %s11, %s9
  // Predicated region
  $region2: #{tpu_custom_call.1} parent=0 // pred_check
    _
  $region3: #{tpu_custom_call.1} parent=0 // pred_check_branch
    %14 = sbr.rel (0) target = $region5
  $region4: #{tpu_custom_call.1} parent=0 // pred_region
    _
  $region5: #{tpu_custom_call.1} parent=0 // pred_fallthru
    _
  // Predicated region
  $region6: #{tpu_custom_call.1} parent=0 // pred_check
    _
  $region7: #{tpu_custom_call.1} parent=0 // pred_check_branch
    %16 = sbr.rel (0) target = $region9
  $region8: #{tpu_custom_call.1} parent=0 // pred_region
    _
  $region9: #{tpu_custom_call.1} parent=0 // pred_fallthru
    _
  // Predicated region
  $region10: #{tpu_custom_call.1} parent=0 // pred_check
    _
  $region11: #{tpu_custom_call.1} parent=0 // pred_check_branch
    %18 = sbr.rel (0) target = $region13
  $region12: #{tpu_custom_call.1} parent=0 // pred_region
    _
  $region13: #{tpu_custom_call.1} parent=0 // pred_fallthru
    _
  // Predicated region
  $region14: #{tpu_custom_call.1} parent=0 // pred_check
    _
  $region15: #{tpu_custom_call.1} parent=0 // pred_check_branch
    %20 = sbr.rel (0) target = $region17
  $region16: #{tpu_custom_call.1} parent=0 // pred_region
    _
  $region17: #{tpu_custom_call.1} parent=0 // pred_fallthru
    _
  // Predicated region
  $region18: #{tpu_custom_call.1} parent=0 // pred_check
    _
  $region19: #{tpu_custom_call.1} parent=0 // pred_check_branch
    %22 = sbr.rel (0) target = $region21
  $region20: #{tpu_custom_call.1} parent=0 // pred_region
    _
  $region21: #{tpu_custom_call.1} parent=0 // pred_fallthru
    _
  // Predicated region
  $region22: #{tpu_custom_call.1} parent=0 // pred_check
    _
  $region23: #{tpu_custom_call.1} parent=0 // pred_check_branch
    %24 = sbr.rel (0) target = $region25
  $region24: #{tpu_custom_call.1} parent=0 // pred_region
    _
  $region25: #{tpu_custom_call.1} parent=0 // pred_fallthru
    _
  // Predicated region
  $region26: #{tpu_custom_call.1} parent=0 // pred_check
    _
  $region27: #{tpu_custom_call.1} parent=0 // pred_check_branch
    %26 = sbr.rel (0) target = $region29
  $region28: #{tpu_custom_call.1} parent=0 // pred_region
    _
  $region29: #{tpu_custom_call.1} parent=0 // pred_fallthru
    _
  // Predicated region
  $region30: #{tpu_custom_call.1} parent=0 // pred_check
    _
  $region31: #{tpu_custom_call.1} parent=0 // pred_check_branch
    %28 = sbr.rel (0) target = $region33
  $region32: #{tpu_custom_call.1} parent=0 // pred_region
    _
  $region33: #{tpu_custom_call.1} parent=0 // pred_fallthru
    _
  %v29 = vld [vmem:[%s0] sm:$0x1]
  %v30 = vld [vmem:[%s0 + $0x1] sm:$0x1]
  %v31 = vld [vmem:[%s0 + $0x2] sm:$0x1]
  %v32 = vld [vmem:[%s0 + $0x3] sm:$0x1]
  %v33 = vld [vmem:[%s0 + $0x4] sm:$0x1]
  %v34 = vld [vmem:[%s0 + $0x5] sm:$0x1]
  %v35 = vld [vmem:[%s0 + $0x6] sm:$0x1]
  %v36 = vld [vmem:[%s0 + $0x7] sm:$0x1]
  %v37 = vld [vmem:[%s1] sm:$0x1]
  %v38 = vld [vmem:[%s1 + $0x1] sm:$0x1]
  %v39 = vld [vmem:[%s1 + $0x2] sm:$0x1]
  %v40 = vld [vmem:[%s1 + $0x3] sm:$0x1]
  %v41 = vld [vmem:[%s1 + $0x4] sm:$0x1]
  %v42 = vld [vmem:[%s1 + $0x5] sm:$0x1]
  %v43 = vld [vmem:[%s1 + $0x6] sm:$0x1]
  %v44 = vld [vmem:[%s1 + $0x7] sm:$0x1]
  %vm45 = vcmp.eq.s32.totalorder %v29, 0
  %vm46 = vcmp.eq.s32.totalorder %v30, 0
  %vm47 = vcmp.eq.s32.totalorder %v31, 0
  %vm48 = vcmp.eq.s32.totalorder %v32, 0
  %vm49 = vcmp.eq.s32.totalorder %v33, 0
  %vm50 = vcmp.eq.s32.totalorder %v34, 0
  %vm51 = vcmp.eq.s32.totalorder %v35, 0
  %vm52 = vcmp.eq.s32.totalorder %v36, 0
  %v53 = vld [vmem:[%s2] sm:$0xff]
  %v54 = vld [vmem:[%s2 + $0x8] sm:$0xff]
  %v55 = vld [vmem:[%s2 + $0x10] sm:$0xff]
  %v56 = vld [vmem:[%s2 + $0x18] sm:$0xff]
  %v57 = vsel %vm45, 1, 0
  %v58 = vsel %vm46, 1, 0
  %v59 = vsel %vm47, 1, 0
  %v60 = vsel %vm48, 1, 0
  %v61 = vsel %vm49, 1, 0
  %v62 = vsel %vm50, 1, 0
  %v63 = vsel %vm51, 1, 0
  %v64 = vsel %vm52, 1, 0
  %v65 = vlaneseq
  %v66 = vshrl.u32 %v65, 7
  %v67 = vsub.s32 0, %v66
  %v68 = vrot.slane %v57, %v67
  %v69 = vlaneseq
  %v70 = vshrl.u32 %v69, 7
  %v71 = vsub.s32 0, %v70
  %v72 = vrot.slane %v58, %v71
  %v73 = vlaneseq
  %v74 = vshrl.u32 %v73, 7
  %v75 = vsub.s32 0, %v74
  %v76 = vrot.slane %v59, %v75
  %v77 = vlaneseq
  %v78 = vshrl.u32 %v77, 7
  %v79 = vsub.s32 0, %v78
  %v80 = vrot.slane %v60, %v79
  %v81 = vlaneseq
  %v82 = vshrl.u32 %v81, 7
  %v83 = vsub.s32 0, %v82
  %v84 = vrot.slane %v61, %v83
  %v85 = vlaneseq
  %v86 = vshrl.u32 %v85, 7
  %v87 = vsub.s32 0, %v86
  %v88 = vrot.slane %v62, %v87
  %v89 = vlaneseq
  %v90 = vshrl.u32 %v89, 7
  %v91 = vsub.s32 0, %v90
  %v92 = vrot.slane %v63, %v91
  %v93 = vlaneseq
  %v94 = vshrl.u32 %v93, 7
  %v95 = vsub.s32 0, %v94
  %v96 = vrot.slane %v64, %v95
  %vm97 = vcmp.eq.s32.totalorder %v68, 1
  %vm98 = vcmp.eq.s32.totalorder %v72, 1
  %vm99 = vcmp.eq.s32.totalorder %v76, 1
  %vm100 = vcmp.eq.s32.totalorder %v80, 1
  %vm101 = vcmp.eq.s32.totalorder %v84, 1
  %vm102 = vcmp.eq.s32.totalorder %v88, 1
  %vm103 = vcmp.eq.s32.totalorder %v92, 1
  %vm104 = vcmp.eq.s32.totalorder %v96, 1
  %106 = vset.pattern.permute.xlu0 0
  %107 = vperm.xlu0 %106, %v53
  %v108 = vpop.permute.xlu0 %107
  %111 = vset.pattern.permute.xlu0 0
  %112 = vperm.xlu0 %111, %v54
  %v113 = vpop.permute.xlu0 %112
  %116 = vset.pattern.permute.xlu0 0
  %117 = vperm.xlu0 %116, %v55
  %v118 = vpop.permute.xlu0 %117
  %121 = vset.pattern.permute.xlu0 0
  %122 = vperm.xlu0 %121, %v56
  %v123 = vpop.permute.xlu0 %122
  %v125 = vsel %vm97, %v108, 0.0
  %v126 = vsel %vm97, %v113, 0.0
  %v127 = vsel %vm97, %v118, 0.0
  %v128 = vsel %vm97, %v123, 0.0
  %v129 = vsel %vm98, %v108, 0.0
  %v130 = vsel %vm98, %v113, 0.0
  %v131 = vsel %vm98, %v118, 0.0
  %v132 = vsel %vm98, %v123, 0.0
  %v133 = vsel %vm99, %v108, 0.0
  %v134 = vsel %vm99, %v113, 0.0
  %v135 = vsel %vm99, %v118, 0.0
  %v136 = vsel %vm99, %v123, 0.0
  %v137 = vsel %vm100, %v108, 0.0
  %v138 = vsel %vm100, %v113, 0.0
  %v139 = vsel %vm100, %v118, 0.0
  %v140 = vsel %vm100, %v123, 0.0
  %v141 = vsel %vm101, %v108, 0.0
  %v142 = vsel %vm101, %v113, 0.0
  %v143 = vsel %vm101, %v118, 0.0
  %v144 = vsel %vm101, %v123, 0.0
  %v145 = vsel %vm102, %v108, 0.0
  %v146 = vsel %vm102, %v113, 0.0
  %v147 = vsel %vm102, %v118, 0.0
  %v148 = vsel %vm102, %v123, 0.0
  %v149 = vsel %vm103, %v108, 0.0
  %v150 = vsel %vm103, %v113, 0.0
  %v151 = vsel %vm103, %v118, 0.0
  %v152 = vsel %vm103, %v123, 0.0
  %v153 = vsel %vm104, %v108, 0.0
  %v154 = vsel %vm104, %v113, 0.0
  %v155 = vsel %vm104, %v118, 0.0
  %v156 = vsel %vm104, %v123, 0.0
  %v157 = vadd.f32 %v125, 0.0
  %v158 = vadd.f32 %v126, 0.0
  %v159 = vadd.f32 %v127, 0.0
  %v160 = vadd.f32 %v128, 0.0
  %v161 = vadd.f32 %v129, 0.0
  %v162 = vadd.f32 %v130, 0.0
  %v163 = vadd.f32 %v131, 0.0
  %v164 = vadd.f32 %v132, 0.0
  %v165 = vadd.f32 %v133, 0.0
  %v166 = vadd.f32 %v134, 0.0
  %v167 = vadd.f32 %v135, 0.0
  %v168 = vadd.f32 %v136, 0.0
  %v169 = vadd.f32 %v137, 0.0
  %v170 = vadd.f32 %v138, 0.0
  %v171 = vadd.f32 %v139, 0.0
  %v172 = vadd.f32 %v140, 0.0
  %v173 = vadd.f32 %v141, 0.0
  %v174 = vadd.f32 %v142, 0.0
  %v175 = vadd.f32 %v143, 0.0
  %v176 = vadd.f32 %v144, 0.0
  %v177 = vadd.f32 %v145, 0.0
  %v178 = vadd.f32 %v146, 0.0
  %v179 = vadd.f32 %v147, 0.0
  %v180 = vadd.f32 %v148, 0.0
  %v181 = vadd.f32 %v149, 0.0
  %v182 = vadd.f32 %v150, 0.0
  %v183 = vadd.f32 %v151, 0.0
  %v184 = vadd.f32 %v152, 0.0
  %v185 = vadd.f32 %v153, 0.0
  %v186 = vadd.f32 %v154, 0.0
  %v187 = vadd.f32 %v155, 0.0
  %v188 = vadd.f32 %v156, 0.0
  %vm189 = vcmp.eq.s32.totalorder %v29, 1
  %vm190 = vcmp.eq.s32.totalorder %v30, 1
  %vm191 = vcmp.eq.s32.totalorder %v31, 1
  %vm192 = vcmp.eq.s32.totalorder %v32, 1
  %vm193 = vcmp.eq.s32.totalorder %v33, 1
  %vm194 = vcmp.eq.s32.totalorder %v34, 1
  %vm195 = vcmp.eq.s32.totalorder %v35, 1
  %vm196 = vcmp.eq.s32.totalorder %v36, 1
  %s197 = scalar_lea.vmem %s2, 32
  %v198 = vld [vmem:[%s197] sm:$0xff]
  %v199 = vld [vmem:[%s197 + $0x8] sm:$0xff]
  %v200 = vld [vmem:[%s197 + $0x10] sm:$0xff]
  %v201 = vld [vmem:[%s197 + $0x18] sm:$0xff]
  %v202 = vsel %vm189, 1, 0
  %v203 = vsel %vm190, 1, 0
  %v204 = vsel %vm191, 1, 0
  %v205 = vsel %vm192, 1, 0
  %v206 = vsel %vm193, 1, 0
  %v207 = vsel %vm194, 1, 0
  %v208 = vsel %vm195, 1, 0
  %v209 = vsel %vm196, 1, 0
  %v210 = vlaneseq
  %v211 = vshrl.u32 %v210, 7
  %v212 = vsub.s32 0, %v211
  %v213 = vrot.slane %v202, %v212
  %v214 = vlaneseq
  %v215 = vshrl.u32 %v214, 7
  %v216 = vsub.s32 0, %v215
  %v217 = vrot.slane %v203, %v216
  %v218 = vlaneseq
  %v219 = vshrl.u32 %v218, 7
  %v220 = vsub.s32 0, %v219
  %v221 = vrot.slane %v204, %v220
  %v222 = vlaneseq
  %v223 = vshrl.u32 %v222, 7
  %v224 = vsub.s32 0, %v223
  %v225 = vrot.slane %v205, %v224
  %v226 = vlaneseq
  %v227 = vshrl.u32 %v226, 7
  %v228 = vsub.s32 0, %v227
  %v229 = vrot.slane %v206, %v228
  %v230 = vlaneseq
  %v231 = vshrl.u32 %v230, 7
  %v232 = vsub.s32 0, %v231
  %v233 = vrot.slane %v207, %v232
  %v234 = vlaneseq
  %v235 = vshrl.u32 %v234, 7
  %v236 = vsub.s32 0, %v235
  %v237 = vrot.slane %v208, %v236
  %v238 = vlaneseq
  %v239 = vshrl.u32 %v238, 7
  %v240 = vsub.s32 0, %v239
  %v241 = vrot.slane %v209, %v240
  %vm242 = vcmp.eq.s32.totalorder %v213, 1
  %vm243 = vcmp.eq.s32.totalorder %v217, 1
  %vm244 = vcmp.eq.s32.totalorder %v221, 1
  %vm245 = vcmp.eq.s32.totalorder %v225, 1
  %vm246 = vcmp.eq.s32.totalorder %v229, 1
  %vm247 = vcmp.eq.s32.totalorder %v233, 1
  %vm248 = vcmp.eq.s32.totalorder %v237, 1
  %vm249 = vcmp.eq.s32.totalorder %v241, 1
  %251 = vset.pattern.permute.xlu0 0
  %252 = vperm.xlu0 %251, %v198
  %v253 = vpop.permute.xlu0 %252
  %256 = vset.pattern.permute.xlu0 0
  %257 = vperm.xlu0 %256, %v199
  %v258 = vpop.permute.xlu0 %257
  %261 = vset.pattern.permute.xlu0 0
  %262 = vperm.xlu0 %261, %v200
  %v263 = vpop.permute.xlu0 %262
  %266 = vset.pattern.permute.xlu0 0
  %267 = vperm.xlu0 %266, %v201
  %v268 = vpop.permute.xlu0 %267
  %v270 = vsel %vm242, %v253, 0.0
  %v271 = vsel %vm242, %v258, 0.0
  %v272 = vsel %vm242, %v263, 0.0
  %v273 = vsel %vm242, %v268, 0.0
  %v274 = vsel %vm243, %v253, 0.0
  %v275 = vsel %vm243, %v258, 0.0
  %v276 = vsel %vm243, %v263, 0.0
  %v277 = vsel %vm243, %v268, 0.0
  %v278 = vsel %vm244, %v253, 0.0
  %v279 = vsel %vm244, %v258, 0.0
  %v280 = vsel %vm244, %v263, 0.0
  %v281 = vsel %vm244, %v268, 0.0
  %v282 = vsel %vm245, %v253, 0.0
  %v283 = vsel %vm245, %v258, 0.0
  %v284 = vsel %vm245, %v263, 0.0
  %v285 = vsel %vm245, %v268, 0.0
  %v286 = vsel %vm246, %v253, 0.0
  %v287 = vsel %vm246, %v258, 0.0
  %v288 = vsel %vm246, %v263, 0.0
  %v289 = vsel %vm246, %v268, 0.0
  %v290 = vsel %vm247, %v253, 0.0
  %v291 = vsel %vm247, %v258, 0.0
  %v292 = vsel %vm247, %v263, 0.0
  %v293 = vsel %vm247, %v268, 0.0
  %v294 = vsel %vm248, %v253, 0.0
  %v295 = vsel %vm248, %v258, 0.0
  %v296 = vsel %vm248, %v263, 0.0
  %v297 = vsel %vm248, %v268, 0.0
  %v298 = vsel %vm249, %v253, 0.0
  %v299 = vsel %vm249, %v258, 0.0
  %v300 = vsel %vm249, %v263, 0.0
  %v301 = vsel %vm249, %v268, 0.0
  %v302 = vadd.f32 %v157, %v270
  %v303 = vadd.f32 %v158, %v271
  %v304 = vadd.f32 %v159, %v272
  %v305 = vadd.f32 %v160, %v273
  %v306 = vadd.f32 %v161, %v274
  %v307 = vadd.f32 %v162, %v275
  %v308 = vadd.f32 %v163, %v276
  %v309 = vadd.f32 %v164, %v277
  %v310 = vadd.f32 %v165, %v278
  %v311 = vadd.f32 %v166, %v279
  %v312 = vadd.f32 %v167, %v280
  %v313 = vadd.f32 %v168, %v281
  %v314 = vadd.f32 %v169, %v282
  %v315 = vadd.f32 %v170, %v283
  %v316 = vadd.f32 %v171, %v284
  %v317 = vadd.f32 %v172, %v285
  %v318 = vadd.f32 %v173, %v286
  %v319 = vadd.f32 %v174, %v287
  %v320 = vadd.f32 %v175, %v288
  %v321 = vadd.f32 %v176, %v289
  %v322 = vadd.f32 %v177, %v290
  %v323 = vadd.f32 %v178, %v291
  %v324 = vadd.f32 %v179, %v292
  %v325 = vadd.f32 %v180, %v293
  %v326 = vadd.f32 %v181, %v294
  %v327 = vadd.f32 %v182, %v295
  %v328 = vadd.f32 %v183, %v296
  %v329 = vadd.f32 %v184, %v297
  %v330 = vadd.f32 %v185, %v298
  %v331 = vadd.f32 %v186, %v299
  %v332 = vadd.f32 %v187, %v300
  %v333 = vadd.f32 %v188, %v301
  %vm334 = vcmp.eq.s32.totalorder %v29, 2
  %vm335 = vcmp.eq.s32.totalorder %v30, 2
  %vm336 = vcmp.eq.s32.totalorder %v31, 2
  %vm337 = vcmp.eq.s32.totalorder %v32, 2
  %vm338 = vcmp.eq.s32.totalorder %v33, 2
  %vm339 = vcmp.eq.s32.totalorder %v34, 2
  %vm340 = vcmp.eq.s32.totalorder %v35, 2
  %vm341 = vcmp.eq.s32.totalorder %v36, 2
  %s342 = scalar_lea.vmem %s2, 64
  %v343 = vld [vmem:[%s342] sm:$0xff]
  %v344 = vld [vmem:[%s342 + $0x8] sm:$0xff]
  %v345 = vld [vmem:[%s342 + $0x10] sm:$0xff]
  %v346 = vld [vmem:[%s342 + $0x18] sm:$0xff]
  %v347 = vsel %vm334, 1, 0
  %v348 = vsel %vm335, 1, 0
  %v349 = vsel %vm336, 1, 0
  %v350 = vsel %vm337, 1, 0
  %v351 = vsel %vm338, 1, 0
  %v352 = vsel %vm339, 1, 0
  %v353 = vsel %vm340, 1, 0
  %v354 = vsel %vm341, 1, 0
  %v355 = vlaneseq
  %v356 = vshrl.u32 %v355, 7
  %v357 = vsub.s32 0, %v356
  %v358 = vrot.slane %v347, %v357
  %v359 = vlaneseq
  %v360 = vshrl.u32 %v359, 7
  %v361 = vsub.s32 0, %v360
  %v362 = vrot.slane %v348, %v361
  %v363 = vlaneseq
  %v364 = vshrl.u32 %v363, 7
  %v365 = vsub.s32 0, %v364
  %v366 = vrot.slane %v349, %v365
  %v367 = vlaneseq
  %v368 = vshrl.u32 %v367, 7
  %v369 = vsub.s32 0, %v368
  %v370 = vrot.slane %v350, %v369
  %v371 = vlaneseq
  %v372 = vshrl.u32 %v371, 7
  %v373 = vsub.s32 0, %v372
  %v374 = vrot.slane %v351, %v373
  %v375 = vlaneseq
  %v376 = vshrl.u32 %v375, 7
  %v377 = vsub.s32 0, %v376
  %v378 = vrot.slane %v352, %v377
  %v379 = vlaneseq
  %v380 = vshrl.u32 %v379, 7
  %v381 = vsub.s32 0, %v380
  %v382 = vrot.slane %v353, %v381
  %v383 = vlaneseq
  %v384 = vshrl.u32 %v383, 7
  %v385 = vsub.s32 0, %v384
  %v386 = vrot.slane %v354, %v385
  %vm387 = vcmp.eq.s32.totalorder %v358, 1
  %vm388 = vcmp.eq.s32.totalorder %v362, 1
  %vm389 = vcmp.eq.s32.totalorder %v366, 1
  %vm390 = vcmp.eq.s32.totalorder %v370, 1
  %vm391 = vcmp.eq.s32.totalorder %v374, 1
  %vm392 = vcmp.eq.s32.totalorder %v378, 1
  %vm393 = vcmp.eq.s32.totalorder %v382, 1
  %vm394 = vcmp.eq.s32.totalorder %v386, 1
  %396 = vset.pattern.permute.xlu0 0
  %397 = vperm.xlu0 %396, %v343
  %v398 = vpop.permute.xlu0 %397
  %401 = vset.pattern.permute.xlu0 0
  %402 = vperm.xlu0 %401, %v344
  %v403 = vpop.permute.xlu0 %402
  %406 = vset.pattern.permute.xlu0 0
  %407 = vperm.xlu0 %406, %v345
  %v408 = vpop.permute.xlu0 %407
  %411 = vset.pattern.permute.xlu0 0
  %412 = vperm.xlu0 %411, %v346
  %v413 = vpop.permute.xlu0 %412
  %v415 = vsel %vm387, %v398, 0.0
  %v416 = vsel %vm387, %v403, 0.0
  %v417 = vsel %vm387, %v408, 0.0
  %v418 = vsel %vm387, %v413, 0.0
  %v419 = vsel %vm388, %v398, 0.0
  %v420 = vsel %vm388, %v403, 0.0
  %v421 = vsel %vm388, %v408, 0.0
  %v422 = vsel %vm388, %v413, 0.0
  %v423 = vsel %vm389, %v398, 0.0
  %v424 = vsel %vm389, %v403, 0.0
  %v425 = vsel %vm389, %v408, 0.0
  %v426 = vsel %vm389, %v413, 0.0
  %v427 = vsel %vm390, %v398, 0.0
  %v428 = vsel %vm390, %v403, 0.0
  %v429 = vsel %vm390, %v408, 0.0
  %v430 = vsel %vm390, %v413, 0.0
  %v431 = vsel %vm391, %v398, 0.0
  %v432 = vsel %vm391, %v403, 0.0
  %v433 = vsel %vm391, %v408, 0.0
  %v434 = vsel %vm391, %v413, 0.0
  %v435 = vsel %vm392, %v398, 0.0
  %v436 = vsel %vm392, %v403, 0.0
  %v437 = vsel %vm392, %v408, 0.0
  %v438 = vsel %vm392, %v413, 0.0
  %v439 = vsel %vm393, %v398, 0.0
  %v440 = vsel %vm393, %v403, 0.0
  %v441 = vsel %vm393, %v408, 0.0
  %v442 = vsel %vm393, %v413, 0.0
  %v443 = vsel %vm394, %v398, 0.0
  %v444 = vsel %vm394, %v403, 0.0
  %v445 = vsel %vm394, %v408, 0.0
  %v446 = vsel %vm394, %v413, 0.0
  %v447 = vadd.f32 %v302, %v415
  %v448 = vadd.f32 %v303, %v416
  %v449 = vadd.f32 %v304, %v417
  %v450 = vadd.f32 %v305, %v418
  %v451 = vadd.f32 %v306, %v419
  %v452 = vadd.f32 %v307, %v420
  %v453 = vadd.f32 %v308, %v421
  %v454 = vadd.f32 %v309, %v422
  %v455 = vadd.f32 %v310, %v423
  %v456 = vadd.f32 %v311, %v424
  %v457 = vadd.f32 %v312, %v425
  %v458 = vadd.f32 %v313, %v426
  %v459 = vadd.f32 %v314, %v427
  %v460 = vadd.f32 %v315, %v428
  %v461 = vadd.f32 %v316, %v429
  %v462 = vadd.f32 %v317, %v430
  %v463 = vadd.f32 %v318, %v431
  %v464 = vadd.f32 %v319, %v432
  %v465 = vadd.f32 %v320, %v433
  %v466 = vadd.f32 %v321, %v434
  %v467 = vadd.f32 %v322, %v435
  %v468 = vadd.f32 %v323, %v436
  %v469 = vadd.f32 %v324, %v437
  %v470 = vadd.f32 %v325, %v438
  %v471 = vadd.f32 %v326, %v439
  %v472 = vadd.f32 %v327, %v440
  %v473 = vadd.f32 %v328, %v441
  %v474 = vadd.f32 %v329, %v442
  %v475 = vadd.f32 %v330, %v443
  %v476 = vadd.f32 %v331, %v444
  %v477 = vadd.f32 %v332, %v445
  %v478 = vadd.f32 %v333, %v446
  %vm479 = vcmp.eq.s32.totalorder %v29, 3
  %vm480 = vcmp.eq.s32.totalorder %v30, 3
  %vm481 = vcmp.eq.s32.totalorder %v31, 3
  %vm482 = vcmp.eq.s32.totalorder %v32, 3
  %vm483 = vcmp.eq.s32.totalorder %v33, 3
  %vm484 = vcmp.eq.s32.totalorder %v34, 3
  %vm485 = vcmp.eq.s32.totalorder %v35, 3
  %vm486 = vcmp.eq.s32.totalorder %v36, 3
  %s487 = scalar_lea.vmem %s2, 96
  %v488 = vld [vmem:[%s487] sm:$0xff]
  %v489 = vld [vmem:[%s487 + $0x8] sm:$0xff]
  %v490 = vld [vmem:[%s487 + $0x10] sm:$0xff]
  %v491 = vld [vmem:[%s487 + $0x18] sm:$0xff]
  %v492 = vsel %vm479, 1, 0
  %v493 = vsel %vm480, 1, 0
  %v494 = vsel %vm481, 1, 0
  %v495 = vsel %vm482, 1, 0
  %v496 = vsel %vm483, 1, 0
  %v497 = vsel %vm484, 1, 0
  %v498 = vsel %vm485, 1, 0
  %v499 = vsel %vm486, 1, 0
  %v500 = vlaneseq
  %v501 = vshrl.u32 %v500, 7
  %v502 = vsub.s32 0, %v501
  %v503 = vrot.slane %v492, %v502
  %v504 = vlaneseq
  %v505 = vshrl.u32 %v504, 7
  %v506 = vsub.s32 0, %v505
  %v507 = vrot.slane %v493, %v506
  %v508 = vlaneseq
  %v509 = vshrl.u32 %v508, 7
  %v510 = vsub.s32 0, %v509
  %v511 = vrot.slane %v494, %v510
  %v512 = vlaneseq
  %v513 = vshrl.u32 %v512, 7
  %v514 = vsub.s32 0, %v513
  %v515 = vrot.slane %v495, %v514
  %v516 = vlaneseq
  %v517 = vshrl.u32 %v516, 7
  %v518 = vsub.s32 0, %v517
  %v519 = vrot.slane %v496, %v518
  %v520 = vlaneseq
  %v521 = vshrl.u32 %v520, 7
  %v522 = vsub.s32 0, %v521
  %v523 = vrot.slane %v497, %v522
  %v524 = vlaneseq
  %v525 = vshrl.u32 %v524, 7
  %v526 = vsub.s32 0, %v525
  %v527 = vrot.slane %v498, %v526
  %v528 = vlaneseq
  %v529 = vshrl.u32 %v528, 7
  %v530 = vsub.s32 0, %v529
  %v531 = vrot.slane %v499, %v530
  %vm532 = vcmp.eq.s32.totalorder %v503, 1
  %vm533 = vcmp.eq.s32.totalorder %v507, 1
  %vm534 = vcmp.eq.s32.totalorder %v511, 1
  %vm535 = vcmp.eq.s32.totalorder %v515, 1
  %vm536 = vcmp.eq.s32.totalorder %v519, 1
  %vm537 = vcmp.eq.s32.totalorder %v523, 1
  %vm538 = vcmp.eq.s32.totalorder %v527, 1
  %vm539 = vcmp.eq.s32.totalorder %v531, 1
  %541 = vset.pattern.permute.xlu0 0
  %542 = vperm.xlu0 %541, %v488
  %v543 = vpop.permute.xlu0 %542
  %546 = vset.pattern.permute.xlu0 0
  %547 = vperm.xlu0 %546, %v489
  %v548 = vpop.permute.xlu0 %547
  %551 = vset.pattern.permute.xlu0 0
  %552 = vperm.xlu0 %551, %v490
  %v553 = vpop.permute.xlu0 %552
  %556 = vset.pattern.permute.xlu0 0
  %557 = vperm.xlu0 %556, %v491
  %v558 = vpop.permute.xlu0 %557
  %v560 = vsel %vm532, %v543, 0.0
  %v561 = vsel %vm532, %v548, 0.0
  %v562 = vsel %vm532, %v553, 0.0
  %v563 = vsel %vm532, %v558, 0.0
  %v564 = vsel %vm533, %v543, 0.0
  %v565 = vsel %vm533, %v548, 0.0
  %v566 = vsel %vm533, %v553, 0.0
  %v567 = vsel %vm533, %v558, 0.0
  %v568 = vsel %vm534, %v543, 0.0
  %v569 = vsel %vm534, %v548, 0.0
  %v570 = vsel %vm534, %v553, 0.0
  %v571 = vsel %vm534, %v558, 0.0
  %v572 = vsel %vm535, %v543, 0.0
  %v573 = vsel %vm535, %v548, 0.0
  %v574 = vsel %vm535, %v553, 0.0
  %v575 = vsel %vm535, %v558, 0.0
  %v576 = vsel %vm536, %v543, 0.0
  %v577 = vsel %vm536, %v548, 0.0
  %v578 = vsel %vm536, %v553, 0.0
  %v579 = vsel %vm536, %v558, 0.0
  %v580 = vsel %vm537, %v543, 0.0
  %v581 = vsel %vm537, %v548, 0.0
  %v582 = vsel %vm537, %v553, 0.0
  %v583 = vsel %vm537, %v558, 0.0
  %v584 = vsel %vm538, %v543, 0.0
  %v585 = vsel %vm538, %v548, 0.0
  %v586 = vsel %vm538, %v553, 0.0
  %v587 = vsel %vm538, %v558, 0.0
  %v588 = vsel %vm539, %v543, 0.0
  %v589 = vsel %vm539, %v548, 0.0
  %v590 = vsel %vm539, %v553, 0.0
  %v591 = vsel %vm539, %v558, 0.0
  %v592 = vadd.f32 %v447, %v560
  %v593 = vadd.f32 %v448, %v561
  %v594 = vadd.f32 %v449, %v562
  %v595 = vadd.f32 %v450, %v563
  %v596 = vadd.f32 %v451, %v564
  %v597 = vadd.f32 %v452, %v565
  %v598 = vadd.f32 %v453, %v566
  %v599 = vadd.f32 %v454, %v567
  %v600 = vadd.f32 %v455, %v568
  %v601 = vadd.f32 %v456, %v569
  %v602 = vadd.f32 %v457, %v570
  %v603 = vadd.f32 %v458, %v571
  %v604 = vadd.f32 %v459, %v572
  %v605 = vadd.f32 %v460, %v573
  %v606 = vadd.f32 %v461, %v574
  %v607 = vadd.f32 %v462, %v575
  %v608 = vadd.f32 %v463, %v576
  %v609 = vadd.f32 %v464, %v577
  %v610 = vadd.f32 %v465, %v578
  %v611 = vadd.f32 %v466, %v579
  %v612 = vadd.f32 %v467, %v580
  %v613 = vadd.f32 %v468, %v581
  %v614 = vadd.f32 %v469, %v582
  %v615 = vadd.f32 %v470, %v583
  %v616 = vadd.f32 %v471, %v584
  %v617 = vadd.f32 %v472, %v585
  %v618 = vadd.f32 %v473, %v586
  %v619 = vadd.f32 %v474, %v587
  %v620 = vadd.f32 %v475, %v588
  %v621 = vadd.f32 %v476, %v589
  %v622 = vadd.f32 %v477, %v590
  %v623 = vadd.f32 %v478, %v591
  %vm624 = vcmp.eq.s32.totalorder %v29, 4
  %vm625 = vcmp.eq.s32.totalorder %v30, 4
  %vm626 = vcmp.eq.s32.totalorder %v31, 4
  %vm627 = vcmp.eq.s32.totalorder %v32, 4
  %vm628 = vcmp.eq.s32.totalorder %v33, 4
  %vm629 = vcmp.eq.s32.totalorder %v34, 4
  %vm630 = vcmp.eq.s32.totalorder %v35, 4
  %vm631 = vcmp.eq.s32.totalorder %v36, 4
  %s632 = scalar_lea.vmem %s2, 128
  %v633 = vld [vmem:[%s632] sm:$0xff]
  %v634 = vld [vmem:[%s632 + $0x8] sm:$0xff]
  %v635 = vld [vmem:[%s632 + $0x10] sm:$0xff]
  %v636 = vld [vmem:[%s632 + $0x18] sm:$0xff]
  %v637 = vsel %vm624, 1, 0
  %v638 = vsel %vm625, 1, 0
  %v639 = vsel %vm626, 1, 0
  %v640 = vsel %vm627, 1, 0
  %v641 = vsel %vm628, 1, 0
  %v642 = vsel %vm629, 1, 0
  %v643 = vsel %vm630, 1, 0
  %v644 = vsel %vm631, 1, 0
  %v645 = vlaneseq
  %v646 = vshrl.u32 %v645, 7
  %v647 = vsub.s32 0, %v646
  %v648 = vrot.slane %v637, %v647
  %v649 = vlaneseq
  %v650 = vshrl.u32 %v649, 7
  %v651 = vsub.s32 0, %v650
  %v652 = vrot.slane %v638, %v651
  %v653 = vlaneseq
  %v654 = vshrl.u32 %v653, 7
  %v655 = vsub.s32 0, %v654
  %v656 = vrot.slane %v639, %v655
  %v657 = vlaneseq
  %v658 = vshrl.u32 %v657, 7
  %v659 = vsub.s32 0, %v658
  %v660 = vrot.slane %v640, %v659
  %v661 = vlaneseq
  %v662 = vshrl.u32 %v661, 7
  %v663 = vsub.s32 0, %v662
  %v664 = vrot.slane %v641, %v663
  %v665 = vlaneseq
  %v666 = vshrl.u32 %v665, 7
  %v667 = vsub.s32 0, %v666
  %v668 = vrot.slane %v642, %v667
  %v669 = vlaneseq
  %v670 = vshrl.u32 %v669, 7
  %v671 = vsub.s32 0, %v670
  %v672 = vrot.slane %v643, %v671
  %v673 = vlaneseq
  %v674 = vshrl.u32 %v673, 7
  %v675 = vsub.s32 0, %v674
  %v676 = vrot.slane %v644, %v675
  %vm677 = vcmp.eq.s32.totalorder %v648, 1
  %vm678 = vcmp.eq.s32.totalorder %v652, 1
  %vm679 = vcmp.eq.s32.totalorder %v656, 1
  %vm680 = vcmp.eq.s32.totalorder %v660, 1
  %vm681 = vcmp.eq.s32.totalorder %v664, 1
  %vm682 = vcmp.eq.s32.totalorder %v668, 1
  %vm683 = vcmp.eq.s32.totalorder %v672, 1
  %vm684 = vcmp.eq.s32.totalorder %v676, 1
  %686 = vset.pattern.permute.xlu0 0
  %687 = vperm.xlu0 %686, %v633
  %v688 = vpop.permute.xlu0 %687
  %691 = vset.pattern.permute.xlu0 0
  %692 = vperm.xlu0 %691, %v634
  %v693 = vpop.permute.xlu0 %692
  %696 = vset.pattern.permute.xlu0 0
  %697 = vperm.xlu0 %696, %v635
  %v698 = vpop.permute.xlu0 %697
  %701 = vset.pattern.permute.xlu0 0
  %702 = vperm.xlu0 %701, %v636
  %v703 = vpop.permute.xlu0 %702
  %v705 = vsel %vm677, %v688, 0.0
  %v706 = vsel %vm677, %v693, 0.0
  %v707 = vsel %vm677, %v698, 0.0
  %v708 = vsel %vm677, %v703, 0.0
  %v709 = vsel %vm678, %v688, 0.0
  %v710 = vsel %vm678, %v693, 0.0
  %v711 = vsel %vm678, %v698, 0.0
  %v712 = vsel %vm678, %v703, 0.0
  %v713 = vsel %vm679, %v688, 0.0
  %v714 = vsel %vm679, %v693, 0.0
  %v715 = vsel %vm679, %v698, 0.0
  %v716 = vsel %vm679, %v703, 0.0
  %v717 = vsel %vm680, %v688, 0.0
  %v718 = vsel %vm680, %v693, 0.0
  %v719 = vsel %vm680, %v698, 0.0
  %v720 = vsel %vm680, %v703, 0.0
  %v721 = vsel %vm681, %v688, 0.0
  %v722 = vsel %vm681, %v693, 0.0
  %v723 = vsel %vm681, %v698, 0.0
  %v724 = vsel %vm681, %v703, 0.0
  %v725 = vsel %vm682, %v688, 0.0
  %v726 = vsel %vm682, %v693, 0.0
  %v727 = vsel %vm682, %v698, 0.0
  %v728 = vsel %vm682, %v703, 0.0
  %v729 = vsel %vm683, %v688, 0.0
  %v730 = vsel %vm683, %v693, 0.0
  %v731 = vsel %vm683, %v698, 0.0
  %v732 = vsel %vm683, %v703, 0.0
  %v733 = vsel %vm684, %v688, 0.0
  %v734 = vsel %vm684, %v693, 0.0
  %v735 = vsel %vm684, %v698, 0.0
  %v736 = vsel %vm684, %v703, 0.0
  %v737 = vadd.f32 %v592, %v705
  %v738 = vadd.f32 %v593, %v706
  %v739 = vadd.f32 %v594, %v707
  %v740 = vadd.f32 %v595, %v708
  %v741 = vadd.f32 %v596, %v709
  %v742 = vadd.f32 %v597, %v710
  %v743 = vadd.f32 %v598, %v711
  %v744 = vadd.f32 %v599, %v712
  %v745 = vadd.f32 %v600, %v713
  %v746 = vadd.f32 %v601, %v714
  %v747 = vadd.f32 %v602, %v715
  %v748 = vadd.f32 %v603, %v716
  %v749 = vadd.f32 %v604, %v717
  %v750 = vadd.f32 %v605, %v718
  %v751 = vadd.f32 %v606, %v719
  %v752 = vadd.f32 %v607, %v720
  %v753 = vadd.f32 %v608, %v721
  %v754 = vadd.f32 %v609, %v722
  %v755 = vadd.f32 %v610, %v723
  %v756 = vadd.f32 %v611, %v724
  %v757 = vadd.f32 %v612, %v725
  %v758 = vadd.f32 %v613, %v726
  %v759 = vadd.f32 %v614, %v727
  %v760 = vadd.f32 %v615, %v728
  %v761 = vadd.f32 %v616, %v729
  %v762 = vadd.f32 %v617, %v730
  %v763 = vadd.f32 %v618, %v731
  %v764 = vadd.f32 %v619, %v732
  %v765 = vadd.f32 %v620, %v733
  %v766 = vadd.f32 %v621, %v734
  %v767 = vadd.f32 %v622, %v735
  %v768 = vadd.f32 %v623, %v736
  %vm769 = vcmp.eq.s32.totalorder %v29, 5
  %vm770 = vcmp.eq.s32.totalorder %v30, 5
  %vm771 = vcmp.eq.s32.totalorder %v31, 5
  %vm772 = vcmp.eq.s32.totalorder %v32, 5
  %vm773 = vcmp.eq.s32.totalorder %v33, 5
  %vm774 = vcmp.eq.s32.totalorder %v34, 5
  %vm775 = vcmp.eq.s32.totalorder %v35, 5
  %vm776 = vcmp.eq.s32.totalorder %v36, 5
  %s777 = scalar_lea.vmem %s2, 160
  %v778 = vld [vmem:[%s777] sm:$0xff]
  %v779 = vld [vmem:[%s777 + $0x8] sm:$0xff]
  %v780 = vld [vmem:[%s777 + $0x10] sm:$0xff]
  %v781 = vld [vmem:[%s777 + $0x18] sm:$0xff]
  %v782 = vsel %vm769, 1, 0
  %v783 = vsel %vm770, 1, 0
  %v784 = vsel %vm771, 1, 0
  %v785 = vsel %vm772, 1, 0
  %v786 = vsel %vm773, 1, 0
  %v787 = vsel %vm774, 1, 0
  %v788 = vsel %vm775, 1, 0
  %v789 = vsel %vm776, 1, 0
  %v790 = vlaneseq
  %v791 = vshrl.u32 %v790, 7
  %v792 = vsub.s32 0, %v791
  %v793 = vrot.slane %v782, %v792
  %v794 = vlaneseq
  %v795 = vshrl.u32 %v794, 7
  %v796 = vsub.s32 0, %v795
  %v797 = vrot.slane %v783, %v796
  %v798 = vlaneseq
  %v799 = vshrl.u32 %v798, 7
  %v800 = vsub.s32 0, %v799
  %v801 = vrot.slane %v784, %v800
  %v802 = vlaneseq
  %v803 = vshrl.u32 %v802, 7
  %v804 = vsub.s32 0, %v803
  %v805 = vrot.slane %v785, %v804
  %v806 = vlaneseq
  %v807 = vshrl.u32 %v806, 7
  %v808 = vsub.s32 0, %v807
  %v809 = vrot.slane %v786, %v808
  %v810 = vlaneseq
  %v811 = vshrl.u32 %v810, 7
  %v812 = vsub.s32 0, %v811
  %v813 = vrot.slane %v787, %v812
  %v814 = vlaneseq
  %v815 = vshrl.u32 %v814, 7
  %v816 = vsub.s32 0, %v815
  %v817 = vrot.slane %v788, %v816
  %v818 = vlaneseq
  %v819 = vshrl.u32 %v818, 7
  %v820 = vsub.s32 0, %v819
  %v821 = vrot.slane %v789, %v820
  %vm822 = vcmp.eq.s32.totalorder %v793, 1
  %vm823 = vcmp.eq.s32.totalorder %v797, 1
  %vm824 = vcmp.eq.s32.totalorder %v801, 1
  %vm825 = vcmp.eq.s32.totalorder %v805, 1
  %vm826 = vcmp.eq.s32.totalorder %v809, 1
  %vm827 = vcmp.eq.s32.totalorder %v813, 1
  %vm828 = vcmp.eq.s32.totalorder %v817, 1
  %vm829 = vcmp.eq.s32.totalorder %v821, 1
  %831 = vset.pattern.permute.xlu0 0
  %832 = vperm.xlu0 %831, %v778
  %v833 = vpop.permute.xlu0 %832
  %836 = vset.pattern.permute.xlu0 0
  %837 = vperm.xlu0 %836, %v779
  %v838 = vpop.permute.xlu0 %837
  %841 = vset.pattern.permute.xlu0 0
  %842 = vperm.xlu0 %841, %v780
  %v843 = vpop.permute.xlu0 %842
  %846 = vset.pattern.permute.xlu0 0
  %847 = vperm.xlu0 %846, %v781
  %v848 = vpop.permute.xlu0 %847
  %v850 = vsel %vm822, %v833, 0.0
  %v851 = vsel %vm822, %v838, 0.0
  %v852 = vsel %vm822, %v843, 0.0
  %v853 = vsel %vm822, %v848, 0.0
  %v854 = vsel %vm823, %v833, 0.0
  %v855 = vsel %vm823, %v838, 0.0
  %v856 = vsel %vm823, %v843, 0.0
  %v857 = vsel %vm823, %v848, 0.0
  %v858 = vsel %vm824, %v833, 0.0
  %v859 = vsel %vm824, %v838, 0.0
  %v860 = vsel %vm824, %v843, 0.0
  %v861 = vsel %vm824, %v848, 0.0
  %v862 = vsel %vm825, %v833, 0.0
  %v863 = vsel %vm825, %v838, 0.0
  %v864 = vsel %vm825, %v843, 0.0
  %v865 = vsel %vm825, %v848, 0.0
  %v866 = vsel %vm826, %v833, 0.0
  %v867 = vsel %vm826, %v838, 0.0
  %v868 = vsel %vm826, %v843, 0.0
  %v869 = vsel %vm826, %v848, 0.0
  %v870 = vsel %vm827, %v833, 0.0
  %v871 = vsel %vm827, %v838, 0.0
  %v872 = vsel %vm827, %v843, 0.0
  %v873 = vsel %vm827, %v848, 0.0
  %v874 = vsel %vm828, %v833, 0.0
  %v875 = vsel %vm828, %v838, 0.0
  %v876 = vsel %vm828, %v843, 0.0
  %v877 = vsel %vm828, %v848, 0.0
  %v878 = vsel %vm829, %v833, 0.0
  %v879 = vsel %vm829, %v838, 0.0
  %v880 = vsel %vm829, %v843, 0.0
  %v881 = vsel %vm829, %v848, 0.0
  %v882 = vadd.f32 %v737, %v850
  %v883 = vadd.f32 %v738, %v851
  %v884 = vadd.f32 %v739, %v852
  %v885 = vadd.f32 %v740, %v853
  %v886 = vadd.f32 %v741, %v854
  %v887 = vadd.f32 %v742, %v855
  %v888 = vadd.f32 %v743, %v856
  %v889 = vadd.f32 %v744, %v857
  %v890 = vadd.f32 %v745, %v858
  %v891 = vadd.f32 %v746, %v859
  %v892 = vadd.f32 %v747, %v860
  %v893 = vadd.f32 %v748, %v861
  %v894 = vadd.f32 %v749, %v862
  %v895 = vadd.f32 %v750, %v863
  %v896 = vadd.f32 %v751, %v864
  %v897 = vadd.f32 %v752, %v865
  %v898 = vadd.f32 %v753, %v866
  %v899 = vadd.f32 %v754, %v867
  %v900 = vadd.f32 %v755, %v868
  %v901 = vadd.f32 %v756, %v869
  %v902 = vadd.f32 %v757, %v870
  %v903 = vadd.f32 %v758, %v871
  %v904 = vadd.f32 %v759, %v872
  %v905 = vadd.f32 %v760, %v873
  %v906 = vadd.f32 %v761, %v874
  %v907 = vadd.f32 %v762, %v875
  %v908 = vadd.f32 %v763, %v876
  %v909 = vadd.f32 %v764, %v877
  %v910 = vadd.f32 %v765, %v878
  %v911 = vadd.f32 %v766, %v879
  %v912 = vadd.f32 %v767, %v880
  %v913 = vadd.f32 %v768, %v881
  %v914 = vlaneseq
  %v915 = vshrl.u32 %v914, 7
  %v916 = vadd.s32 %v915, 8
  %v917 = vadd.s32 %v915, 16
  %v918 = vadd.s32 %v915, 24
  %vm919 = vcmp.eq.s32.totalorder %v915, 31
  %vm920 = vcmp.eq.s32.totalorder %v916, 31
  %vm921 = vcmp.eq.s32.totalorder %v917, 31
  %vm922 = vcmp.eq.s32.totalorder %v918, 31
  %v923 = vsel %vm919, 1, 0
  %v924 = vsel %vm920, 1, 0
  %v925 = vsel %vm921, 1, 0
  %v926 = vsel %vm922, 1, 0
  %v927 = vcvt.s32.f32 %v923
  %v928 = vcvt.s32.f32 %v924
  %v929 = vcvt.s32.f32 %v925
  %v930 = vcvt.s32.f32 %v926
  %v939 = vlaneseq
  %v940 = vshrl.u32 %v939, 7
  %v941 = vsub.s32 0, %v940
  %v942 = vrot.slane %v37, %v941
  %v943 = vlaneseq
  %v944 = vshrl.u32 %v943, 7
  %v945 = vsub.s32 0, %v944
  %v946 = vrot.slane %v38, %v945
  %v947 = vlaneseq
  %v948 = vshrl.u32 %v947, 7
  %v949 = vsub.s32 0, %v948
  %v950 = vrot.slane %v39, %v949
  %v951 = vlaneseq
  %v952 = vshrl.u32 %v951, 7
  %v953 = vsub.s32 0, %v952
  %v954 = vrot.slane %v40, %v953
  %v955 = vlaneseq
  %v956 = vshrl.u32 %v955, 7
  %v957 = vsub.s32 0, %v956
  %v958 = vrot.slane %v41, %v957
  %v959 = vlaneseq
  %v960 = vshrl.u32 %v959, 7
  %v961 = vsub.s32 0, %v960
  %v962 = vrot.slane %v42, %v961
  %v963 = vlaneseq
  %v964 = vshrl.u32 %v963, 7
  %v965 = vsub.s32 0, %v964
  %v966 = vrot.slane %v43, %v965
  %v967 = vlaneseq
  %v968 = vshrl.u32 %v967, 7
  %v969 = vsub.s32 0, %v968
  %v970 = vrot.slane %v44, %v969
  %v979 = vmul.f32 %v942, %v927
  %v980 = vmul.f32 %v942, %v928
  %v981 = vmul.f32 %v942, %v929
  %v982 = vmul.f32 %v942, %v930
  %v983 = vmul.f32 %v946, %v927
  %v984 = vmul.f32 %v946, %v928
  %v985 = vmul.f32 %v946, %v929
  %v986 = vmul.f32 %v946, %v930
  %v987 = vmul.f32 %v950, %v927
  %v988 = vmul.f32 %v950, %v928
  %v989 = vmul.f32 %v950, %v929
  %v990 = vmul.f32 %v950, %v930
  %v991 = vmul.f32 %v954, %v927
  %v992 = vmul.f32 %v954, %v928
  %v993 = vmul.f32 %v954, %v929
  %v994 = vmul.f32 %v954, %v930
  %v995 = vmul.f32 %v958, %v927
  %v996 = vmul.f32 %v958, %v928
  %v997 = vmul.f32 %v958, %v929
  %v998 = vmul.f32 %v958, %v930
  %v999 = vmul.f32 %v962, %v927
  %v1000 = vmul.f32 %v962, %v928
  %v1001 = vmul.f32 %v962, %v929
  %v1002 = vmul.f32 %v962, %v930
  %v1003 = vmul.f32 %v966, %v927
  %v1004 = vmul.f32 %v966, %v928
  %v1005 = vmul.f32 %v966, %v929
  %v1006 = vmul.f32 %v966, %v930
  %v1007 = vmul.f32 %v970, %v927
  %v1008 = vmul.f32 %v970, %v928
  %v1009 = vmul.f32 %v970, %v929
  %v1010 = vmul.f32 %v970, %v930
  %v1011 = vadd.f32 %v882, %v979
  %v1012 = vadd.f32 %v883, %v980
  %v1013 = vadd.f32 %v884, %v981
  %v1014 = vadd.f32 %v885, %v982
  %v1015 = vadd.f32 %v886, %v983
  %v1016 = vadd.f32 %v887, %v984
  %v1017 = vadd.f32 %v888, %v985
  %v1018 = vadd.f32 %v889, %v986
  %v1019 = vadd.f32 %v890, %v987
  %v1020 = vadd.f32 %v891, %v988
  %v1021 = vadd.f32 %v892, %v989
  %v1022 = vadd.f32 %v893, %v990
  %v1023 = vadd.f32 %v894, %v991
  %v1024 = vadd.f32 %v895, %v992
  %v1025 = vadd.f32 %v896, %v993
  %v1026 = vadd.f32 %v897, %v994
  %v1027 = vadd.f32 %v898, %v995
  %v1028 = vadd.f32 %v899, %v996
  %v1029 = vadd.f32 %v900, %v997
  %v1030 = vadd.f32 %v901, %v998
  %v1031 = vadd.f32 %v902, %v999
  %v1032 = vadd.f32 %v903, %v1000
  %v1033 = vadd.f32 %v904, %v1001
  %v1034 = vadd.f32 %v905, %v1002
  %v1035 = vadd.f32 %v906, %v1003
  %v1036 = vadd.f32 %v907, %v1004
  %v1037 = vadd.f32 %v908, %v1005
  %v1038 = vadd.f32 %v909, %v1006
  %v1039 = vadd.f32 %v910, %v1007
  %v1040 = vadd.f32 %v911, %v1008
  %v1041 = vadd.f32 %v912, %v1009
  %v1042 = vadd.f32 %v913, %v1010
  %vm1043 = vcmask 64512
  %1044 = vst.msk [vmem:[#allocation2] sm:$0xff] %vm1043, %v1011
  %1045 = vst.msk [vmem:[#allocation2 + $0x8] sm:$0xff] %vm1043, %v1012
  %1046 = vst.msk [vmem:[#allocation2 + $0x10] sm:$0xff] %vm1043, %v1013
  %1047 = vst.msk [vmem:[#allocation2 + $0x18] sm:$0xff] %vm1043, %v1014
  %1048 = vst.msk [vmem:[#allocation2 + $0x20] sm:$0xff] %vm1043, %v1015
  %1049 = vst.msk [vmem:[#allocation2 + $0x28] sm:$0xff] %vm1043, %v1016
  %1050 = vst.msk [vmem:[#allocation2 + $0x30] sm:$0xff] %vm1043, %v1017
  %1051 = vst.msk [vmem:[#allocation2 + $0x38] sm:$0xff] %vm1043, %v1018
  %1052 = vst.msk [vmem:[#allocation2 + $0x40] sm:$0xff] %vm1043, %v1019
  %1053 = vst.msk [vmem:[#allocation2 + $0x48] sm:$0xff] %vm1043, %v1020
  %1054 = vst.msk [vmem:[#allocation2 + $0x50] sm:$0xff] %vm1043, %v1021
  %1055 = vst.msk [vmem:[#allocation2 + $0x58] sm:$0xff] %vm1043, %v1022
  %1056 = vst.msk [vmem:[#allocation2 + $0x60] sm:$0xff] %vm1043, %v1023
  %1057 = vst.msk [vmem:[#allocation2 + $0x68] sm:$0xff] %vm1043, %v1024
  %1058 = vst.msk [vmem:[#allocation2 + $0x70] sm:$0xff] %vm1043, %v1025
  %1059 = vst.msk [vmem:[#allocation2 + $0x78] sm:$0xff] %vm1043, %v1026
  %1060 = vst.msk [vmem:[#allocation2 + $0x80] sm:$0xff] %vm1043, %v1027
  %1061 = vst.msk [vmem:[#allocation2 + $0x88] sm:$0xff] %vm1043, %v1028
  %1062 = vst.msk [vmem:[#allocation2 + $0x90] sm:$0xff] %vm1043, %v1029
  %1063 = vst.msk [vmem:[#allocation2 + $0x98] sm:$0xff] %vm1043, %v1030
  %1064 = vst.msk [vmem:[#allocation2 + $0xa0] sm:$0xff] %vm1043, %v1031
  %1065 = vst.msk [vmem:[#allocation2 + $0xa8] sm:$0xff] %vm1043, %v1032
  %1066 = vst.msk [vmem:[#allocation2 + $0xb0] sm:$0xff] %vm1043, %v1033
  %1067 = vst.msk [vmem:[#allocation2 + $0xb8] sm:$0xff] %vm1043, %v1034
  %1068 = vst.msk [vmem:[#allocation2 + $0xc0] sm:$0xff] %vm1043, %v1035
  %1069 = vst.msk [vmem:[#allocation2 + $0xc8] sm:$0xff] %vm1043, %v1036
  %1070 = vst.msk [vmem:[#allocation2 + $0xd0] sm:$0xff] %vm1043, %v1037
  %1071 = vst.msk [vmem:[#allocation2 + $0xd8] sm:$0xff] %vm1043, %v1038
  %1072 = vst.msk [vmem:[#allocation2 + $0xe0] sm:$0xff] %vm1043, %v1039
  %1073 = vst.msk [vmem:[#allocation2 + $0xe8] sm:$0xff] %vm1043, %v1040
  %1074 = vst.msk [vmem:[#allocation2 + $0xf0] sm:$0xff] %vm1043, %v1041
  %1075 = vst.msk [vmem:[#allocation2 + $0xf8] sm:$0xff] %vm1043, %v1042
  %v1076 = vld [vmem:[%s6] sm:$0xff]
  %v1077 = vld [vmem:[%s6 + $0x8] sm:$0xff]
  %v1078 = vld [vmem:[%s6 + $0x10] sm:$0xff]
  %v1079 = vld [vmem:[%s6 + $0x18] sm:$0xff]
  %v1080 = vld [vmem:[%s7] sm:$0xff]
  %v1081 = vld [vmem:[%s7 + $0x8] sm:$0xff]
  %v1082 = vld [vmem:[%s7 + $0x10] sm:$0xff]
  %v1083 = vld [vmem:[%s7 + $0x18] sm:$0xff]
  %v1084 = vld [vmem:[%s3] sm:$0xff]
  %v1085 = vld [vmem:[%s3 + $0x8] sm:$0xff]
  %v1086 = vld [vmem:[%s3 + $0x10] sm:$0xff]
  %v1087 = vld [vmem:[%s3 + $0x18] sm:$0xff]
  %v1088 = vld [vmem:[%s3 + $0x20] sm:$0xff]
  %v1089 = vld [vmem:[%s3 + $0x28] sm:$0xff]
  %v1090 = vld [vmem:[%s3 + $0x30] sm:$0xff]
  %v1091 = vld [vmem:[%s3 + $0x38] sm:$0xff]
  %v1092 = vld [vmem:[%s3 + $0x40] sm:$0xff]
  %v1093 = vld [vmem:[%s3 + $0x48] sm:$0xff]
  %v1094 = vld [vmem:[%s3 + $0x50] sm:$0xff]
  %v1095 = vld [vmem:[%s3 + $0x58] sm:$0xff]
  %v1096 = vld [vmem:[%s3 + $0x60] sm:$0xff]
  %v1097 = vld [vmem:[%s3 + $0x68] sm:$0xff]
  %v1098 = vld [vmem:[%s3 + $0x70] sm:$0xff]
  %v1099 = vld [vmem:[%s3 + $0x78] sm:$0xff]
  %v1100 = vld [vmem:[%s4] sm:$0xff]
  %v1101 = vld [vmem:[%s4 + $0x8] sm:$0xff]
  %v1102 = vld [vmem:[%s4 + $0x10] sm:$0xff]
  %v1103 = vld [vmem:[%s4 + $0x18] sm:$0xff]
  %v1104 = vld [vmem:[%s4 + $0x20] sm:$0xff]
  %v1105 = vld [vmem:[%s4 + $0x28] sm:$0xff]
  %v1106 = vld [vmem:[%s4 + $0x30] sm:$0xff]
  %v1107 = vld [vmem:[%s4 + $0x38] sm:$0xff]
  %v1108 = vld [vmem:[%s4 + $0x40] sm:$0xff]
  %v1109 = vld [vmem:[%s4 + $0x48] sm:$0xff]
  %v1110 = vld [vmem:[%s4 + $0x50] sm:$0xff]
  %v1111 = vld [vmem:[%s4 + $0x58] sm:$0xff]
  %v1112 = vld [vmem:[%s4 + $0x60] sm:$0xff]
  %v1113 = vld [vmem:[%s4 + $0x68] sm:$0xff]
  %v1114 = vld [vmem:[%s4 + $0x70] sm:$0xff]
  %v1115 = vld [vmem:[%s4 + $0x78] sm:$0xff]
  %v1116 = vld [vmem:[%s5] sm:$0xff]
  %v1117 = vld [vmem:[%s5 + $0x8] sm:$0xff]
  %v1118 = vld [vmem:[%s5 + $0x10] sm:$0xff]
  %v1119 = vld [vmem:[%s5 + $0x18] sm:$0xff]
  %v1120 = vld [vmem:[%s5 + $0x20] sm:$0xff]
  %v1121 = vld [vmem:[%s5 + $0x28] sm:$0xff]
  %v1122 = vld [vmem:[%s5 + $0x30] sm:$0xff]
  %v1123 = vld [vmem:[%s5 + $0x38] sm:$0xff]
  %v1124 = vld [vmem:[%s5 + $0x40] sm:$0xff]
  %v1125 = vld [vmem:[%s5 + $0x48] sm:$0xff]
  %v1126 = vld [vmem:[%s5 + $0x50] sm:$0xff]
  %v1127 = vld [vmem:[%s5 + $0x58] sm:$0xff]
  %v1128 = vld [vmem:[%s5 + $0x60] sm:$0xff]
  %v1129 = vld [vmem:[%s5 + $0x68] sm:$0xff]
  %v1130 = vld [vmem:[%s5 + $0x70] sm:$0xff]
  %v1131 = vld [vmem:[%s5 + $0x78] sm:$0xff]
  %1133 = vset.pattern.permute.xlu0 0
  %1134 = vperm.xlu0 %1133, %v1116
  %v1135 = vpop.permute.xlu0 %1134
  %1138 = vset.pattern.permute.xlu0 0
  %1139 = vperm.xlu0 %1138, %v1117
  %v1140 = vpop.permute.xlu0 %1139
  %1143 = vset.pattern.permute.xlu0 0
  %1144 = vperm.xlu0 %1143, %v1118
  %v1145 = vpop.permute.xlu0 %1144
  %1148 = vset.pattern.permute.xlu0 0
  %1149 = vperm.xlu0 %1148, %v1119
  %v1150 = vpop.permute.xlu0 %1149
  %1153 = vset.pattern.permute.xlu0 0
  %1154 = vperm.xlu0 %1153, %v1120
  %v1155 = vpop.permute.xlu0 %1154
  %1158 = vset.pattern.permute.xlu0 0
  %1159 = vperm.xlu0 %1158, %v1121
  %v1160 = vpop.permute.xlu0 %1159
  %1163 = vset.pattern.permute.xlu0 0
  %1164 = vperm.xlu0 %1163, %v1122
  %v1165 = vpop.permute.xlu0 %1164
  %1168 = vset.pattern.permute.xlu0 0
  %1169 = vperm.xlu0 %1168, %v1123
  %v1170 = vpop.permute.xlu0 %1169
  %1173 = vset.pattern.permute.xlu0 0
  %1174 = vperm.xlu0 %1173, %v1124
  %v1175 = vpop.permute.xlu0 %1174
  %1178 = vset.pattern.permute.xlu0 0
  %1179 = vperm.xlu0 %1178, %v1125
  %v1180 = vpop.permute.xlu0 %1179
  %1183 = vset.pattern.permute.xlu0 0
  %1184 = vperm.xlu0 %1183, %v1126
  %v1185 = vpop.permute.xlu0 %1184
  %1188 = vset.pattern.permute.xlu0 0
  %1189 = vperm.xlu0 %1188, %v1127
  %v1190 = vpop.permute.xlu0 %1189
  %1193 = vset.pattern.permute.xlu0 0
  %1194 = vperm.xlu0 %1193, %v1128
  %v1195 = vpop.permute.xlu0 %1194
  %1198 = vset.pattern.permute.xlu0 0
  %1199 = vperm.xlu0 %1198, %v1129
  %v1200 = vpop.permute.xlu0 %1199
  %1203 = vset.pattern.permute.xlu0 0
  %1204 = vperm.xlu0 %1203, %v1130
  %v1205 = vpop.permute.xlu0 %1204
  %1208 = vset.pattern.permute.xlu0 0
  %1209 = vperm.xlu0 %1208, %v1131
  %v1210 = vpop.permute.xlu0 %1209
  %v1212 = vld [vmem:[#allocation2] sm:$0xff]
  %v1213 = vld [vmem:[#allocation2 + $0x8] sm:$0xff]
  %v1214 = vld [vmem:[#allocation2 + $0x10] sm:$0xff]
  %v1215 = vld [vmem:[#allocation2 + $0x18] sm:$0xff]
  %vm1216 = vcmask 261120
  %v1218 = vsel %vm1216, %v1100, 0
  %v1221 = vsel %vm1216, %v1101, 0
  %v1224 = vsel %vm1216, %v1102, 0
  %v1227 = vsel %vm1216, %v1103, 0
  %v1230 = vsel %vm1216, %v1104, 0
  %v1233 = vsel %vm1216, %v1105, 0
  %v1236 = vsel %vm1216, %v1106, 0
  %v1239 = vsel %vm1216, %v1107, 0
  %v1242 = vsel %vm1216, %v1108, 0
  %v1245 = vsel %vm1216, %v1109, 0
  %v1248 = vsel %vm1216, %v1110, 0
  %v1251 = vsel %vm1216, %v1111, 0
  %v1254 = vsel %vm1216, %v1112, 0
  %v1257 = vsel %vm1216, %v1113, 0
  %v1260 = vsel %vm1216, %v1114, 0
  %v1263 = vsel %vm1216, %v1115, 0
  %1265 = vmatprep.subr.mxu0 0.0
  %1266 = vmatpush1.msra.mxu0 0.0
  %1267 = vmatprep.subr.mxu0 0.0
  %1268 = vmatpush1.msra.mxu0 0.0
  %1269 = vmatprep.subr.mxu0 0.0
  %1270 = vmatpush1.msra.mxu0 0.0
  %1271 = vmatprep.subr.mxu0 0.0
  %1272 = vmatpush1.msra.mxu0 0.0
  %1273 = vmatprep.subr.mxu0 0.0
  %1274 = vmatpush1.msra.mxu0 0.0
  %1275 = vmatprep.subr.mxu0 0.0
  %1276 = vmatpush1.msra.mxu0 0.0
  %1277 = vmatprep.subr.mxu0 0.0
  %1278 = vmatpush1.msra.mxu0 0.0
  %1279 = vmatprep.subr.mxu0 0.0
  %1280 = vmatpush1.msra.mxu0 0.0
  %1281 = vmatprep.subr.mxu0 0.0
  %1282 = vmatpush1.msra.mxu0 0.0
  %1283 = vmatprep.subr.mxu0 0.0
  %1284 = vmatpush1.msra.mxu0 0.0
  %1285 = vmatprep.subr.mxu0 0.0
  %1286 = vmatpush1.msra.mxu0 0.0
  %1287 = vmatprep.subr.mxu0 0.0
  %1288 = vmatpush1.msra.mxu0 0.0
  %1289 = vmatprep.subr.mxu0 0.0
  %1290 = vmatpush1.msra.mxu0 0.0
  %1291 = vmatprep.subr.mxu0 0.0
  %1292 = vmatpush1.msra.mxu0 0.0
  %1293 = vmatprep.subr.mxu0 0.0
  %1294 = vmatpush1.msra.mxu0 0.0
  %1295 = vmatprep.subr.mxu0 0.0
  %1296 = vmatpush1.msra.mxu0 0.0
  %1297 = vmatprep.subr.mxu0 0.0
  %1298 = vmatpush2.msra.mxu0 0.0
  %1299 = vmatprep.subr.mxu0 0.0
  %1300 = vmatpush2.msra.mxu0 0.0
  %1301 = vmatprep.subr.mxu0 0.0
  %1302 = vmatpush2.msra.mxu0 0.0
  %1303 = vmatprep.subr.mxu0 0.0
  %1304 = vmatpush2.msra.mxu0 0.0
  %1305 = vmatprep.subr.mxu0 0.0
  %1306 = vmatpush2.msra.mxu0 0.0
  %1307 = vmatprep.subr.mxu0 0.0
  %1308 = vmatpush2.msra.mxu0 0.0
  %1309 = vmatprep.subr.mxu0 0.0
  %1310 = vmatpush2.msra.mxu0 0.0
  %1311 = vmatprep.subr.mxu0 0.0
  %1312 = vmatpush2.msra.mxu0 0.0
  %1313 = vmatprep.subr.mxu0 0.0
  %1314 = vmatpush2.msra.mxu0 0.0
  %1315 = vmatprep.subr.mxu0 0.0
  %1316 = vmatpush2.msra.mxu0 0.0
  %1317 = vmatprep.subr.mxu0 0.0
  %1318 = vmatpush2.msra.mxu0 0.0
  %1319 = vmatprep.subr.mxu0 0.0
  %1320 = vmatpush2.msra.mxu0 0.0
  %1321 = vmatprep.subr.mxu0 0.0
  %1322 = vmatpush2.msra.mxu0 0.0
  %1323 = vmatprep.subr.mxu0 0.0
  %1324 = vmatpush2.msra.mxu0 0.0
  %1325 = vmatprep.subr.mxu0 0.0
  %1326 = vmatpush2.msra.mxu0 0.0
  %1327 = vmatprep.subr.mxu0 0.0
  %1328 = vmatpush2.msra.mxu0 0.0
  %1329 = vmatprep.mubr.f32.mxu0 0.0
  %1330 = vmatmul.mubr.f32.gmra.mxu0 %v1218
  %v1331 = vpop.f32.mrf.mxu0
  %v1332 = vadd.f32 0.0, %v1331
  %v1333 = vpop.f32.mrf.mxu0
  %1334 = vmatprep.mubr.f32.mxu0 0.0
  %1335 = vmatmul.mubr.f32.gmra.mxu0 %v1221
  %v1336 = vpop.f32.mrf.mxu0
  %v1337 = vadd.f32 0.0, %v1336
  %v1338 = vpop.f32.mrf.mxu0
  %1339 = vmatprep.mubr.f32.mxu0 0.0
  %1340 = vmatmul.mubr.f32.gmra.mxu0 %v1224
  %v1341 = vpop.f32.mrf.mxu0
  %v1342 = vadd.f32 0.0, %v1341
  %v1343 = vpop.f32.mrf.mxu0
  %1344 = vmatprep.mubr.f32.mxu0 0.0
  %1345 = vmatmul.mubr.f32.gmra.mxu0 %v1227
  %v1346 = vpop.f32.mrf.mxu0
  %v1347 = vadd.f32 0.0, %v1346
  %v1348 = vpop.f32.mrf.mxu0
  %1349 = vmatprep.mubr.f32.mxu0 0.0
  %1350 = vmatmul.mubr.f32.gmra.mxu0 %v1230
  %v1351 = vpop.f32.mrf.mxu0
  %v1352 = vadd.f32 0.0, %v1351
  %v1353 = vpop.f32.mrf.mxu0
  %1354 = vmatprep.mubr.f32.mxu0 0.0
  %1355 = vmatmul.mubr.f32.gmra.mxu0 %v1233
  %v1356 = vpop.f32.mrf.mxu0
  %v1357 = vadd.f32 0.0, %v1356
  %v1358 = vpop.f32.mrf.mxu0
  %1359 = vmatprep.mubr.f32.mxu0 0.0
  %1360 = vmatmul.mubr.f32.gmra.mxu0 %v1236
  %v1361 = vpop.f32.mrf.mxu0
  %v1362 = vadd.f32 0.0, %v1361
  %v1363 = vpop.f32.mrf.mxu0
  %1364 = vmatprep.mubr.f32.mxu0 0.0
  %1365 = vmatmul.mubr.f32.gmra.mxu0 %v1239
  %v1366 = vpop.f32.mrf.mxu0
  %v1367 = vadd.f32 0.0, %v1366
  %v1368 = vpop.f32.mrf.mxu0
  %1369 = vmatprep.mubr.f32.mxu0 0.0
  %1370 = vmatmul.mubr.f32.gmra.mxu0 %v1242
  %v1371 = vpop.f32.mrf.mxu0
  %v1372 = vadd.f32 0.0, %v1371
  %v1373 = vpop.f32.mrf.mxu0
  %1374 = vmatprep.mubr.f32.mxu0 0.0
  %1375 = vmatmul.mubr.f32.gmra.mxu0 %v1245
  %v1376 = vpop.f32.mrf.mxu0
  %v1377 = vadd.f32 0.0, %v1376
  %v1378 = vpop.f32.mrf.mxu0
  %1379 = vmatprep.mubr.f32.mxu0 0.0
  %1380 = vmatmul.mubr.f32.gmra.mxu0 %v1248
  %v1381 = vpop.f32.mrf.mxu0
  %v1382 = vadd.f32 0.0, %v1381
  %v1383 = vpop.f32.mrf.mxu0
  %1384 = vmatprep.mubr.f32.mxu0 0.0
  %1385 = vmatmul.mubr.f32.gmra.mxu0 %v1251
  %v1386 = vpop.f32.mrf.mxu0
  %v1387 = vadd.f32 0.0, %v1386
  %v1388 = vpop.f32.mrf.mxu0
  %1389 = vmatprep.mubr.f32.mxu0 0.0
  %1390 = vmatmul.mubr.f32.gmra.mxu0 %v1254
  %v1391 = vpop.f32.mrf.mxu0
  %v1392 = vadd.f32 0.0, %v1391
  %v1393 = vpop.f32.mrf.mxu0
  %1394 = vmatprep.mubr.f32.mxu0 0.0
  %1395 = vmatmul.mubr.f32.gmra.mxu0 %v1257
  %v1396 = vpop.f32.mrf.mxu0
  %v1397 = vadd.f32 0.0, %v1396
  %v1398 = vpop.f32.mrf.mxu0
  %1399 = vmatprep.mubr.f32.mxu0 0.0
  %1400 = vmatmul.mubr.f32.gmra.mxu0 %v1260
  %v1401 = vpop.f32.mrf.mxu0
  %v1402 = vadd.f32 0.0, %v1401
  %v1403 = vpop.f32.mrf.mxu0
  %1404 = vmatprep.mubr.f32.mxu0 0.0
  %1405 = vmatmul.mubr.f32.gmra.mxu0 %v1263
  %v1406 = vpop.f32.mrf.mxu0
  %v1407 = vadd.f32 0.0, %v1406
  %v1408 = vpop.f32.mrf.mxu0
  %1409 = vdwg.mxu0
  %v1411 = vsel %vm1216, %v1084, 0
  %v1414 = vsel %vm1216, %v1085, 0
  %v1417 = vsel %vm1216, %v1086, 0
  %v1420 = vsel %vm1216, %v1087, 0
  %v1423 = vsel %vm1216, %v1088, 0
  %v1426 = vsel %vm1216, %v1089, 0
  %v1429 = vsel %vm1216, %v1090, 0
  %v1432 = vsel %vm1216, %v1091, 0
  %v1435 = vsel %vm1216, %v1092, 0
  %v1438 = vsel %vm1216, %v1093, 0
  %v1441 = vsel %vm1216, %v1094, 0
  %v1444 = vsel %vm1216, %v1095, 0
  %v1447 = vsel %vm1216, %v1096, 0
  %v1450 = vsel %vm1216, %v1097, 0
  %v1453 = vsel %vm1216, %v1098, 0
  %v1456 = vsel %vm1216, %v1099, 0
  %1458 = vmatprep.subr.mxu0 0.0
  %1459 = vmatpush1.msra.mxu0 0.0
  %1460 = vmatprep.subr.mxu0 0.0
  %1461 = vmatpush1.msra.mxu0 0.0
  %1462 = vmatprep.subr.mxu0 0.0
  %1463 = vmatpush1.msra.mxu0 0.0
  %1464 = vmatprep.subr.mxu0 0.0
  %1465 = vmatpush1.msra.mxu0 0.0
  %1466 = vmatprep.subr.mxu0 0.0
  %1467 = vmatpush1.msra.mxu0 0.0
  %1468 = vmatprep.subr.mxu0 0.0
  %1469 = vmatpush1.msra.mxu0 0.0
  %1470 = vmatprep.subr.mxu0 0.0
  %1471 = vmatpush1.msra.mxu0 0.0
  %1472 = vmatprep.subr.mxu0 0.0
  %1473 = vmatpush1.msra.mxu0 0.0
  %1474 = vmatprep.subr.mxu0 0.0
  %1475 = vmatpush1.msra.mxu0 0.0
  %1476 = vmatprep.subr.mxu0 0.0
  %1477 = vmatpush1.msra.mxu0 0.0
  %1478 = vmatprep.subr.mxu0 0.0
  %1479 = vmatpush1.msra.mxu0 0.0
  %1480 = vmatprep.subr.mxu0 0.0
  %1481 = vmatpush1.msra.mxu0 0.0
  %1482 = vmatprep.subr.mxu0 0.0
  %1483 = vmatpush1.msra.mxu0 %v1215
  %1484 = vmatprep.subr.mxu0 0.0
  %1485 = vmatpush1.msra.mxu0 %v1214
  %1486 = vmatprep.subr.mxu0 0.0
  %1487 = vmatpush1.msra.mxu0 %v1213
  %1488 = vmatprep.subr.mxu0 0.0
  %1489 = vmatpush1.msra.mxu0 %v1212
  %1490 = vmatprep.subr.mxu0 0.0
  %1491 = vmatpush2.msra.mxu0 0.0
  %1492 = vmatprep.subr.mxu0 0.0
  %1493 = vmatpush2.msra.mxu0 0.0
  %1494 = vmatprep.subr.mxu0 0.0
  %1495 = vmatpush2.msra.mxu0 0.0
  %1496 = vmatprep.subr.mxu0 0.0
  %1497 = vmatpush2.msra.mxu0 0.0
  %1498 = vmatprep.subr.mxu0 0.0
  %1499 = vmatpush2.msra.mxu0 0.0
  %1500 = vmatprep.subr.mxu0 0.0
  %1501 = vmatpush2.msra.mxu0 0.0
  %1502 = vmatprep.subr.mxu0 0.0
  %1503 = vmatpush2.msra.mxu0 0.0
  %1504 = vmatprep.subr.mxu0 0.0
  %1505 = vmatpush2.msra.mxu0 0.0
  %1506 = vmatprep.subr.mxu0 0.0
  %1507 = vmatpush2.msra.mxu0 0.0
  %1508 = vmatprep.subr.mxu0 0.0
  %1509 = vmatpush2.msra.mxu0 0.0
  %1510 = vmatprep.subr.mxu0 0.0
  %1511 = vmatpush2.msra.mxu0 0.0
  %1512 = vmatprep.subr.mxu0 0.0
  %1513 = vmatpush2.msra.mxu0 0.0
  %1514 = vmatprep.subr.mxu0 0.0
  %1515 = vmatpush2.msra.mxu0 0.0
  %1516 = vmatprep.subr.mxu0 0.0
  %1517 = vmatpush2.msra.mxu0 0.0
  %1518 = vmatprep.subr.mxu0 0.0
  %1519 = vmatpush2.msra.mxu0 0.0
  %1520 = vmatprep.subr.mxu0 0.0
  %1521 = vmatpush2.msra.mxu0 0.0
  %1522 = vmatprep.mubr.f32.mxu0 0.0
  %1523 = vmatmul.mubr.f32.gmra.mxu0 %v1411
  %v1524 = vpop.f32.mrf.mxu0
  %v1525 = vadd.f32 %v1332, %v1524
  %v1526 = vpop.f32.mrf.mxu0
  %1527 = vmatprep.mubr.f32.mxu0 0.0
  %1528 = vmatmul.mubr.f32.gmra.mxu0 %v1414
  %v1529 = vpop.f32.mrf.mxu0
  %v1530 = vadd.f32 %v1337, %v1529
  %v1531 = vpop.f32.mrf.mxu0
  %1532 = vmatprep.mubr.f32.mxu0 0.0
  %1533 = vmatmul.mubr.f32.gmra.mxu0 %v1417
  %v1534 = vpop.f32.mrf.mxu0
  %v1535 = vadd.f32 %v1342, %v1534
  %v1536 = vpop.f32.mrf.mxu0
  %1537 = vmatprep.mubr.f32.mxu0 0.0
  %1538 = vmatmul.mubr.f32.gmra.mxu0 %v1420
  %v1539 = vpop.f32.mrf.mxu0
  %v1540 = vadd.f32 %v1347, %v1539
  %v1541 = vpop.f32.mrf.mxu0
  %1542 = vmatprep.mubr.f32.mxu0 0.0
  %1543 = vmatmul.mubr.f32.gmra.mxu0 %v1423
  %v1544 = vpop.f32.mrf.mxu0
  %v1545 = vadd.f32 %v1352, %v1544
  %v1546 = vpop.f32.mrf.mxu0
  %1547 = vmatprep.mubr.f32.mxu0 0.0
  %1548 = vmatmul.mubr.f32.gmra.mxu0 %v1426
  %v1549 = vpop.f32.mrf.mxu0
  %v1550 = vadd.f32 %v1357, %v1549
  %v1551 = vpop.f32.mrf.mxu0
  %1552 = vmatprep.mubr.f32.mxu0 0.0
  %1553 = vmatmul.mubr.f32.gmra.mxu0 %v1429
  %v1554 = vpop.f32.mrf.mxu0
  %v1555 = vadd.f32 %v1362, %v1554
  %v1556 = vpop.f32.mrf.mxu0
  %1557 = vmatprep.mubr.f32.mxu0 0.0
  %1558 = vmatmul.mubr.f32.gmra.mxu0 %v1432
  %v1559 = vpop.f32.mrf.mxu0
  %v1560 = vadd.f32 %v1367, %v1559
  %v1561 = vpop.f32.mrf.mxu0
  %1562 = vmatprep.mubr.f32.mxu0 0.0
  %1563 = vmatmul.mubr.f32.gmra.mxu0 %v1435
  %v1564 = vpop.f32.mrf.mxu0
  %v1565 = vadd.f32 %v1372, %v1564
  %v1566 = vpop.f32.mrf.mxu0
  %1567 = vmatprep.mubr.f32.mxu0 0.0
  %1568 = vmatmul.mubr.f32.gmra.mxu0 %v1438
  %v1569 = vpop.f32.mrf.mxu0
  %v1570 = vadd.f32 %v1377, %v1569
  %v1571 = vpop.f32.mrf.mxu0
  %1572 = vmatprep.mubr.f32.mxu0 0.0
  %1573 = vmatmul.mubr.f32.gmra.mxu0 %v1441
  %v1574 = vpop.f32.mrf.mxu0
  %v1575 = vadd.f32 %v1382, %v1574
  %v1576 = vpop.f32.mrf.mxu0
  %1577 = vmatprep.mubr.f32.mxu0 0.0
  %1578 = vmatmul.mubr.f32.gmra.mxu0 %v1444
  %v1579 = vpop.f32.mrf.mxu0
  %v1580 = vadd.f32 %v1387, %v1579
  %v1581 = vpop.f32.mrf.mxu0
  %1582 = vmatprep.mubr.f32.mxu0 0.0
  %1583 = vmatmul.mubr.f32.gmra.mxu0 %v1447
  %v1584 = vpop.f32.mrf.mxu0
  %v1585 = vadd.f32 %v1392, %v1584
  %v1586 = vpop.f32.mrf.mxu0
  %1587 = vmatprep.mubr.f32.mxu0 0.0
  %1588 = vmatmul.mubr.f32.gmra.mxu0 %v1450
  %v1589 = vpop.f32.mrf.mxu0
  %v1590 = vadd.f32 %v1397, %v1589
  %v1591 = vpop.f32.mrf.mxu0
  %1592 = vmatprep.mubr.f32.mxu0 0.0
  %1593 = vmatmul.mubr.f32.gmra.mxu0 %v1453
  %v1594 = vpop.f32.mrf.mxu0
  %v1595 = vadd.f32 %v1402, %v1594
  %v1596 = vpop.f32.mrf.mxu0
  %1597 = vmatprep.mubr.f32.mxu0 0.0
  %1598 = vmatmul.mubr.f32.gmra.mxu0 %v1456
  %v1599 = vpop.f32.mrf.mxu0
  %v1600 = vadd.f32 %v1407, %v1599
  %v1601 = vpop.f32.mrf.mxu0
  %1602 = vdwg.mxu0
  %v1603 = vadd.f32 %v1525, %v1135
  %v1604 = vadd.f32 %v1530, %v1140
  %v1605 = vadd.f32 %v1535, %v1145
  %v1606 = vadd.f32 %v1540, %v1150
  %v1607 = vadd.f32 %v1545, %v1155
  %v1608 = vadd.f32 %v1550, %v1160
  %v1609 = vadd.f32 %v1555, %v1165
  %v1610 = vadd.f32 %v1560, %v1170
  %v1611 = vadd.f32 %v1565, %v1175
  %v1612 = vadd.f32 %v1570, %v1180
  %v1613 = vadd.f32 %v1575, %v1185
  %v1614 = vadd.f32 %v1580, %v1190
  %v1615 = vadd.f32 %v1585, %v1195
  %v1616 = vadd.f32 %v1590, %v1200
  %v1617 = vadd.f32 %v1595, %v1205
  %v1618 = vadd.f32 %v1600, %v1210
  %v1619 = vxor.u32 %v1603, 2147483648
  %v1620 = vxor.u32 %v1604, 2147483648
  %v1621 = vxor.u32 %v1605, 2147483648
  %v1622 = vxor.u32 %v1606, 2147483648
  %v1623 = vmul.f32 %v1619, 1.442695
  %v1624 = vpow.pop %v1623
  %v1625 = vmul.f32 %v1620, 1.442695
  %v1626 = vpow.pop %v1625
  %v1627 = vmul.f32 %v1621, 1.442695
  %v1628 = vpow.pop %v1627
  %v1629 = vmul.f32 %v1622, 1.442695
  %v1630 = vpow.pop %v1629
  %v1631 = vadd.f32 %v1624, 1.0
  %v1632 = vadd.f32 %v1626, 1.0
  %v1633 = vadd.f32 %v1628, 1.0
  %v1634 = vadd.f32 %v1630, 1.0
  %v1635 = vrcp.pop %v1631
  %v1636 = vmul.f32 1.0, %v1635
  %v1637 = vrcp.pop %v1632
  %v1638 = vmul.f32 1.0, %v1637
  %v1639 = vrcp.pop %v1633
  %v1640 = vmul.f32 1.0, %v1639
  %v1641 = vrcp.pop %v1634
  %v1642 = vmul.f32 1.0, %v1641
  %v1643 = vxor.u32 %v1607, 2147483648
  %v1644 = vxor.u32 %v1608, 2147483648
  %v1645 = vxor.u32 %v1609, 2147483648
  %v1646 = vxor.u32 %v1610, 2147483648
  %v1647 = vmul.f32 %v1643, 1.442695
  %v1648 = vpow.pop %v1647
  %v1649 = vmul.f32 %v1644, 1.442695
  %v1650 = vpow.pop %v1649
  %v1651 = vmul.f32 %v1645, 1.442695
  %v1652 = vpow.pop %v1651
  %v1653 = vmul.f32 %v1646, 1.442695
  %v1654 = vpow.pop %v1653
  %v1655 = vadd.f32 %v1648, 1.0
  %v1656 = vadd.f32 %v1650, 1.0
  %v1657 = vadd.f32 %v1652, 1.0
  %v1658 = vadd.f32 %v1654, 1.0
  %v1659 = vrcp.pop %v1655
  %v1660 = vmul.f32 1.0, %v1659
  %v1661 = vrcp.pop %v1656
  %v1662 = vmul.f32 1.0, %v1661
  %v1663 = vrcp.pop %v1657
  %v1664 = vmul.f32 1.0, %v1663
  %v1665 = vrcp.pop %v1658
  %v1666 = vmul.f32 1.0, %v1665
  %v1667 = vtanh.pop %v1611
  %v1668 = vtanh.pop %v1612
  %v1669 = vtanh.pop %v1613
  %v1670 = vtanh.pop %v1614
  %v1671 = vxor.u32 %v1615, 2147483648
  %v1672 = vxor.u32 %v1616, 2147483648
  %v1673 = vxor.u32 %v1617, 2147483648
  %v1674 = vxor.u32 %v1618, 2147483648
  %v1675 = vmul.f32 %v1671, 1.442695
  %v1676 = vpow.pop %v1675
  %v1677 = vmul.f32 %v1672, 1.442695
  %v1678 = vpow.pop %v1677
  %v1679 = vmul.f32 %v1673, 1.442695
  %v1680 = vpow.pop %v1679
  %v1681 = vmul.f32 %v1674, 1.442695
  %v1682 = vpow.pop %v1681
  %v1683 = vadd.f32 %v1676, 1.0
  %v1684 = vadd.f32 %v1678, 1.0
  %v1685 = vadd.f32 %v1680, 1.0
  %v1686 = vadd.f32 %v1682, 1.0
  %v1687 = vrcp.pop %v1683
  %v1688 = vmul.f32 1.0, %v1687
  %v1689 = vrcp.pop %v1684
  %v1690 = vmul.f32 1.0, %v1689
  %v1691 = vrcp.pop %v1685
  %v1692 = vmul.f32 1.0, %v1691
  %v1693 = vrcp.pop %v1686
  %v1694 = vmul.f32 1.0, %v1693
  %v1695 = vmul.f32 %v1660, 0.0
  %v1696 = vmul.f32 %v1662, 0.0
  %v1697 = vmul.f32 %v1664, 0.0
  %v1698 = vmul.f32 %v1666, 0.0
  %v1699 = vmul.f32 %v1636, %v1667
  %v1700 = vmul.f32 %v1638, %v1668
  %v1701 = vmul.f32 %v1640, %v1669
  %v1702 = vmul.f32 %v1642, %v1670
  %v1703 = vadd.f32 %v1695, %v1699
  %v1704 = vadd.f32 %v1696, %v1700
  %v1705 = vadd.f32 %v1697, %v1701
  %v1706 = vadd.f32 %v1698, %v1702
  %v1707 = vtanh.pop %v1703
  %v1708 = vtanh.pop %v1704
  %v1709 = vtanh.pop %v1705
  %v1710 = vtanh.pop %v1706
  %v1711 = vmul.f32 %v1688, %v1707
  %v1712 = vmul.f32 %v1690, %v1708
  %v1713 = vmul.f32 %v1692, %v1709
  %v1714 = vmul.f32 %v1694, %v1710
  %1715 = vst.msk [vmem:[#allocation3] sm:$0xff] %vm1043, %v1711
  %1716 = vst.msk [vmem:[#allocation3 + $0x8] sm:$0xff] %vm1043, %v1712
  %1717 = vst.msk [vmem:[#allocation3 + $0x10] sm:$0xff] %vm1043, %v1713
  %1718 = vst.msk [vmem:[#allocation3 + $0x18] sm:$0xff] %vm1043, %v1714
  %s1719 = scalar_lea.vmem [#allocation2], 32
  %v1720 = vld [vmem:[%s1719] sm:$0xff]
  %v1721 = vld [vmem:[%s1719 + $0x8] sm:$0xff]
  %v1722 = vld [vmem:[%s1719 + $0x10] sm:$0xff]
  %v1723 = vld [vmem:[%s1719 + $0x18] sm:$0xff]
  %1724 = vmatprep.subr.mxu0 0.0
  %1725 = vmatpush1.msra.mxu0 0.0
  %1726 = vmatprep.subr.mxu0 0.0
  %1727 = vmatpush1.msra.mxu0 0.0
  %1728 = vmatprep.subr.mxu0 0.0
  %1729 = vmatpush1.msra.mxu0 0.0
  %1730 = vmatprep.subr.mxu0 0.0
  %1731 = vmatpush1.msra.mxu0 0.0
  %1732 = vmatprep.subr.mxu0 0.0
  %1733 = vmatpush1.msra.mxu0 0.0
  %1734 = vmatprep.subr.mxu0 0.0
  %1735 = vmatpush1.msra.mxu0 0.0
  %1736 = vmatprep.subr.mxu0 0.0
  %1737 = vmatpush1.msra.mxu0 0.0
  %1738 = vmatprep.subr.mxu0 0.0
  %1739 = vmatpush1.msra.mxu0 0.0
  %1740 = vmatprep.subr.mxu0 0.0
  %1741 = vmatpush1.msra.mxu0 0.0
  %1742 = vmatprep.subr.mxu0 0.0
  %1743 = vmatpush1.msra.mxu0 0.0
  %1744 = vmatprep.subr.mxu0 0.0
  %1745 = vmatpush1.msra.mxu0 0.0
  %1746 = vmatprep.subr.mxu0 0.0
  %1747 = vmatpush1.msra.mxu0 0.0
  %1748 = vmatprep.subr.mxu0 0.0
  %1749 = vmatpush1.msra.mxu0 %v1714
  %1750 = vmatprep.subr.mxu0 0.0
  %1751 = vmatpush1.msra.mxu0 %v1713
  %1752 = vmatprep.subr.mxu0 0.0
  %1753 = vmatpush1.msra.mxu0 %v1712
  %1754 = vmatprep.subr.mxu0 0.0
  %1755 = vmatpush1.msra.mxu0 %v1711
  %1756 = vmatprep.subr.mxu0 0.0
  %1757 = vmatpush2.msra.mxu0 0.0
  %1758 = vmatprep.subr.mxu0 0.0
  %1759 = vmatpush2.msra.mxu0 0.0
  %1760 = vmatprep.subr.mxu0 0.0
  %1761 = vmatpush2.msra.mxu0 0.0
  %1762 = vmatprep.subr.mxu0 0.0
  %1763 = vmatpush2.msra.mxu0 0.0
  %1764 = vmatprep.subr.mxu0 0.0
  %1765 = vmatpush2.msra.mxu0 0.0
  %1766 = vmatprep.subr.mxu0 0.0
  %1767 = vmatpush2.msra.mxu0 0.0
  %1768 = vmatprep.subr.mxu0 0.0
  %1769 = vmatpush2.msra.mxu0 0.0
  %1770 = vmatprep.subr.mxu0 0.0
  %1771 = vmatpush2.msra.mxu0 0.0
  %1772 = vmatprep.subr.mxu0 0.0
  %1773 = vmatpush2.msra.mxu0 0.0
  %1774 = vmatprep.subr.mxu0 0.0
  %1775 = vmatpush2.msra.mxu0 0.0
  %1776 = vmatprep.subr.mxu0 0.0
  %1777 = vmatpush2.msra.mxu0 0.0
  %1778 = vmatprep.subr.mxu0 0.0
  %1779 = vmatpush2.msra.mxu0 0.0
  %1780 = vmatprep.subr.mxu0 0.0
  %1781 = vmatpush2.msra.mxu0 0.0
  %1782 = vmatprep.subr.mxu0 0.0
  %1783 = vmatpush2.msra.mxu0 0.0
  %1784 = vmatprep.subr.mxu0 0.0
  %1785 = vmatpush2.msra.mxu0 0.0
  %1786 = vmatprep.subr.mxu0 0.0
  %1787 = vmatpush2.msra.mxu0 0.0
  %1788 = vmatprep.mubr.f32.mxu0 0.0
  %1789 = vmatmul.mubr.f32.gmra.mxu0 %v1218
  %v1790 = vpop.f32.mrf.mxu0
  %v1791 = vadd.f32 0.0, %v1790
  %v1792 = vpop.f32.mrf.mxu0
  %1793 = vmatprep.mubr.f32.mxu0 0.0
  %1794 = vmatmul.mubr.f32.gmra.mxu0 %v1221
  %v1795 = vpop.f32.mrf.mxu0
  %v1796 = vadd.f32 0.0, %v1795
  %v1797 = vpop.f32.mrf.mxu0
  %1798 = vmatprep.mubr.f32.mxu0 0.0
  %1799 = vmatmul.mubr.f32.gmra.mxu0 %v1224
  %v1800 = vpop.f32.mrf.mxu0
  %v1801 = vadd.f32 0.0, %v1800
  %v1802 = vpop.f32.mrf.mxu0
  %1803 = vmatprep.mubr.f32.mxu0 0.0
  %1804 = vmatmul.mubr.f32.gmra.mxu0 %v1227
  %v1805 = vpop.f32.mrf.mxu0
  %v1806 = vadd.f32 0.0, %v1805
  %v1807 = vpop.f32.mrf.mxu0
  %1808 = vmatprep.mubr.f32.mxu0 0.0
  %1809 = vmatmul.mubr.f32.gmra.mxu0 %v1230
  %v1810 = vpop.f32.mrf.mxu0
  %v1811 = vadd.f32 0.0, %v1810
  %v1812 = vpop.f32.mrf.mxu0
  %1813 = vmatprep.mubr.f32.mxu0 0.0
  %1814 = vmatmul.mubr.f32.gmra.mxu0 %v1233
  %v1815 = vpop.f32.mrf.mxu0
  %v1816 = vadd.f32 0.0, %v1815
  %v1817 = vpop.f32.mrf.mxu0
  %1818 = vmatprep.mubr.f32.mxu0 0.0
  %1819 = vmatmul.mubr.f32.gmra.mxu0 %v1236
  %v1820 = vpop.f32.mrf.mxu0
  %v1821 = vadd.f32 0.0, %v1820
  %v1822 = vpop.f32.mrf.mxu0
  %1823 = vmatprep.mubr.f32.mxu0 0.0
  %1824 = vmatmul.mubr.f32.gmra.mxu0 %v1239
  %v1825 = vpop.f32.mrf.mxu0
  %v1826 = vadd.f32 0.0, %v1825
  %v1827 = vpop.f32.mrf.mxu0
  %1828 = vmatprep.mubr.f32.mxu0 0.0
  %1829 = vmatmul.mubr.f32.gmra.mxu0 %v1242
  %v1830 = vpop.f32.mrf.mxu0
  %v1831 = vadd.f32 0.0, %v1830
  %v1832 = vpop.f32.mrf.mxu0
  %1833 = vmatprep.mubr.f32.mxu0 0.0
  %1834 = vmatmul.mubr.f32.gmra.mxu0 %v1245
  %v1835 = vpop.f32.mrf.mxu0
  %v1836 = vadd.f32 0.0, %v1835
  %v1837 = vpop.f32.mrf.mxu0
  %1838 = vmatprep.mubr.f32.mxu0 0.0
  %1839 = vmatmul.mubr.f32.gmra.mxu0 %v1248
  %v1840 = vpop.f32.mrf.mxu0
  %v1841 = vadd.f32 0.0, %v1840
  %v1842 = vpop.f32.mrf.mxu0
  %1843 = vmatprep.mubr.f32.mxu0 0.0
  %1844 = vmatmul.mubr.f32.gmra.mxu0 %v1251
  %v1845 = vpop.f32.mrf.mxu0
  %v1846 = vadd.f32 0.0, %v1845
  %v1847 = vpop.f32.mrf.mxu0
  %1848 = vmatprep.mubr.f32.mxu0 0.0
  %1849 = vmatmul.mubr.f32.gmra.mxu0 %v1254
  %v1850 = vpop.f32.mrf.mxu0
  %v1851 = vadd.f32 0.0, %v1850
  %v1852 = vpop.f32.mrf.mxu0
  %1853 = vmatprep.mubr.f32.mxu0 0.0
  %1854 = vmatmul.mubr.f32.gmra.mxu0 %v1257
  %v1855 = vpop.f32.mrf.mxu0
  %v1856 = vadd.f32 0.0, %v1855
  %v1857 = vpop.f32.mrf.mxu0
  %1858 = vmatprep.mubr.f32.mxu0 0.0
  %1859 = vmatmul.mubr.f32.gmra.mxu0 %v1260
  %v1860 = vpop.f32.mrf.mxu0
  %v1861 = vadd.f32 0.0, %v1860
  %v1862 = vpop.f32.mrf.mxu0
  %1863 = vmatprep.mubr.f32.mxu0 0.0
  %1864 = vmatmul.mubr.f32.gmra.mxu0 %v1263
  %v1865 = vpop.f32.mrf.mxu0
  %v1866 = vadd.f32 0.0, %v1865
  %v1867 = vpop.f32.mrf.mxu0
  %1868 = vdwg.mxu0
  %1869 = vmatprep.subr.mxu0 0.0
  %1870 = vmatpush1.msra.mxu0 0.0
  %1871 = vmatprep.subr.mxu0 0.0
  %1872 = vmatpush1.msra.mxu0 0.0
  %1873 = vmatprep.subr.mxu0 0.0
  %1874 = vmatpush1.msra.mxu0 0.0
  %1875 = vmatprep.subr.mxu0 0.0
  %1876 = vmatpush1.msra.mxu0 0.0
  %1877 = vmatprep.subr.mxu0 0.0
  %1878 = vmatpush1.msra.mxu0 0.0
  %1879 = vmatprep.subr.mxu0 0.0
  %1880 = vmatpush1.msra.mxu0 0.0
  %1881 = vmatprep.subr.mxu0 0.0
  %1882 = vmatpush1.msra.mxu0 0.0
  %1883 = vmatprep.subr.mxu0 0.0
  %1884 = vmatpush1.msra.mxu0 0.0
  %1885 = vmatprep.subr.mxu0 0.0
  %1886 = vmatpush1.msra.mxu0 0.0
  %1887 = vmatprep.subr.mxu0 0.0
  %1888 = vmatpush1.msra.mxu0 0.0
  %1889 = vmatprep.subr.mxu0 0.0
  %1890 = vmatpush1.msra.mxu0 0.0
  %1891 = vmatprep.subr.mxu0 0.0
  %1892 = vmatpush1.msra.mxu0 0.0
  %1893 = vmatprep.subr.mxu0 0.0
  %1894 = vmatpush1.msra.mxu0 %v1723
  %1895 = vmatprep.subr.mxu0 0.0
  %1896 = vmatpush1.msra.mxu0 %v1722
  %1897 = vmatprep.subr.mxu0 0.0
  %1898 = vmatpush1.msra.mxu0 %v1721
  %1899 = vmatprep.subr.mxu0 0.0
  %1900 = vmatpush1.msra.mxu0 %v1720
  %1901 = vmatprep.subr.mxu0 0.0
  %1902 = vmatpush2.msra.mxu0 0.0
  %1903 = vmatprep.subr.mxu0 0.0
  %1904 = vmatpush2.msra.mxu0 0.0
  %1905 = vmatprep.subr.mxu0 0.0
  %1906 = vmatpush2.msra.mxu0 0.0
  %1907 = vmatprep.subr.mxu0 0.0
  %1908 = vmatpush2.msra.mxu0 0.0
  %1909 = vmatprep.subr.mxu0 0.0
  %1910 = vmatpush2.msra.mxu0 0.0
  %1911 = vmatprep.subr.mxu0 0.0
  %1912 = vmatpush2.msra.mxu0 0.0
  %1913 = vmatprep.subr.mxu0 0.0
  %1914 = vmatpush2.msra.mxu0 0.0
  %1915 = vmatprep.subr.mxu0 0.0
  %1916 = vmatpush2.msra.mxu0 0.0
  %1917 = vmatprep.subr.mxu0 0.0
  %1918 = vmatpush2.msra.mxu0 0.0
  %1919 = vmatprep.subr.mxu0 0.0
  %1920 = vmatpush2.msra.mxu0 0.0
  %1921 = vmatprep.subr.mxu0 0.0
  %1922 = vmatpush2.msra.mxu0 0.0
  %1923 = vmatprep.subr.mxu0 0.0
  %1924 = vmatpush2.msra.mxu0 0.0
  %1925 = vmatprep.subr.mxu0 0.0
  %1926 = vmatpush2.msra.mxu0 0.0
  %1927 = vmatprep.subr.mxu0 0.0
  %1928 = vmatpush2.msra.mxu0 0.0
  %1929 = vmatprep.subr.mxu0 0.0
  %1930 = vmatpush2.msra.mxu0 0.0
  %1931 = vmatprep.subr.mxu0 0.0
  %1932 = vmatpush2.msra.mxu0 0.0
  %1933 = vmatprep.mubr.f32.mxu0 0.0
  %1934 = vmatmul.mubr.f32.gmra.mxu0 %v1411
  %v1935 = vpop.f32.mrf.mxu0
  %v1936 = vadd.f32 %v1791, %v1935
  %v1937 = vpop.f32.mrf.mxu0
  %1938 = vmatprep.mubr.f32.mxu0 0.0
  %1939 = vmatmul.mubr.f32.gmra.mxu0 %v1414
  %v1940 = vpop.f32.mrf.mxu0
  %v1941 = vadd.f32 %v1796, %v1940
  %v1942 = vpop.f32.mrf.mxu0
  %1943 = vmatprep.mubr.f32.mxu0 0.0
  %1944 = vmatmul.mubr.f32.gmra.mxu0 %v1417
  %v1945 = vpop.f32.mrf.mxu0
  %v1946 = vadd.f32 %v1801, %v1945
  %v1947 = vpop.f32.mrf.mxu0
  %1948 = vmatprep.mubr.f32.mxu0 0.0
  %1949 = vmatmul.mubr.f32.gmra.mxu0 %v1420
  %v1950 = vpop.f32.mrf.mxu0
  %v1951 = vadd.f32 %v1806, %v1950
  %v1952 = vpop.f32.mrf.mxu0
  %1953 = vmatprep.mubr.f32.mxu0 0.0
  %1954 = vmatmul.mubr.f32.gmra.mxu0 %v1423
  %v1955 = vpop.f32.mrf.mxu0
  %v1956 = vadd.f32 %v1811, %v1955
  %v1957 = vpop.f32.mrf.mxu0
  %1958 = vmatprep.mubr.f32.mxu0 0.0
  %1959 = vmatmul.mubr.f32.gmra.mxu0 %v1426
  %v1960 = vpop.f32.mrf.mxu0
  %v1961 = vadd.f32 %v1816, %v1960
  %v1962 = vpop.f32.mrf.mxu0
  %1963 = vmatprep.mubr.f32.mxu0 0.0
  %1964 = vmatmul.mubr.f32.gmra.mxu0 %v1429
  %v1965 = vpop.f32.mrf.mxu0
  %v1966 = vadd.f32 %v1821, %v1965
  %v1967 = vpop.f32.mrf.mxu0
  %1968 = vmatprep.mubr.f32.mxu0 0.0
  %1969 = vmatmul.mubr.f32.gmra.mxu0 %v1432
  %v1970 = vpop.f32.mrf.mxu0
  %v1971 = vadd.f32 %v1826, %v1970
  %v1972 = vpop.f32.mrf.mxu0
  %1973 = vmatprep.mubr.f32.mxu0 0.0
  %1974 = vmatmul.mubr.f32.gmra.mxu0 %v1435
  %v1975 = vpop.f32.mrf.mxu0
  %v1976 = vadd.f32 %v1831, %v1975
  %v1977 = vpop.f32.mrf.mxu0
  %1978 = vmatprep.mubr.f32.mxu0 0.0
  %1979 = vmatmul.mubr.f32.gmra.mxu0 %v1438
  %v1980 = vpop.f32.mrf.mxu0
  %v1981 = vadd.f32 %v1836, %v1980
  %v1982 = vpop.f32.mrf.mxu0
  %1983 = vmatprep.mubr.f32.mxu0 0.0
  %1984 = vmatmul.mubr.f32.gmra.mxu0 %v1441
  %v1985 = vpop.f32.mrf.mxu0
  %v1986 = vadd.f32 %v1841, %v1985
  %v1987 = vpop.f32.mrf.mxu0
  %1988 = vmatprep.mubr.f32.mxu0 0.0
  %1989 = vmatmul.mubr.f32.gmra.mxu0 %v1444
  %v1990 = vpop.f32.mrf.mxu0
  %v1991 = vadd.f32 %v1846, %v1990
  %v1992 = vpop.f32.mrf.mxu0
  %1993 = vmatprep.mubr.f32.mxu0 0.0
  %1994 = vmatmul.mubr.f32.gmra.mxu0 %v1447
  %v1995 = vpop.f32.mrf.mxu0
  %v1996 = vadd.f32 %v1851, %v1995
  %v1997 = vpop.f32.mrf.mxu0
  %1998 = vmatprep.mubr.f32.mxu0 0.0
  %1999 = vmatmul.mubr.f32.gmra.mxu0 %v1450
  %v2000 = vpop.f32.mrf.mxu0
  %v2001 = vadd.f32 %v1856, %v2000
  %v2002 = vpop.f32.mrf.mxu0
  %2003 = vmatprep.mubr.f32.mxu0 0.0
  %2004 = vmatmul.mubr.f32.gmra.mxu0 %v1453
  %v2005 = vpop.f32.mrf.mxu0
  %v2006 = vadd.f32 %v1861, %v2005
  %v2007 = vpop.f32.mrf.mxu0
  %2008 = vmatprep.mubr.f32.mxu0 0.0
  %2009 = vmatmul.mubr.f32.gmra.mxu0 %v1456
  %v2010 = vpop.f32.mrf.mxu0
  %v2011 = vadd.f32 %v1866, %v2010
  %v2012 = vpop.f32.mrf.mxu0
  %2013 = vdwg.mxu0
  %v2014 = vadd.f32 %v1936, %v1135
  %v2015 = vadd.f32 %v1941, %v1140
  %v2016 = vadd.f32 %v1946, %v1145
  %v2017 = vadd.f32 %v1951, %v1150
  %v2018 = vadd.f32 %v1956, %v1155
  %v2019 = vadd.f32 %v1961, %v1160
  %v2020 = vadd.f32 %v1966, %v1165
  %v2021 = vadd.f32 %v1971, %v1170
  %v2022 = vadd.f32 %v1976, %v1175
  %v2023 = vadd.f32 %v1981, %v1180
  %v2024 = vadd.f32 %v1986, %v1185
  %v2025 = vadd.f32 %v1991, %v1190
  %v2026 = vadd.f32 %v1996, %v1195
  %v2027 = vadd.f32 %v2001, %v1200
  %v2028 = vadd.f32 %v2006, %v1205
  %v2029 = vadd.f32 %v2011, %v1210
  %v2030 = vxor.u32 %v2014, 2147483648
  %v2031 = vxor.u32 %v2015, 2147483648
  %v2032 = vxor.u32 %v2016, 2147483648
  %v2033 = vxor.u32 %v2017, 2147483648
  %v2034 = vmul.f32 %v2030, 1.442695
  %v2035 = vpow.pop %v2034
  %v2036 = vmul.f32 %v2031, 1.442695
  %v2037 = vpow.pop %v2036
  %v2038 = vmul.f32 %v2032, 1.442695
  %v2039 = vpow.pop %v2038
  %v2040 = vmul.f32 %v2033, 1.442695
  %v2041 = vpow.pop %v2040
  %v2042 = vadd.f32 %v2035, 1.0
  %v2043 = vadd.f32 %v2037, 1.0
  %v2044 = vadd.f32 %v2039, 1.0
  %v2045 = vadd.f32 %v2041, 1.0
  %v2046 = vrcp.pop %v2042
  %v2047 = vmul.f32 1.0, %v2046
  %v2048 = vrcp.pop %v2043
  %v2049 = vmul.f32 1.0, %v2048
  %v2050 = vrcp.pop %v2044
  %v2051 = vmul.f32 1.0, %v2050
  %v2052 = vrcp.pop %v2045
  %v2053 = vmul.f32 1.0, %v2052
  %v2054 = vxor.u32 %v2018, 2147483648
  %v2055 = vxor.u32 %v2019, 2147483648
  %v2056 = vxor.u32 %v2020, 2147483648
  %v2057 = vxor.u32 %v2021, 2147483648
  %v2058 = vmul.f32 %v2054, 1.442695
  %v2059 = vpow.pop %v2058
  %v2060 = vmul.f32 %v2055, 1.442695
  %v2061 = vpow.pop %v2060
  %v2062 = vmul.f32 %v2056, 1.442695
  %v2063 = vpow.pop %v2062
  %v2064 = vmul.f32 %v2057, 1.442695
  %v2065 = vpow.pop %v2064
  %v2066 = vadd.f32 %v2059, 1.0
  %v2067 = vadd.f32 %v2061, 1.0
  %v2068 = vadd.f32 %v2063, 1.0
  %v2069 = vadd.f32 %v2065, 1.0
  %v2070 = vrcp.pop %v2066
  %v2071 = vmul.f32 1.0, %v2070
  %v2072 = vrcp.pop %v2067
  %v2073 = vmul.f32 1.0, %v2072
  %v2074 = vrcp.pop %v2068
  %v2075 = vmul.f32 1.0, %v2074
  %v2076 = vrcp.pop %v2069
  %v2077 = vmul.f32 1.0, %v2076
  %v2078 = vtanh.pop %v2022
  %v2079 = vtanh.pop %v2023
  %v2080 = vtanh.pop %v2024
  %v2081 = vtanh.pop %v2025
  %v2082 = vxor.u32 %v2026, 2147483648
  %v2083 = vxor.u32 %v2027, 2147483648
  %v2084 = vxor.u32 %v2028, 2147483648
  %v2085 = vxor.u32 %v2029, 2147483648
  %v2086 = vmul.f32 %v2082, 1.442695
  %v2087 = vpow.pop %v2086
  %v2088 = vmul.f32 %v2083, 1.442695
  %v2089 = vpow.pop %v2088
  %v2090 = vmul.f32 %v2084, 1.442695
  %v2091 = vpow.pop %v2090
  %v2092 = vmul.f32 %v2085, 1.442695
  %v2093 = vpow.pop %v2092
  %v2094 = vadd.f32 %v2087, 1.0
  %v2095 = vadd.f32 %v2089, 1.0
  %v2096 = vadd.f32 %v2091, 1.0
  %v2097 = vadd.f32 %v2093, 1.0
  %v2098 = vrcp.pop %v2094
  %v2099 = vmul.f32 1.0, %v2098
  %v2100 = vrcp.pop %v2095
  %v2101 = vmul.f32 1.0, %v2100
  %v2102 = vrcp.pop %v2096
  %v2103 = vmul.f32 1.0, %v2102
  %v2104 = vrcp.pop %v2097
  %v2105 = vmul.f32 1.0, %v2104
  %v2106 = vmul.f32 %v2071, %v1703
  %v2107 = vmul.f32 %v2073, %v1704
  %v2108 = vmul.f32 %v2075, %v1705
  %v2109 = vmul.f32 %v2077, %v1706
  %v2110 = vmul.f32 %v2047, %v2078
  %v2111 = vmul.f32 %v2049, %v2079
  %v2112 = vmul.f32 %v2051, %v2080
  %v2113 = vmul.f32 %v2053, %v2081
  %v2114 = vadd.f32 %v2106, %v2110
  %v2115 = vadd.f32 %v2107, %v2111
  %v2116 = vadd.f32 %v2108, %v2112
  %v2117 = vadd.f32 %v2109, %v2113
  %v2118 = vtanh.pop %v2114
  %v2119 = vtanh.pop %v2115
  %v2120 = vtanh.pop %v2116
  %v2121 = vtanh.pop %v2117
  %v2122 = vmul.f32 %v2099, %v2118
  %v2123 = vmul.f32 %v2101, %v2119
  %v2124 = vmul.f32 %v2103, %v2120
  %v2125 = vmul.f32 %v2105, %v2121
  %s2126 = scalar_lea.vmem [#allocation3], 32
  %2127 = vst.msk [vmem:[%s2126] sm:$0xff] %vm1043, %v2122
  %2128 = vst.msk [vmem:[%s2126 + $0x8] sm:$0xff] %vm1043, %v2123
  %2129 = vst.msk [vmem:[%s2126 + $0x10] sm:$0xff] %vm1043, %v2124
  %2130 = vst.msk [vmem:[%s2126 + $0x18] sm:$0xff] %vm1043, %v2125
  %s2131 = scalar_lea.vmem [#allocation2], 64
  %v2132 = vld [vmem:[%s2131] sm:$0xff]
  %v2133 = vld [vmem:[%s2131 + $0x8] sm:$0xff]
  %v2134 = vld [vmem:[%s2131 + $0x10] sm:$0xff]
  %v2135 = vld [vmem:[%s2131 + $0x18] sm:$0xff]
  %2136 = vmatprep.subr.mxu0 0.0
  %2137 = vmatpush1.msra.mxu0 0.0
  %2138 = vmatprep.subr.mxu0 0.0
  %2139 = vmatpush1.msra.mxu0 0.0
  %2140 = vmatprep.subr.mxu0 0.0
  %2141 = vmatpush1.msra.mxu0 0.0
  %2142 = vmatprep.subr.mxu0 0.0
  %2143 = vmatpush1.msra.mxu0 0.0
  %2144 = vmatprep.subr.mxu0 0.0
  %2145 = vmatpush1.msra.mxu0 0.0
  %2146 = vmatprep.subr.mxu0 0.0
  %2147 = vmatpush1.msra.mxu0 0.0
  %2148 = vmatprep.subr.mxu0 0.0
  %2149 = vmatpush1.msra.mxu0 0.0
  %2150 = vmatprep.subr.mxu0 0.0
  %2151 = vmatpush1.msra.mxu0 0.0
  %2152 = vmatprep.subr.mxu0 0.0
  %2153 = vmatpush1.msra.mxu0 0.0
  %2154 = vmatprep.subr.mxu0 0.0
  %2155 = vmatpush1.msra.mxu0 0.0
  %2156 = vmatprep.subr.mxu0 0.0
  %2157 = vmatpush1.msra.mxu0 0.0
  %2158 = vmatprep.subr.mxu0 0.0
  %2159 = vmatpush1.msra.mxu0 0.0
  %2160 = vmatprep.subr.mxu0 0.0
  %2161 = vmatpush1.msra.mxu0 %v2125
  %2162 = vmatprep.subr.mxu0 0.0
  %2163 = vmatpush1.msra.mxu0 %v2124
  %2164 = vmatprep.subr.mxu0 0.0
  %2165 = vmatpush1.msra.mxu0 %v2123
  %2166 = vmatprep.subr.mxu0 0.0
  %2167 = vmatpush1.msra.mxu0 %v2122
  %2168 = vmatprep.subr.mxu0 0.0
  %2169 = vmatpush2.msra.mxu0 0.0
  %2170 = vmatprep.subr.mxu0 0.0
  %2171 = vmatpush2.msra.mxu0 0.0
  %2172 = vmatprep.subr.mxu0 0.0
  %2173 = vmatpush2.msra.mxu0 0.0
  %2174 = vmatprep.subr.mxu0 0.0
  %2175 = vmatpush2.msra.mxu0 0.0
  %2176 = vmatprep.subr.mxu0 0.0
  %2177 = vmatpush2.msra.mxu0 0.0
  %2178 = vmatprep.subr.mxu0 0.0
  %2179 = vmatpush2.msra.mxu0 0.0
  %2180 = vmatprep.subr.mxu0 0.0
  %2181 = vmatpush2.msra.mxu0 0.0
  %2182 = vmatprep.subr.mxu0 0.0
  %2183 = vmatpush2.msra.mxu0 0.0
  %2184 = vmatprep.subr.mxu0 0.0
  %2185 = vmatpush2.msra.mxu0 0.0
  %2186 = vmatprep.subr.mxu0 0.0
  %2187 = vmatpush2.msra.mxu0 0.0
  %2188 = vmatprep.subr.mxu0 0.0
  %2189 = vmatpush2.msra.mxu0 0.0
  %2190 = vmatprep.subr.mxu0 0.0
  %2191 = vmatpush2.msra.mxu0 0.0
  %2192 = vmatprep.subr.mxu0 0.0
  %2193 = vmatpush2.msra.mxu0 0.0
  %2194 = vmatprep.subr.mxu0 0.0
  %2195 = vmatpush2.msra.mxu0 0.0
  %2196 = vmatprep.subr.mxu0 0.0
  %2197 = vmatpush2.msra.mxu0 0.0
  %2198 = vmatprep.subr.mxu0 0.0
  %2199 = vmatpush2.msra.mxu0 0.0
  %2200 = vmatprep.mubr.f32.mxu0 0.0
  %2201 = vmatmul.mubr.f32.gmra.mxu0 %v1218
  %v2202 = vpop.f32.mrf.mxu0
  %v2203 = vadd.f32 0.0, %v2202
  %v2204 = vpop.f32.mrf.mxu0
  %2205 = vmatprep.mubr.f32.mxu0 0.0
  %2206 = vmatmul.mubr.f32.gmra.mxu0 %v1221
  %v2207 = vpop.f32.mrf.mxu0
  %v2208 = vadd.f32 0.0, %v2207
  %v2209 = vpop.f32.mrf.mxu0
  %2210 = vmatprep.mubr.f32.mxu0 0.0
  %2211 = vmatmul.mubr.f32.gmra.mxu0 %v1224
  %v2212 = vpop.f32.mrf.mxu0
  %v2213 = vadd.f32 0.0, %v2212
  %v2214 = vpop.f32.mrf.mxu0
  %2215 = vmatprep.mubr.f32.mxu0 0.0
  %2216 = vmatmul.mubr.f32.gmra.mxu0 %v1227
  %v2217 = vpop.f32.mrf.mxu0
  %v2218 = vadd.f32 0.0, %v2217
  %v2219 = vpop.f32.mrf.mxu0
  %2220 = vmatprep.mubr.f32.mxu0 0.0
  %2221 = vmatmul.mubr.f32.gmra.mxu0 %v1230
  %v2222 = vpop.f32.mrf.mxu0
  %v2223 = vadd.f32 0.0, %v2222
  %v2224 = vpop.f32.mrf.mxu0
  %2225 = vmatprep.mubr.f32.mxu0 0.0
  %2226 = vmatmul.mubr.f32.gmra.mxu0 %v1233
  %v2227 = vpop.f32.mrf.mxu0
  %v2228 = vadd.f32 0.0, %v2227
  %v2229 = vpop.f32.mrf.mxu0
  %2230 = vmatprep.mubr.f32.mxu0 0.0
  %2231 = vmatmul.mubr.f32.gmra.mxu0 %v1236
  %v2232 = vpop.f32.mrf.mxu0
  %v2233 = vadd.f32 0.0, %v2232
  %v2234 = vpop.f32.mrf.mxu0
  %2235 = vmatprep.mubr.f32.mxu0 0.0
  %2236 = vmatmul.mubr.f32.gmra.mxu0 %v1239
  %v2237 = vpop.f32.mrf.mxu0
  %v2238 = vadd.f32 0.0, %v2237
  %v2239 = vpop.f32.mrf.mxu0
  %2240 = vmatprep.mubr.f32.mxu0 0.0
  %2241 = vmatmul.mubr.f32.gmra.mxu0 %v1242
  %v2242 = vpop.f32.mrf.mxu0
  %v2243 = vadd.f32 0.0, %v2242
  %v2244 = vpop.f32.mrf.mxu0
  %2245 = vmatprep.mubr.f32.mxu0 0.0
  %2246 = vmatmul.mubr.f32.gmra.mxu0 %v1245
  %v2247 = vpop.f32.mrf.mxu0
  %v2248 = vadd.f32 0.0, %v2247
  %v2249 = vpop.f32.mrf.mxu0
  %2250 = vmatprep.mubr.f32.mxu0 0.0
  %2251 = vmatmul.mubr.f32.gmra.mxu0 %v1248
  %v2252 = vpop.f32.mrf.mxu0
  %v2253 = vadd.f32 0.0, %v2252
  %v2254 = vpop.f32.mrf.mxu0
  %2255 = vmatprep.mubr.f32.mxu0 0.0
  %2256 = vmatmul.mubr.f32.gmra.mxu0 %v1251
  %v2257 = vpop.f32.mrf.mxu0
  %v2258 = vadd.f32 0.0, %v2257
  %v2259 = vpop.f32.mrf.mxu0
  %2260 = vmatprep.mubr.f32.mxu0 0.0
  %2261 = vmatmul.mubr.f32.gmra.mxu0 %v1254
  %v2262 = vpop.f32.mrf.mxu0
  %v2263 = vadd.f32 0.0, %v2262
  %v2264 = vpop.f32.mrf.mxu0
  %2265 = vmatprep.mubr.f32.mxu0 0.0
  %2266 = vmatmul.mubr.f32.gmra.mxu0 %v1257
  %v2267 = vpop.f32.mrf.mxu0
  %v2268 = vadd.f32 0.0, %v2267
  %v2269 = vpop.f32.mrf.mxu0
  %2270 = vmatprep.mubr.f32.mxu0 0.0
  %2271 = vmatmul.mubr.f32.gmra.mxu0 %v1260
  %v2272 = vpop.f32.mrf.mxu0
  %v2273 = vadd.f32 0.0, %v2272
  %v2274 = vpop.f32.mrf.mxu0
  %2275 = vmatprep.mubr.f32.mxu0 0.0
  %2276 = vmatmul.mubr.f32.gmra.mxu0 %v1263
  %v2277 = vpop.f32.mrf.mxu0
  %v2278 = vadd.f32 0.0, %v2277
  %v2279 = vpop.f32.mrf.mxu0
  %2280 = vdwg.mxu0
  %2281 = vmatprep.subr.mxu0 0.0
  %2282 = vmatpush1.msra.mxu0 0.0
  %2283 = vmatprep.subr.mxu0 0.0
  %2284 = vmatpush1.msra.mxu0 0.0
  %2285 = vmatprep.subr.mxu0 0.0
  %2286 = vmatpush1.msra.mxu0 0.0
  %2287 = vmatprep.subr.mxu0 0.0
  %2288 = vmatpush1.msra.mxu0 0.0
  %2289 = vmatprep.subr.mxu0 0.0
  %2290 = vmatpush1.msra.mxu0 0.0
  %2291 = vmatprep.subr.mxu0 0.0
  %2292 = vmatpush1.msra.mxu0 0.0
  %2293 = vmatprep.subr.mxu0 0.0
  %2294 = vmatpush1.msra.mxu0 0.0
  %2295 = vmatprep.subr.mxu0 0.0
  %2296 = vmatpush1.msra.mxu0 0.0
  %2297 = vmatprep.subr.mxu0 0.0
  %2298 = vmatpush1.msra.mxu0 0.0
  %2299 = vmatprep.subr.mxu0 0.0
  %2300 = vmatpush1.msra.mxu0 0.0
  %2301 = vmatprep.subr.mxu0 0.0
  %2302 = vmatpush1.msra.mxu0 0.0
  %2303 = vmatprep.subr.mxu0 0.0
  %2304 = vmatpush1.msra.mxu0 0.0
  %2305 = vmatprep.subr.mxu0 0.0
  %2306 = vmatpush1.msra.mxu0 %v2135
  %2307 = vmatprep.subr.mxu0 0.0
  %2308 = vmatpush1.msra.mxu0 %v2134
  %2309 = vmatprep.subr.mxu0 0.0
  %2310 = vmatpush1.msra.mxu0 %v2133
  %2311 = vmatprep.subr.mxu0 0.0
  %2312 = vmatpush1.msra.mxu0 %v2132
  %2313 = vmatprep.subr.mxu0 0.0
  %2314 = vmatpush2.msra.mxu0 0.0
  %2315 = vmatprep.subr.mxu0 0.0
  %2316 = vmatpush2.msra.mxu0 0.0
  %2317 = vmatprep.subr.mxu0 0.0
  %2318 = vmatpush2.msra.mxu0 0.0
  %2319 = vmatprep.subr.mxu0 0.0
  %2320 = vmatpush2.msra.mxu0 0.0
  %2321 = vmatprep.subr.mxu0 0.0
  %2322 = vmatpush2.msra.mxu0 0.0
  %2323 = vmatprep.subr.mxu0 0.0
  %2324 = vmatpush2.msra.mxu0 0.0
  %2325 = vmatprep.subr.mxu0 0.0
  %2326 = vmatpush2.msra.mxu0 0.0
  %2327 = vmatprep.subr.mxu0 0.0
  %2328 = vmatpush2.msra.mxu0 0.0
  %2329 = vmatprep.subr.mxu0 0.0
  %2330 = vmatpush2.msra.mxu0 0.0
  %2331 = vmatprep.subr.mxu0 0.0
  %2332 = vmatpush2.msra.mxu0 0.0
  %2333 = vmatprep.subr.mxu0 0.0
  %2334 = vmatpush2.msra.mxu0 0.0
  %2335 = vmatprep.subr.mxu0 0.0
  %2336 = vmatpush2.msra.mxu0 0.0
  %2337 = vmatprep.subr.mxu0 0.0
  %2338 = vmatpush2.msra.mxu0 0.0
  %2339 = vmatprep.subr.mxu0 0.0
  %2340 = vmatpush2.msra.mxu0 0.0
  %2341 = vmatprep.subr.mxu0 0.0
  %2342 = vmatpush2.msra.mxu0 0.0
  %2343 = vmatprep.subr.mxu0 0.0
  %2344 = vmatpush2.msra.mxu0 0.0
  %2345 = vmatprep.mubr.f32.mxu0 0.0
  %2346 = vmatmul.mubr.f32.gmra.mxu0 %v1411
  %v2347 = vpop.f32.mrf.mxu0
  %v2348 = vadd.f32 %v2203, %v2347
  %v2349 = vpop.f32.mrf.mxu0
  %2350 = vmatprep.mubr.f32.mxu0 0.0
  %2351 = vmatmul.mubr.f32.gmra.mxu0 %v1414
  %v2352 = vpop.f32.mrf.mxu0
  %v2353 = vadd.f32 %v2208, %v2352
  %v2354 = vpop.f32.mrf.mxu0
  %2355 = vmatprep.mubr.f32.mxu0 0.0
  %2356 = vmatmul.mubr.f32.gmra.mxu0 %v1417
  %v2357 = vpop.f32.mrf.mxu0
  %v2358 = vadd.f32 %v2213, %v2357
  %v2359 = vpop.f32.mrf.mxu0
  %2360 = vmatprep.mubr.f32.mxu0 0.0
  %2361 = vmatmul.mubr.f32.gmra.mxu0 %v1420
  %v2362 = vpop.f32.mrf.mxu0
  %v2363 = vadd.f32 %v2218, %v2362
  %v2364 = vpop.f32.mrf.mxu0
  %2365 = vmatprep.mubr.f32.mxu0 0.0
  %2366 = vmatmul.mubr.f32.gmra.mxu0 %v1423
  %v2367 = vpop.f32.mrf.mxu0
  %v2368 = vadd.f32 %v2223, %v2367
  %v2369 = vpop.f32.mrf.mxu0
  %2370 = vmatprep.mubr.f32.mxu0 0.0
  %2371 = vmatmul.mubr.f32.gmra.mxu0 %v1426
  %v2372 = vpop.f32.mrf.mxu0
  %v2373 = vadd.f32 %v2228, %v2372
  %v2374 = vpop.f32.mrf.mxu0
  %2375 = vmatprep.mubr.f32.mxu0 0.0
  %2376 = vmatmul.mubr.f32.gmra.mxu0 %v1429
  %v2377 = vpop.f32.mrf.mxu0
  %v2378 = vadd.f32 %v2233, %v2377
  %v2379 = vpop.f32.mrf.mxu0
  %2380 = vmatprep.mubr.f32.mxu0 0.0
  %2381 = vmatmul.mubr.f32.gmra.mxu0 %v1432
  %v2382 = vpop.f32.mrf.mxu0
  %v2383 = vadd.f32 %v2238, %v2382
  %v2384 = vpop.f32.mrf.mxu0
  %2385 = vmatprep.mubr.f32.mxu0 0.0
  %2386 = vmatmul.mubr.f32.gmra.mxu0 %v1435
  %v2387 = vpop.f32.mrf.mxu0
  %v2388 = vadd.f32 %v2243, %v2387
  %v2389 = vpop.f32.mrf.mxu0
  %2390 = vmatprep.mubr.f32.mxu0 0.0
  %2391 = vmatmul.mubr.f32.gmra.mxu0 %v1438
  %v2392 = vpop.f32.mrf.mxu0
  %v2393 = vadd.f32 %v2248, %v2392
  %v2394 = vpop.f32.mrf.mxu0
  %2395 = vmatprep.mubr.f32.mxu0 0.0
  %2396 = vmatmul.mubr.f32.gmra.mxu0 %v1441
  %v2397 = vpop.f32.mrf.mxu0
  %v2398 = vadd.f32 %v2253, %v2397
  %v2399 = vpop.f32.mrf.mxu0
  %2400 = vmatprep.mubr.f32.mxu0 0.0
  %2401 = vmatmul.mubr.f32.gmra.mxu0 %v1444
  %v2402 = vpop.f32.mrf.mxu0
  %v2403 = vadd.f32 %v2258, %v2402
  %v2404 = vpop.f32.mrf.mxu0
  %2405 = vmatprep.mubr.f32.mxu0 0.0
  %2406 = vmatmul.mubr.f32.gmra.mxu0 %v1447
  %v2407 = vpop.f32.mrf.mxu0
  %v2408 = vadd.f32 %v2263, %v2407
  %v2409 = vpop.f32.mrf.mxu0
  %2410 = vmatprep.mubr.f32.mxu0 0.0
  %2411 = vmatmul.mubr.f32.gmra.mxu0 %v1450
  %v2412 = vpop.f32.mrf.mxu0
  %v2413 = vadd.f32 %v2268, %v2412
  %v2414 = vpop.f32.mrf.mxu0
  %2415 = vmatprep.mubr.f32.mxu0 0.0
  %2416 = vmatmul.mubr.f32.gmra.mxu0 %v1453
  %v2417 = vpop.f32.mrf.mxu0
  %v2418 = vadd.f32 %v2273, %v2417
  %v2419 = vpop.f32.mrf.mxu0
  %2420 = vmatprep.mubr.f32.mxu0 0.0
  %2421 = vmatmul.mubr.f32.gmra.mxu0 %v1456
  %v2422 = vpop.f32.mrf.mxu0
  %v2423 = vadd.f32 %v2278, %v2422
  %v2424 = vpop.f32.mrf.mxu0
  %2425 = vdwg.mxu0
  %v2426 = vadd.f32 %v2348, %v1135
  %v2427 = vadd.f32 %v2353, %v1140
  %v2428 = vadd.f32 %v2358, %v1145
  %v2429 = vadd.f32 %v2363, %v1150
  %v2430 = vadd.f32 %v2368, %v1155
  %v2431 = vadd.f32 %v2373, %v1160
  %v2432 = vadd.f32 %v2378, %v1165
  %v2433 = vadd.f32 %v2383, %v1170
  %v2434 = vadd.f32 %v2388, %v1175
  %v2435 = vadd.f32 %v2393, %v1180
  %v2436 = vadd.f32 %v2398, %v1185
  %v2437 = vadd.f32 %v2403, %v1190
  %v2438 = vadd.f32 %v2408, %v1195
  %v2439 = vadd.f32 %v2413, %v1200
  %v2440 = vadd.f32 %v2418, %v1205
  %v2441 = vadd.f32 %v2423, %v1210
  %v2442 = vxor.u32 %v2426, 2147483648
  %v2443 = vxor.u32 %v2427, 2147483648
  %v2444 = vxor.u32 %v2428, 2147483648
  %v2445 = vxor.u32 %v2429, 2147483648
  %v2446 = vmul.f32 %v2442, 1.442695
  %v2447 = vpow.pop %v2446
  %v2448 = vmul.f32 %v2443, 1.442695
  %v2449 = vpow.pop %v2448
  %v2450 = vmul.f32 %v2444, 1.442695
  %v2451 = vpow.pop %v2450
  %v2452 = vmul.f32 %v2445, 1.442695
  %v2453 = vpow.pop %v2452
  %v2454 = vadd.f32 %v2447, 1.0
  %v2455 = vadd.f32 %v2449, 1.0
  %v2456 = vadd.f32 %v2451, 1.0
  %v2457 = vadd.f32 %v2453, 1.0
  %v2458 = vrcp.pop %v2454
  %v2459 = vmul.f32 1.0, %v2458
  %v2460 = vrcp.pop %v2455
  %v2461 = vmul.f32 1.0, %v2460
  %v2462 = vrcp.pop %v2456
  %v2463 = vmul.f32 1.0, %v2462
  %v2464 = vrcp.pop %v2457
  %v2465 = vmul.f32 1.0, %v2464
  %v2466 = vxor.u32 %v2430, 2147483648
  %v2467 = vxor.u32 %v2431, 2147483648
  %v2468 = vxor.u32 %v2432, 2147483648
  %v2469 = vxor.u32 %v2433, 2147483648
  %v2470 = vmul.f32 %v2466, 1.442695
  %v2471 = vpow.pop %v2470
  %v2472 = vmul.f32 %v2467, 1.442695
  %v2473 = vpow.pop %v2472
  %v2474 = vmul.f32 %v2468, 1.442695
  %v2475 = vpow.pop %v2474
  %v2476 = vmul.f32 %v2469, 1.442695
  %v2477 = vpow.pop %v2476
  %v2478 = vadd.f32 %v2471, 1.0
  %v2479 = vadd.f32 %v2473, 1.0
  %v2480 = vadd.f32 %v2475, 1.0
  %v2481 = vadd.f32 %v2477, 1.0
  %v2482 = vrcp.pop %v2478
  %v2483 = vmul.f32 1.0, %v2482
  %v2484 = vrcp.pop %v2479
  %v2485 = vmul.f32 1.0, %v2484
  %v2486 = vrcp.pop %v2480
  %v2487 = vmul.f32 1.0, %v2486
  %v2488 = vrcp.pop %v2481
  %v2489 = vmul.f32 1.0, %v2488
  %v2490 = vtanh.pop %v2434
  %v2491 = vtanh.pop %v2435
  %v2492 = vtanh.pop %v2436
  %v2493 = vtanh.pop %v2437
  %v2494 = vxor.u32 %v2438, 2147483648
  %v2495 = vxor.u32 %v2439, 2147483648
  %v2496 = vxor.u32 %v2440, 2147483648
  %v2497 = vxor.u32 %v2441, 2147483648
  %v2498 = vmul.f32 %v2494, 1.442695
  %v2499 = vpow.pop %v2498
  %v2500 = vmul.f32 %v2495, 1.442695
  %v2501 = vpow.pop %v2500
  %v2502 = vmul.f32 %v2496, 1.442695
  %v2503 = vpow.pop %v2502
  %v2504 = vmul.f32 %v2497, 1.442695
  %v2505 = vpow.pop %v2504
  %v2506 = vadd.f32 %v2499, 1.0
  %v2507 = vadd.f32 %v2501, 1.0
  %v2508 = vadd.f32 %v2503, 1.0
  %v2509 = vadd.f32 %v2505, 1.0
  %v2510 = vrcp.pop %v2506
  %v2511 = vmul.f32 1.0, %v2510
  %v2512 = vrcp.pop %v2507
  %v2513 = vmul.f32 1.0, %v2512
  %v2514 = vrcp.pop %v2508
  %v2515 = vmul.f32 1.0, %v2514
  %v2516 = vrcp.pop %v2509
  %v2517 = vmul.f32 1.0, %v2516
  %v2518 = vmul.f32 %v2483, %v2114
  %v2519 = vmul.f32 %v2485, %v2115
  %v2520 = vmul.f32 %v2487, %v2116
  %v2521 = vmul.f32 %v2489, %v2117
  %v2522 = vmul.f32 %v2459, %v2490
  %v2523 = vmul.f32 %v2461, %v2491
  %v2524 = vmul.f32 %v2463, %v2492
  %v2525 = vmul.f32 %v2465, %v2493
  %v2526 = vadd.f32 %v2518, %v2522
  %v2527 = vadd.f32 %v2519, %v2523
  %v2528 = vadd.f32 %v2520, %v2524
  %v2529 = vadd.f32 %v2521, %v2525
  %v2530 = vtanh.pop %v2526
  %v2531 = vtanh.pop %v2527
  %v2532 = vtanh.pop %v2528
  %v2533 = vtanh.pop %v2529
  %v2534 = vmul.f32 %v2511, %v2530
  %v2535 = vmul.f32 %v2513, %v2531
  %v2536 = vmul.f32 %v2515, %v2532
  %v2537 = vmul.f32 %v2517, %v2533
  %s2538 = scalar_lea.vmem [#allocation3], 64
  %2539 = vst.msk [vmem:[%s2538] sm:$0xff] %vm1043, %v2534
  %2540 = vst.msk [vmem:[%s2538 + $0x8] sm:$0xff] %vm1043, %v2535
  %2541 = vst.msk [vmem:[%s2538 + $0x10] sm:$0xff] %vm1043, %v2536
  %2542 = vst.msk [vmem:[%s2538 + $0x18] sm:$0xff] %vm1043, %v2537
  %s2543 = scalar_lea.vmem [#allocation2], 96
  %v2544 = vld [vmem:[%s2543] sm:$0xff]
  %v2545 = vld [vmem:[%s2543 + $0x8] sm:$0xff]
  %v2546 = vld [vmem:[%s2543 + $0x10] sm:$0xff]
  %v2547 = vld [vmem:[%s2543 + $0x18] sm:$0xff]
  %2548 = vmatprep.subr.mxu0 0.0
  %2549 = vmatpush1.msra.mxu0 0.0
  %2550 = vmatprep.subr.mxu0 0.0
  %2551 = vmatpush1.msra.mxu0 0.0
  %2552 = vmatprep.subr.mxu0 0.0
  %2553 = vmatpush1.msra.mxu0 0.0
  %2554 = vmatprep.subr.mxu0 0.0
  %2555 = vmatpush1.msra.mxu0 0.0
  %2556 = vmatprep.subr.mxu0 0.0
  %2557 = vmatpush1.msra.mxu0 0.0
  %2558 = vmatprep.subr.mxu0 0.0
  %2559 = vmatpush1.msra.mxu0 0.0
  %2560 = vmatprep.subr.mxu0 0.0
  %2561 = vmatpush1.msra.mxu0 0.0
  %2562 = vmatprep.subr.mxu0 0.0
  %2563 = vmatpush1.msra.mxu0 0.0
  %2564 = vmatprep.subr.mxu0 0.0
  %2565 = vmatpush1.msra.mxu0 0.0
  %2566 = vmatprep.subr.mxu0 0.0
  %2567 = vmatpush1.msra.mxu0 0.0
  %2568 = vmatprep.subr.mxu0 0.0
  %2569 = vmatpush1.msra.mxu0 0.0
  %2570 = vmatprep.subr.mxu0 0.0
  %2571 = vmatpush1.msra.mxu0 0.0
  %2572 = vmatprep.subr.mxu0 0.0
  %2573 = vmatpush1.msra.mxu0 %v2537
  %2574 = vmatprep.subr.mxu0 0.0
  %2575 = vmatpush1.msra.mxu0 %v2536
  %2576 = vmatprep.subr.mxu0 0.0
  %2577 = vmatpush1.msra.mxu0 %v2535
  %2578 = vmatprep.subr.mxu0 0.0
  %2579 = vmatpush1.msra.mxu0 %v2534
  %2580 = vmatprep.subr.mxu0 0.0
  %2581 = vmatpush2.msra.mxu0 0.0
  %2582 = vmatprep.subr.mxu0 0.0
  %2583 = vmatpush2.msra.mxu0 0.0
  %2584 = vmatprep.subr.mxu0 0.0
  %2585 = vmatpush2.msra.mxu0 0.0
  %2586 = vmatprep.subr.mxu0 0.0
  %2587 = vmatpush2.msra.mxu0 0.0
  %2588 = vmatprep.subr.mxu0 0.0
  %2589 = vmatpush2.msra.mxu0 0.0
  %2590 = vmatprep.subr.mxu0 0.0
  %2591 = vmatpush2.msra.mxu0 0.0
  %2592 = vmatprep.subr.mxu0 0.0
  %2593 = vmatpush2.msra.mxu0 0.0
  %2594 = vmatprep.subr.mxu0 0.0
  %2595 = vmatpush2.msra.mxu0 0.0
  %2596 = vmatprep.subr.mxu0 0.0
  %2597 = vmatpush2.msra.mxu0 0.0
  %2598 = vmatprep.subr.mxu0 0.0
  %2599 = vmatpush2.msra.mxu0 0.0
  %2600 = vmatprep.subr.mxu0 0.0
  %2601 = vmatpush2.msra.mxu0 0.0
  %2602 = vmatprep.subr.mxu0 0.0
  %2603 = vmatpush2.msra.mxu0 0.0
  %2604 = vmatprep.subr.mxu0 0.0
  %2605 = vmatpush2.msra.mxu0 0.0
  %2606 = vmatprep.subr.mxu0 0.0
  %2607 = vmatpush2.msra.mxu0 0.0
  %2608 = vmatprep.subr.mxu0 0.0
  %2609 = vmatpush2.msra.mxu0 0.0
  %2610 = vmatprep.subr.mxu0 0.0
  %2611 = vmatpush2.msra.mxu0 0.0
  %2612 = vmatprep.mubr.f32.mxu0 0.0
  %2613 = vmatmul.mubr.f32.gmra.mxu0 %v1218
  %v2614 = vpop.f32.mrf.mxu0
  %v2615 = vadd.f32 0.0, %v2614
  %v2616 = vpop.f32.mrf.mxu0
  %2617 = vmatprep.mubr.f32.mxu0 0.0
  %2618 = vmatmul.mubr.f32.gmra.mxu0 %v1221
  %v2619 = vpop.f32.mrf.mxu0
  %v2620 = vadd.f32 0.0, %v2619
  %v2621 = vpop.f32.mrf.mxu0
  %2622 = vmatprep.mubr.f32.mxu0 0.0
  %2623 = vmatmul.mubr.f32.gmra.mxu0 %v1224
  %v2624 = vpop.f32.mrf.mxu0
  %v2625 = vadd.f32 0.0, %v2624
  %v2626 = vpop.f32.mrf.mxu0
  %2627 = vmatprep.mubr.f32.mxu0 0.0
  %2628 = vmatmul.mubr.f32.gmra.mxu0 %v1227
  %v2629 = vpop.f32.mrf.mxu0
  %v2630 = vadd.f32 0.0, %v2629
  %v2631 = vpop.f32.mrf.mxu0
  %2632 = vmatprep.mubr.f32.mxu0 0.0
  %2633 = vmatmul.mubr.f32.gmra.mxu0 %v1230
  %v2634 = vpop.f32.mrf.mxu0
  %v2635 = vadd.f32 0.0, %v2634
  %v2636 = vpop.f32.mrf.mxu0
  %2637 = vmatprep.mubr.f32.mxu0 0.0
  %2638 = vmatmul.mubr.f32.gmra.mxu0 %v1233
  %v2639 = vpop.f32.mrf.mxu0
  %v2640 = vadd.f32 0.0, %v2639
  %v2641 = vpop.f32.mrf.mxu0
  %2642 = vmatprep.mubr.f32.mxu0 0.0
  %2643 = vmatmul.mubr.f32.gmra.mxu0 %v1236
  %v2644 = vpop.f32.mrf.mxu0
  %v2645 = vadd.f32 0.0, %v2644
  %v2646 = vpop.f32.mrf.mxu0
  %2647 = vmatprep.mubr.f32.mxu0 0.0
  %2648 = vmatmul.mubr.f32.gmra.mxu0 %v1239
  %v2649 = vpop.f32.mrf.mxu0
  %v2650 = vadd.f32 0.0, %v2649
  %v2651 = vpop.f32.mrf.mxu0
  %2652 = vmatprep.mubr.f32.mxu0 0.0
  %2653 = vmatmul.mubr.f32.gmra.mxu0 %v1242
  %v2654 = vpop.f32.mrf.mxu0
  %v2655 = vadd.f32 0.0, %v2654
  %v2656 = vpop.f32.mrf.mxu0
  %2657 = vmatprep.mubr.f32.mxu0 0.0
  %2658 = vmatmul.mubr.f32.gmra.mxu0 %v1245
  %v2659 = vpop.f32.mrf.mxu0
  %v2660 = vadd.f32 0.0, %v2659
  %v2661 = vpop.f32.mrf.mxu0
  %2662 = vmatprep.mubr.f32.mxu0 0.0
  %2663 = vmatmul.mubr.f32.gmra.mxu0 %v1248
  %v2664 = vpop.f32.mrf.mxu0
  %v2665 = vadd.f32 0.0, %v2664
  %v2666 = vpop.f32.mrf.mxu0
  %2667 = vmatprep.mubr.f32.mxu0 0.0
  %2668 = vmatmul.mubr.f32.gmra.mxu0 %v1251
  %v2669 = vpop.f32.mrf.mxu0
  %v2670 = vadd.f32 0.0, %v2669
  %v2671 = vpop.f32.mrf.mxu0
  %2672 = vmatprep.mubr.f32.mxu0 0.0
  %2673 = vmatmul.mubr.f32.gmra.mxu0 %v1254
  %v2674 = vpop.f32.mrf.mxu0
  %v2675 = vadd.f32 0.0, %v2674
  %v2676 = vpop.f32.mrf.mxu0
  %2677 = vmatprep.mubr.f32.mxu0 0.0
  %2678 = vmatmul.mubr.f32.gmra.mxu0 %v1257
  %v2679 = vpop.f32.mrf.mxu0
  %v2680 = vadd.f32 0.0, %v2679
  %v2681 = vpop.f32.mrf.mxu0
  %2682 = vmatprep.mubr.f32.mxu0 0.0
  %2683 = vmatmul.mubr.f32.gmra.mxu0 %v1260
  %v2684 = vpop.f32.mrf.mxu0
  %v2685 = vadd.f32 0.0, %v2684
  %v2686 = vpop.f32.mrf.mxu0
  %2687 = vmatprep.mubr.f32.mxu0 0.0
  %2688 = vmatmul.mubr.f32.gmra.mxu0 %v1263
  %v2689 = vpop.f32.mrf.mxu0
  %v2690 = vadd.f32 0.0, %v2689
  %v2691 = vpop.f32.mrf.mxu0
  %2692 = vdwg.mxu0
  %2693 = vmatprep.subr.mxu0 0.0
  %2694 = vmatpush1.msra.mxu0 0.0
  %2695 = vmatprep.subr.mxu0 0.0
  %2696 = vmatpush1.msra.mxu0 0.0
  %2697 = vmatprep.subr.mxu0 0.0
  %2698 = vmatpush1.msra.mxu0 0.0
  %2699 = vmatprep.subr.mxu0 0.0
  %2700 = vmatpush1.msra.mxu0 0.0
  %2701 = vmatprep.subr.mxu0 0.0
  %2702 = vmatpush1.msra.mxu0 0.0
  %2703 = vmatprep.subr.mxu0 0.0
  %2704 = vmatpush1.msra.mxu0 0.0
  %2705 = vmatprep.subr.mxu0 0.0
  %2706 = vmatpush1.msra.mxu0 0.0
  %2707 = vmatprep.subr.mxu0 0.0
  %2708 = vmatpush1.msra.mxu0 0.0
  %2709 = vmatprep.subr.mxu0 0.0
  %2710 = vmatpush1.msra.mxu0 0.0
  %2711 = vmatprep.subr.mxu0 0.0
  %2712 = vmatpush1.msra.mxu0 0.0
  %2713 = vmatprep.subr.mxu0 0.0
  %2714 = vmatpush1.msra.mxu0 0.0
  %2715 = vmatprep.subr.mxu0 0.0
  %2716 = vmatpush1.msra.mxu0 0.0
  %2717 = vmatprep.subr.mxu0 0.0
  %2718 = vmatpush1.msra.mxu0 %v2547
  %2719 = vmatprep.subr.mxu0 0.0
  %2720 = vmatpush1.msra.mxu0 %v2546
  %2721 = vmatprep.subr.mxu0 0.0
  %2722 = vmatpush1.msra.mxu0 %v2545
  %2723 = vmatprep.subr.mxu0 0.0
  %2724 = vmatpush1.msra.mxu0 %v2544
  %2725 = vmatprep.subr.mxu0 0.0
  %2726 = vmatpush2.msra.mxu0 0.0
  %2727 = vmatprep.subr.mxu0 0.0
  %2728 = vmatpush2.msra.mxu0 0.0
  %2729 = vmatprep.subr.mxu0 0.0
  %2730 = vmatpush2.msra.mxu0 0.0
  %2731 = vmatprep.subr.mxu0 0.0
  %2732 = vmatpush2.msra.mxu0 0.0
  %2733 = vmatprep.subr.mxu0 0.0
  %2734 = vmatpush2.msra.mxu0 0.0
  %2735 = vmatprep.subr.mxu0 0.0
  %2736 = vmatpush2.msra.mxu0 0.0
  %2737 = vmatprep.subr.mxu0 0.0
  %2738 = vmatpush2.msra.mxu0 0.0
  %2739 = vmatprep.subr.mxu0 0.0
  %2740 = vmatpush2.msra.mxu0 0.0
  %2741 = vmatprep.subr.mxu0 0.0
  %2742 = vmatpush2.msra.mxu0 0.0
  %2743 = vmatprep.subr.mxu0 0.0
  %2744 = vmatpush2.msra.mxu0 0.0
  %2745 = vmatprep.subr.mxu0 0.0
  %2746 = vmatpush2.msra.mxu0 0.0
  %2747 = vmatprep.subr.mxu0 0.0
  %2748 = vmatpush2.msra.mxu0 0.0
  %2749 = vmatprep.subr.mxu0 0.0
  %2750 = vmatpush2.msra.mxu0 0.0
  %2751 = vmatprep.subr.mxu0 0.0
  %2752 = vmatpush2.msra.mxu0 0.0
  %2753 = vmatprep.subr.mxu0 0.0
  %2754 = vmatpush2.msra.mxu0 0.0
  %2755 = vmatprep.subr.mxu0 0.0
  %2756 = vmatpush2.msra.mxu0 0.0
  %2757 = vmatprep.mubr.f32.mxu0 0.0
  %2758 = vmatmul.mubr.f32.gmra.mxu0 %v1411
  %v2759 = vpop.f32.mrf.mxu0
  %v2760 = vadd.f32 %v2615, %v2759
  %v2761 = vpop.f32.mrf.mxu0
  %2762 = vmatprep.mubr.f32.mxu0 0.0
  %2763 = vmatmul.mubr.f32.gmra.mxu0 %v1414
  %v2764 = vpop.f32.mrf.mxu0
  %v2765 = vadd.f32 %v2620, %v2764
  %v2766 = vpop.f32.mrf.mxu0
  %2767 = vmatprep.mubr.f32.mxu0 0.0
  %2768 = vmatmul.mubr.f32.gmra.mxu0 %v1417
  %v2769 = vpop.f32.mrf.mxu0
  %v2770 = vadd.f32 %v2625, %v2769
  %v2771 = vpop.f32.mrf.mxu0
  %2772 = vmatprep.mubr.f32.mxu0 0.0
  %2773 = vmatmul.mubr.f32.gmra.mxu0 %v1420
  %v2774 = vpop.f32.mrf.mxu0
  %v2775 = vadd.f32 %v2630, %v2774
  %v2776 = vpop.f32.mrf.mxu0
  %2777 = vmatprep.mubr.f32.mxu0 0.0
  %2778 = vmatmul.mubr.f32.gmra.mxu0 %v1423
  %v2779 = vpop.f32.mrf.mxu0
  %v2780 = vadd.f32 %v2635, %v2779
  %v2781 = vpop.f32.mrf.mxu0
  %2782 = vmatprep.mubr.f32.mxu0 0.0
  %2783 = vmatmul.mubr.f32.gmra.mxu0 %v1426
  %v2784 = vpop.f32.mrf.mxu0
  %v2785 = vadd.f32 %v2640, %v2784
  %v2786 = vpop.f32.mrf.mxu0
  %2787 = vmatprep.mubr.f32.mxu0 0.0
  %2788 = vmatmul.mubr.f32.gmra.mxu0 %v1429
  %v2789 = vpop.f32.mrf.mxu0
  %v2790 = vadd.f32 %v2645, %v2789
  %v2791 = vpop.f32.mrf.mxu0
  %2792 = vmatprep.mubr.f32.mxu0 0.0
  %2793 = vmatmul.mubr.f32.gmra.mxu0 %v1432
  %v2794 = vpop.f32.mrf.mxu0
  %v2795 = vadd.f32 %v2650, %v2794
  %v2796 = vpop.f32.mrf.mxu0
  %2797 = vmatprep.mubr.f32.mxu0 0.0
  %2798 = vmatmul.mubr.f32.gmra.mxu0 %v1435
  %v2799 = vpop.f32.mrf.mxu0
  %v2800 = vadd.f32 %v2655, %v2799
  %v2801 = vpop.f32.mrf.mxu0
  %2802 = vmatprep.mubr.f32.mxu0 0.0
  %2803 = vmatmul.mubr.f32.gmra.mxu0 %v1438
  %v2804 = vpop.f32.mrf.mxu0
  %v2805 = vadd.f32 %v2660, %v2804
  %v2806 = vpop.f32.mrf.mxu0
  %2807 = vmatprep.mubr.f32.mxu0 0.0
  %2808 = vmatmul.mubr.f32.gmra.mxu0 %v1441
  %v2809 = vpop.f32.mrf.mxu0
  %v2810 = vadd.f32 %v2665, %v2809
  %v2811 = vpop.f32.mrf.mxu0
  %2812 = vmatprep.mubr.f32.mxu0 0.0
  %2813 = vmatmul.mubr.f32.gmra.mxu0 %v1444
  %v2814 = vpop.f32.mrf.mxu0
  %v2815 = vadd.f32 %v2670, %v2814
  %v2816 = vpop.f32.mrf.mxu0
  %2817 = vmatprep.mubr.f32.mxu0 0.0
  %2818 = vmatmul.mubr.f32.gmra.mxu0 %v1447
  %v2819 = vpop.f32.mrf.mxu0
  %v2820 = vadd.f32 %v2675, %v2819
  %v2821 = vpop.f32.mrf.mxu0
  %2822 = vmatprep.mubr.f32.mxu0 0.0
  %2823 = vmatmul.mubr.f32.gmra.mxu0 %v1450
  %v2824 = vpop.f32.mrf.mxu0
  %v2825 = vadd.f32 %v2680, %v2824
  %v2826 = vpop.f32.mrf.mxu0
  %2827 = vmatprep.mubr.f32.mxu0 0.0
  %2828 = vmatmul.mubr.f32.gmra.mxu0 %v1453
  %v2829 = vpop.f32.mrf.mxu0
  %v2830 = vadd.f32 %v2685, %v2829
  %v2831 = vpop.f32.mrf.mxu0
  %2832 = vmatprep.mubr.f32.mxu0 0.0
  %2833 = vmatmul.mubr.f32.gmra.mxu0 %v1456
  %v2834 = vpop.f32.mrf.mxu0
  %v2835 = vadd.f32 %v2690, %v2834
  %v2836 = vpop.f32.mrf.mxu0
  %2837 = vdwg.mxu0
  %v2838 = vadd.f32 %v2760, %v1135
  %v2839 = vadd.f32 %v2765, %v1140
  %v2840 = vadd.f32 %v2770, %v1145
  %v2841 = vadd.f32 %v2775, %v1150
  %v2842 = vadd.f32 %v2780, %v1155
  %v2843 = vadd.f32 %v2785, %v1160
  %v2844 = vadd.f32 %v2790, %v1165
  %v2845 = vadd.f32 %v2795, %v1170
  %v2846 = vadd.f32 %v2800, %v1175
  %v2847 = vadd.f32 %v2805, %v1180
  %v2848 = vadd.f32 %v2810, %v1185
  %v2849 = vadd.f32 %v2815, %v1190
  %v2850 = vadd.f32 %v2820, %v1195
  %v2851 = vadd.f32 %v2825, %v1200
  %v2852 = vadd.f32 %v2830, %v1205
  %v2853 = vadd.f32 %v2835, %v1210
  %v2854 = vxor.u32 %v2838, 2147483648
  %v2855 = vxor.u32 %v2839, 2147483648
  %v2856 = vxor.u32 %v2840, 2147483648
  %v2857 = vxor.u32 %v2841, 2147483648
  %v2858 = vmul.f32 %v2854, 1.442695
  %v2859 = vpow.pop %v2858
  %v2860 = vmul.f32 %v2855, 1.442695
  %v2861 = vpow.pop %v2860
  %v2862 = vmul.f32 %v2856, 1.442695
  %v2863 = vpow.pop %v2862
  %v2864 = vmul.f32 %v2857, 1.442695
  %v2865 = vpow.pop %v2864
  %v2866 = vadd.f32 %v2859, 1.0
  %v2867 = vadd.f32 %v2861, 1.0
  %v2868 = vadd.f32 %v2863, 1.0
  %v2869 = vadd.f32 %v2865, 1.0
  %v2870 = vrcp.pop %v2866
  %v2871 = vmul.f32 1.0, %v2870
  %v2872 = vrcp.pop %v2867
  %v2873 = vmul.f32 1.0, %v2872
  %v2874 = vrcp.pop %v2868
  %v2875 = vmul.f32 1.0, %v2874
  %v2876 = vrcp.pop %v2869
  %v2877 = vmul.f32 1.0, %v2876
  %v2878 = vxor.u32 %v2842, 2147483648
  %v2879 = vxor.u32 %v2843, 2147483648
  %v2880 = vxor.u32 %v2844, 2147483648
  %v2881 = vxor.u32 %v2845, 2147483648
  %v2882 = vmul.f32 %v2878, 1.442695
  %v2883 = vpow.pop %v2882
  %v2884 = vmul.f32 %v2879, 1.442695
  %v2885 = vpow.pop %v2884
  %v2886 = vmul.f32 %v2880, 1.442695
  %v2887 = vpow.pop %v2886
  %v2888 = vmul.f32 %v2881, 1.442695
  %v2889 = vpow.pop %v2888
  %v2890 = vadd.f32 %v2883, 1.0
  %v2891 = vadd.f32 %v2885, 1.0
  %v2892 = vadd.f32 %v2887, 1.0
  %v2893 = vadd.f32 %v2889, 1.0
  %v2894 = vrcp.pop %v2890
  %v2895 = vmul.f32 1.0, %v2894
  %v2896 = vrcp.pop %v2891
  %v2897 = vmul.f32 1.0, %v2896
  %v2898 = vrcp.pop %v2892
  %v2899 = vmul.f32 1.0, %v2898
  %v2900 = vrcp.pop %v2893
  %v2901 = vmul.f32 1.0, %v2900
  %v2902 = vtanh.pop %v2846
  %v2903 = vtanh.pop %v2847
  %v2904 = vtanh.pop %v2848
  %v2905 = vtanh.pop %v2849
  %v2906 = vxor.u32 %v2850, 2147483648
  %v2907 = vxor.u32 %v2851, 2147483648
  %v2908 = vxor.u32 %v2852, 2147483648
  %v2909 = vxor.u32 %v2853, 2147483648
  %v2910 = vmul.f32 %v2906, 1.442695
  %v2911 = vpow.pop %v2910
  %v2912 = vmul.f32 %v2907, 1.442695
  %v2913 = vpow.pop %v2912
  %v2914 = vmul.f32 %v2908, 1.442695
  %v2915 = vpow.pop %v2914
  %v2916 = vmul.f32 %v2909, 1.442695
  %v2917 = vpow.pop %v2916
  %v2918 = vadd.f32 %v2911, 1.0
  %v2919 = vadd.f32 %v2913, 1.0
  %v2920 = vadd.f32 %v2915, 1.0
  %v2921 = vadd.f32 %v2917, 1.0
  %v2922 = vrcp.pop %v2918
  %v2923 = vmul.f32 1.0, %v2922
  %v2924 = vrcp.pop %v2919
  %v2925 = vmul.f32 1.0, %v2924
  %v2926 = vrcp.pop %v2920
  %v2927 = vmul.f32 1.0, %v2926
  %v2928 = vrcp.pop %v2921
  %v2929 = vmul.f32 1.0, %v2928
  %v2930 = vmul.f32 %v2895, %v2526
  %v2931 = vmul.f32 %v2897, %v2527
  %v2932 = vmul.f32 %v2899, %v2528
  %v2933 = vmul.f32 %v2901, %v2529
  %v2934 = vmul.f32 %v2871, %v2902
  %v2935 = vmul.f32 %v2873, %v2903
  %v2936 = vmul.f32 %v2875, %v2904
  %v2937 = vmul.f32 %v2877, %v2905
  %v2938 = vadd.f32 %v2930, %v2934
  %v2939 = vadd.f32 %v2931, %v2935
  %v2940 = vadd.f32 %v2932, %v2936
  %v2941 = vadd.f32 %v2933, %v2937
  %v2942 = vtanh.pop %v2938
  %v2943 = vtanh.pop %v2939
  %v2944 = vtanh.pop %v2940
  %v2945 = vtanh.pop %v2941
  %v2946 = vmul.f32 %v2923, %v2942
  %v2947 = vmul.f32 %v2925, %v2943
  %v2948 = vmul.f32 %v2927, %v2944
  %v2949 = vmul.f32 %v2929, %v2945
  %s2950 = scalar_lea.vmem [#allocation3], 96
  %2951 = vst.msk [vmem:[%s2950] sm:$0xff] %vm1043, %v2946
  %2952 = vst.msk [vmem:[%s2950 + $0x8] sm:$0xff] %vm1043, %v2947
  %2953 = vst.msk [vmem:[%s2950 + $0x10] sm:$0xff] %vm1043, %v2948
  %2954 = vst.msk [vmem:[%s2950 + $0x18] sm:$0xff] %vm1043, %v2949
  %s2955 = scalar_lea.vmem [#allocation2], 128
  %v2956 = vld [vmem:[%s2955] sm:$0xff]
  %v2957 = vld [vmem:[%s2955 + $0x8] sm:$0xff]
  %v2958 = vld [vmem:[%s2955 + $0x10] sm:$0xff]
  %v2959 = vld [vmem:[%s2955 + $0x18] sm:$0xff]
  %2960 = vmatprep.subr.mxu0 0.0
  %2961 = vmatpush1.msra.mxu0 0.0
  %2962 = vmatprep.subr.mxu0 0.0
  %2963 = vmatpush1.msra.mxu0 0.0
  %2964 = vmatprep.subr.mxu0 0.0
  %2965 = vmatpush1.msra.mxu0 0.0
  %2966 = vmatprep.subr.mxu0 0.0
  %2967 = vmatpush1.msra.mxu0 0.0
  %2968 = vmatprep.subr.mxu0 0.0
  %2969 = vmatpush1.msra.mxu0 0.0
  %2970 = vmatprep.subr.mxu0 0.0
  %2971 = vmatpush1.msra.mxu0 0.0
  %2972 = vmatprep.subr.mxu0 0.0
  %2973 = vmatpush1.msra.mxu0 0.0
  %2974 = vmatprep.subr.mxu0 0.0
  %2975 = vmatpush1.msra.mxu0 0.0
  %2976 = vmatprep.subr.mxu0 0.0
  %2977 = vmatpush1.msra.mxu0 0.0
  %2978 = vmatprep.subr.mxu0 0.0
  %2979 = vmatpush1.msra.mxu0 0.0
  %2980 = vmatprep.subr.mxu0 0.0
  %2981 = vmatpush1.msra.mxu0 0.0
  %2982 = vmatprep.subr.mxu0 0.0
  %2983 = vmatpush1.msra.mxu0 0.0
  %2984 = vmatprep.subr.mxu0 0.0
  %2985 = vmatpush1.msra.mxu0 %v2949
  %2986 = vmatprep.subr.mxu0 0.0
  %2987 = vmatpush1.msra.mxu0 %v2948
  %2988 = vmatprep.subr.mxu0 0.0
  %2989 = vmatpush1.msra.mxu0 %v2947
  %2990 = vmatprep.subr.mxu0 0.0
  %2991 = vmatpush1.msra.mxu0 %v2946
  %2992 = vmatprep.subr.mxu0 0.0
  %2993 = vmatpush2.msra.mxu0 0.0
  %2994 = vmatprep.subr.mxu0 0.0
  %2995 = vmatpush2.msra.mxu0 0.0
  %2996 = vmatprep.subr.mxu0 0.0
  %2997 = vmatpush2.msra.mxu0 0.0
  %2998 = vmatprep.subr.mxu0 0.0
  %2999 = vmatpush2.msra.mxu0 0.0
  %3000 = vmatprep.subr.mxu0 0.0
  %3001 = vmatpush2.msra.mxu0 0.0
  %3002 = vmatprep.subr.mxu0 0.0
  %3003 = vmatpush2.msra.mxu0 0.0
  %3004 = vmatprep.subr.mxu0 0.0
  %3005 = vmatpush2.msra.mxu0 0.0
  %3006 = vmatprep.subr.mxu0 0.0
  %3007 = vmatpush2.msra.mxu0 0.0
  %3008 = vmatprep.subr.mxu0 0.0
  %3009 = vmatpush2.msra.mxu0 0.0
  %3010 = vmatprep.subr.mxu0 0.0
  %3011 = vmatpush2.msra.mxu0 0.0
  %3012 = vmatprep.subr.mxu0 0.0
  %3013 = vmatpush2.msra.mxu0 0.0
  %3014 = vmatprep.subr.mxu0 0.0
  %3015 = vmatpush2.msra.mxu0 0.0
  %3016 = vmatprep.subr.mxu0 0.0
  %3017 = vmatpush2.msra.mxu0 0.0
  %3018 = vmatprep.subr.mxu0 0.0
  %3019 = vmatpush2.msra.mxu0 0.0
  %3020 = vmatprep.subr.mxu0 0.0
  %3021 = vmatpush2.msra.mxu0 0.0
  %3022 = vmatprep.subr.mxu0 0.0
  %3023 = vmatpush2.msra.mxu0 0.0
  %3024 = vmatprep.mubr.f32.mxu0 0.0
  %3025 = vmatmul.mubr.f32.gmra.mxu0 %v1218
  %v3026 = vpop.f32.mrf.mxu0
  %v3027 = vadd.f32 0.0, %v3026
  %v3028 = vpop.f32.mrf.mxu0
  %3029 = vmatprep.mubr.f32.mxu0 0.0
  %3030 = vmatmul.mubr.f32.gmra.mxu0 %v1221
  %v3031 = vpop.f32.mrf.mxu0
  %v3032 = vadd.f32 0.0, %v3031
  %v3033 = vpop.f32.mrf.mxu0
  %3034 = vmatprep.mubr.f32.mxu0 0.0
  %3035 = vmatmul.mubr.f32.gmra.mxu0 %v1224
  %v3036 = vpop.f32.mrf.mxu0
  %v3037 = vadd.f32 0.0, %v3036
  %v3038 = vpop.f32.mrf.mxu0
  %3039 = vmatprep.mubr.f32.mxu0 0.0
  %3040 = vmatmul.mubr.f32.gmra.mxu0 %v1227
  %v3041 = vpop.f32.mrf.mxu0
  %v3042 = vadd.f32 0.0, %v3041
  %v3043 = vpop.f32.mrf.mxu0
  %3044 = vmatprep.mubr.f32.mxu0 0.0
  %3045 = vmatmul.mubr.f32.gmra.mxu0 %v1230
  %v3046 = vpop.f32.mrf.mxu0
  %v3047 = vadd.f32 0.0, %v3046
  %v3048 = vpop.f32.mrf.mxu0
  %3049 = vmatprep.mubr.f32.mxu0 0.0
  %3050 = vmatmul.mubr.f32.gmra.mxu0 %v1233
  %v3051 = vpop.f32.mrf.mxu0
  %v3052 = vadd.f32 0.0, %v3051
  %v3053 = vpop.f32.mrf.mxu0
  %3054 = vmatprep.mubr.f32.mxu0 0.0
  %3055 = vmatmul.mubr.f32.gmra.mxu0 %v1236
  %v3056 = vpop.f32.mrf.mxu0
  %v3057 = vadd.f32 0.0, %v3056
  %v3058 = vpop.f32.mrf.mxu0
  %3059 = vmatprep.mubr.f32.mxu0 0.0
  %3060 = vmatmul.mubr.f32.gmra.mxu0 %v1239
  %v3061 = vpop.f32.mrf.mxu0
  %v3062 = vadd.f32 0.0, %v3061
  %v3063 = vpop.f32.mrf.mxu0
  %3064 = vmatprep.mubr.f32.mxu0 0.0
  %3065 = vmatmul.mubr.f32.gmra.mxu0 %v1242
  %v3066 = vpop.f32.mrf.mxu0
  %v3067 = vadd.f32 0.0, %v3066
  %v3068 = vpop.f32.mrf.mxu0
  %3069 = vmatprep.mubr.f32.mxu0 0.0
  %3070 = vmatmul.mubr.f32.gmra.mxu0 %v1245
  %v3071 = vpop.f32.mrf.mxu0
  %v3072 = vadd.f32 0.0, %v3071
  %v3073 = vpop.f32.mrf.mxu0
  %3074 = vmatprep.mubr.f32.mxu0 0.0
  %3075 = vmatmul.mubr.f32.gmra.mxu0 %v1248
  %v3076 = vpop.f32.mrf.mxu0
  %v3077 = vadd.f32 0.0, %v3076
  %v3078 = vpop.f32.mrf.mxu0
  %3079 = vmatprep.mubr.f32.mxu0 0.0
  %3080 = vmatmul.mubr.f32.gmra.mxu0 %v1251
  %v3081 = vpop.f32.mrf.mxu0
  %v3082 = vadd.f32 0.0, %v3081
  %v3083 = vpop.f32.mrf.mxu0
  %3084 = vmatprep.mubr.f32.mxu0 0.0
  %3085 = vmatmul.mubr.f32.gmra.mxu0 %v1254
  %v3086 = vpop.f32.mrf.mxu0
  %v3087 = vadd.f32 0.0, %v3086
  %v3088 = vpop.f32.mrf.mxu0
  %3089 = vmatprep.mubr.f32.mxu0 0.0
  %3090 = vmatmul.mubr.f32.gmra.mxu0 %v1257
  %v3091 = vpop.f32.mrf.mxu0
  %v3092 = vadd.f32 0.0, %v3091
  %v3093 = vpop.f32.mrf.mxu0
  %3094 = vmatprep.mubr.f32.mxu0 0.0
  %3095 = vmatmul.mubr.f32.gmra.mxu0 %v1260
  %v3096 = vpop.f32.mrf.mxu0
  %v3097 = vadd.f32 0.0, %v3096
  %v3098 = vpop.f32.mrf.mxu0
  %3099 = vmatprep.mubr.f32.mxu0 0.0
  %3100 = vmatmul.mubr.f32.gmra.mxu0 %v1263
  %v3101 = vpop.f32.mrf.mxu0
  %v3102 = vadd.f32 0.0, %v3101
  %v3103 = vpop.f32.mrf.mxu0
  %3104 = vdwg.mxu0
  %3105 = vmatprep.subr.mxu0 0.0
  %3106 = vmatpush1.msra.mxu0 0.0
  %3107 = vmatprep.subr.mxu0 0.0
  %3108 = vmatpush1.msra.mxu0 0.0
  %3109 = vmatprep.subr.mxu0 0.0
  %3110 = vmatpush1.msra.mxu0 0.0
  %3111 = vmatprep.subr.mxu0 0.0
  %3112 = vmatpush1.msra.mxu0 0.0
  %3113 = vmatprep.subr.mxu0 0.0
  %3114 = vmatpush1.msra.mxu0 0.0
  %3115 = vmatprep.subr.mxu0 0.0
  %3116 = vmatpush1.msra.mxu0 0.0
  %3117 = vmatprep.subr.mxu0 0.0
  %3118 = vmatpush1.msra.mxu0 0.0
  %3119 = vmatprep.subr.mxu0 0.0
  %3120 = vmatpush1.msra.mxu0 0.0
  %3121 = vmatprep.subr.mxu0 0.0
  %3122 = vmatpush1.msra.mxu0 0.0
  %3123 = vmatprep.subr.mxu0 0.0
  %3124 = vmatpush1.msra.mxu0 0.0
  %3125 = vmatprep.subr.mxu0 0.0
  %3126 = vmatpush1.msra.mxu0 0.0
  %3127 = vmatprep.subr.mxu0 0.0
  %3128 = vmatpush1.msra.mxu0 0.0
  %3129 = vmatprep.subr.mxu0 0.0
  %3130 = vmatpush1.msra.mxu0 %v2959
  %3131 = vmatprep.subr.mxu0 0.0
  %3132 = vmatpush1.msra.mxu0 %v2958
  %3133 = vmatprep.subr.mxu0 0.0
  %3134 = vmatpush1.msra.mxu0 %v2957
  %3135 = vmatprep.subr.mxu0 0.0
  %3136 = vmatpush1.msra.mxu0 %v2956
  %3137 = vmatprep.subr.mxu0 0.0
  %3138 = vmatpush2.msra.mxu0 0.0
  %3139 = vmatprep.subr.mxu0 0.0
  %3140 = vmatpush2.msra.mxu0 0.0
  %3141 = vmatprep.subr.mxu0 0.0
  %3142 = vmatpush2.msra.mxu0 0.0
  %3143 = vmatprep.subr.mxu0 0.0
  %3144 = vmatpush2.msra.mxu0 0.0
  %3145 = vmatprep.subr.mxu0 0.0
  %3146 = vmatpush2.msra.mxu0 0.0
  %3147 = vmatprep.subr.mxu0 0.0
  %3148 = vmatpush2.msra.mxu0 0.0
  %3149 = vmatprep.subr.mxu0 0.0
  %3150 = vmatpush2.msra.mxu0 0.0
  %3151 = vmatprep.subr.mxu0 0.0
  %3152 = vmatpush2.msra.mxu0 0.0
  %3153 = vmatprep.subr.mxu0 0.0
  %3154 = vmatpush2.msra.mxu0 0.0
  %3155 = vmatprep.subr.mxu0 0.0
  %3156 = vmatpush2.msra.mxu0 0.0
  %3157 = vmatprep.subr.mxu0 0.0
  %3158 = vmatpush2.msra.mxu0 0.0
  %3159 = vmatprep.subr.mxu0 0.0
  %3160 = vmatpush2.msra.mxu0 0.0
  %3161 = vmatprep.subr.mxu0 0.0
  %3162 = vmatpush2.msra.mxu0 0.0
  %3163 = vmatprep.subr.mxu0 0.0
  %3164 = vmatpush2.msra.mxu0 0.0
  %3165 = vmatprep.subr.mxu0 0.0
  %3166 = vmatpush2.msra.mxu0 0.0
  %3167 = vmatprep.subr.mxu0 0.0
  %3168 = vmatpush2.msra.mxu0 0.0
  %3169 = vmatprep.mubr.f32.mxu0 0.0
  %3170 = vmatmul.mubr.f32.gmra.mxu0 %v1411
  %v3171 = vpop.f32.mrf.mxu0
  %v3172 = vadd.f32 %v3027, %v3171
  %v3173 = vpop.f32.mrf.mxu0
  %3174 = vmatprep.mubr.f32.mxu0 0.0
  %3175 = vmatmul.mubr.f32.gmra.mxu0 %v1414
  %v3176 = vpop.f32.mrf.mxu0
  %v3177 = vadd.f32 %v3032, %v3176
  %v3178 = vpop.f32.mrf.mxu0
  %3179 = vmatprep.mubr.f32.mxu0 0.0
  %3180 = vmatmul.mubr.f32.gmra.mxu0 %v1417
  %v3181 = vpop.f32.mrf.mxu0
  %v3182 = vadd.f32 %v3037, %v3181
  %v3183 = vpop.f32.mrf.mxu0
  %3184 = vmatprep.mubr.f32.mxu0 0.0
  %3185 = vmatmul.mubr.f32.gmra.mxu0 %v1420
  %v3186 = vpop.f32.mrf.mxu0
  %v3187 = vadd.f32 %v3042, %v3186
  %v3188 = vpop.f32.mrf.mxu0
  %3189 = vmatprep.mubr.f32.mxu0 0.0
  %3190 = vmatmul.mubr.f32.gmra.mxu0 %v1423
  %v3191 = vpop.f32.mrf.mxu0
  %v3192 = vadd.f32 %v3047, %v3191
  %v3193 = vpop.f32.mrf.mxu0
  %3194 = vmatprep.mubr.f32.mxu0 0.0
  %3195 = vmatmul.mubr.f32.gmra.mxu0 %v1426
  %v3196 = vpop.f32.mrf.mxu0
  %v3197 = vadd.f32 %v3052, %v3196
  %v3198 = vpop.f32.mrf.mxu0
  %3199 = vmatprep.mubr.f32.mxu0 0.0
  %3200 = vmatmul.mubr.f32.gmra.mxu0 %v1429
  %v3201 = vpop.f32.mrf.mxu0
  %v3202 = vadd.f32 %v3057, %v3201
  %v3203 = vpop.f32.mrf.mxu0
  %3204 = vmatprep.mubr.f32.mxu0 0.0
  %3205 = vmatmul.mubr.f32.gmra.mxu0 %v1432
  %v3206 = vpop.f32.mrf.mxu0
  %v3207 = vadd.f32 %v3062, %v3206
  %v3208 = vpop.f32.mrf.mxu0
  %3209 = vmatprep.mubr.f32.mxu0 0.0
  %3210 = vmatmul.mubr.f32.gmra.mxu0 %v1435
  %v3211 = vpop.f32.mrf.mxu0
  %v3212 = vadd.f32 %v3067, %v3211
  %v3213 = vpop.f32.mrf.mxu0
  %3214 = vmatprep.mubr.f32.mxu0 0.0
  %3215 = vmatmul.mubr.f32.gmra.mxu0 %v1438
  %v3216 = vpop.f32.mrf.mxu0
  %v3217 = vadd.f32 %v3072, %v3216
  %v3218 = vpop.f32.mrf.mxu0
  %3219 = vmatprep.mubr.f32.mxu0 0.0
  %3220 = vmatmul.mubr.f32.gmra.mxu0 %v1441
  %v3221 = vpop.f32.mrf.mxu0
  %v3222 = vadd.f32 %v3077, %v3221
  %v3223 = vpop.f32.mrf.mxu0
  %3224 = vmatprep.mubr.f32.mxu0 0.0
  %3225 = vmatmul.mubr.f32.gmra.mxu0 %v1444
  %v3226 = vpop.f32.mrf.mxu0
  %v3227 = vadd.f32 %v3082, %v3226
  %v3228 = vpop.f32.mrf.mxu0
  %3229 = vmatprep.mubr.f32.mxu0 0.0
  %3230 = vmatmul.mubr.f32.gmra.mxu0 %v1447
  %v3231 = vpop.f32.mrf.mxu0
  %v3232 = vadd.f32 %v3087, %v3231
  %v3233 = vpop.f32.mrf.mxu0
  %3234 = vmatprep.mubr.f32.mxu0 0.0
  %3235 = vmatmul.mubr.f32.gmra.mxu0 %v1450
  %v3236 = vpop.f32.mrf.mxu0
  %v3237 = vadd.f32 %v3092, %v3236
  %v3238 = vpop.f32.mrf.mxu0
  %3239 = vmatprep.mubr.f32.mxu0 0.0
  %3240 = vmatmul.mubr.f32.gmra.mxu0 %v1453
  %v3241 = vpop.f32.mrf.mxu0
  %v3242 = vadd.f32 %v3097, %v3241
  %v3243 = vpop.f32.mrf.mxu0
  %3244 = vmatprep.mubr.f32.mxu0 0.0
  %3245 = vmatmul.mubr.f32.gmra.mxu0 %v1456
  %v3246 = vpop.f32.mrf.mxu0
  %v3247 = vadd.f32 %v3102, %v3246
  %v3248 = vpop.f32.mrf.mxu0
  %3249 = vdwg.mxu0
  %v3250 = vadd.f32 %v3172, %v1135
  %v3251 = vadd.f32 %v3177, %v1140
  %v3252 = vadd.f32 %v3182, %v1145
  %v3253 = vadd.f32 %v3187, %v1150
  %v3254 = vadd.f32 %v3192, %v1155
  %v3255 = vadd.f32 %v3197, %v1160
  %v3256 = vadd.f32 %v3202, %v1165
  %v3257 = vadd.f32 %v3207, %v1170
  %v3258 = vadd.f32 %v3212, %v1175
  %v3259 = vadd.f32 %v3217, %v1180
  %v3260 = vadd.f32 %v3222, %v1185
  %v3261 = vadd.f32 %v3227, %v1190
  %v3262 = vadd.f32 %v3232, %v1195
  %v3263 = vadd.f32 %v3237, %v1200
  %v3264 = vadd.f32 %v3242, %v1205
  %v3265 = vadd.f32 %v3247, %v1210
  %v3266 = vxor.u32 %v3250, 2147483648
  %v3267 = vxor.u32 %v3251, 2147483648
  %v3268 = vxor.u32 %v3252, 2147483648
  %v3269 = vxor.u32 %v3253, 2147483648
  %v3270 = vmul.f32 %v3266, 1.442695
  %v3271 = vpow.pop %v3270
  %v3272 = vmul.f32 %v3267, 1.442695
  %v3273 = vpow.pop %v3272
  %v3274 = vmul.f32 %v3268, 1.442695
  %v3275 = vpow.pop %v3274
  %v3276 = vmul.f32 %v3269, 1.442695
  %v3277 = vpow.pop %v3276
  %v3278 = vadd.f32 %v3271, 1.0
  %v3279 = vadd.f32 %v3273, 1.0
  %v3280 = vadd.f32 %v3275, 1.0
  %v3281 = vadd.f32 %v3277, 1.0
  %v3282 = vrcp.pop %v3278
  %v3283 = vmul.f32 1.0, %v3282
  %v3284 = vrcp.pop %v3279
  %v3285 = vmul.f32 1.0, %v3284
  %v3286 = vrcp.pop %v3280
  %v3287 = vmul.f32 1.0, %v3286
  %v3288 = vrcp.pop %v3281
  %v3289 = vmul.f32 1.0, %v3288
  %v3290 = vxor.u32 %v3254, 2147483648
  %v3291 = vxor.u32 %v3255, 2147483648
  %v3292 = vxor.u32 %v3256, 2147483648
  %v3293 = vxor.u32 %v3257, 2147483648
  %v3294 = vmul.f32 %v3290, 1.442695
  %v3295 = vpow.pop %v3294
  %v3296 = vmul.f32 %v3291, 1.442695
  %v3297 = vpow.pop %v3296
  %v3298 = vmul.f32 %v3292, 1.442695
  %v3299 = vpow.pop %v3298
  %v3300 = vmul.f32 %v3293, 1.442695
  %v3301 = vpow.pop %v3300
  %v3302 = vadd.f32 %v3295, 1.0
  %v3303 = vadd.f32 %v3297, 1.0
  %v3304 = vadd.f32 %v3299, 1.0
  %v3305 = vadd.f32 %v3301, 1.0
  %v3306 = vrcp.pop %v3302
  %v3307 = vmul.f32 1.0, %v3306
  %v3308 = vrcp.pop %v3303
  %v3309 = vmul.f32 1.0, %v3308
  %v3310 = vrcp.pop %v3304
  %v3311 = vmul.f32 1.0, %v3310
  %v3312 = vrcp.pop %v3305
  %v3313 = vmul.f32 1.0, %v3312
  %v3314 = vtanh.pop %v3258
  %v3315 = vtanh.pop %v3259
  %v3316 = vtanh.pop %v3260
  %v3317 = vtanh.pop %v3261
  %v3318 = vxor.u32 %v3262, 2147483648
  %v3319 = vxor.u32 %v3263, 2147483648
  %v3320 = vxor.u32 %v3264, 2147483648
  %v3321 = vxor.u32 %v3265, 2147483648
  %v3322 = vmul.f32 %v3318, 1.442695
  %v3323 = vpow.pop %v3322
  %v3324 = vmul.f32 %v3319, 1.442695
  %v3325 = vpow.pop %v3324
  %v3326 = vmul.f32 %v3320, 1.442695
  %v3327 = vpow.pop %v3326
  %v3328 = vmul.f32 %v3321, 1.442695
  %v3329 = vpow.pop %v3328
  %v3330 = vadd.f32 %v3323, 1.0
  %v3331 = vadd.f32 %v3325, 1.0
  %v3332 = vadd.f32 %v3327, 1.0
  %v3333 = vadd.f32 %v3329, 1.0
  %v3334 = vrcp.pop %v3330
  %v3335 = vmul.f32 1.0, %v3334
  %v3336 = vrcp.pop %v3331
  %v3337 = vmul.f32 1.0, %v3336
  %v3338 = vrcp.pop %v3332
  %v3339 = vmul.f32 1.0, %v3338
  %v3340 = vrcp.pop %v3333
  %v3341 = vmul.f32 1.0, %v3340
  %v3342 = vmul.f32 %v3307, %v2938
  %v3343 = vmul.f32 %v3309, %v2939
  %v3344 = vmul.f32 %v3311, %v2940
  %v3345 = vmul.f32 %v3313, %v2941
  %v3346 = vmul.f32 %v3283, %v3314
  %v3347 = vmul.f32 %v3285, %v3315
  %v3348 = vmul.f32 %v3287, %v3316
  %v3349 = vmul.f32 %v3289, %v3317
  %v3350 = vadd.f32 %v3342, %v3346
  %v3351 = vadd.f32 %v3343, %v3347
  %v3352 = vadd.f32 %v3344, %v3348
  %v3353 = vadd.f32 %v3345, %v3349
  %v3354 = vtanh.pop %v3350
  %v3355 = vtanh.pop %v3351
  %v3356 = vtanh.pop %v3352
  %v3357 = vtanh.pop %v3353
  %v3358 = vmul.f32 %v3335, %v3354
  %v3359 = vmul.f32 %v3337, %v3355
  %v3360 = vmul.f32 %v3339, %v3356
  %v3361 = vmul.f32 %v3341, %v3357
  %s3362 = scalar_lea.vmem [#allocation3], 128
  %3363 = vst.msk [vmem:[%s3362] sm:$0xff] %vm1043, %v3358
  %3364 = vst.msk [vmem:[%s3362 + $0x8] sm:$0xff] %vm1043, %v3359
  %3365 = vst.msk [vmem:[%s3362 + $0x10] sm:$0xff] %vm1043, %v3360
  %3366 = vst.msk [vmem:[%s3362 + $0x18] sm:$0xff] %vm1043, %v3361
  %s3367 = scalar_lea.vmem [#allocation2], 160
  %v3368 = vld [vmem:[%s3367] sm:$0xff]
  %v3369 = vld [vmem:[%s3367 + $0x8] sm:$0xff]
  %v3370 = vld [vmem:[%s3367 + $0x10] sm:$0xff]
  %v3371 = vld [vmem:[%s3367 + $0x18] sm:$0xff]
  %3372 = vmatprep.subr.mxu0 0.0
  %3373 = vmatpush1.msra.mxu0 0.0
  %3374 = vmatprep.subr.mxu0 0.0
  %3375 = vmatpush1.msra.mxu0 0.0
  %3376 = vmatprep.subr.mxu0 0.0
  %3377 = vmatpush1.msra.mxu0 0.0
  %3378 = vmatprep.subr.mxu0 0.0
  %3379 = vmatpush1.msra.mxu0 0.0
  %3380 = vmatprep.subr.mxu0 0.0
  %3381 = vmatpush1.msra.mxu0 0.0
  %3382 = vmatprep.subr.mxu0 0.0
  %3383 = vmatpush1.msra.mxu0 0.0
  %3384 = vmatprep.subr.mxu0 0.0
  %3385 = vmatpush1.msra.mxu0 0.0
  %3386 = vmatprep.subr.mxu0 0.0
  %3387 = vmatpush1.msra.mxu0 0.0
  %3388 = vmatprep.subr.mxu0 0.0
  %3389 = vmatpush1.msra.mxu0 0.0
  %3390 = vmatprep.subr.mxu0 0.0
  %3391 = vmatpush1.msra.mxu0 0.0
  %3392 = vmatprep.subr.mxu0 0.0
  %3393 = vmatpush1.msra.mxu0 0.0
  %3394 = vmatprep.subr.mxu0 0.0
  %3395 = vmatpush1.msra.mxu0 0.0
  %3396 = vmatprep.subr.mxu0 0.0
  %3397 = vmatpush1.msra.mxu0 %v3361
  %3398 = vmatprep.subr.mxu0 0.0
  %3399 = vmatpush1.msra.mxu0 %v3360
  %3400 = vmatprep.subr.mxu0 0.0
  %3401 = vmatpush1.msra.mxu0 %v3359
  %3402 = vmatprep.subr.mxu0 0.0
  %3403 = vmatpush1.msra.mxu0 %v3358
  %3404 = vmatprep.subr.mxu0 0.0
  %3405 = vmatpush2.msra.mxu0 0.0
  %3406 = vmatprep.subr.mxu0 0.0
  %3407 = vmatpush2.msra.mxu0 0.0
  %3408 = vmatprep.subr.mxu0 0.0
  %3409 = vmatpush2.msra.mxu0 0.0
  %3410 = vmatprep.subr.mxu0 0.0
  %3411 = vmatpush2.msra.mxu0 0.0
  %3412 = vmatprep.subr.mxu0 0.0
  %3413 = vmatpush2.msra.mxu0 0.0
  %3414 = vmatprep.subr.mxu0 0.0
  %3415 = vmatpush2.msra.mxu0 0.0
  %3416 = vmatprep.subr.mxu0 0.0
  %3417 = vmatpush2.msra.mxu0 0.0
  %3418 = vmatprep.subr.mxu0 0.0
  %3419 = vmatpush2.msra.mxu0 0.0
  %3420 = vmatprep.subr.mxu0 0.0
  %3421 = vmatpush2.msra.mxu0 0.0
  %3422 = vmatprep.subr.mxu0 0.0
  %3423 = vmatpush2.msra.mxu0 0.0
  %3424 = vmatprep.subr.mxu0 0.0
  %3425 = vmatpush2.msra.mxu0 0.0
  %3426 = vmatprep.subr.mxu0 0.0
  %3427 = vmatpush2.msra.mxu0 0.0
  %3428 = vmatprep.subr.mxu0 0.0
  %3429 = vmatpush2.msra.mxu0 0.0
  %3430 = vmatprep.subr.mxu0 0.0
  %3431 = vmatpush2.msra.mxu0 0.0
  %3432 = vmatprep.subr.mxu0 0.0
  %3433 = vmatpush2.msra.mxu0 0.0
  %3434 = vmatprep.subr.mxu0 0.0
  %3435 = vmatpush2.msra.mxu0 0.0
  %3436 = vmatprep.mubr.f32.mxu0 0.0
  %3437 = vmatmul.mubr.f32.gmra.mxu0 %v1218
  %v3438 = vpop.f32.mrf.mxu0
  %v3439 = vadd.f32 0.0, %v3438
  %v3440 = vpop.f32.mrf.mxu0
  %3441 = vmatprep.mubr.f32.mxu0 0.0
  %3442 = vmatmul.mubr.f32.gmra.mxu0 %v1221
  %v3443 = vpop.f32.mrf.mxu0
  %v3444 = vadd.f32 0.0, %v3443
  %v3445 = vpop.f32.mrf.mxu0
  %3446 = vmatprep.mubr.f32.mxu0 0.0
  %3447 = vmatmul.mubr.f32.gmra.mxu0 %v1224
  %v3448 = vpop.f32.mrf.mxu0
  %v3449 = vadd.f32 0.0, %v3448
  %v3450 = vpop.f32.mrf.mxu0
  %3451 = vmatprep.mubr.f32.mxu0 0.0
  %3452 = vmatmul.mubr.f32.gmra.mxu0 %v1227
  %v3453 = vpop.f32.mrf.mxu0
  %v3454 = vadd.f32 0.0, %v3453
  %v3455 = vpop.f32.mrf.mxu0
  %3456 = vmatprep.mubr.f32.mxu0 0.0
  %3457 = vmatmul.mubr.f32.gmra.mxu0 %v1230
  %v3458 = vpop.f32.mrf.mxu0
  %v3459 = vadd.f32 0.0, %v3458
  %v3460 = vpop.f32.mrf.mxu0
  %3461 = vmatprep.mubr.f32.mxu0 0.0
  %3462 = vmatmul.mubr.f32.gmra.mxu0 %v1233
  %v3463 = vpop.f32.mrf.mxu0
  %v3464 = vadd.f32 0.0, %v3463
  %v3465 = vpop.f32.mrf.mxu0
  %3466 = vmatprep.mubr.f32.mxu0 0.0
  %3467 = vmatmul.mubr.f32.gmra.mxu0 %v1236
  %v3468 = vpop.f32.mrf.mxu0
  %v3469 = vadd.f32 0.0, %v3468
  %v3470 = vpop.f32.mrf.mxu0
  %3471 = vmatprep.mubr.f32.mxu0 0.0
  %3472 = vmatmul.mubr.f32.gmra.mxu0 %v1239
  %v3473 = vpop.f32.mrf.mxu0
  %v3474 = vadd.f32 0.0, %v3473
  %v3475 = vpop.f32.mrf.mxu0
  %3476 = vmatprep.mubr.f32.mxu0 0.0
  %3477 = vmatmul.mubr.f32.gmra.mxu0 %v1242
  %v3478 = vpop.f32.mrf.mxu0
  %v3479 = vadd.f32 0.0, %v3478
  %v3480 = vpop.f32.mrf.mxu0
  %3481 = vmatprep.mubr.f32.mxu0 0.0
  %3482 = vmatmul.mubr.f32.gmra.mxu0 %v1245
  %v3483 = vpop.f32.mrf.mxu0
  %v3484 = vadd.f32 0.0, %v3483
  %v3485 = vpop.f32.mrf.mxu0
  %3486 = vmatprep.mubr.f32.mxu0 0.0
  %3487 = vmatmul.mubr.f32.gmra.mxu0 %v1248
  %v3488 = vpop.f32.mrf.mxu0
  %v3489 = vadd.f32 0.0, %v3488
  %v3490 = vpop.f32.mrf.mxu0
  %3491 = vmatprep.mubr.f32.mxu0 0.0
  %3492 = vmatmul.mubr.f32.gmra.mxu0 %v1251
  %v3493 = vpop.f32.mrf.mxu0
  %v3494 = vadd.f32 0.0, %v3493
  %v3495 = vpop.f32.mrf.mxu0
  %3496 = vmatprep.mubr.f32.mxu0 0.0
  %3497 = vmatmul.mubr.f32.gmra.mxu0 %v1254
  %v3498 = vpop.f32.mrf.mxu0
  %v3499 = vadd.f32 0.0, %v3498
  %v3500 = vpop.f32.mrf.mxu0
  %3501 = vmatprep.mubr.f32.mxu0 0.0
  %3502 = vmatmul.mubr.f32.gmra.mxu0 %v1257
  %v3503 = vpop.f32.mrf.mxu0
  %v3504 = vadd.f32 0.0, %v3503
  %v3505 = vpop.f32.mrf.mxu0
  %3506 = vmatprep.mubr.f32.mxu0 0.0
  %3507 = vmatmul.mubr.f32.gmra.mxu0 %v1260
  %v3508 = vpop.f32.mrf.mxu0
  %v3509 = vadd.f32 0.0, %v3508
  %v3510 = vpop.f32.mrf.mxu0
  %3511 = vmatprep.mubr.f32.mxu0 0.0
  %3512 = vmatmul.mubr.f32.gmra.mxu0 %v1263
  %v3513 = vpop.f32.mrf.mxu0
  %v3514 = vadd.f32 0.0, %v3513
  %v3515 = vpop.f32.mrf.mxu0
  %3516 = vdwg.mxu0
  %3517 = vmatprep.subr.mxu0 0.0
  %3518 = vmatpush1.msra.mxu0 0.0
  %3519 = vmatprep.subr.mxu0 0.0
  %3520 = vmatpush1.msra.mxu0 0.0
  %3521 = vmatprep.subr.mxu0 0.0
  %3522 = vmatpush1.msra.mxu0 0.0
  %3523 = vmatprep.subr.mxu0 0.0
  %3524 = vmatpush1.msra.mxu0 0.0
  %3525 = vmatprep.subr.mxu0 0.0
  %3526 = vmatpush1.msra.mxu0 0.0
  %3527 = vmatprep.subr.mxu0 0.0
  %3528 = vmatpush1.msra.mxu0 0.0
  %3529 = vmatprep.subr.mxu0 0.0
  %3530 = vmatpush1.msra.mxu0 0.0
  %3531 = vmatprep.subr.mxu0 0.0
  %3532 = vmatpush1.msra.mxu0 0.0
  %3533 = vmatprep.subr.mxu0 0.0
  %3534 = vmatpush1.msra.mxu0 0.0
  %3535 = vmatprep.subr.mxu0 0.0
  %3536 = vmatpush1.msra.mxu0 0.0
  %3537 = vmatprep.subr.mxu0 0.0
  %3538 = vmatpush1.msra.mxu0 0.0
  %3539 = vmatprep.subr.mxu0 0.0
  %3540 = vmatpush1.msra.mxu0 0.0
  %3541 = vmatprep.subr.mxu0 0.0
  %3542 = vmatpush1.msra.mxu0 %v3371
  %3543 = vmatprep.subr.mxu0 0.0
  %3544 = vmatpush1.msra.mxu0 %v3370
  %3545 = vmatprep.subr.mxu0 0.0
  %3546 = vmatpush1.msra.mxu0 %v3369
  %3547 = vmatprep.subr.mxu0 0.0
  %3548 = vmatpush1.msra.mxu0 %v3368
  %3549 = vmatprep.subr.mxu0 0.0
  %3550 = vmatpush2.msra.mxu0 0.0
  %3551 = vmatprep.subr.mxu0 0.0
  %3552 = vmatpush2.msra.mxu0 0.0
  %3553 = vmatprep.subr.mxu0 0.0
  %3554 = vmatpush2.msra.mxu0 0.0
  %3555 = vmatprep.subr.mxu0 0.0
  %3556 = vmatpush2.msra.mxu0 0.0
  %3557 = vmatprep.subr.mxu0 0.0
  %3558 = vmatpush2.msra.mxu0 0.0
  %3559 = vmatprep.subr.mxu0 0.0
  %3560 = vmatpush2.msra.mxu0 0.0
  %3561 = vmatprep.subr.mxu0 0.0
  %3562 = vmatpush2.msra.mxu0 0.0
  %3563 = vmatprep.subr.mxu0 0.0
  %3564 = vmatpush2.msra.mxu0 0.0
  %3565 = vmatprep.subr.mxu0 0.0
  %3566 = vmatpush2.msra.mxu0 0.0
  %3567 = vmatprep.subr.mxu0 0.0
  %3568 = vmatpush2.msra.mxu0 0.0
  %3569 = vmatprep.subr.mxu0 0.0
  %3570 = vmatpush2.msra.mxu0 0.0
  %3571 = vmatprep.subr.mxu0 0.0
  %3572 = vmatpush2.msra.mxu0 0.0
  %3573 = vmatprep.subr.mxu0 0.0
  %3574 = vmatpush2.msra.mxu0 0.0
  %3575 = vmatprep.subr.mxu0 0.0
  %3576 = vmatpush2.msra.mxu0 0.0
  %3577 = vmatprep.subr.mxu0 0.0
  %3578 = vmatpush2.msra.mxu0 0.0
  %3579 = vmatprep.subr.mxu0 0.0
  %3580 = vmatpush2.msra.mxu0 0.0
  %3581 = vmatprep.mubr.f32.mxu0 0.0
  %3582 = vmatmul.mubr.f32.gmra.mxu0 %v1411
  %v3583 = vpop.f32.mrf.mxu0
  %v3584 = vadd.f32 %v3439, %v3583
  %v3585 = vpop.f32.mrf.mxu0
  %3586 = vmatprep.mubr.f32.mxu0 0.0
  %3587 = vmatmul.mubr.f32.gmra.mxu0 %v1414
  %v3588 = vpop.f32.mrf.mxu0
  %v3589 = vadd.f32 %v3444, %v3588
  %v3590 = vpop.f32.mrf.mxu0
  %3591 = vmatprep.mubr.f32.mxu0 0.0
  %3592 = vmatmul.mubr.f32.gmra.mxu0 %v1417
  %v3593 = vpop.f32.mrf.mxu0
  %v3594 = vadd.f32 %v3449, %v3593
  %v3595 = vpop.f32.mrf.mxu0
  %3596 = vmatprep.mubr.f32.mxu0 0.0
  %3597 = vmatmul.mubr.f32.gmra.mxu0 %v1420
  %v3598 = vpop.f32.mrf.mxu0
  %v3599 = vadd.f32 %v3454, %v3598
  %v3600 = vpop.f32.mrf.mxu0
  %3601 = vmatprep.mubr.f32.mxu0 0.0
  %3602 = vmatmul.mubr.f32.gmra.mxu0 %v1423
  %v3603 = vpop.f32.mrf.mxu0
  %v3604 = vadd.f32 %v3459, %v3603
  %v3605 = vpop.f32.mrf.mxu0
  %3606 = vmatprep.mubr.f32.mxu0 0.0
  %3607 = vmatmul.mubr.f32.gmra.mxu0 %v1426
  %v3608 = vpop.f32.mrf.mxu0
  %v3609 = vadd.f32 %v3464, %v3608
  %v3610 = vpop.f32.mrf.mxu0
  %3611 = vmatprep.mubr.f32.mxu0 0.0
  %3612 = vmatmul.mubr.f32.gmra.mxu0 %v1429
  %v3613 = vpop.f32.mrf.mxu0
  %v3614 = vadd.f32 %v3469, %v3613
  %v3615 = vpop.f32.mrf.mxu0
  %3616 = vmatprep.mubr.f32.mxu0 0.0
  %3617 = vmatmul.mubr.f32.gmra.mxu0 %v1432
  %v3618 = vpop.f32.mrf.mxu0
  %v3619 = vadd.f32 %v3474, %v3618
  %v3620 = vpop.f32.mrf.mxu0
  %3621 = vmatprep.mubr.f32.mxu0 0.0
  %3622 = vmatmul.mubr.f32.gmra.mxu0 %v1435
  %v3623 = vpop.f32.mrf.mxu0
  %v3624 = vadd.f32 %v3479, %v3623
  %v3625 = vpop.f32.mrf.mxu0
  %3626 = vmatprep.mubr.f32.mxu0 0.0
  %3627 = vmatmul.mubr.f32.gmra.mxu0 %v1438
  %v3628 = vpop.f32.mrf.mxu0
  %v3629 = vadd.f32 %v3484, %v3628
  %v3630 = vpop.f32.mrf.mxu0
  %3631 = vmatprep.mubr.f32.mxu0 0.0
  %3632 = vmatmul.mubr.f32.gmra.mxu0 %v1441
  %v3633 = vpop.f32.mrf.mxu0
  %v3634 = vadd.f32 %v3489, %v3633
  %v3635 = vpop.f32.mrf.mxu0
  %3636 = vmatprep.mubr.f32.mxu0 0.0
  %3637 = vmatmul.mubr.f32.gmra.mxu0 %v1444
  %v3638 = vpop.f32.mrf.mxu0
  %v3639 = vadd.f32 %v3494, %v3638
  %v3640 = vpop.f32.mrf.mxu0
  %3641 = vmatprep.mubr.f32.mxu0 0.0
  %3642 = vmatmul.mubr.f32.gmra.mxu0 %v1447
  %v3643 = vpop.f32.mrf.mxu0
  %v3644 = vadd.f32 %v3499, %v3643
  %v3645 = vpop.f32.mrf.mxu0
  %3646 = vmatprep.mubr.f32.mxu0 0.0
  %3647 = vmatmul.mubr.f32.gmra.mxu0 %v1450
  %v3648 = vpop.f32.mrf.mxu0
  %v3649 = vadd.f32 %v3504, %v3648
  %v3650 = vpop.f32.mrf.mxu0
  %3651 = vmatprep.mubr.f32.mxu0 0.0
  %3652 = vmatmul.mubr.f32.gmra.mxu0 %v1453
  %v3653 = vpop.f32.mrf.mxu0
  %v3654 = vadd.f32 %v3509, %v3653
  %v3655 = vpop.f32.mrf.mxu0
  %3656 = vmatprep.mubr.f32.mxu0 0.0
  %3657 = vmatmul.mubr.f32.gmra.mxu0 %v1456
  %v3658 = vpop.f32.mrf.mxu0
  %v3659 = vadd.f32 %v3514, %v3658
  %v3660 = vpop.f32.mrf.mxu0
  %3661 = vdwg.mxu0
  %v3662 = vadd.f32 %v3584, %v1135
  %v3663 = vadd.f32 %v3589, %v1140
  %v3664 = vadd.f32 %v3594, %v1145
  %v3665 = vadd.f32 %v3599, %v1150
  %v3666 = vadd.f32 %v3604, %v1155
  %v3667 = vadd.f32 %v3609, %v1160
  %v3668 = vadd.f32 %v3614, %v1165
  %v3669 = vadd.f32 %v3619, %v1170
  %v3670 = vadd.f32 %v3624, %v1175
  %v3671 = vadd.f32 %v3629, %v1180
  %v3672 = vadd.f32 %v3634, %v1185
  %v3673 = vadd.f32 %v3639, %v1190
  %v3674 = vadd.f32 %v3644, %v1195
  %v3675 = vadd.f32 %v3649, %v1200
  %v3676 = vadd.f32 %v3654, %v1205
  %v3677 = vadd.f32 %v3659, %v1210
  %v3678 = vxor.u32 %v3662, 2147483648
  %v3679 = vxor.u32 %v3663, 2147483648
  %v3680 = vxor.u32 %v3664, 2147483648
  %v3681 = vxor.u32 %v3665, 2147483648
  %v3682 = vmul.f32 %v3678, 1.442695
  %v3683 = vpow.pop %v3682
  %v3684 = vmul.f32 %v3679, 1.442695
  %v3685 = vpow.pop %v3684
  %v3686 = vmul.f32 %v3680, 1.442695
  %v3687 = vpow.pop %v3686
  %v3688 = vmul.f32 %v3681, 1.442695
  %v3689 = vpow.pop %v3688
  %v3690 = vadd.f32 %v3683, 1.0
  %v3691 = vadd.f32 %v3685, 1.0
  %v3692 = vadd.f32 %v3687, 1.0
  %v3693 = vadd.f32 %v3689, 1.0
  %v3694 = vrcp.pop %v3690
  %v3695 = vmul.f32 1.0, %v3694
  %v3696 = vrcp.pop %v3691
  %v3697 = vmul.f32 1.0, %v3696
  %v3698 = vrcp.pop %v3692
  %v3699 = vmul.f32 1.0, %v3698
  %v3700 = vrcp.pop %v3693
  %v3701 = vmul.f32 1.0, %v3700
  %v3702 = vxor.u32 %v3666, 2147483648
  %v3703 = vxor.u32 %v3667, 2147483648
  %v3704 = vxor.u32 %v3668, 2147483648
  %v3705 = vxor.u32 %v3669, 2147483648
  %v3706 = vmul.f32 %v3702, 1.442695
  %v3707 = vpow.pop %v3706
  %v3708 = vmul.f32 %v3703, 1.442695
  %v3709 = vpow.pop %v3708
  %v3710 = vmul.f32 %v3704, 1.442695
  %v3711 = vpow.pop %v3710
  %v3712 = vmul.f32 %v3705, 1.442695
  %v3713 = vpow.pop %v3712
  %v3714 = vadd.f32 %v3707, 1.0
  %v3715 = vadd.f32 %v3709, 1.0
  %v3716 = vadd.f32 %v3711, 1.0
  %v3717 = vadd.f32 %v3713, 1.0
  %v3718 = vrcp.pop %v3714
  %v3719 = vmul.f32 1.0, %v3718
  %v3720 = vrcp.pop %v3715
  %v3721 = vmul.f32 1.0, %v3720
  %v3722 = vrcp.pop %v3716
  %v3723 = vmul.f32 1.0, %v3722
  %v3724 = vrcp.pop %v3717
  %v3725 = vmul.f32 1.0, %v3724
  %v3726 = vtanh.pop %v3670
  %v3727 = vtanh.pop %v3671
  %v3728 = vtanh.pop %v3672
  %v3729 = vtanh.pop %v3673
  %v3730 = vxor.u32 %v3674, 2147483648
  %v3731 = vxor.u32 %v3675, 2147483648
  %v3732 = vxor.u32 %v3676, 2147483648
  %v3733 = vxor.u32 %v3677, 2147483648
  %v3734 = vmul.f32 %v3730, 1.442695
  %v3735 = vpow.pop %v3734
  %v3736 = vmul.f32 %v3731, 1.442695
  %v3737 = vpow.pop %v3736
  %v3738 = vmul.f32 %v3732, 1.442695
  %v3739 = vpow.pop %v3738
  %v3740 = vmul.f32 %v3733, 1.442695
  %v3741 = vpow.pop %v3740
  %v3742 = vadd.f32 %v3735, 1.0
  %v3743 = vadd.f32 %v3737, 1.0
  %v3744 = vadd.f32 %v3739, 1.0
  %v3745 = vadd.f32 %v3741, 1.0
  %v3746 = vrcp.pop %v3742
  %v3747 = vmul.f32 1.0, %v3746
  %v3748 = vrcp.pop %v3743
  %v3749 = vmul.f32 1.0, %v3748
  %v3750 = vrcp.pop %v3744
  %v3751 = vmul.f32 1.0, %v3750
  %v3752 = vrcp.pop %v3745
  %v3753 = vmul.f32 1.0, %v3752
  %v3754 = vmul.f32 %v3719, %v3350
  %v3755 = vmul.f32 %v3721, %v3351
  %v3756 = vmul.f32 %v3723, %v3352
  %v3757 = vmul.f32 %v3725, %v3353
  %v3758 = vmul.f32 %v3695, %v3726
  %v3759 = vmul.f32 %v3697, %v3727
  %v3760 = vmul.f32 %v3699, %v3728
  %v3761 = vmul.f32 %v3701, %v3729
  %v3762 = vadd.f32 %v3754, %v3758
  %v3763 = vadd.f32 %v3755, %v3759
  %v3764 = vadd.f32 %v3756, %v3760
  %v3765 = vadd.f32 %v3757, %v3761
  %v3766 = vtanh.pop %v3762
  %v3767 = vtanh.pop %v3763
  %v3768 = vtanh.pop %v3764
  %v3769 = vtanh.pop %v3765
  %v3770 = vmul.f32 %v3747, %v3766
  %v3771 = vmul.f32 %v3749, %v3767
  %v3772 = vmul.f32 %v3751, %v3768
  %v3773 = vmul.f32 %v3753, %v3769
  %s3774 = scalar_lea.vmem [#allocation3], 160
  %3775 = vst.msk [vmem:[%s3774] sm:$0xff] %vm1043, %v3770
  %3776 = vst.msk [vmem:[%s3774 + $0x8] sm:$0xff] %vm1043, %v3771
  %3777 = vst.msk [vmem:[%s3774 + $0x10] sm:$0xff] %vm1043, %v3772
  %3778 = vst.msk [vmem:[%s3774 + $0x18] sm:$0xff] %vm1043, %v3773
  %s3779 = scalar_lea.vmem [#allocation2], 192
  %v3780 = vld [vmem:[%s3779] sm:$0xff]
  %v3781 = vld [vmem:[%s3779 + $0x8] sm:$0xff]
  %v3782 = vld [vmem:[%s3779 + $0x10] sm:$0xff]
  %v3783 = vld [vmem:[%s3779 + $0x18] sm:$0xff]
  %3784 = vmatprep.subr.mxu0 0.0
  %3785 = vmatpush1.msra.mxu0 0.0
  %3786 = vmatprep.subr.mxu0 0.0
  %3787 = vmatpush1.msra.mxu0 0.0
  %3788 = vmatprep.subr.mxu0 0.0
  %3789 = vmatpush1.msra.mxu0 0.0
  %3790 = vmatprep.subr.mxu0 0.0
  %3791 = vmatpush1.msra.mxu0 0.0
  %3792 = vmatprep.subr.mxu0 0.0
  %3793 = vmatpush1.msra.mxu0 0.0
  %3794 = vmatprep.subr.mxu0 0.0
  %3795 = vmatpush1.msra.mxu0 0.0
  %3796 = vmatprep.subr.mxu0 0.0
  %3797 = vmatpush1.msra.mxu0 0.0
  %3798 = vmatprep.subr.mxu0 0.0
  %3799 = vmatpush1.msra.mxu0 0.0
  %3800 = vmatprep.subr.mxu0 0.0
  %3801 = vmatpush1.msra.mxu0 0.0
  %3802 = vmatprep.subr.mxu0 0.0
  %3803 = vmatpush1.msra.mxu0 0.0
  %3804 = vmatprep.subr.mxu0 0.0
  %3805 = vmatpush1.msra.mxu0 0.0
  %3806 = vmatprep.subr.mxu0 0.0
  %3807 = vmatpush1.msra.mxu0 0.0
  %3808 = vmatprep.subr.mxu0 0.0
  %3809 = vmatpush1.msra.mxu0 %v3773
  %3810 = vmatprep.subr.mxu0 0.0
  %3811 = vmatpush1.msra.mxu0 %v3772
  %3812 = vmatprep.subr.mxu0 0.0
  %3813 = vmatpush1.msra.mxu0 %v3771
  %3814 = vmatprep.subr.mxu0 0.0
  %3815 = vmatpush1.msra.mxu0 %v3770
  %3816 = vmatprep.subr.mxu0 0.0
  %3817 = vmatpush2.msra.mxu0 0.0
  %3818 = vmatprep.subr.mxu0 0.0
  %3819 = vmatpush2.msra.mxu0 0.0
  %3820 = vmatprep.subr.mxu0 0.0
  %3821 = vmatpush2.msra.mxu0 0.0
  %3822 = vmatprep.subr.mxu0 0.0
  %3823 = vmatpush2.msra.mxu0 0.0
  %3824 = vmatprep.subr.mxu0 0.0
  %3825 = vmatpush2.msra.mxu0 0.0
  %3826 = vmatprep.subr.mxu0 0.0
  %3827 = vmatpush2.msra.mxu0 0.0
  %3828 = vmatprep.subr.mxu0 0.0
  %3829 = vmatpush2.msra.mxu0 0.0
  %3830 = vmatprep.subr.mxu0 0.0
  %3831 = vmatpush2.msra.mxu0 0.0
  %3832 = vmatprep.subr.mxu0 0.0
  %3833 = vmatpush2.msra.mxu0 0.0
  %3834 = vmatprep.subr.mxu0 0.0
  %3835 = vmatpush2.msra.mxu0 0.0
  %3836 = vmatprep.subr.mxu0 0.0
  %3837 = vmatpush2.msra.mxu0 0.0
  %3838 = vmatprep.subr.mxu0 0.0
  %3839 = vmatpush2.msra.mxu0 0.0
  %3840 = vmatprep.subr.mxu0 0.0
  %3841 = vmatpush2.msra.mxu0 0.0
  %3842 = vmatprep.subr.mxu0 0.0
  %3843 = vmatpush2.msra.mxu0 0.0
  %3844 = vmatprep.subr.mxu0 0.0
  %3845 = vmatpush2.msra.mxu0 0.0
  %3846 = vmatprep.subr.mxu0 0.0
  %3847 = vmatpush2.msra.mxu0 0.0
  %3848 = vmatprep.mubr.f32.mxu0 0.0
  %3849 = vmatmul.mubr.f32.gmra.mxu0 %v1218
  %v3850 = vpop.f32.mrf.mxu0
  %v3851 = vadd.f32 0.0, %v3850
  %v3852 = vpop.f32.mrf.mxu0
  %3853 = vmatprep.mubr.f32.mxu0 0.0
  %3854 = vmatmul.mubr.f32.gmra.mxu0 %v1221
  %v3855 = vpop.f32.mrf.mxu0
  %v3856 = vadd.f32 0.0, %v3855
  %v3857 = vpop.f32.mrf.mxu0
  %3858 = vmatprep.mubr.f32.mxu0 0.0
  %3859 = vmatmul.mubr.f32.gmra.mxu0 %v1224
  %v3860 = vpop.f32.mrf.mxu0
  %v3861 = vadd.f32 0.0, %v3860
  %v3862 = vpop.f32.mrf.mxu0
  %3863 = vmatprep.mubr.f32.mxu0 0.0
  %3864 = vmatmul.mubr.f32.gmra.mxu0 %v1227
  %v3865 = vpop.f32.mrf.mxu0
  %v3866 = vadd.f32 0.0, %v3865
  %v3867 = vpop.f32.mrf.mxu0
  %3868 = vmatprep.mubr.f32.mxu0 0.0
  %3869 = vmatmul.mubr.f32.gmra.mxu0 %v1230
  %v3870 = vpop.f32.mrf.mxu0
  %v3871 = vadd.f32 0.0, %v3870
  %v3872 = vpop.f32.mrf.mxu0
  %3873 = vmatprep.mubr.f32.mxu0 0.0
  %3874 = vmatmul.mubr.f32.gmra.mxu0 %v1233
  %v3875 = vpop.f32.mrf.mxu0
  %v3876 = vadd.f32 0.0, %v3875
  %v3877 = vpop.f32.mrf.mxu0
  %3878 = vmatprep.mubr.f32.mxu0 0.0
  %3879 = vmatmul.mubr.f32.gmra.mxu0 %v1236
  %v3880 = vpop.f32.mrf.mxu0
  %v3881 = vadd.f32 0.0, %v3880
  %v3882 = vpop.f32.mrf.mxu0
  %3883 = vmatprep.mubr.f32.mxu0 0.0
  %3884 = vmatmul.mubr.f32.gmra.mxu0 %v1239
  %v3885 = vpop.f32.mrf.mxu0
  %v3886 = vadd.f32 0.0, %v3885
  %v3887 = vpop.f32.mrf.mxu0
  %3888 = vmatprep.mubr.f32.mxu0 0.0
  %3889 = vmatmul.mubr.f32.gmra.mxu0 %v1242
  %v3890 = vpop.f32.mrf.mxu0
  %v3891 = vadd.f32 0.0, %v3890
  %v3892 = vpop.f32.mrf.mxu0
  %3893 = vmatprep.mubr.f32.mxu0 0.0
  %3894 = vmatmul.mubr.f32.gmra.mxu0 %v1245
  %v3895 = vpop.f32.mrf.mxu0
  %v3896 = vadd.f32 0.0, %v3895
  %v3897 = vpop.f32.mrf.mxu0
  %3898 = vmatprep.mubr.f32.mxu0 0.0
  %3899 = vmatmul.mubr.f32.gmra.mxu0 %v1248
  %v3900 = vpop.f32.mrf.mxu0
  %v3901 = vadd.f32 0.0, %v3900
  %v3902 = vpop.f32.mrf.mxu0
  %3903 = vmatprep.mubr.f32.mxu0 0.0
  %3904 = vmatmul.mubr.f32.gmra.mxu0 %v1251
  %v3905 = vpop.f32.mrf.mxu0
  %v3906 = vadd.f32 0.0, %v3905
  %v3907 = vpop.f32.mrf.mxu0
  %3908 = vmatprep.mubr.f32.mxu0 0.0
  %3909 = vmatmul.mubr.f32.gmra.mxu0 %v1254
  %v3910 = vpop.f32.mrf.mxu0
  %v3911 = vadd.f32 0.0, %v3910
  %v3912 = vpop.f32.mrf.mxu0
  %3913 = vmatprep.mubr.f32.mxu0 0.0
  %3914 = vmatmul.mubr.f32.gmra.mxu0 %v1257
  %v3915 = vpop.f32.mrf.mxu0
  %v3916 = vadd.f32 0.0, %v3915
  %v3917 = vpop.f32.mrf.mxu0
  %3918 = vmatprep.mubr.f32.mxu0 0.0
  %3919 = vmatmul.mubr.f32.gmra.mxu0 %v1260
  %v3920 = vpop.f32.mrf.mxu0
  %v3921 = vadd.f32 0.0, %v3920
  %v3922 = vpop.f32.mrf.mxu0
  %3923 = vmatprep.mubr.f32.mxu0 0.0
  %3924 = vmatmul.mubr.f32.gmra.mxu0 %v1263
  %v3925 = vpop.f32.mrf.mxu0
  %v3926 = vadd.f32 0.0, %v3925
  %v3927 = vpop.f32.mrf.mxu0
  %3928 = vdwg.mxu0
  %3929 = vmatprep.subr.mxu0 0.0
  %3930 = vmatpush1.msra.mxu0 0.0
  %3931 = vmatprep.subr.mxu0 0.0
  %3932 = vmatpush1.msra.mxu0 0.0
  %3933 = vmatprep.subr.mxu0 0.0
  %3934 = vmatpush1.msra.mxu0 0.0
  %3935 = vmatprep.subr.mxu0 0.0
  %3936 = vmatpush1.msra.mxu0 0.0
  %3937 = vmatprep.subr.mxu0 0.0
  %3938 = vmatpush1.msra.mxu0 0.0
  %3939 = vmatprep.subr.mxu0 0.0
  %3940 = vmatpush1.msra.mxu0 0.0
  %3941 = vmatprep.subr.mxu0 0.0
  %3942 = vmatpush1.msra.mxu0 0.0
  %3943 = vmatprep.subr.mxu0 0.0
  %3944 = vmatpush1.msra.mxu0 0.0
  %3945 = vmatprep.subr.mxu0 0.0
  %3946 = vmatpush1.msra.mxu0 0.0
  %3947 = vmatprep.subr.mxu0 0.0
  %3948 = vmatpush1.msra.mxu0 0.0
  %3949 = vmatprep.subr.mxu0 0.0
  %3950 = vmatpush1.msra.mxu0 0.0
  %3951 = vmatprep.subr.mxu0 0.0
  %3952 = vmatpush1.msra.mxu0 0.0
  %3953 = vmatprep.subr.mxu0 0.0
  %3954 = vmatpush1.msra.mxu0 %v3783
  %3955 = vmatprep.subr.mxu0 0.0
  %3956 = vmatpush1.msra.mxu0 %v3782
  %3957 = vmatprep.subr.mxu0 0.0
  %3958 = vmatpush1.msra.mxu0 %v3781
  %3959 = vmatprep.subr.mxu0 0.0
  %3960 = vmatpush1.msra.mxu0 %v3780
  %3961 = vmatprep.subr.mxu0 0.0
  %3962 = vmatpush2.msra.mxu0 0.0
  %3963 = vmatprep.subr.mxu0 0.0
  %3964 = vmatpush2.msra.mxu0 0.0
  %3965 = vmatprep.subr.mxu0 0.0
  %3966 = vmatpush2.msra.mxu0 0.0
  %3967 = vmatprep.subr.mxu0 0.0
  %3968 = vmatpush2.msra.mxu0 0.0
  %3969 = vmatprep.subr.mxu0 0.0
  %3970 = vmatpush2.msra.mxu0 0.0
  %3971 = vmatprep.subr.mxu0 0.0
  %3972 = vmatpush2.msra.mxu0 0.0
  %3973 = vmatprep.subr.mxu0 0.0
  %3974 = vmatpush2.msra.mxu0 0.0
  %3975 = vmatprep.subr.mxu0 0.0
  %3976 = vmatpush2.msra.mxu0 0.0
  %3977 = vmatprep.subr.mxu0 0.0
  %3978 = vmatpush2.msra.mxu0 0.0
  %3979 = vmatprep.subr.mxu0 0.0
  %3980 = vmatpush2.msra.mxu0 0.0
  %3981 = vmatprep.subr.mxu0 0.0
  %3982 = vmatpush2.msra.mxu0 0.0
  %3983 = vmatprep.subr.mxu0 0.0
  %3984 = vmatpush2.msra.mxu0 0.0
  %3985 = vmatprep.subr.mxu0 0.0
  %3986 = vmatpush2.msra.mxu0 0.0
  %3987 = vmatprep.subr.mxu0 0.0
  %3988 = vmatpush2.msra.mxu0 0.0
  %3989 = vmatprep.subr.mxu0 0.0
  %3990 = vmatpush2.msra.mxu0 0.0
  %3991 = vmatprep.subr.mxu0 0.0
  %3992 = vmatpush2.msra.mxu0 0.0
  %3993 = vmatprep.mubr.f32.mxu0 0.0
  %3994 = vmatmul.mubr.f32.gmra.mxu0 %v1411
  %v3995 = vpop.f32.mrf.mxu0
  %v3996 = vadd.f32 %v3851, %v3995
  %v3997 = vpop.f32.mrf.mxu0
  %3998 = vmatprep.mubr.f32.mxu0 0.0
  %3999 = vmatmul.mubr.f32.gmra.mxu0 %v1414
  %v4000 = vpop.f32.mrf.mxu0
  %v4001 = vadd.f32 %v3856, %v4000
  %v4002 = vpop.f32.mrf.mxu0
  %4003 = vmatprep.mubr.f32.mxu0 0.0
  %4004 = vmatmul.mubr.f32.gmra.mxu0 %v1417
  %v4005 = vpop.f32.mrf.mxu0
  %v4006 = vadd.f32 %v3861, %v4005
  %v4007 = vpop.f32.mrf.mxu0
  %4008 = vmatprep.mubr.f32.mxu0 0.0
  %4009 = vmatmul.mubr.f32.gmra.mxu0 %v1420
  %v4010 = vpop.f32.mrf.mxu0
  %v4011 = vadd.f32 %v3866, %v4010
  %v4012 = vpop.f32.mrf.mxu0
  %4013 = vmatprep.mubr.f32.mxu0 0.0
  %4014 = vmatmul.mubr.f32.gmra.mxu0 %v1423
  %v4015 = vpop.f32.mrf.mxu0
  %v4016 = vadd.f32 %v3871, %v4015
  %v4017 = vpop.f32.mrf.mxu0
  %4018 = vmatprep.mubr.f32.mxu0 0.0
  %4019 = vmatmul.mubr.f32.gmra.mxu0 %v1426
  %v4020 = vpop.f32.mrf.mxu0
  %v4021 = vadd.f32 %v3876, %v4020
  %v4022 = vpop.f32.mrf.mxu0
  %4023 = vmatprep.mubr.f32.mxu0 0.0
  %4024 = vmatmul.mubr.f32.gmra.mxu0 %v1429
  %v4025 = vpop.f32.mrf.mxu0
  %v4026 = vadd.f32 %v3881, %v4025
  %v4027 = vpop.f32.mrf.mxu0
  %4028 = vmatprep.mubr.f32.mxu0 0.0
  %4029 = vmatmul.mubr.f32.gmra.mxu0 %v1432
  %v4030 = vpop.f32.mrf.mxu0
  %v4031 = vadd.f32 %v3886, %v4030
  %v4032 = vpop.f32.mrf.mxu0
  %4033 = vmatprep.mubr.f32.mxu0 0.0
  %4034 = vmatmul.mubr.f32.gmra.mxu0 %v1435
  %v4035 = vpop.f32.mrf.mxu0
  %v4036 = vadd.f32 %v3891, %v4035
  %v4037 = vpop.f32.mrf.mxu0
  %4038 = vmatprep.mubr.f32.mxu0 0.0
  %4039 = vmatmul.mubr.f32.gmra.mxu0 %v1438
  %v4040 = vpop.f32.mrf.mxu0
  %v4041 = vadd.f32 %v3896, %v4040
  %v4042 = vpop.f32.mrf.mxu0
  %4043 = vmatprep.mubr.f32.mxu0 0.0
  %4044 = vmatmul.mubr.f32.gmra.mxu0 %v1441
  %v4045 = vpop.f32.mrf.mxu0
  %v4046 = vadd.f32 %v3901, %v4045
  %v4047 = vpop.f32.mrf.mxu0
  %4048 = vmatprep.mubr.f32.mxu0 0.0
  %4049 = vmatmul.mubr.f32.gmra.mxu0 %v1444
  %v4050 = vpop.f32.mrf.mxu0
  %v4051 = vadd.f32 %v3906, %v4050
  %v4052 = vpop.f32.mrf.mxu0
  %4053 = vmatprep.mubr.f32.mxu0 0.0
  %4054 = vmatmul.mubr.f32.gmra.mxu0 %v1447
  %v4055 = vpop.f32.mrf.mxu0
  %v4056 = vadd.f32 %v3911, %v4055
  %v4057 = vpop.f32.mrf.mxu0
  %4058 = vmatprep.mubr.f32.mxu0 0.0
  %4059 = vmatmul.mubr.f32.gmra.mxu0 %v1450
  %v4060 = vpop.f32.mrf.mxu0
  %v4061 = vadd.f32 %v3916, %v4060
  %v4062 = vpop.f32.mrf.mxu0
  %4063 = vmatprep.mubr.f32.mxu0 0.0
  %4064 = vmatmul.mubr.f32.gmra.mxu0 %v1453
  %v4065 = vpop.f32.mrf.mxu0
  %v4066 = vadd.f32 %v3921, %v4065
  %v4067 = vpop.f32.mrf.mxu0
  %4068 = vmatprep.mubr.f32.mxu0 0.0
  %4069 = vmatmul.mubr.f32.gmra.mxu0 %v1456
  %v4070 = vpop.f32.mrf.mxu0
  %v4071 = vadd.f32 %v3926, %v4070
  %v4072 = vpop.f32.mrf.mxu0
  %4073 = vdwg.mxu0
  %v4074 = vadd.f32 %v3996, %v1135
  %v4075 = vadd.f32 %v4001, %v1140
  %v4076 = vadd.f32 %v4006, %v1145
  %v4077 = vadd.f32 %v4011, %v1150
  %v4078 = vadd.f32 %v4016, %v1155
  %v4079 = vadd.f32 %v4021, %v1160
  %v4080 = vadd.f32 %v4026, %v1165
  %v4081 = vadd.f32 %v4031, %v1170
  %v4082 = vadd.f32 %v4036, %v1175
  %v4083 = vadd.f32 %v4041, %v1180
  %v4084 = vadd.f32 %v4046, %v1185
  %v4085 = vadd.f32 %v4051, %v1190
  %v4086 = vadd.f32 %v4056, %v1195
  %v4087 = vadd.f32 %v4061, %v1200
  %v4088 = vadd.f32 %v4066, %v1205
  %v4089 = vadd.f32 %v4071, %v1210
  %v4090 = vxor.u32 %v4074, 2147483648
  %v4091 = vxor.u32 %v4075, 2147483648
  %v4092 = vxor.u32 %v4076, 2147483648
  %v4093 = vxor.u32 %v4077, 2147483648
  %v4094 = vmul.f32 %v4090, 1.442695
  %v4095 = vpow.pop %v4094
  %v4096 = vmul.f32 %v4091, 1.442695
  %v4097 = vpow.pop %v4096
  %v4098 = vmul.f32 %v4092, 1.442695
  %v4099 = vpow.pop %v4098
  %v4100 = vmul.f32 %v4093, 1.442695
  %v4101 = vpow.pop %v4100
  %v4102 = vadd.f32 %v4095, 1.0
  %v4103 = vadd.f32 %v4097, 1.0
  %v4104 = vadd.f32 %v4099, 1.0
  %v4105 = vadd.f32 %v4101, 1.0
  %v4106 = vrcp.pop %v4102
  %v4107 = vmul.f32 1.0, %v4106
  %v4108 = vrcp.pop %v4103
  %v4109 = vmul.f32 1.0, %v4108
  %v4110 = vrcp.pop %v4104
  %v4111 = vmul.f32 1.0, %v4110
  %v4112 = vrcp.pop %v4105
  %v4113 = vmul.f32 1.0, %v4112
  %v4114 = vxor.u32 %v4078, 2147483648
  %v4115 = vxor.u32 %v4079, 2147483648
  %v4116 = vxor.u32 %v4080, 2147483648
  %v4117 = vxor.u32 %v4081, 2147483648
  %v4118 = vmul.f32 %v4114, 1.442695
  %v4119 = vpow.pop %v4118
  %v4120 = vmul.f32 %v4115, 1.442695
  %v4121 = vpow.pop %v4120
  %v4122 = vmul.f32 %v4116, 1.442695
  %v4123 = vpow.pop %v4122
  %v4124 = vmul.f32 %v4117, 1.442695
  %v4125 = vpow.pop %v4124
  %v4126 = vadd.f32 %v4119, 1.0
  %v4127 = vadd.f32 %v4121, 1.0
  %v4128 = vadd.f32 %v4123, 1.0
  %v4129 = vadd.f32 %v4125, 1.0
  %v4130 = vrcp.pop %v4126
  %v4131 = vmul.f32 1.0, %v4130
  %v4132 = vrcp.pop %v4127
  %v4133 = vmul.f32 1.0, %v4132
  %v4134 = vrcp.pop %v4128
  %v4135 = vmul.f32 1.0, %v4134
  %v4136 = vrcp.pop %v4129
  %v4137 = vmul.f32 1.0, %v4136
  %v4138 = vtanh.pop %v4082
  %v4139 = vtanh.pop %v4083
  %v4140 = vtanh.pop %v4084
  %v4141 = vtanh.pop %v4085
  %v4142 = vxor.u32 %v4086, 2147483648
  %v4143 = vxor.u32 %v4087, 2147483648
  %v4144 = vxor.u32 %v4088, 2147483648
  %v4145 = vxor.u32 %v4089, 2147483648
  %v4146 = vmul.f32 %v4142, 1.442695
  %v4147 = vpow.pop %v4146
  %v4148 = vmul.f32 %v4143, 1.442695
  %v4149 = vpow.pop %v4148
  %v4150 = vmul.f32 %v4144, 1.442695
  %v4151 = vpow.pop %v4150
  %v4152 = vmul.f32 %v4145, 1.442695
  %v4153 = vpow.pop %v4152
  %v4154 = vadd.f32 %v4147, 1.0
  %v4155 = vadd.f32 %v4149, 1.0
  %v4156 = vadd.f32 %v4151, 1.0
  %v4157 = vadd.f32 %v4153, 1.0
  %v4158 = vrcp.pop %v4154
  %v4159 = vmul.f32 1.0, %v4158
  %v4160 = vrcp.pop %v4155
  %v4161 = vmul.f32 1.0, %v4160
  %v4162 = vrcp.pop %v4156
  %v4163 = vmul.f32 1.0, %v4162
  %v4164 = vrcp.pop %v4157
  %v4165 = vmul.f32 1.0, %v4164
  %v4166 = vmul.f32 %v4131, %v3762
  %v4167 = vmul.f32 %v4133, %v3763
  %v4168 = vmul.f32 %v4135, %v3764
  %v4169 = vmul.f32 %v4137, %v3765
  %v4170 = vmul.f32 %v4107, %v4138
  %v4171 = vmul.f32 %v4109, %v4139
  %v4172 = vmul.f32 %v4111, %v4140
  %v4173 = vmul.f32 %v4113, %v4141
  %v4174 = vadd.f32 %v4166, %v4170
  %v4175 = vadd.f32 %v4167, %v4171
  %v4176 = vadd.f32 %v4168, %v4172
  %v4177 = vadd.f32 %v4169, %v4173
  %v4178 = vtanh.pop %v4174
  %v4179 = vtanh.pop %v4175
  %v4180 = vtanh.pop %v4176
  %v4181 = vtanh.pop %v4177
  %v4182 = vmul.f32 %v4159, %v4178
  %v4183 = vmul.f32 %v4161, %v4179
  %v4184 = vmul.f32 %v4163, %v4180
  %v4185 = vmul.f32 %v4165, %v4181
  %s4186 = scalar_lea.vmem [#allocation3], 192
  %4187 = vst.msk [vmem:[%s4186] sm:$0xff] %vm1043, %v4182
  %4188 = vst.msk [vmem:[%s4186 + $0x8] sm:$0xff] %vm1043, %v4183
  %4189 = vst.msk [vmem:[%s4186 + $0x10] sm:$0xff] %vm1043, %v4184
  %4190 = vst.msk [vmem:[%s4186 + $0x18] sm:$0xff] %vm1043, %v4185
  %s4191 = scalar_lea.vmem [#allocation2], 224
  %v4192 = vld [vmem:[%s4191] sm:$0xff]
  %v4193 = vld [vmem:[%s4191 + $0x8] sm:$0xff]
  %v4194 = vld [vmem:[%s4191 + $0x10] sm:$0xff]
  %v4195 = vld [vmem:[%s4191 + $0x18] sm:$0xff]
  %4196 = vmatprep.subr.mxu0 0.0
  %4197 = vmatpush1.msra.mxu0 0.0
  %4198 = vmatprep.subr.mxu0 0.0
  %4199 = vmatpush1.msra.mxu0 0.0
  %4200 = vmatprep.subr.mxu0 0.0
  %4201 = vmatpush1.msra.mxu0 0.0
  %4202 = vmatprep.subr.mxu0 0.0
  %4203 = vmatpush1.msra.mxu0 0.0
  %4204 = vmatprep.subr.mxu0 0.0
  %4205 = vmatpush1.msra.mxu0 0.0
  %4206 = vmatprep.subr.mxu0 0.0
  %4207 = vmatpush1.msra.mxu0 0.0
  %4208 = vmatprep.subr.mxu0 0.0
  %4209 = vmatpush1.msra.mxu0 0.0
  %4210 = vmatprep.subr.mxu0 0.0
  %4211 = vmatpush1.msra.mxu0 0.0
  %4212 = vmatprep.subr.mxu0 0.0
  %4213 = vmatpush1.msra.mxu0 0.0
  %4214 = vmatprep.subr.mxu0 0.0
  %4215 = vmatpush1.msra.mxu0 0.0
  %4216 = vmatprep.subr.mxu0 0.0
  %4217 = vmatpush1.msra.mxu0 0.0
  %4218 = vmatprep.subr.mxu0 0.0
  %4219 = vmatpush1.msra.mxu0 0.0
  %4220 = vmatprep.subr.mxu0 0.0
  %4221 = vmatpush1.msra.mxu0 %v4185
  %4222 = vmatprep.subr.mxu0 0.0
  %4223 = vmatpush1.msra.mxu0 %v4184
  %4224 = vmatprep.subr.mxu0 0.0
  %4225 = vmatpush1.msra.mxu0 %v4183
  %4226 = vmatprep.subr.mxu0 0.0
  %4227 = vmatpush1.msra.mxu0 %v4182
  %4228 = vmatprep.subr.mxu0 0.0
  %4229 = vmatpush2.msra.mxu0 0.0
  %4230 = vmatprep.subr.mxu0 0.0
  %4231 = vmatpush2.msra.mxu0 0.0
  %4232 = vmatprep.subr.mxu0 0.0
  %4233 = vmatpush2.msra.mxu0 0.0
  %4234 = vmatprep.subr.mxu0 0.0
  %4235 = vmatpush2.msra.mxu0 0.0
  %4236 = vmatprep.subr.mxu0 0.0
  %4237 = vmatpush2.msra.mxu0 0.0
  %4238 = vmatprep.subr.mxu0 0.0
  %4239 = vmatpush2.msra.mxu0 0.0
  %4240 = vmatprep.subr.mxu0 0.0
  %4241 = vmatpush2.msra.mxu0 0.0
  %4242 = vmatprep.subr.mxu0 0.0
  %4243 = vmatpush2.msra.mxu0 0.0
  %4244 = vmatprep.subr.mxu0 0.0
  %4245 = vmatpush2.msra.mxu0 0.0
  %4246 = vmatprep.subr.mxu0 0.0
  %4247 = vmatpush2.msra.mxu0 0.0
  %4248 = vmatprep.subr.mxu0 0.0
  %4249 = vmatpush2.msra.mxu0 0.0
  %4250 = vmatprep.subr.mxu0 0.0
  %4251 = vmatpush2.msra.mxu0 0.0
  %4252 = vmatprep.subr.mxu0 0.0
  %4253 = vmatpush2.msra.mxu0 0.0
  %4254 = vmatprep.subr.mxu0 0.0
  %4255 = vmatpush2.msra.mxu0 0.0
  %4256 = vmatprep.subr.mxu0 0.0
  %4257 = vmatpush2.msra.mxu0 0.0
  %4258 = vmatprep.subr.mxu0 0.0
  %4259 = vmatpush2.msra.mxu0 0.0
  %4260 = vmatprep.mubr.f32.mxu0 0.0
  %4261 = vmatmul.mubr.f32.gmra.mxu0 %v1218
  %v4262 = vpop.f32.mrf.mxu0
  %v4263 = vadd.f32 0.0, %v4262
  %v4264 = vpop.f32.mrf.mxu0
  %4265 = vmatprep.mubr.f32.mxu0 0.0
  %4266 = vmatmul.mubr.f32.gmra.mxu0 %v1221
  %v4267 = vpop.f32.mrf.mxu0
  %v4268 = vadd.f32 0.0, %v4267
  %v4269 = vpop.f32.mrf.mxu0
  %4270 = vmatprep.mubr.f32.mxu0 0.0
  %4271 = vmatmul.mubr.f32.gmra.mxu0 %v1224
  %v4272 = vpop.f32.mrf.mxu0
  %v4273 = vadd.f32 0.0, %v4272
  %v4274 = vpop.f32.mrf.mxu0
  %4275 = vmatprep.mubr.f32.mxu0 0.0
  %4276 = vmatmul.mubr.f32.gmra.mxu0 %v1227
  %v4277 = vpop.f32.mrf.mxu0
  %v4278 = vadd.f32 0.0, %v4277
  %v4279 = vpop.f32.mrf.mxu0
  %4280 = vmatprep.mubr.f32.mxu0 0.0
  %4281 = vmatmul.mubr.f32.gmra.mxu0 %v1230
  %v4282 = vpop.f32.mrf.mxu0
  %v4283 = vadd.f32 0.0, %v4282
  %v4284 = vpop.f32.mrf.mxu0
  %4285 = vmatprep.mubr.f32.mxu0 0.0
  %4286 = vmatmul.mubr.f32.gmra.mxu0 %v1233
  %v4287 = vpop.f32.mrf.mxu0
  %v4288 = vadd.f32 0.0, %v4287
  %v4289 = vpop.f32.mrf.mxu0
  %4290 = vmatprep.mubr.f32.mxu0 0.0
  %4291 = vmatmul.mubr.f32.gmra.mxu0 %v1236
  %v4292 = vpop.f32.mrf.mxu0
  %v4293 = vadd.f32 0.0, %v4292
  %v4294 = vpop.f32.mrf.mxu0
  %4295 = vmatprep.mubr.f32.mxu0 0.0
  %4296 = vmatmul.mubr.f32.gmra.mxu0 %v1239
  %v4297 = vpop.f32.mrf.mxu0
  %v4298 = vadd.f32 0.0, %v4297
  %v4299 = vpop.f32.mrf.mxu0
  %4300 = vmatprep.mubr.f32.mxu0 0.0
  %4301 = vmatmul.mubr.f32.gmra.mxu0 %v1242
  %v4302 = vpop.f32.mrf.mxu0
  %v4303 = vadd.f32 0.0, %v4302
  %v4304 = vpop.f32.mrf.mxu0
  %4305 = vmatprep.mubr.f32.mxu0 0.0
  %4306 = vmatmul.mubr.f32.gmra.mxu0 %v1245
  %v4307 = vpop.f32.mrf.mxu0
  %v4308 = vadd.f32 0.0, %v4307
  %v4309 = vpop.f32.mrf.mxu0
  %4310 = vmatprep.mubr.f32.mxu0 0.0
  %4311 = vmatmul.mubr.f32.gmra.mxu0 %v1248
  %v4312 = vpop.f32.mrf.mxu0
  %v4313 = vadd.f32 0.0, %v4312
  %v4314 = vpop.f32.mrf.mxu0
  %4315 = vmatprep.mubr.f32.mxu0 0.0
  %4316 = vmatmul.mubr.f32.gmra.mxu0 %v1251
  %v4317 = vpop.f32.mrf.mxu0
  %v4318 = vadd.f32 0.0, %v4317
  %v4319 = vpop.f32.mrf.mxu0
  %4320 = vmatprep.mubr.f32.mxu0 0.0
  %4321 = vmatmul.mubr.f32.gmra.mxu0 %v1254
  %v4322 = vpop.f32.mrf.mxu0
  %v4323 = vadd.f32 0.0, %v4322
  %v4324 = vpop.f32.mrf.mxu0
  %4325 = vmatprep.mubr.f32.mxu0 0.0
  %4326 = vmatmul.mubr.f32.gmra.mxu0 %v1257
  %v4327 = vpop.f32.mrf.mxu0
  %v4328 = vadd.f32 0.0, %v4327
  %v4329 = vpop.f32.mrf.mxu0
  %4330 = vmatprep.mubr.f32.mxu0 0.0
  %4331 = vmatmul.mubr.f32.gmra.mxu0 %v1260
  %v4332 = vpop.f32.mrf.mxu0
  %v4333 = vadd.f32 0.0, %v4332
  %v4334 = vpop.f32.mrf.mxu0
  %4335 = vmatprep.mubr.f32.mxu0 0.0
  %4336 = vmatmul.mubr.f32.gmra.mxu0 %v1263
  %v4337 = vpop.f32.mrf.mxu0
  %v4338 = vadd.f32 0.0, %v4337
  %v4339 = vpop.f32.mrf.mxu0
  %4340 = vdwg.mxu0
  %4341 = vmatprep.subr.mxu0 0.0
  %4342 = vmatpush1.msra.mxu0 0.0
  %4343 = vmatprep.subr.mxu0 0.0
  %4344 = vmatpush1.msra.mxu0 0.0
  %4345 = vmatprep.subr.mxu0 0.0
  %4346 = vmatpush1.msra.mxu0 0.0
  %4347 = vmatprep.subr.mxu0 0.0
  %4348 = vmatpush1.msra.mxu0 0.0
  %4349 = vmatprep.subr.mxu0 0.0
  %4350 = vmatpush1.msra.mxu0 0.0
  %4351 = vmatprep.subr.mxu0 0.0
  %4352 = vmatpush1.msra.mxu0 0.0
  %4353 = vmatprep.subr.mxu0 0.0
  %4354 = vmatpush1.msra.mxu0 0.0
  %4355 = vmatprep.subr.mxu0 0.0
  %4356 = vmatpush1.msra.mxu0 0.0
  %4357 = vmatprep.subr.mxu0 0.0
  %4358 = vmatpush1.msra.mxu0 0.0
  %4359 = vmatprep.subr.mxu0 0.0
  %4360 = vmatpush1.msra.mxu0 0.0
  %4361 = vmatprep.subr.mxu0 0.0
  %4362 = vmatpush1.msra.mxu0 0.0
  %4363 = vmatprep.subr.mxu0 0.0
  %4364 = vmatpush1.msra.mxu0 0.0
  %4365 = vmatprep.subr.mxu0 0.0
  %4366 = vmatpush1.msra.mxu0 %v4195
  %4367 = vmatprep.subr.mxu0 0.0
  %4368 = vmatpush1.msra.mxu0 %v4194
  %4369 = vmatprep.subr.mxu0 0.0
  %4370 = vmatpush1.msra.mxu0 %v4193
  %4371 = vmatprep.subr.mxu0 0.0
  %4372 = vmatpush1.msra.mxu0 %v4192
  %4373 = vmatprep.subr.mxu0 0.0
  %4374 = vmatpush2.msra.mxu0 0.0
  %4375 = vmatprep.subr.mxu0 0.0
  %4376 = vmatpush2.msra.mxu0 0.0
  %4377 = vmatprep.subr.mxu0 0.0
  %4378 = vmatpush2.msra.mxu0 0.0
  %4379 = vmatprep.subr.mxu0 0.0
  %4380 = vmatpush2.msra.mxu0 0.0
  %4381 = vmatprep.subr.mxu0 0.0
  %4382 = vmatpush2.msra.mxu0 0.0
  %4383 = vmatprep.subr.mxu0 0.0
  %4384 = vmatpush2.msra.mxu0 0.0
  %4385 = vmatprep.subr.mxu0 0.0
  %4386 = vmatpush2.msra.mxu0 0.0
  %4387 = vmatprep.subr.mxu0 0.0
  %4388 = vmatpush2.msra.mxu0 0.0
  %4389 = vmatprep.subr.mxu0 0.0
  %4390 = vmatpush2.msra.mxu0 0.0
  %4391 = vmatprep.subr.mxu0 0.0
  %4392 = vmatpush2.msra.mxu0 0.0
  %4393 = vmatprep.subr.mxu0 0.0
  %4394 = vmatpush2.msra.mxu0 0.0
  %4395 = vmatprep.subr.mxu0 0.0
  %4396 = vmatpush2.msra.mxu0 0.0
  %4397 = vmatprep.subr.mxu0 0.0
  %4398 = vmatpush2.msra.mxu0 0.0
  %4399 = vmatprep.subr.mxu0 0.0
  %4400 = vmatpush2.msra.mxu0 0.0
  %4401 = vmatprep.subr.mxu0 0.0
  %4402 = vmatpush2.msra.mxu0 0.0
  %4403 = vmatprep.subr.mxu0 0.0
  %4404 = vmatpush2.msra.mxu0 0.0
  %4405 = vmatprep.mubr.f32.mxu0 0.0
  %4406 = vmatmul.mubr.f32.gmra.mxu0 %v1411
  %v4407 = vpop.f32.mrf.mxu0
  %v4408 = vadd.f32 %v4263, %v4407
  %v4409 = vpop.f32.mrf.mxu0
  %4410 = vmatprep.mubr.f32.mxu0 0.0
  %4411 = vmatmul.mubr.f32.gmra.mxu0 %v1414
  %v4412 = vpop.f32.mrf.mxu0
  %v4413 = vadd.f32 %v4268, %v4412
  %v4414 = vpop.f32.mrf.mxu0
  %4415 = vmatprep.mubr.f32.mxu0 0.0
  %4416 = vmatmul.mubr.f32.gmra.mxu0 %v1417
  %v4417 = vpop.f32.mrf.mxu0
  %v4418 = vadd.f32 %v4273, %v4417
  %v4419 = vpop.f32.mrf.mxu0
  %4420 = vmatprep.mubr.f32.mxu0 0.0
  %4421 = vmatmul.mubr.f32.gmra.mxu0 %v1420
  %v4422 = vpop.f32.mrf.mxu0
  %v4423 = vadd.f32 %v4278, %v4422
  %v4424 = vpop.f32.mrf.mxu0
  %4425 = vmatprep.mubr.f32.mxu0 0.0
  %4426 = vmatmul.mubr.f32.gmra.mxu0 %v1423
  %v4427 = vpop.f32.mrf.mxu0
  %v4428 = vadd.f32 %v4283, %v4427
  %v4429 = vpop.f32.mrf.mxu0
  %4430 = vmatprep.mubr.f32.mxu0 0.0
  %4431 = vmatmul.mubr.f32.gmra.mxu0 %v1426
  %v4432 = vpop.f32.mrf.mxu0
  %v4433 = vadd.f32 %v4288, %v4432
  %v4434 = vpop.f32.mrf.mxu0
  %4435 = vmatprep.mubr.f32.mxu0 0.0
  %4436 = vmatmul.mubr.f32.gmra.mxu0 %v1429
  %v4437 = vpop.f32.mrf.mxu0
  %v4438 = vadd.f32 %v4293, %v4437
  %v4439 = vpop.f32.mrf.mxu0
  %4440 = vmatprep.mubr.f32.mxu0 0.0
  %4441 = vmatmul.mubr.f32.gmra.mxu0 %v1432
  %v4442 = vpop.f32.mrf.mxu0
  %v4443 = vadd.f32 %v4298, %v4442
  %v4444 = vpop.f32.mrf.mxu0
  %4445 = vmatprep.mubr.f32.mxu0 0.0
  %4446 = vmatmul.mubr.f32.gmra.mxu0 %v1435
  %v4447 = vpop.f32.mrf.mxu0
  %v4448 = vadd.f32 %v4303, %v4447
  %v4449 = vpop.f32.mrf.mxu0
  %4450 = vmatprep.mubr.f32.mxu0 0.0
  %4451 = vmatmul.mubr.f32.gmra.mxu0 %v1438
  %v4452 = vpop.f32.mrf.mxu0
  %v4453 = vadd.f32 %v4308, %v4452
  %v4454 = vpop.f32.mrf.mxu0
  %4455 = vmatprep.mubr.f32.mxu0 0.0
  %4456 = vmatmul.mubr.f32.gmra.mxu0 %v1441
  %v4457 = vpop.f32.mrf.mxu0
  %v4458 = vadd.f32 %v4313, %v4457
  %v4459 = vpop.f32.mrf.mxu0
  %4460 = vmatprep.mubr.f32.mxu0 0.0
  %4461 = vmatmul.mubr.f32.gmra.mxu0 %v1444
  %v4462 = vpop.f32.mrf.mxu0
  %v4463 = vadd.f32 %v4318, %v4462
  %v4464 = vpop.f32.mrf.mxu0
  %4465 = vmatprep.mubr.f32.mxu0 0.0
  %4466 = vmatmul.mubr.f32.gmra.mxu0 %v1447
  %v4467 = vpop.f32.mrf.mxu0
  %v4468 = vadd.f32 %v4323, %v4467
  %v4469 = vpop.f32.mrf.mxu0
  %4470 = vmatprep.mubr.f32.mxu0 0.0
  %4471 = vmatmul.mubr.f32.gmra.mxu0 %v1450
  %v4472 = vpop.f32.mrf.mxu0
  %v4473 = vadd.f32 %v4328, %v4472
  %v4474 = vpop.f32.mrf.mxu0
  %4475 = vmatprep.mubr.f32.mxu0 0.0
  %4476 = vmatmul.mubr.f32.gmra.mxu0 %v1453
  %v4477 = vpop.f32.mrf.mxu0
  %v4478 = vadd.f32 %v4333, %v4477
  %v4479 = vpop.f32.mrf.mxu0
  %4480 = vmatprep.mubr.f32.mxu0 0.0
  %4481 = vmatmul.mubr.f32.gmra.mxu0 %v1456
  %v4482 = vpop.f32.mrf.mxu0
  %v4483 = vadd.f32 %v4338, %v4482
  %v4484 = vpop.f32.mrf.mxu0
  %4485 = vdwg.mxu0
  %v4486 = vadd.f32 %v4408, %v1135
  %v4487 = vadd.f32 %v4413, %v1140
  %v4488 = vadd.f32 %v4418, %v1145
  %v4489 = vadd.f32 %v4423, %v1150
  %v4490 = vadd.f32 %v4428, %v1155
  %v4491 = vadd.f32 %v4433, %v1160
  %v4492 = vadd.f32 %v4438, %v1165
  %v4493 = vadd.f32 %v4443, %v1170
  %v4494 = vadd.f32 %v4448, %v1175
  %v4495 = vadd.f32 %v4453, %v1180
  %v4496 = vadd.f32 %v4458, %v1185
  %v4497 = vadd.f32 %v4463, %v1190
  %v4498 = vadd.f32 %v4468, %v1195
  %v4499 = vadd.f32 %v4473, %v1200
  %v4500 = vadd.f32 %v4478, %v1205
  %v4501 = vadd.f32 %v4483, %v1210
  %v4502 = vxor.u32 %v4486, 2147483648
  %v4503 = vxor.u32 %v4487, 2147483648
  %v4504 = vxor.u32 %v4488, 2147483648
  %v4505 = vxor.u32 %v4489, 2147483648
  %v4506 = vmul.f32 %v4502, 1.442695
  %v4507 = vpow.pop %v4506
  %v4508 = vmul.f32 %v4503, 1.442695
  %v4509 = vpow.pop %v4508
  %v4510 = vmul.f32 %v4504, 1.442695
  %v4511 = vpow.pop %v4510
  %v4512 = vmul.f32 %v4505, 1.442695
  %v4513 = vpow.pop %v4512
  %v4514 = vadd.f32 %v4507, 1.0
  %v4515 = vadd.f32 %v4509, 1.0
  %v4516 = vadd.f32 %v4511, 1.0
  %v4517 = vadd.f32 %v4513, 1.0
  %v4518 = vrcp.pop %v4514
  %v4519 = vmul.f32 1.0, %v4518
  %v4520 = vrcp.pop %v4515
  %v4521 = vmul.f32 1.0, %v4520
  %v4522 = vrcp.pop %v4516
  %v4523 = vmul.f32 1.0, %v4522
  %v4524 = vrcp.pop %v4517
  %v4525 = vmul.f32 1.0, %v4524
  %v4526 = vxor.u32 %v4490, 2147483648
  %v4527 = vxor.u32 %v4491, 2147483648
  %v4528 = vxor.u32 %v4492, 2147483648
  %v4529 = vxor.u32 %v4493, 2147483648
  %v4530 = vmul.f32 %v4526, 1.442695
  %v4531 = vpow.pop %v4530
  %v4532 = vmul.f32 %v4527, 1.442695
  %v4533 = vpow.pop %v4532
  %v4534 = vmul.f32 %v4528, 1.442695
  %v4535 = vpow.pop %v4534
  %v4536 = vmul.f32 %v4529, 1.442695
  %v4537 = vpow.pop %v4536
  %v4538 = vadd.f32 %v4531, 1.0
  %v4539 = vadd.f32 %v4533, 1.0
  %v4540 = vadd.f32 %v4535, 1.0
  %v4541 = vadd.f32 %v4537, 1.0
  %v4542 = vrcp.pop %v4538
  %v4543 = vmul.f32 1.0, %v4542
  %v4544 = vrcp.pop %v4539
  %v4545 = vmul.f32 1.0, %v4544
  %v4546 = vrcp.pop %v4540
  %v4547 = vmul.f32 1.0, %v4546
  %v4548 = vrcp.pop %v4541
  %v4549 = vmul.f32 1.0, %v4548
  %v4550 = vtanh.pop %v4494
  %v4551 = vtanh.pop %v4495
  %v4552 = vtanh.pop %v4496
  %v4553 = vtanh.pop %v4497
  %v4554 = vxor.u32 %v4498, 2147483648
  %v4555 = vxor.u32 %v4499, 2147483648
  %v4556 = vxor.u32 %v4500, 2147483648
  %v4557 = vxor.u32 %v4501, 2147483648
  %v4558 = vmul.f32 %v4554, 1.442695
  %v4559 = vpow.pop %v4558
  %v4560 = vmul.f32 %v4555, 1.442695
  %v4561 = vpow.pop %v4560
  %v4562 = vmul.f32 %v4556, 1.442695
  %v4563 = vpow.pop %v4562
  %v4564 = vmul.f32 %v4557, 1.442695
  %v4565 = vpow.pop %v4564
  %v4566 = vadd.f32 %v4559, 1.0
  %v4567 = vadd.f32 %v4561, 1.0
  %v4568 = vadd.f32 %v4563, 1.0
  %v4569 = vadd.f32 %v4565, 1.0
  %v4570 = vrcp.pop %v4566
  %v4571 = vmul.f32 1.0, %v4570
  %v4572 = vrcp.pop %v4567
  %v4573 = vmul.f32 1.0, %v4572
  %v4574 = vrcp.pop %v4568
  %v4575 = vmul.f32 1.0, %v4574
  %v4576 = vrcp.pop %v4569
  %v4577 = vmul.f32 1.0, %v4576
  %v4578 = vmul.f32 %v4543, %v4174
  %v4579 = vmul.f32 %v4545, %v4175
  %v4580 = vmul.f32 %v4547, %v4176
  %v4581 = vmul.f32 %v4549, %v4177
  %v4582 = vmul.f32 %v4519, %v4550
  %v4583 = vmul.f32 %v4521, %v4551
  %v4584 = vmul.f32 %v4523, %v4552
  %v4585 = vmul.f32 %v4525, %v4553
  %v4586 = vadd.f32 %v4578, %v4582
  %v4587 = vadd.f32 %v4579, %v4583
  %v4588 = vadd.f32 %v4580, %v4584
  %v4589 = vadd.f32 %v4581, %v4585
  %v4590 = vtanh.pop %v4586
  %v4591 = vtanh.pop %v4587
  %v4592 = vtanh.pop %v4588
  %v4593 = vtanh.pop %v4589
  %v4594 = vmul.f32 %v4571, %v4590
  %v4595 = vmul.f32 %v4573, %v4591
  %v4596 = vmul.f32 %v4575, %v4592
  %v4597 = vmul.f32 %v4577, %v4593
  %s4598 = scalar_lea.vmem [#allocation3], 224
  %4599 = vst.msk [vmem:[%s4598] sm:$0xff] %vm1043, %v4594
  %4600 = vst.msk [vmem:[%s4598 + $0x8] sm:$0xff] %vm1043, %v4595
  %4601 = vst.msk [vmem:[%s4598 + $0x10] sm:$0xff] %vm1043, %v4596
  %4602 = vst.msk [vmem:[%s4598 + $0x18] sm:$0xff] %vm1043, %v4597
  %v4603 = vsel %vm1043, %v4594, 0.0
  %v4604 = vsel %vm1043, %v4595, 0.0
  %v4605 = vadd.f32 %v4603, %v4604
  %v4606 = vsel %vm1043, %v4596, 0.0
  %v4607 = vadd.f32 %v4605, %v4606
  %v4608 = vsel %vm1043, %v4597, 0.0
  %v4609 = vadd.f32 %v4607, %v4608
  %v4610 = vrot.slane %v4609, 4
  %v4611 = vadd.f32 %v4609, %v4610
  %v4612 = vrot.slane %v4611, 2
  %v4613 = vadd.f32 %v4611, %v4612
  %v4614 = vrot.slane %v4613, 1
  %v4615 = vadd.f32 %v4613, %v4614
  %v4616 = vrcp.pop 32.0
  %v4617 = vmul.f32 %v4615, %v4616
  %v4618 = vsub.f32 %v4594, %v4617
  %v4619 = vsub.f32 %v4595, %v4617
  %v4620 = vsub.f32 %v4596, %v4617
  %v4621 = vsub.f32 %v4597, %v4617
  %v4622 = vmul.f32 %v4618, %v4618
  %v4623 = vmul.f32 %v4619, %v4619
  %v4624 = vmul.f32 %v4620, %v4620
  %v4625 = vmul.f32 %v4621, %v4621
  %v4626 = vsel %vm1043, %v4622, 0.0
  %v4627 = vsel %vm1043, %v4623, 0.0
  %v4628 = vadd.f32 %v4626, %v4627
  %v4629 = vsel %vm1043, %v4624, 0.0
  %v4630 = vadd.f32 %v4628, %v4629
  %v4631 = vsel %vm1043, %v4625, 0.0
  %v4632 = vadd.f32 %v4630, %v4631
  %v4633 = vrot.slane %v4632, 4
  %v4634 = vadd.f32 %v4632, %v4633
  %v4635 = vrot.slane %v4634, 2
  %v4636 = vadd.f32 %v4634, %v4635
  %v4637 = vrot.slane %v4636, 1
  %v4638 = vadd.f32 %v4636, %v4637
  %v4639 = vmul.f32 %v4638, %v4616
  %v4640 = vadd.f32 %v4639, 1e-05
  %v4641 = vrsqrt.pop %v4640
  %v4642 = vmul.f32 %v4618, %v4641
  %v4643 = vmul.f32 %v4619, %v4641
  %v4644 = vmul.f32 %v4620, %v4641
  %v4645 = vmul.f32 %v4621, %v4641
  %4647 = vset.pattern.permute.xlu0 0
  %4648 = vperm.xlu0 %4647, %v1076
  %v4649 = vpop.permute.xlu0 %4648
  %4652 = vset.pattern.permute.xlu0 0
  %4653 = vperm.xlu0 %4652, %v1077
  %v4654 = vpop.permute.xlu0 %4653
  %4657 = vset.pattern.permute.xlu0 0
  %4658 = vperm.xlu0 %4657, %v1078
  %v4659 = vpop.permute.xlu0 %4658
  %4662 = vset.pattern.permute.xlu0 0
  %4663 = vperm.xlu0 %4662, %v1079
  %v4664 = vpop.permute.xlu0 %4663
  %v4666 = vmul.f32 %v4642, %v4649
  %v4667 = vmul.f32 %v4643, %v4654
  %v4668 = vmul.f32 %v4644, %v4659
  %v4669 = vmul.f32 %v4645, %v4664
  %4671 = vset.pattern.permute.xlu0 0
  %4672 = vperm.xlu0 %4671, %v1080
  %v4673 = vpop.permute.xlu0 %4672
  %4676 = vset.pattern.permute.xlu0 0
  %4677 = vperm.xlu0 %4676, %v1081
  %v4678 = vpop.permute.xlu0 %4677
  %4681 = vset.pattern.permute.xlu0 0
  %4682 = vperm.xlu0 %4681, %v1082
  %v4683 = vpop.permute.xlu0 %4682
  %4686 = vset.pattern.permute.xlu0 0
  %4687 = vperm.xlu0 %4686, %v1083
  %v4688 = vpop.permute.xlu0 %4687
  %v4690 = vadd.f32 %v4666, %v4673
  %v4691 = vadd.f32 %v4667, %v4678
  %v4692 = vadd.f32 %v4668, %v4683
  %v4693 = vadd.f32 %v4669, %v4688
  %v4694 = vsel %vm1043, %v4586, 0.0
  %v4695 = vsel %vm1043, %v4587, 0.0
  %v4696 = vadd.f32 %v4694, %v4695
  %v4697 = vsel %vm1043, %v4588, 0.0
  %v4698 = vadd.f32 %v4696, %v4697
  %v4699 = vsel %vm1043, %v4589, 0.0
  %v4700 = vadd.f32 %v4698, %v4699
  %v4701 = vrot.slane %v4700, 4
  %v4702 = vadd.f32 %v4700, %v4701
  %v4703 = vrot.slane %v4702, 2
  %v4704 = vadd.f32 %v4702, %v4703
  %v4705 = vrot.slane %v4704, 1
  %v4706 = vadd.f32 %v4704, %v4705
  %v4707 = vmul.f32 %v4706, %v4616
  %v4708 = vsub.f32 %v4586, %v4707
  %v4709 = vsub.f32 %v4587, %v4707
  %v4710 = vsub.f32 %v4588, %v4707
  %v4711 = vsub.f32 %v4589, %v4707
  %v4712 = vmul.f32 %v4708, %v4708
  %v4713 = vmul.f32 %v4709, %v4709
  %v4714 = vmul.f32 %v4710, %v4710
  %v4715 = vmul.f32 %v4711, %v4711
  %v4716 = vsel %vm1043, %v4712, 0.0
  %v4717 = vsel %vm1043, %v4713, 0.0
  %v4718 = vadd.f32 %v4716, %v4717
  %v4719 = vsel %vm1043, %v4714, 0.0
  %v4720 = vadd.f32 %v4718, %v4719
  %v4721 = vsel %vm1043, %v4715, 0.0
  %v4722 = vadd.f32 %v4720, %v4721
  %v4723 = vrot.slane %v4722, 4
  %v4724 = vadd.f32 %v4722, %v4723
  %v4725 = vrot.slane %v4724, 2
  %v4726 = vadd.f32 %v4724, %v4725
  %v4727 = vrot.slane %v4726, 1
  %v4728 = vadd.f32 %v4726, %v4727
  %v4729 = vmul.f32 %v4728, %v4616
  %v4730 = vadd.f32 %v4729, 1e-05
  %v4731 = vrsqrt.pop %v4730
  %v4732 = vmul.f32 %v4708, %v4731
  %v4733 = vmul.f32 %v4709, %v4731
  %v4734 = vmul.f32 %v4710, %v4731
  %v4735 = vmul.f32 %v4711, %v4731
  %v4736 = vmul.f32 %v4732, %v4649
  %v4737 = vmul.f32 %v4733, %v4654
  %v4738 = vmul.f32 %v4734, %v4659
  %v4739 = vmul.f32 %v4735, %v4664
  %v4740 = vadd.f32 %v4736, %v4673
  %v4741 = vadd.f32 %v4737, %v4678
  %v4742 = vadd.f32 %v4738, %v4683
  %v4743 = vadd.f32 %v4739, %v4688
  %s4744 = scalar_lea.vmem %s3, 128
  %v4745 = vld [vmem:[%s4744] sm:$0xff]
  %v4746 = vld [vmem:[%s4744 + $0x8] sm:$0xff]
  %v4747 = vld [vmem:[%s4744 + $0x10] sm:$0xff]
  %v4748 = vld [vmem:[%s4744 + $0x18] sm:$0xff]
  %v4749 = vld [vmem:[%s4744 + $0x20] sm:$0xff]
  %v4750 = vld [vmem:[%s4744 + $0x28] sm:$0xff]
  %v4751 = vld [vmem:[%s4744 + $0x30] sm:$0xff]
  %v4752 = vld [vmem:[%s4744 + $0x38] sm:$0xff]
  %v4753 = vld [vmem:[%s4744 + $0x40] sm:$0xff]
  %v4754 = vld [vmem:[%s4744 + $0x48] sm:$0xff]
  %v4755 = vld [vmem:[%s4744 + $0x50] sm:$0xff]
  %v4756 = vld [vmem:[%s4744 + $0x58] sm:$0xff]
  %v4757 = vld [vmem:[%s4744 + $0x60] sm:$0xff]
  %v4758 = vld [vmem:[%s4744 + $0x68] sm:$0xff]
  %v4759 = vld [vmem:[%s4744 + $0x70] sm:$0xff]
  %v4760 = vld [vmem:[%s4744 + $0x78] sm:$0xff]
  %s4761 = scalar_lea.vmem %s4, 128
  %v4762 = vld [vmem:[%s4761] sm:$0xff]
  %v4763 = vld [vmem:[%s4761 + $0x8] sm:$0xff]
  %v4764 = vld [vmem:[%s4761 + $0x10] sm:$0xff]
  %v4765 = vld [vmem:[%s4761 + $0x18] sm:$0xff]
  %v4766 = vld [vmem:[%s4761 + $0x20] sm:$0xff]
  %v4767 = vld [vmem:[%s4761 + $0x28] sm:$0xff]
  %v4768 = vld [vmem:[%s4761 + $0x30] sm:$0xff]
  %v4769 = vld [vmem:[%s4761 + $0x38] sm:$0xff]
  %v4770 = vld [vmem:[%s4761 + $0x40] sm:$0xff]
  %v4771 = vld [vmem:[%s4761 + $0x48] sm:$0xff]
  %v4772 = vld [vmem:[%s4761 + $0x50] sm:$0xff]
  %v4773 = vld [vmem:[%s4761 + $0x58] sm:$0xff]
  %v4774 = vld [vmem:[%s4761 + $0x60] sm:$0xff]
  %v4775 = vld [vmem:[%s4761 + $0x68] sm:$0xff]
  %v4776 = vld [vmem:[%s4761 + $0x70] sm:$0xff]
  %v4777 = vld [vmem:[%s4761 + $0x78] sm:$0xff]
  %s4778 = scalar_lea.vmem %s5, 128
  %v4779 = vld [vmem:[%s4778] sm:$0xff]
  %v4780 = vld [vmem:[%s4778 + $0x8] sm:$0xff]
  %v4781 = vld [vmem:[%s4778 + $0x10] sm:$0xff]
  %v4782 = vld [vmem:[%s4778 + $0x18] sm:$0xff]
  %v4783 = vld [vmem:[%s4778 + $0x20] sm:$0xff]
  %v4784 = vld [vmem:[%s4778 + $0x28] sm:$0xff]
  %v4785 = vld [vmem:[%s4778 + $0x30] sm:$0xff]
  %v4786 = vld [vmem:[%s4778 + $0x38] sm:$0xff]
  %v4787 = vld [vmem:[%s4778 + $0x40] sm:$0xff]
  %v4788 = vld [vmem:[%s4778 + $0x48] sm:$0xff]
  %v4789 = vld [vmem:[%s4778 + $0x50] sm:$0xff]
  %v4790 = vld [vmem:[%s4778 + $0x58] sm:$0xff]
  %v4791 = vld [vmem:[%s4778 + $0x60] sm:$0xff]
  %v4792 = vld [vmem:[%s4778 + $0x68] sm:$0xff]
  %v4793 = vld [vmem:[%s4778 + $0x70] sm:$0xff]
  %v4794 = vld [vmem:[%s4778 + $0x78] sm:$0xff]
  %4796 = vset.pattern.permute.xlu0 0
  %4797 = vperm.xlu0 %4796, %v4779
  %v4798 = vpop.permute.xlu0 %4797
  %4801 = vset.pattern.permute.xlu0 0
  %4802 = vperm.xlu0 %4801, %v4780
  %v4803 = vpop.permute.xlu0 %4802
  %4806 = vset.pattern.permute.xlu0 0
  %4807 = vperm.xlu0 %4806, %v4781
  %v4808 = vpop.permute.xlu0 %4807
  %4811 = vset.pattern.permute.xlu0 0
  %4812 = vperm.xlu0 %4811, %v4782
  %v4813 = vpop.permute.xlu0 %4812
  %4816 = vset.pattern.permute.xlu0 0
  %4817 = vperm.xlu0 %4816, %v4783
  %v4818 = vpop.permute.xlu0 %4817
  %4821 = vset.pattern.permute.xlu0 0
  %4822 = vperm.xlu0 %4821, %v4784
  %v4823 = vpop.permute.xlu0 %4822
  %4826 = vset.pattern.permute.xlu0 0
  %4827 = vperm.xlu0 %4826, %v4785
  %v4828 = vpop.permute.xlu0 %4827
  %4831 = vset.pattern.permute.xlu0 0
  %4832 = vperm.xlu0 %4831, %v4786
  %v4833 = vpop.permute.xlu0 %4832
  %4836 = vset.pattern.permute.xlu0 0
  %4837 = vperm.xlu0 %4836, %v4787
  %v4838 = vpop.permute.xlu0 %4837
  %4841 = vset.pattern.permute.xlu0 0
  %4842 = vperm.xlu0 %4841, %v4788
  %v4843 = vpop.permute.xlu0 %4842
  %4846 = vset.pattern.permute.xlu0 0
  %4847 = vperm.xlu0 %4846, %v4789
  %v4848 = vpop.permute.xlu0 %4847
  %4851 = vset.pattern.permute.xlu0 0
  %4852 = vperm.xlu0 %4851, %v4790
  %v4853 = vpop.permute.xlu0 %4852
  %4856 = vset.pattern.permute.xlu0 0
  %4857 = vperm.xlu0 %4856, %v4791
  %v4858 = vpop.permute.xlu0 %4857
  %4861 = vset.pattern.permute.xlu0 0
  %4862 = vperm.xlu0 %4861, %v4792
  %v4863 = vpop.permute.xlu0 %4862
  %4866 = vset.pattern.permute.xlu0 0
  %4867 = vperm.xlu0 %4866, %v4793
  %v4868 = vpop.permute.xlu0 %4867
  %4871 = vset.pattern.permute.xlu0 0
  %4872 = vperm.xlu0 %4871, %v4794
  %v4873 = vpop.permute.xlu0 %4872
  %v4875 = vld [vmem:[#allocation3] sm:$0xff]
  %v4876 = vld [vmem:[#allocation3 + $0x8] sm:$0xff]
  %v4877 = vld [vmem:[#allocation3 + $0x10] sm:$0xff]
  %v4878 = vld [vmem:[#allocation3 + $0x18] sm:$0xff]
  %v4880 = vsel %vm1216, %v4762, 0
  %v4883 = vsel %vm1216, %v4763, 0
  %v4886 = vsel %vm1216, %v4764, 0
  %v4889 = vsel %vm1216, %v4765, 0
  %v4892 = vsel %vm1216, %v4766, 0
  %v4895 = vsel %vm1216, %v4767, 0
  %v4898 = vsel %vm1216, %v4768, 0
  %v4901 = vsel %vm1216, %v4769, 0
  %v4904 = vsel %vm1216, %v4770, 0
  %v4907 = vsel %vm1216, %v4771, 0
  %v4910 = vsel %vm1216, %v4772, 0
  %v4913 = vsel %vm1216, %v4773, 0
  %v4916 = vsel %vm1216, %v4774, 0
  %v4919 = vsel %vm1216, %v4775, 0
  %v4922 = vsel %vm1216, %v4776, 0
  %v4925 = vsel %vm1216, %v4777, 0
  %4927 = vmatprep.subr.mxu0 0.0
  %4928 = vmatpush1.msra.mxu0 0.0
  %4929 = vmatprep.subr.mxu0 0.0
  %4930 = vmatpush1.msra.mxu0 0.0
  %4931 = vmatprep.subr.mxu0 0.0
  %4932 = vmatpush1.msra.mxu0 0.0
  %4933 = vmatprep.subr.mxu0 0.0
  %4934 = vmatpush1.msra.mxu0 0.0
  %4935 = vmatprep.subr.mxu0 0.0
  %4936 = vmatpush1.msra.mxu0 0.0
  %4937 = vmatprep.subr.mxu0 0.0
  %4938 = vmatpush1.msra.mxu0 0.0
  %4939 = vmatprep.subr.mxu0 0.0
  %4940 = vmatpush1.msra.mxu0 0.0
  %4941 = vmatprep.subr.mxu0 0.0
  %4942 = vmatpush1.msra.mxu0 0.0
  %4943 = vmatprep.subr.mxu0 0.0
  %4944 = vmatpush1.msra.mxu0 0.0
  %4945 = vmatprep.subr.mxu0 0.0
  %4946 = vmatpush1.msra.mxu0 0.0
  %4947 = vmatprep.subr.mxu0 0.0
  %4948 = vmatpush1.msra.mxu0 0.0
  %4949 = vmatprep.subr.mxu0 0.0
  %4950 = vmatpush1.msra.mxu0 0.0
  %4951 = vmatprep.subr.mxu0 0.0
  %4952 = vmatpush1.msra.mxu0 0.0
  %4953 = vmatprep.subr.mxu0 0.0
  %4954 = vmatpush1.msra.mxu0 0.0
  %4955 = vmatprep.subr.mxu0 0.0
  %4956 = vmatpush1.msra.mxu0 0.0
  %4957 = vmatprep.subr.mxu0 0.0
  %4958 = vmatpush1.msra.mxu0 0.0
  %4959 = vmatprep.subr.mxu0 0.0
  %4960 = vmatpush2.msra.mxu0 0.0
  %4961 = vmatprep.subr.mxu0 0.0
  %4962 = vmatpush2.msra.mxu0 0.0
  %4963 = vmatprep.subr.mxu0 0.0
  %4964 = vmatpush2.msra.mxu0 0.0
  %4965 = vmatprep.subr.mxu0 0.0
  %4966 = vmatpush2.msra.mxu0 0.0
  %4967 = vmatprep.subr.mxu0 0.0
  %4968 = vmatpush2.msra.mxu0 0.0
  %4969 = vmatprep.subr.mxu0 0.0
  %4970 = vmatpush2.msra.mxu0 0.0
  %4971 = vmatprep.subr.mxu0 0.0
  %4972 = vmatpush2.msra.mxu0 0.0
  %4973 = vmatprep.subr.mxu0 0.0
  %4974 = vmatpush2.msra.mxu0 0.0
  %4975 = vmatprep.subr.mxu0 0.0
  %4976 = vmatpush2.msra.mxu0 0.0
  %4977 = vmatprep.subr.mxu0 0.0
  %4978 = vmatpush2.msra.mxu0 0.0
  %4979 = vmatprep.subr.mxu0 0.0
  %4980 = vmatpush2.msra.mxu0 0.0
  %4981 = vmatprep.subr.mxu0 0.0
  %4982 = vmatpush2.msra.mxu0 0.0
  %4983 = vmatprep.subr.mxu0 0.0
  %4984 = vmatpush2.msra.mxu0 0.0
  %4985 = vmatprep.subr.mxu0 0.0
  %4986 = vmatpush2.msra.mxu0 0.0
  %4987 = vmatprep.subr.mxu0 0.0
  %4988 = vmatpush2.msra.mxu0 0.0
  %4989 = vmatprep.subr.mxu0 0.0
  %4990 = vmatpush2.msra.mxu0 0.0
  %4991 = vmatprep.mubr.f32.mxu0 0.0
  %4992 = vmatmul.mubr.f32.gmra.mxu0 %v4880
  %v4993 = vpop.f32.mrf.mxu0
  %v4994 = vadd.f32 0.0, %v4993
  %v4995 = vpop.f32.mrf.mxu0
  %4996 = vmatprep.mubr.f32.mxu0 0.0
  %4997 = vmatmul.mubr.f32.gmra.mxu0 %v4883
  %v4998 = vpop.f32.mrf.mxu0
  %v4999 = vadd.f32 0.0, %v4998
  %v5000 = vpop.f32.mrf.mxu0
  %5001 = vmatprep.mubr.f32.mxu0 0.0
  %5002 = vmatmul.mubr.f32.gmra.mxu0 %v4886
  %v5003 = vpop.f32.mrf.mxu0
  %v5004 = vadd.f32 0.0, %v5003
  %v5005 = vpop.f32.mrf.mxu0
  %5006 = vmatprep.mubr.f32.mxu0 0.0
  %5007 = vmatmul.mubr.f32.gmra.mxu0 %v4889
  %v5008 = vpop.f32.mrf.mxu0
  %v5009 = vadd.f32 0.0, %v5008
  %v5010 = vpop.f32.mrf.mxu0
  %5011 = vmatprep.mubr.f32.mxu0 0.0
  %5012 = vmatmul.mubr.f32.gmra.mxu0 %v4892
  %v5013 = vpop.f32.mrf.mxu0
  %v5014 = vadd.f32 0.0, %v5013
  %v5015 = vpop.f32.mrf.mxu0
  %5016 = vmatprep.mubr.f32.mxu0 0.0
  %5017 = vmatmul.mubr.f32.gmra.mxu0 %v4895
  %v5018 = vpop.f32.mrf.mxu0
  %v5019 = vadd.f32 0.0, %v5018
  %v5020 = vpop.f32.mrf.mxu0
  %5021 = vmatprep.mubr.f32.mxu0 0.0
  %5022 = vmatmul.mubr.f32.gmra.mxu0 %v4898
  %v5023 = vpop.f32.mrf.mxu0
  %v5024 = vadd.f32 0.0, %v5023
  %v5025 = vpop.f32.mrf.mxu0
  %5026 = vmatprep.mubr.f32.mxu0 0.0
  %5027 = vmatmul.mubr.f32.gmra.mxu0 %v4901
  %v5028 = vpop.f32.mrf.mxu0
  %v5029 = vadd.f32 0.0, %v5028
  %v5030 = vpop.f32.mrf.mxu0
  %5031 = vmatprep.mubr.f32.mxu0 0.0
  %5032 = vmatmul.mubr.f32.gmra.mxu0 %v4904
  %v5033 = vpop.f32.mrf.mxu0
  %v5034 = vadd.f32 0.0, %v5033
  %v5035 = vpop.f32.mrf.mxu0
  %5036 = vmatprep.mubr.f32.mxu0 0.0
  %5037 = vmatmul.mubr.f32.gmra.mxu0 %v4907
  %v5038 = vpop.f32.mrf.mxu0
  %v5039 = vadd.f32 0.0, %v5038
  %v5040 = vpop.f32.mrf.mxu0
  %5041 = vmatprep.mubr.f32.mxu0 0.0
  %5042 = vmatmul.mubr.f32.gmra.mxu0 %v4910
  %v5043 = vpop.f32.mrf.mxu0
  %v5044 = vadd.f32 0.0, %v5043
  %v5045 = vpop.f32.mrf.mxu0
  %5046 = vmatprep.mubr.f32.mxu0 0.0
  %5047 = vmatmul.mubr.f32.gmra.mxu0 %v4913
  %v5048 = vpop.f32.mrf.mxu0
  %v5049 = vadd.f32 0.0, %v5048
  %v5050 = vpop.f32.mrf.mxu0
  %5051 = vmatprep.mubr.f32.mxu0 0.0
  %5052 = vmatmul.mubr.f32.gmra.mxu0 %v4916
  %v5053 = vpop.f32.mrf.mxu0
  %v5054 = vadd.f32 0.0, %v5053
  %v5055 = vpop.f32.mrf.mxu0
  %5056 = vmatprep.mubr.f32.mxu0 0.0
  %5057 = vmatmul.mubr.f32.gmra.mxu0 %v4919
  %v5058 = vpop.f32.mrf.mxu0
  %v5059 = vadd.f32 0.0, %v5058
  %v5060 = vpop.f32.mrf.mxu0
  %5061 = vmatprep.mubr.f32.mxu0 0.0
  %5062 = vmatmul.mubr.f32.gmra.mxu0 %v4922
  %v5063 = vpop.f32.mrf.mxu0
  %v5064 = vadd.f32 0.0, %v5063
  %v5065 = vpop.f32.mrf.mxu0
  %5066 = vmatprep.mubr.f32.mxu0 0.0
  %5067 = vmatmul.mubr.f32.gmra.mxu0 %v4925
  %v5068 = vpop.f32.mrf.mxu0
  %v5069 = vadd.f32 0.0, %v5068
  %v5070 = vpop.f32.mrf.mxu0
  %5071 = vdwg.mxu0
  %v5073 = vsel %vm1216, %v4745, 0
  %v5076 = vsel %vm1216, %v4746, 0
  %v5079 = vsel %vm1216, %v4747, 0
  %v5082 = vsel %vm1216, %v4748, 0
  %v5085 = vsel %vm1216, %v4749, 0
  %v5088 = vsel %vm1216, %v4750, 0
  %v5091 = vsel %vm1216, %v4751, 0
  %v5094 = vsel %vm1216, %v4752, 0
  %v5097 = vsel %vm1216, %v4753, 0
  %v5100 = vsel %vm1216, %v4754, 0
  %v5103 = vsel %vm1216, %v4755, 0
  %v5106 = vsel %vm1216, %v4756, 0
  %v5109 = vsel %vm1216, %v4757, 0
  %v5112 = vsel %vm1216, %v4758, 0
  %v5115 = vsel %vm1216, %v4759, 0
  %v5118 = vsel %vm1216, %v4760, 0
  %5120 = vmatprep.subr.mxu0 0.0
  %5121 = vmatpush1.msra.mxu0 0.0
  %5122 = vmatprep.subr.mxu0 0.0
  %5123 = vmatpush1.msra.mxu0 0.0
  %5124 = vmatprep.subr.mxu0 0.0
  %5125 = vmatpush1.msra.mxu0 0.0
  %5126 = vmatprep.subr.mxu0 0.0
  %5127 = vmatpush1.msra.mxu0 0.0
  %5128 = vmatprep.subr.mxu0 0.0
  %5129 = vmatpush1.msra.mxu0 0.0
  %5130 = vmatprep.subr.mxu0 0.0
  %5131 = vmatpush1.msra.mxu0 0.0
  %5132 = vmatprep.subr.mxu0 0.0
  %5133 = vmatpush1.msra.mxu0 0.0
  %5134 = vmatprep.subr.mxu0 0.0
  %5135 = vmatpush1.msra.mxu0 0.0
  %5136 = vmatprep.subr.mxu0 0.0
  %5137 = vmatpush1.msra.mxu0 0.0
  %5138 = vmatprep.subr.mxu0 0.0
  %5139 = vmatpush1.msra.mxu0 0.0
  %5140 = vmatprep.subr.mxu0 0.0
  %5141 = vmatpush1.msra.mxu0 0.0
  %5142 = vmatprep.subr.mxu0 0.0
  %5143 = vmatpush1.msra.mxu0 0.0
  %5144 = vmatprep.subr.mxu0 0.0
  %5145 = vmatpush1.msra.mxu0 %v4878
  %5146 = vmatprep.subr.mxu0 0.0
  %5147 = vmatpush1.msra.mxu0 %v4877
  %5148 = vmatprep.subr.mxu0 0.0
  %5149 = vmatpush1.msra.mxu0 %v4876
  %5150 = vmatprep.subr.mxu0 0.0
  %5151 = vmatpush1.msra.mxu0 %v4875
  %5152 = vmatprep.subr.mxu0 0.0
  %5153 = vmatpush2.msra.mxu0 0.0
  %5154 = vmatprep.subr.mxu0 0.0
  %5155 = vmatpush2.msra.mxu0 0.0
  %5156 = vmatprep.subr.mxu0 0.0
  %5157 = vmatpush2.msra.mxu0 0.0
  %5158 = vmatprep.subr.mxu0 0.0
  %5159 = vmatpush2.msra.mxu0 0.0
  %5160 = vmatprep.subr.mxu0 0.0
  %5161 = vmatpush2.msra.mxu0 0.0
  %5162 = vmatprep.subr.mxu0 0.0
  %5163 = vmatpush2.msra.mxu0 0.0
  %5164 = vmatprep.subr.mxu0 0.0
  %5165 = vmatpush2.msra.mxu0 0.0
  %5166 = vmatprep.subr.mxu0 0.0
  %5167 = vmatpush2.msra.mxu0 0.0
  %5168 = vmatprep.subr.mxu0 0.0
  %5169 = vmatpush2.msra.mxu0 0.0
  %5170 = vmatprep.subr.mxu0 0.0
  %5171 = vmatpush2.msra.mxu0 0.0
  %5172 = vmatprep.subr.mxu0 0.0
  %5173 = vmatpush2.msra.mxu0 0.0
  %5174 = vmatprep.subr.mxu0 0.0
  %5175 = vmatpush2.msra.mxu0 0.0
  %5176 = vmatprep.subr.mxu0 0.0
  %5177 = vmatpush2.msra.mxu0 0.0
  %5178 = vmatprep.subr.mxu0 0.0
  %5179 = vmatpush2.msra.mxu0 0.0
  %5180 = vmatprep.subr.mxu0 0.0
  %5181 = vmatpush2.msra.mxu0 0.0
  %5182 = vmatprep.subr.mxu0 0.0
  %5183 = vmatpush2.msra.mxu0 0.0
  %5184 = vmatprep.mubr.f32.mxu0 0.0
  %5185 = vmatmul.mubr.f32.gmra.mxu0 %v5073
  %v5186 = vpop.f32.mrf.mxu0
  %v5187 = vadd.f32 %v4994, %v5186
  %v5188 = vpop.f32.mrf.mxu0
  %5189 = vmatprep.mubr.f32.mxu0 0.0
  %5190 = vmatmul.mubr.f32.gmra.mxu0 %v5076
  %v5191 = vpop.f32.mrf.mxu0
  %v5192 = vadd.f32 %v4999, %v5191
  %v5193 = vpop.f32.mrf.mxu0
  %5194 = vmatprep.mubr.f32.mxu0 0.0
  %5195 = vmatmul.mubr.f32.gmra.mxu0 %v5079
  %v5196 = vpop.f32.mrf.mxu0
  %v5197 = vadd.f32 %v5004, %v5196
  %v5198 = vpop.f32.mrf.mxu0
  %5199 = vmatprep.mubr.f32.mxu0 0.0
  %5200 = vmatmul.mubr.f32.gmra.mxu0 %v5082
  %v5201 = vpop.f32.mrf.mxu0
  %v5202 = vadd.f32 %v5009, %v5201
  %v5203 = vpop.f32.mrf.mxu0
  %5204 = vmatprep.mubr.f32.mxu0 0.0
  %5205 = vmatmul.mubr.f32.gmra.mxu0 %v5085
  %v5206 = vpop.f32.mrf.mxu0
  %v5207 = vadd.f32 %v5014, %v5206
  %v5208 = vpop.f32.mrf.mxu0
  %5209 = vmatprep.mubr.f32.mxu0 0.0
  %5210 = vmatmul.mubr.f32.gmra.mxu0 %v5088
  %v5211 = vpop.f32.mrf.mxu0
  %v5212 = vadd.f32 %v5019, %v5211
  %v5213 = vpop.f32.mrf.mxu0
  %5214 = vmatprep.mubr.f32.mxu0 0.0
  %5215 = vmatmul.mubr.f32.gmra.mxu0 %v5091
  %v5216 = vpop.f32.mrf.mxu0
  %v5217 = vadd.f32 %v5024, %v5216
  %v5218 = vpop.f32.mrf.mxu0
  %5219 = vmatprep.mubr.f32.mxu0 0.0
  %5220 = vmatmul.mubr.f32.gmra.mxu0 %v5094
  %v5221 = vpop.f32.mrf.mxu0
  %v5222 = vadd.f32 %v5029, %v5221
  %v5223 = vpop.f32.mrf.mxu0
  %5224 = vmatprep.mubr.f32.mxu0 0.0
  %5225 = vmatmul.mubr.f32.gmra.mxu0 %v5097
  %v5226 = vpop.f32.mrf.mxu0
  %v5227 = vadd.f32 %v5034, %v5226
  %v5228 = vpop.f32.mrf.mxu0
  %5229 = vmatprep.mubr.f32.mxu0 0.0
  %5230 = vmatmul.mubr.f32.gmra.mxu0 %v5100
  %v5231 = vpop.f32.mrf.mxu0
  %v5232 = vadd.f32 %v5039, %v5231
  %v5233 = vpop.f32.mrf.mxu0
  %5234 = vmatprep.mubr.f32.mxu0 0.0
  %5235 = vmatmul.mubr.f32.gmra.mxu0 %v5103
  %v5236 = vpop.f32.mrf.mxu0
  %v5237 = vadd.f32 %v5044, %v5236
  %v5238 = vpop.f32.mrf.mxu0
  %5239 = vmatprep.mubr.f32.mxu0 0.0
  %5240 = vmatmul.mubr.f32.gmra.mxu0 %v5106
  %v5241 = vpop.f32.mrf.mxu0
  %v5242 = vadd.f32 %v5049, %v5241
  %v5243 = vpop.f32.mrf.mxu0
  %5244 = vmatprep.mubr.f32.mxu0 0.0
  %5245 = vmatmul.mubr.f32.gmra.mxu0 %v5109
  %v5246 = vpop.f32.mrf.mxu0
  %v5247 = vadd.f32 %v5054, %v5246
  %v5248 = vpop.f32.mrf.mxu0
  %5249 = vmatprep.mubr.f32.mxu0 0.0
  %5250 = vmatmul.mubr.f32.gmra.mxu0 %v5112
  %v5251 = vpop.f32.mrf.mxu0
  %v5252 = vadd.f32 %v5059, %v5251
  %v5253 = vpop.f32.mrf.mxu0
  %5254 = vmatprep.mubr.f32.mxu0 0.0
  %5255 = vmatmul.mubr.f32.gmra.mxu0 %v5115
  %v5256 = vpop.f32.mrf.mxu0
  %v5257 = vadd.f32 %v5064, %v5256
  %v5258 = vpop.f32.mrf.mxu0
  %5259 = vmatprep.mubr.f32.mxu0 0.0
  %5260 = vmatmul.mubr.f32.gmra.mxu0 %v5118
  %v5261 = vpop.f32.mrf.mxu0
  %v5262 = vadd.f32 %v5069, %v5261
  %v5263 = vpop.f32.mrf.mxu0
  %5264 = vdwg.mxu0
  %v5265 = vadd.f32 %v5187, %v4798
  %v5266 = vadd.f32 %v5192, %v4803
  %v5267 = vadd.f32 %v5197, %v4808
  %v5268 = vadd.f32 %v5202, %v4813
  %v5269 = vadd.f32 %v5207, %v4818
  %v5270 = vadd.f32 %v5212, %v4823
  %v5271 = vadd.f32 %v5217, %v4828
  %v5272 = vadd.f32 %v5222, %v4833
  %v5273 = vadd.f32 %v5227, %v4838
  %v5274 = vadd.f32 %v5232, %v4843
  %v5275 = vadd.f32 %v5237, %v4848
  %v5276 = vadd.f32 %v5242, %v4853
  %v5277 = vadd.f32 %v5247, %v4858
  %v5278 = vadd.f32 %v5252, %v4863
  %v5279 = vadd.f32 %v5257, %v4868
  %v5280 = vadd.f32 %v5262, %v4873
  %v5281 = vxor.u32 %v5265, 2147483648
  %v5282 = vxor.u32 %v5266, 2147483648
  %v5283 = vxor.u32 %v5267, 2147483648
  %v5284 = vxor.u32 %v5268, 2147483648
  %v5285 = vmul.f32 %v5281, 1.442695
  %v5286 = vpow.pop %v5285
  %v5287 = vmul.f32 %v5282, 1.442695
  %v5288 = vpow.pop %v5287
  %v5289 = vmul.f32 %v5283, 1.442695
  %v5290 = vpow.pop %v5289
  %v5291 = vmul.f32 %v5284, 1.442695
  %v5292 = vpow.pop %v5291
  %v5293 = vadd.f32 %v5286, 1.0
  %v5294 = vadd.f32 %v5288, 1.0
  %v5295 = vadd.f32 %v5290, 1.0
  %v5296 = vadd.f32 %v5292, 1.0
  %v5297 = vrcp.pop %v5293
  %v5298 = vmul.f32 1.0, %v5297
  %v5299 = vrcp.pop %v5294
  %v5300 = vmul.f32 1.0, %v5299
  %v5301 = vrcp.pop %v5295
  %v5302 = vmul.f32 1.0, %v5301
  %v5303 = vrcp.pop %v5296
  %v5304 = vmul.f32 1.0, %v5303
  %v5305 = vxor.u32 %v5269, 2147483648
  %v5306 = vxor.u32 %v5270, 2147483648
  %v5307 = vxor.u32 %v5271, 2147483648
  %v5308 = vxor.u32 %v5272, 2147483648
  %v5309 = vmul.f32 %v5305, 1.442695
  %v5310 = vpow.pop %v5309
  %v5311 = vmul.f32 %v5306, 1.442695
  %v5312 = vpow.pop %v5311
  %v5313 = vmul.f32 %v5307, 1.442695
  %v5314 = vpow.pop %v5313
  %v5315 = vmul.f32 %v5308, 1.442695
  %v5316 = vpow.pop %v5315
  %v5317 = vadd.f32 %v5310, 1.0
  %v5318 = vadd.f32 %v5312, 1.0
  %v5319 = vadd.f32 %v5314, 1.0
  %v5320 = vadd.f32 %v5316, 1.0
  %v5321 = vrcp.pop %v5317
  %v5322 = vmul.f32 1.0, %v5321
  %v5323 = vrcp.pop %v5318
  %v5324 = vmul.f32 1.0, %v5323
  %v5325 = vrcp.pop %v5319
  %v5326 = vmul.f32 1.0, %v5325
  %v5327 = vrcp.pop %v5320
  %v5328 = vmul.f32 1.0, %v5327
  %v5329 = vtanh.pop %v5273
  %v5330 = vtanh.pop %v5274
  %v5331 = vtanh.pop %v5275
  %v5332 = vtanh.pop %v5276
  %v5333 = vxor.u32 %v5277, 2147483648
  %v5334 = vxor.u32 %v5278, 2147483648
  %v5335 = vxor.u32 %v5279, 2147483648
  %v5336 = vxor.u32 %v5280, 2147483648
  %v5337 = vmul.f32 %v5333, 1.442695
  %v5338 = vpow.pop %v5337
  %v5339 = vmul.f32 %v5334, 1.442695
  %v5340 = vpow.pop %v5339
  %v5341 = vmul.f32 %v5335, 1.442695
  %v5342 = vpow.pop %v5341
  %v5343 = vmul.f32 %v5336, 1.442695
  %v5344 = vpow.pop %v5343
  %v5345 = vadd.f32 %v5338, 1.0
  %v5346 = vadd.f32 %v5340, 1.0
  %v5347 = vadd.f32 %v5342, 1.0
  %v5348 = vadd.f32 %v5344, 1.0
  %v5349 = vrcp.pop %v5345
  %v5350 = vmul.f32 1.0, %v5349
  %v5351 = vrcp.pop %v5346
  %v5352 = vmul.f32 1.0, %v5351
  %v5353 = vrcp.pop %v5347
  %v5354 = vmul.f32 1.0, %v5353
  %v5355 = vrcp.pop %v5348
  %v5356 = vmul.f32 1.0, %v5355
  %v5357 = vmul.f32 %v5322, 0.0
  %v5358 = vmul.f32 %v5324, 0.0
  %v5359 = vmul.f32 %v5326, 0.0
  %v5360 = vmul.f32 %v5328, 0.0
  %v5361 = vmul.f32 %v5298, %v5329
  %v5362 = vmul.f32 %v5300, %v5330
  %v5363 = vmul.f32 %v5302, %v5331
  %v5364 = vmul.f32 %v5304, %v5332
  %v5365 = vadd.f32 %v5357, %v5361
  %v5366 = vadd.f32 %v5358, %v5362
  %v5367 = vadd.f32 %v5359, %v5363
  %v5368 = vadd.f32 %v5360, %v5364
  %v5369 = vtanh.pop %v5365
  %v5370 = vtanh.pop %v5366
  %v5371 = vtanh.pop %v5367
  %v5372 = vtanh.pop %v5368
  %v5373 = vmul.f32 %v5350, %v5369
  %v5374 = vmul.f32 %v5352, %v5370
  %v5375 = vmul.f32 %v5354, %v5371
  %v5376 = vmul.f32 %v5356, %v5372
  %v5377 = vld [vmem:[%s2126] sm:$0xff]
  %v5378 = vld [vmem:[%s2126 + $0x8] sm:$0xff]
  %v5379 = vld [vmem:[%s2126 + $0x10] sm:$0xff]
  %v5380 = vld [vmem:[%s2126 + $0x18] sm:$0xff]
  %5381 = vmatprep.subr.mxu0 0.0
  %5382 = vmatpush1.msra.mxu0 0.0
  %5383 = vmatprep.subr.mxu0 0.0
  %5384 = vmatpush1.msra.mxu0 0.0
  %5385 = vmatprep.subr.mxu0 0.0
  %5386 = vmatpush1.msra.mxu0 0.0
  %5387 = vmatprep.subr.mxu0 0.0
  %5388 = vmatpush1.msra.mxu0 0.0
  %5389 = vmatprep.subr.mxu0 0.0
  %5390 = vmatpush1.msra.mxu0 0.0
  %5391 = vmatprep.subr.mxu0 0.0
  %5392 = vmatpush1.msra.mxu0 0.0
  %5393 = vmatprep.subr.mxu0 0.0
  %5394 = vmatpush1.msra.mxu0 0.0
  %5395 = vmatprep.subr.mxu0 0.0
  %5396 = vmatpush1.msra.mxu0 0.0
  %5397 = vmatprep.subr.mxu0 0.0
  %5398 = vmatpush1.msra.mxu0 0.0
  %5399 = vmatprep.subr.mxu0 0.0
  %5400 = vmatpush1.msra.mxu0 0.0
  %5401 = vmatprep.subr.mxu0 0.0
  %5402 = vmatpush1.msra.mxu0 0.0
  %5403 = vmatprep.subr.mxu0 0.0
  %5404 = vmatpush1.msra.mxu0 0.0
  %5405 = vmatprep.subr.mxu0 0.0
  %5406 = vmatpush1.msra.mxu0 %v5376
  %5407 = vmatprep.subr.mxu0 0.0
  %5408 = vmatpush1.msra.mxu0 %v5375
  %5409 = vmatprep.subr.mxu0 0.0
  %5410 = vmatpush1.msra.mxu0 %v5374
  %5411 = vmatprep.subr.mxu0 0.0
  %5412 = vmatpush1.msra.mxu0 %v5373
  %5413 = vmatprep.subr.mxu0 0.0
  %5414 = vmatpush2.msra.mxu0 0.0
  %5415 = vmatprep.subr.mxu0 0.0
  %5416 = vmatpush2.msra.mxu0 0.0
  %5417 = vmatprep.subr.mxu0 0.0
  %5418 = vmatpush2.msra.mxu0 0.0
  %5419 = vmatprep.subr.mxu0 0.0
  %5420 = vmatpush2.msra.mxu0 0.0
  %5421 = vmatprep.subr.mxu0 0.0
  %5422 = vmatpush2.msra.mxu0 0.0
  %5423 = vmatprep.subr.mxu0 0.0
  %5424 = vmatpush2.msra.mxu0 0.0
  %5425 = vmatprep.subr.mxu0 0.0
  %5426 = vmatpush2.msra.mxu0 0.0
  %5427 = vmatprep.subr.mxu0 0.0
  %5428 = vmatpush2.msra.mxu0 0.0
  %5429 = vmatprep.subr.mxu0 0.0
  %5430 = vmatpush2.msra.mxu0 0.0
  %5431 = vmatprep.subr.mxu0 0.0
  %5432 = vmatpush2.msra.mxu0 0.0
  %5433 = vmatprep.subr.mxu0 0.0
  %5434 = vmatpush2.msra.mxu0 0.0
  %5435 = vmatprep.subr.mxu0 0.0
  %5436 = vmatpush2.msra.mxu0 0.0
  %5437 = vmatprep.subr.mxu0 0.0
  %5438 = vmatpush2.msra.mxu0 0.0
  %5439 = vmatprep.subr.mxu0 0.0
  %5440 = vmatpush2.msra.mxu0 0.0
  %5441 = vmatprep.subr.mxu0 0.0
  %5442 = vmatpush2.msra.mxu0 0.0
  %5443 = vmatprep.subr.mxu0 0.0
  %5444 = vmatpush2.msra.mxu0 0.0
  %5445 = vmatprep.mubr.f32.mxu0 0.0
  %5446 = vmatmul.mubr.f32.gmra.mxu0 %v4880
  %v5447 = vpop.f32.mrf.mxu0
  %v5448 = vadd.f32 0.0, %v5447
  %v5449 = vpop.f32.mrf.mxu0
  %5450 = vmatprep.mubr.f32.mxu0 0.0
  %5451 = vmatmul.mubr.f32.gmra.mxu0 %v4883
  %v5452 = vpop.f32.mrf.mxu0
  %v5453 = vadd.f32 0.0, %v5452
  %v5454 = vpop.f32.mrf.mxu0
  %5455 = vmatprep.mubr.f32.mxu0 0.0
  %5456 = vmatmul.mubr.f32.gmra.mxu0 %v4886
  %v5457 = vpop.f32.mrf.mxu0
  %v5458 = vadd.f32 0.0, %v5457
  %v5459 = vpop.f32.mrf.mxu0
  %5460 = vmatprep.mubr.f32.mxu0 0.0
  %5461 = vmatmul.mubr.f32.gmra.mxu0 %v4889
  %v5462 = vpop.f32.mrf.mxu0
  %v5463 = vadd.f32 0.0, %v5462
  %v5464 = vpop.f32.mrf.mxu0
  %5465 = vmatprep.mubr.f32.mxu0 0.0
  %5466 = vmatmul.mubr.f32.gmra.mxu0 %v4892
  %v5467 = vpop.f32.mrf.mxu0
  %v5468 = vadd.f32 0.0, %v5467
  %v5469 = vpop.f32.mrf.mxu0
  %5470 = vmatprep.mubr.f32.mxu0 0.0
  %5471 = vmatmul.mubr.f32.gmra.mxu0 %v4895
  %v5472 = vpop.f32.mrf.mxu0
  %v5473 = vadd.f32 0.0, %v5472
  %v5474 = vpop.f32.mrf.mxu0
  %5475 = vmatprep.mubr.f32.mxu0 0.0
  %5476 = vmatmul.mubr.f32.gmra.mxu0 %v4898
  %v5477 = vpop.f32.mrf.mxu0
  %v5478 = vadd.f32 0.0, %v5477
  %v5479 = vpop.f32.mrf.mxu0
  %5480 = vmatprep.mubr.f32.mxu0 0.0
  %5481 = vmatmul.mubr.f32.gmra.mxu0 %v4901
  %v5482 = vpop.f32.mrf.mxu0
  %v5483 = vadd.f32 0.0, %v5482
  %v5484 = vpop.f32.mrf.mxu0
  %5485 = vmatprep.mubr.f32.mxu0 0.0
  %5486 = vmatmul.mubr.f32.gmra.mxu0 %v4904
  %v5487 = vpop.f32.mrf.mxu0
  %v5488 = vadd.f32 0.0, %v5487
  %v5489 = vpop.f32.mrf.mxu0
  %5490 = vmatprep.mubr.f32.mxu0 0.0
  %5491 = vmatmul.mubr.f32.gmra.mxu0 %v4907
  %v5492 = vpop.f32.mrf.mxu0
  %v5493 = vadd.f32 0.0, %v5492
  %v5494 = vpop.f32.mrf.mxu0
  %5495 = vmatprep.mubr.f32.mxu0 0.0
  %5496 = vmatmul.mubr.f32.gmra.mxu0 %v4910
  %v5497 = vpop.f32.mrf.mxu0
  %v5498 = vadd.f32 0.0, %v5497
  %v5499 = vpop.f32.mrf.mxu0
  %5500 = vmatprep.mubr.f32.mxu0 0.0
  %5501 = vmatmul.mubr.f32.gmra.mxu0 %v4913
  %v5502 = vpop.f32.mrf.mxu0
  %v5503 = vadd.f32 0.0, %v5502
  %v5504 = vpop.f32.mrf.mxu0
  %5505 = vmatprep.mubr.f32.mxu0 0.0
  %5506 = vmatmul.mubr.f32.gmra.mxu0 %v4916
  %v5507 = vpop.f32.mrf.mxu0
  %v5508 = vadd.f32 0.0, %v5507
  %v5509 = vpop.f32.mrf.mxu0
  %5510 = vmatprep.mubr.f32.mxu0 0.0
  %5511 = vmatmul.mubr.f32.gmra.mxu0 %v4919
  %v5512 = vpop.f32.mrf.mxu0
  %v5513 = vadd.f32 0.0, %v5512
  %v5514 = vpop.f32.mrf.mxu0
  %5515 = vmatprep.mubr.f32.mxu0 0.0
  %5516 = vmatmul.mubr.f32.gmra.mxu0 %v4922
  %v5517 = vpop.f32.mrf.mxu0
  %v5518 = vadd.f32 0.0, %v5517
  %v5519 = vpop.f32.mrf.mxu0
  %5520 = vmatprep.mubr.f32.mxu0 0.0
  %5521 = vmatmul.mubr.f32.gmra.mxu0 %v4925
  %v5522 = vpop.f32.mrf.mxu0
  %v5523 = vadd.f32 0.0, %v5522
  %v5524 = vpop.f32.mrf.mxu0
  %5525 = vdwg.mxu0
  %5526 = vmatprep.subr.mxu0 0.0
  %5527 = vmatpush1.msra.mxu0 0.0
  %5528 = vmatprep.subr.mxu0 0.0
  %5529 = vmatpush1.msra.mxu0 0.0
  %5530 = vmatprep.subr.mxu0 0.0
  %5531 = vmatpush1.msra.mxu0 0.0
  %5532 = vmatprep.subr.mxu0 0.0
  %5533 = vmatpush1.msra.mxu0 0.0
  %5534 = vmatprep.subr.mxu0 0.0
  %5535 = vmatpush1.msra.mxu0 0.0
  %5536 = vmatprep.subr.mxu0 0.0
  %5537 = vmatpush1.msra.mxu0 0.0
  %5538 = vmatprep.subr.mxu0 0.0
  %5539 = vmatpush1.msra.mxu0 0.0
  %5540 = vmatprep.subr.mxu0 0.0
  %5541 = vmatpush1.msra.mxu0 0.0
  %5542 = vmatprep.subr.mxu0 0.0
  %5543 = vmatpush1.msra.mxu0 0.0
  %5544 = vmatprep.subr.mxu0 0.0
  %5545 = vmatpush1.msra.mxu0 0.0
  %5546 = vmatprep.subr.mxu0 0.0
  %5547 = vmatpush1.msra.mxu0 0.0
  %5548 = vmatprep.subr.mxu0 0.0
  %5549 = vmatpush1.msra.mxu0 0.0
  %5550 = vmatprep.subr.mxu0 0.0
  %5551 = vmatpush1.msra.mxu0 %v5380
  %5552 = vmatprep.subr.mxu0 0.0
  %5553 = vmatpush1.msra.mxu0 %v5379
  %5554 = vmatprep.subr.mxu0 0.0
  %5555 = vmatpush1.msra.mxu0 %v5378
  %5556 = vmatprep.subr.mxu0 0.0
  %5557 = vmatpush1.msra.mxu0 %v5377
  %5558 = vmatprep.subr.mxu0 0.0
  %5559 = vmatpush2.msra.mxu0 0.0
  %5560 = vmatprep.subr.mxu0 0.0
  %5561 = vmatpush2.msra.mxu0 0.0
  %5562 = vmatprep.subr.mxu0 0.0
  %5563 = vmatpush2.msra.mxu0 0.0
  %5564 = vmatprep.subr.mxu0 0.0
  %5565 = vmatpush2.msra.mxu0 0.0
  %5566 = vmatprep.subr.mxu0 0.0
  %5567 = vmatpush2.msra.mxu0 0.0
  %5568 = vmatprep.subr.mxu0 0.0
  %5569 = vmatpush2.msra.mxu0 0.0
  %5570 = vmatprep.subr.mxu0 0.0
  %5571 = vmatpush2.msra.mxu0 0.0
  %5572 = vmatprep.subr.mxu0 0.0
  %5573 = vmatpush2.msra.mxu0 0.0
  %5574 = vmatprep.subr.mxu0 0.0
  %5575 = vmatpush2.msra.mxu0 0.0
  %5576 = vmatprep.subr.mxu0 0.0
  %5577 = vmatpush2.msra.mxu0 0.0
  %5578 = vmatprep.subr.mxu0 0.0
  %5579 = vmatpush2.msra.mxu0 0.0
  %5580 = vmatprep.subr.mxu0 0.0
  %5581 = vmatpush2.msra.mxu0 0.0
  %5582 = vmatprep.subr.mxu0 0.0
  %5583 = vmatpush2.msra.mxu0 0.0
  %5584 = vmatprep.subr.mxu0 0.0
  %5585 = vmatpush2.msra.mxu0 0.0
  %5586 = vmatprep.subr.mxu0 0.0
  %5587 = vmatpush2.msra.mxu0 0.0
  %5588 = vmatprep.subr.mxu0 0.0
  %5589 = vmatpush2.msra.mxu0 0.0
  %5590 = vmatprep.mubr.f32.mxu0 0.0
  %5591 = vmatmul.mubr.f32.gmra.mxu0 %v5073
  %v5592 = vpop.f32.mrf.mxu0
  %v5593 = vadd.f32 %v5448, %v5592
  %v5594 = vpop.f32.mrf.mxu0
  %5595 = vmatprep.mubr.f32.mxu0 0.0
  %5596 = vmatmul.mubr.f32.gmra.mxu0 %v5076
  %v5597 = vpop.f32.mrf.mxu0
  %v5598 = vadd.f32 %v5453, %v5597
  %v5599 = vpop.f32.mrf.mxu0
  %5600 = vmatprep.mubr.f32.mxu0 0.0
  %5601 = vmatmul.mubr.f32.gmra.mxu0 %v5079
  %v5602 = vpop.f32.mrf.mxu0
  %v5603 = vadd.f32 %v5458, %v5602
  %v5604 = vpop.f32.mrf.mxu0
  %5605 = vmatprep.mubr.f32.mxu0 0.0
  %5606 = vmatmul.mubr.f32.gmra.mxu0 %v5082
  %v5607 = vpop.f32.mrf.mxu0
  %v5608 = vadd.f32 %v5463, %v5607
  %v5609 = vpop.f32.mrf.mxu0
  %5610 = vmatprep.mubr.f32.mxu0 0.0
  %5611 = vmatmul.mubr.f32.gmra.mxu0 %v5085
  %v5612 = vpop.f32.mrf.mxu0
  %v5613 = vadd.f32 %v5468, %v5612
  %v5614 = vpop.f32.mrf.mxu0
  %5615 = vmatprep.mubr.f32.mxu0 0.0
  %5616 = vmatmul.mubr.f32.gmra.mxu0 %v5088
  %v5617 = vpop.f32.mrf.mxu0
  %v5618 = vadd.f32 %v5473, %v5617
  %v5619 = vpop.f32.mrf.mxu0
  %5620 = vmatprep.mubr.f32.mxu0 0.0
  %5621 = vmatmul.mubr.f32.gmra.mxu0 %v5091
  %v5622 = vpop.f32.mrf.mxu0
  %v5623 = vadd.f32 %v5478, %v5622
  %v5624 = vpop.f32.mrf.mxu0
  %5625 = vmatprep.mubr.f32.mxu0 0.0
  %5626 = vmatmul.mubr.f32.gmra.mxu0 %v5094
  %v5627 = vpop.f32.mrf.mxu0
  %v5628 = vadd.f32 %v5483, %v5627
  %v5629 = vpop.f32.mrf.mxu0
  %5630 = vmatprep.mubr.f32.mxu0 0.0
  %5631 = vmatmul.mubr.f32.gmra.mxu0 %v5097
  %v5632 = vpop.f32.mrf.mxu0
  %v5633 = vadd.f32 %v5488, %v5632
  %v5634 = vpop.f32.mrf.mxu0
  %5635 = vmatprep.mubr.f32.mxu0 0.0
  %5636 = vmatmul.mubr.f32.gmra.mxu0 %v5100
  %v5637 = vpop.f32.mrf.mxu0
  %v5638 = vadd.f32 %v5493, %v5637
  %v5639 = vpop.f32.mrf.mxu0
  %5640 = vmatprep.mubr.f32.mxu0 0.0
  %5641 = vmatmul.mubr.f32.gmra.mxu0 %v5103
  %v5642 = vpop.f32.mrf.mxu0
  %v5643 = vadd.f32 %v5498, %v5642
  %v5644 = vpop.f32.mrf.mxu0
  %5645 = vmatprep.mubr.f32.mxu0 0.0
  %5646 = vmatmul.mubr.f32.gmra.mxu0 %v5106
  %v5647 = vpop.f32.mrf.mxu0
  %v5648 = vadd.f32 %v5503, %v5647
  %v5649 = vpop.f32.mrf.mxu0
  %5650 = vmatprep.mubr.f32.mxu0 0.0
  %5651 = vmatmul.mubr.f32.gmra.mxu0 %v5109
  %v5652 = vpop.f32.mrf.mxu0
  %v5653 = vadd.f32 %v5508, %v5652
  %v5654 = vpop.f32.mrf.mxu0
  %5655 = vmatprep.mubr.f32.mxu0 0.0
  %5656 = vmatmul.mubr.f32.gmra.mxu0 %v5112
  %v5657 = vpop.f32.mrf.mxu0
  %v5658 = vadd.f32 %v5513, %v5657
  %v5659 = vpop.f32.mrf.mxu0
  %5660 = vmatprep.mubr.f32.mxu0 0.0
  %5661 = vmatmul.mubr.f32.gmra.mxu0 %v5115
  %v5662 = vpop.f32.mrf.mxu0
  %v5663 = vadd.f32 %v5518, %v5662
  %v5664 = vpop.f32.mrf.mxu0
  %5665 = vmatprep.mubr.f32.mxu0 0.0
  %5666 = vmatmul.mubr.f32.gmra.mxu0 %v5118
  %v5667 = vpop.f32.mrf.mxu0
  %v5668 = vadd.f32 %v5523, %v5667
  %v5669 = vpop.f32.mrf.mxu0
  %5670 = vdwg.mxu0
  %v5671 = vadd.f32 %v5593, %v4798
  %v5672 = vadd.f32 %v5598, %v4803
  %v5673 = vadd.f32 %v5603, %v4808
  %v5674 = vadd.f32 %v5608, %v4813
  %v5675 = vadd.f32 %v5613, %v4818
  %v5676 = vadd.f32 %v5618, %v4823
  %v5677 = vadd.f32 %v5623, %v4828
  %v5678 = vadd.f32 %v5628, %v4833
  %v5679 = vadd.f32 %v5633, %v4838
  %v5680 = vadd.f32 %v5638, %v4843
  %v5681 = vadd.f32 %v5643, %v4848
  %v5682 = vadd.f32 %v5648, %v4853
  %v5683 = vadd.f32 %v5653, %v4858
  %v5684 = vadd.f32 %v5658, %v4863
  %v5685 = vadd.f32 %v5663, %v4868
  %v5686 = vadd.f32 %v5668, %v4873
  %v5687 = vxor.u32 %v5671, 2147483648
  %v5688 = vxor.u32 %v5672, 2147483648
  %v5689 = vxor.u32 %v5673, 2147483648
  %v5690 = vxor.u32 %v5674, 2147483648
  %v5691 = vmul.f32 %v5687, 1.442695
  %v5692 = vpow.pop %v5691
  %v5693 = vmul.f32 %v5688, 1.442695
  %v5694 = vpow.pop %v5693
  %v5695 = vmul.f32 %v5689, 1.442695
  %v5696 = vpow.pop %v5695
  %v5697 = vmul.f32 %v5690, 1.442695
  %v5698 = vpow.pop %v5697
  %v5699 = vadd.f32 %v5692, 1.0
  %v5700 = vadd.f32 %v5694, 1.0
  %v5701 = vadd.f32 %v5696, 1.0
  %v5702 = vadd.f32 %v5698, 1.0
  %v5703 = vrcp.pop %v5699
  %v5704 = vmul.f32 1.0, %v5703
  %v5705 = vrcp.pop %v5700
  %v5706 = vmul.f32 1.0, %v5705
  %v5707 = vrcp.pop %v5701
  %v5708 = vmul.f32 1.0, %v5707
  %v5709 = vrcp.pop %v5702
  %v5710 = vmul.f32 1.0, %v5709
  %v5711 = vxor.u32 %v5675, 2147483648
  %v5712 = vxor.u32 %v5676, 2147483648
  %v5713 = vxor.u32 %v5677, 2147483648
  %v5714 = vxor.u32 %v5678, 2147483648
  %v5715 = vmul.f32 %v5711, 1.442695
  %v5716 = vpow.pop %v5715
  %v5717 = vmul.f32 %v5712, 1.442695
  %v5718 = vpow.pop %v5717
  %v5719 = vmul.f32 %v5713, 1.442695
  %v5720 = vpow.pop %v5719
  %v5721 = vmul.f32 %v5714, 1.442695
  %v5722 = vpow.pop %v5721
  %v5723 = vadd.f32 %v5716, 1.0
  %v5724 = vadd.f32 %v5718, 1.0
  %v5725 = vadd.f32 %v5720, 1.0
  %v5726 = vadd.f32 %v5722, 1.0
  %v5727 = vrcp.pop %v5723
  %v5728 = vmul.f32 1.0, %v5727
  %v5729 = vrcp.pop %v5724
  %v5730 = vmul.f32 1.0, %v5729
  %v5731 = vrcp.pop %v5725
  %v5732 = vmul.f32 1.0, %v5731
  %v5733 = vrcp.pop %v5726
  %v5734 = vmul.f32 1.0, %v5733
  %v5735 = vtanh.pop %v5679
  %v5736 = vtanh.pop %v5680
  %v5737 = vtanh.pop %v5681
  %v5738 = vtanh.pop %v5682
  %v5739 = vxor.u32 %v5683, 2147483648
  %v5740 = vxor.u32 %v5684, 2147483648
  %v5741 = vxor.u32 %v5685, 2147483648
  %v5742 = vxor.u32 %v5686, 2147483648
  %v5743 = vmul.f32 %v5739, 1.442695
  %v5744 = vpow.pop %v5743
  %v5745 = vmul.f32 %v5740, 1.442695
  %v5746 = vpow.pop %v5745
  %v5747 = vmul.f32 %v5741, 1.442695
  %v5748 = vpow.pop %v5747
  %v5749 = vmul.f32 %v5742, 1.442695
  %v5750 = vpow.pop %v5749
  %v5751 = vadd.f32 %v5744, 1.0
  %v5752 = vadd.f32 %v5746, 1.0
  %v5753 = vadd.f32 %v5748, 1.0
  %v5754 = vadd.f32 %v5750, 1.0
  %v5755 = vrcp.pop %v5751
  %v5756 = vmul.f32 1.0, %v5755
  %v5757 = vrcp.pop %v5752
  %v5758 = vmul.f32 1.0, %v5757
  %v5759 = vrcp.pop %v5753
  %v5760 = vmul.f32 1.0, %v5759
  %v5761 = vrcp.pop %v5754
  %v5762 = vmul.f32 1.0, %v5761
  %v5763 = vmul.f32 %v5728, %v5365
  %v5764 = vmul.f32 %v5730, %v5366
  %v5765 = vmul.f32 %v5732, %v5367
  %v5766 = vmul.f32 %v5734, %v5368
  %v5767 = vmul.f32 %v5704, %v5735
  %v5768 = vmul.f32 %v5706, %v5736
  %v5769 = vmul.f32 %v5708, %v5737
  %v5770 = vmul.f32 %v5710, %v5738
  %v5771 = vadd.f32 %v5763, %v5767
  %v5772 = vadd.f32 %v5764, %v5768
  %v5773 = vadd.f32 %v5765, %v5769
  %v5774 = vadd.f32 %v5766, %v5770
  %v5775 = vtanh.pop %v5771
  %v5776 = vtanh.pop %v5772
  %v5777 = vtanh.pop %v5773
  %v5778 = vtanh.pop %v5774
  %v5779 = vmul.f32 %v5756, %v5775
  %v5780 = vmul.f32 %v5758, %v5776
  %v5781 = vmul.f32 %v5760, %v5777
  %v5782 = vmul.f32 %v5762, %v5778
  %v5783 = vld [vmem:[%s2538] sm:$0xff]
  %v5784 = vld [vmem:[%s2538 + $0x8] sm:$0xff]
  %v5785 = vld [vmem:[%s2538 + $0x10] sm:$0xff]
  %v5786 = vld [vmem:[%s2538 + $0x18] sm:$0xff]
  %5787 = vmatprep.subr.mxu0 0.0
  %5788 = vmatpush1.msra.mxu0 0.0
  %5789 = vmatprep.subr.mxu0 0.0
  %5790 = vmatpush1.msra.mxu0 0.0
  %5791 = vmatprep.subr.mxu0 0.0
  %5792 = vmatpush1.msra.mxu0 0.0
  %5793 = vmatprep.subr.mxu0 0.0
  %5794 = vmatpush1.msra.mxu0 0.0
  %5795 = vmatprep.subr.mxu0 0.0
  %5796 = vmatpush1.msra.mxu0 0.0
  %5797 = vmatprep.subr.mxu0 0.0
  %5798 = vmatpush1.msra.mxu0 0.0
  %5799 = vmatprep.subr.mxu0 0.0
  %5800 = vmatpush1.msra.mxu0 0.0
  %5801 = vmatprep.subr.mxu0 0.0
  %5802 = vmatpush1.msra.mxu0 0.0
  %5803 = vmatprep.subr.mxu0 0.0
  %5804 = vmatpush1.msra.mxu0 0.0
  %5805 = vmatprep.subr.mxu0 0.0
  %5806 = vmatpush1.msra.mxu0 0.0
  %5807 = vmatprep.subr.mxu0 0.0
  %5808 = vmatpush1.msra.mxu0 0.0
  %5809 = vmatprep.subr.mxu0 0.0
  %5810 = vmatpush1.msra.mxu0 0.0
  %5811 = vmatprep.subr.mxu0 0.0
  %5812 = vmatpush1.msra.mxu0 %v5782
  %5813 = vmatprep.subr.mxu0 0.0
  %5814 = vmatpush1.msra.mxu0 %v5781
  %5815 = vmatprep.subr.mxu0 0.0
  %5816 = vmatpush1.msra.mxu0 %v5780
  %5817 = vmatprep.subr.mxu0 0.0
  %5818 = vmatpush1.msra.mxu0 %v5779
  %5819 = vmatprep.subr.mxu0 0.0
  %5820 = vmatpush2.msra.mxu0 0.0
  %5821 = vmatprep.subr.mxu0 0.0
  %5822 = vmatpush2.msra.mxu0 0.0
  %5823 = vmatprep.subr.mxu0 0.0
  %5824 = vmatpush2.msra.mxu0 0.0
  %5825 = vmatprep.subr.mxu0 0.0
  %5826 = vmatpush2.msra.mxu0 0.0
  %5827 = vmatprep.subr.mxu0 0.0
  %5828 = vmatpush2.msra.mxu0 0.0
  %5829 = vmatprep.subr.mxu0 0.0
  %5830 = vmatpush2.msra.mxu0 0.0
  %5831 = vmatprep.subr.mxu0 0.0
  %5832 = vmatpush2.msra.mxu0 0.0
  %5833 = vmatprep.subr.mxu0 0.0
  %5834 = vmatpush2.msra.mxu0 0.0
  %5835 = vmatprep.subr.mxu0 0.0
  %5836 = vmatpush2.msra.mxu0 0.0
  %5837 = vmatprep.subr.mxu0 0.0
  %5838 = vmatpush2.msra.mxu0 0.0
  %5839 = vmatprep.subr.mxu0 0.0
  %5840 = vmatpush2.msra.mxu0 0.0
  %5841 = vmatprep.subr.mxu0 0.0
  %5842 = vmatpush2.msra.mxu0 0.0
  %5843 = vmatprep.subr.mxu0 0.0
  %5844 = vmatpush2.msra.mxu0 0.0
  %5845 = vmatprep.subr.mxu0 0.0
  %5846 = vmatpush2.msra.mxu0 0.0
  %5847 = vmatprep.subr.mxu0 0.0
  %5848 = vmatpush2.msra.mxu0 0.0
  %5849 = vmatprep.subr.mxu0 0.0
  %5850 = vmatpush2.msra.mxu0 0.0
  %5851 = vmatprep.mubr.f32.mxu0 0.0
  %5852 = vmatmul.mubr.f32.gmra.mxu0 %v4880
  %v5853 = vpop.f32.mrf.mxu0
  %v5854 = vadd.f32 0.0, %v5853
  %v5855 = vpop.f32.mrf.mxu0
  %5856 = vmatprep.mubr.f32.mxu0 0.0
  %5857 = vmatmul.mubr.f32.gmra.mxu0 %v4883
  %v5858 = vpop.f32.mrf.mxu0
  %v5859 = vadd.f32 0.0, %v5858
  %v5860 = vpop.f32.mrf.mxu0
  %5861 = vmatprep.mubr.f32.mxu0 0.0
  %5862 = vmatmul.mubr.f32.gmra.mxu0 %v4886
  %v5863 = vpop.f32.mrf.mxu0
  %v5864 = vadd.f32 0.0, %v5863
  %v5865 = vpop.f32.mrf.mxu0
  %5866 = vmatprep.mubr.f32.mxu0 0.0
  %5867 = vmatmul.mubr.f32.gmra.mxu0 %v4889
  %v5868 = vpop.f32.mrf.mxu0
  %v5869 = vadd.f32 0.0, %v5868
  %v5870 = vpop.f32.mrf.mxu0
  %5871 = vmatprep.mubr.f32.mxu0 0.0
  %5872 = vmatmul.mubr.f32.gmra.mxu0 %v4892
  %v5873 = vpop.f32.mrf.mxu0
  %v5874 = vadd.f32 0.0, %v5873
  %v5875 = vpop.f32.mrf.mxu0
  %5876 = vmatprep.mubr.f32.mxu0 0.0
  %5877 = vmatmul.mubr.f32.gmra.mxu0 %v4895
  %v5878 = vpop.f32.mrf.mxu0
  %v5879 = vadd.f32 0.0, %v5878
  %v5880 = vpop.f32.mrf.mxu0
  %5881 = vmatprep.mubr.f32.mxu0 0.0
  %5882 = vmatmul.mubr.f32.gmra.mxu0 %v4898
  %v5883 = vpop.f32.mrf.mxu0
  %v5884 = vadd.f32 0.0, %v5883
  %v5885 = vpop.f32.mrf.mxu0
  %5886 = vmatprep.mubr.f32.mxu0 0.0
  %5887 = vmatmul.mubr.f32.gmra.mxu0 %v4901
  %v5888 = vpop.f32.mrf.mxu0
  %v5889 = vadd.f32 0.0, %v5888
  %v5890 = vpop.f32.mrf.mxu0
  %5891 = vmatprep.mubr.f32.mxu0 0.0
  %5892 = vmatmul.mubr.f32.gmra.mxu0 %v4904
  %v5893 = vpop.f32.mrf.mxu0
  %v5894 = vadd.f32 0.0, %v5893
  %v5895 = vpop.f32.mrf.mxu0
  %5896 = vmatprep.mubr.f32.mxu0 0.0
  %5897 = vmatmul.mubr.f32.gmra.mxu0 %v4907
  %v5898 = vpop.f32.mrf.mxu0
  %v5899 = vadd.f32 0.0, %v5898
  %v5900 = vpop.f32.mrf.mxu0
  %5901 = vmatprep.mubr.f32.mxu0 0.0
  %5902 = vmatmul.mubr.f32.gmra.mxu0 %v4910
  %v5903 = vpop.f32.mrf.mxu0
  %v5904 = vadd.f32 0.0, %v5903
  %v5905 = vpop.f32.mrf.mxu0
  %5906 = vmatprep.mubr.f32.mxu0 0.0
  %5907 = vmatmul.mubr.f32.gmra.mxu0 %v4913
  %v5908 = vpop.f32.mrf.mxu0
  %v5909 = vadd.f32 0.0, %v5908
  %v5910 = vpop.f32.mrf.mxu0
  %5911 = vmatprep.mubr.f32.mxu0 0.0
  %5912 = vmatmul.mubr.f32.gmra.mxu0 %v4916
  %v5913 = vpop.f32.mrf.mxu0
  %v5914 = vadd.f32 0.0, %v5913
  %v5915 = vpop.f32.mrf.mxu0
  %5916 = vmatprep.mubr.f32.mxu0 0.0
  %5917 = vmatmul.mubr.f32.gmra.mxu0 %v4919
  %v5918 = vpop.f32.mrf.mxu0
  %v5919 = vadd.f32 0.0, %v5918
  %v5920 = vpop.f32.mrf.mxu0
  %5921 = vmatprep.mubr.f32.mxu0 0.0
  %5922 = vmatmul.mubr.f32.gmra.mxu0 %v4922
  %v5923 = vpop.f32.mrf.mxu0
  %v5924 = vadd.f32 0.0, %v5923
  %v5925 = vpop.f32.mrf.mxu0
  %5926 = vmatprep.mubr.f32.mxu0 0.0
  %5927 = vmatmul.mubr.f32.gmra.mxu0 %v4925
  %v5928 = vpop.f32.mrf.mxu0
  %v5929 = vadd.f32 0.0, %v5928
  %v5930 = vpop.f32.mrf.mxu0
  %5931 = vdwg.mxu0
  %5932 = vmatprep.subr.mxu0 0.0
  %5933 = vmatpush1.msra.mxu0 0.0
  %5934 = vmatprep.subr.mxu0 0.0
  %5935 = vmatpush1.msra.mxu0 0.0
  %5936 = vmatprep.subr.mxu0 0.0
  %5937 = vmatpush1.msra.mxu0 0.0
  %5938 = vmatprep.subr.mxu0 0.0
  %5939 = vmatpush1.msra.mxu0 0.0
  %5940 = vmatprep.subr.mxu0 0.0
  %5941 = vmatpush1.msra.mxu0 0.0
  %5942 = vmatprep.subr.mxu0 0.0
  %5943 = vmatpush1.msra.mxu0 0.0
  %5944 = vmatprep.subr.mxu0 0.0
  %5945 = vmatpush1.msra.mxu0 0.0
  %5946 = vmatprep.subr.mxu0 0.0
  %5947 = vmatpush1.msra.mxu0 0.0
  %5948 = vmatprep.subr.mxu0 0.0
  %5949 = vmatpush1.msra.mxu0 0.0
  %5950 = vmatprep.subr.mxu0 0.0
  %5951 = vmatpush1.msra.mxu0 0.0
  %5952 = vmatprep.subr.mxu0 0.0
  %5953 = vmatpush1.msra.mxu0 0.0
  %5954 = vmatprep.subr.mxu0 0.0
  %5955 = vmatpush1.msra.mxu0 0.0
  %5956 = vmatprep.subr.mxu0 0.0
  %5957 = vmatpush1.msra.mxu0 %v5786
  %5958 = vmatprep.subr.mxu0 0.0
  %5959 = vmatpush1.msra.mxu0 %v5785
  %5960 = vmatprep.subr.mxu0 0.0
  %5961 = vmatpush1.msra.mxu0 %v5784
  %5962 = vmatprep.subr.mxu0 0.0
  %5963 = vmatpush1.msra.mxu0 %v5783
  %5964 = vmatprep.subr.mxu0 0.0
  %5965 = vmatpush2.msra.mxu0 0.0
  %5966 = vmatprep.subr.mxu0 0.0
  %5967 = vmatpush2.msra.mxu0 0.0
  %5968 = vmatprep.subr.mxu0 0.0
  %5969 = vmatpush2.msra.mxu0 0.0
  %5970 = vmatprep.subr.mxu0 0.0
  %5971 = vmatpush2.msra.mxu0 0.0
  %5972 = vmatprep.subr.mxu0 0.0
  %5973 = vmatpush2.msra.mxu0 0.0
  %5974 = vmatprep.subr.mxu0 0.0
  %5975 = vmatpush2.msra.mxu0 0.0
  %5976 = vmatprep.subr.mxu0 0.0
  %5977 = vmatpush2.msra.mxu0 0.0
  %5978 = vmatprep.subr.mxu0 0.0
  %5979 = vmatpush2.msra.mxu0 0.0
  %5980 = vmatprep.subr.mxu0 0.0
  %5981 = vmatpush2.msra.mxu0 0.0
  %5982 = vmatprep.subr.mxu0 0.0
  %5983 = vmatpush2.msra.mxu0 0.0
  %5984 = vmatprep.subr.mxu0 0.0
  %5985 = vmatpush2.msra.mxu0 0.0
  %5986 = vmatprep.subr.mxu0 0.0
  %5987 = vmatpush2.msra.mxu0 0.0
  %5988 = vmatprep.subr.mxu0 0.0
  %5989 = vmatpush2.msra.mxu0 0.0
  %5990 = vmatprep.subr.mxu0 0.0
  %5991 = vmatpush2.msra.mxu0 0.0
  %5992 = vmatprep.subr.mxu0 0.0
  %5993 = vmatpush2.msra.mxu0 0.0
  %5994 = vmatprep.subr.mxu0 0.0
  %5995 = vmatpush2.msra.mxu0 0.0
  %5996 = vmatprep.mubr.f32.mxu0 0.0
  %5997 = vmatmul.mubr.f32.gmra.mxu0 %v5073
  %v5998 = vpop.f32.mrf.mxu0
  %v5999 = vadd.f32 %v5854, %v5998
  %v6000 = vpop.f32.mrf.mxu0
  %6001 = vmatprep.mubr.f32.mxu0 0.0
  %6002 = vmatmul.mubr.f32.gmra.mxu0 %v5076
  %v6003 = vpop.f32.mrf.mxu0
  %v6004 = vadd.f32 %v5859, %v6003
  %v6005 = vpop.f32.mrf.mxu0
  %6006 = vmatprep.mubr.f32.mxu0 0.0
  %6007 = vmatmul.mubr.f32.gmra.mxu0 %v5079
  %v6008 = vpop.f32.mrf.mxu0
  %v6009 = vadd.f32 %v5864, %v6008
  %v6010 = vpop.f32.mrf.mxu0
  %6011 = vmatprep.mubr.f32.mxu0 0.0
  %6012 = vmatmul.mubr.f32.gmra.mxu0 %v5082
  %v6013 = vpop.f32.mrf.mxu0
  %v6014 = vadd.f32 %v5869, %v6013
  %v6015 = vpop.f32.mrf.mxu0
  %6016 = vmatprep.mubr.f32.mxu0 0.0
  %6017 = vmatmul.mubr.f32.gmra.mxu0 %v5085
  %v6018 = vpop.f32.mrf.mxu0
  %v6019 = vadd.f32 %v5874, %v6018
  %v6020 = vpop.f32.mrf.mxu0
  %6021 = vmatprep.mubr.f32.mxu0 0.0
  %6022 = vmatmul.mubr.f32.gmra.mxu0 %v5088
  %v6023 = vpop.f32.mrf.mxu0
  %v6024 = vadd.f32 %v5879, %v6023
  %v6025 = vpop.f32.mrf.mxu0
  %6026 = vmatprep.mubr.f32.mxu0 0.0
  %6027 = vmatmul.mubr.f32.gmra.mxu0 %v5091
  %v6028 = vpop.f32.mrf.mxu0
  %v6029 = vadd.f32 %v5884, %v6028
  %v6030 = vpop.f32.mrf.mxu0
  %6031 = vmatprep.mubr.f32.mxu0 0.0
  %6032 = vmatmul.mubr.f32.gmra.mxu0 %v5094
  %v6033 = vpop.f32.mrf.mxu0
  %v6034 = vadd.f32 %v5889, %v6033
  %v6035 = vpop.f32.mrf.mxu0
  %6036 = vmatprep.mubr.f32.mxu0 0.0
  %6037 = vmatmul.mubr.f32.gmra.mxu0 %v5097
  %v6038 = vpop.f32.mrf.mxu0
  %v6039 = vadd.f32 %v5894, %v6038
  %v6040 = vpop.f32.mrf.mxu0
  %6041 = vmatprep.mubr.f32.mxu0 0.0
  %6042 = vmatmul.mubr.f32.gmra.mxu0 %v5100
  %v6043 = vpop.f32.mrf.mxu0
  %v6044 = vadd.f32 %v5899, %v6043
  %v6045 = vpop.f32.mrf.mxu0
  %6046 = vmatprep.mubr.f32.mxu0 0.0
  %6047 = vmatmul.mubr.f32.gmra.mxu0 %v5103
  %v6048 = vpop.f32.mrf.mxu0
  %v6049 = vadd.f32 %v5904, %v6048
  %v6050 = vpop.f32.mrf.mxu0
  %6051 = vmatprep.mubr.f32.mxu0 0.0
  %6052 = vmatmul.mubr.f32.gmra.mxu0 %v5106
  %v6053 = vpop.f32.mrf.mxu0
  %v6054 = vadd.f32 %v5909, %v6053
  %v6055 = vpop.f32.mrf.mxu0
  %6056 = vmatprep.mubr.f32.mxu0 0.0
  %6057 = vmatmul.mubr.f32.gmra.mxu0 %v5109
  %v6058 = vpop.f32.mrf.mxu0
  %v6059 = vadd.f32 %v5914, %v6058
  %v6060 = vpop.f32.mrf.mxu0
  %6061 = vmatprep.mubr.f32.mxu0 0.0
  %6062 = vmatmul.mubr.f32.gmra.mxu0 %v5112
  %v6063 = vpop.f32.mrf.mxu0
  %v6064 = vadd.f32 %v5919, %v6063
  %v6065 = vpop.f32.mrf.mxu0
  %6066 = vmatprep.mubr.f32.mxu0 0.0
  %6067 = vmatmul.mubr.f32.gmra.mxu0 %v5115
  %v6068 = vpop.f32.mrf.mxu0
  %v6069 = vadd.f32 %v5924, %v6068
  %v6070 = vpop.f32.mrf.mxu0
  %6071 = vmatprep.mubr.f32.mxu0 0.0
  %6072 = vmatmul.mubr.f32.gmra.mxu0 %v5118
  %v6073 = vpop.f32.mrf.mxu0
  %v6074 = vadd.f32 %v5929, %v6073
  %v6075 = vpop.f32.mrf.mxu0
  %6076 = vdwg.mxu0
  %v6077 = vadd.f32 %v5999, %v4798
  %v6078 = vadd.f32 %v6004, %v4803
  %v6079 = vadd.f32 %v6009, %v4808
  %v6080 = vadd.f32 %v6014, %v4813
  %v6081 = vadd.f32 %v6019, %v4818
  %v6082 = vadd.f32 %v6024, %v4823
  %v6083 = vadd.f32 %v6029, %v4828
  %v6084 = vadd.f32 %v6034, %v4833
  %v6085 = vadd.f32 %v6039, %v4838
  %v6086 = vadd.f32 %v6044, %v4843
  %v6087 = vadd.f32 %v6049, %v4848
  %v6088 = vadd.f32 %v6054, %v4853
  %v6089 = vadd.f32 %v6059, %v4858
  %v6090 = vadd.f32 %v6064, %v4863
  %v6091 = vadd.f32 %v6069, %v4868
  %v6092 = vadd.f32 %v6074, %v4873
  %v6093 = vxor.u32 %v6077, 2147483648
  %v6094 = vxor.u32 %v6078, 2147483648
  %v6095 = vxor.u32 %v6079, 2147483648
  %v6096 = vxor.u32 %v6080, 2147483648
  %v6097 = vmul.f32 %v6093, 1.442695
  %v6098 = vpow.pop %v6097
  %v6099 = vmul.f32 %v6094, 1.442695
  %v6100 = vpow.pop %v6099
  %v6101 = vmul.f32 %v6095, 1.442695
  %v6102 = vpow.pop %v6101
  %v6103 = vmul.f32 %v6096, 1.442695
  %v6104 = vpow.pop %v6103
  %v6105 = vadd.f32 %v6098, 1.0
  %v6106 = vadd.f32 %v6100, 1.0
  %v6107 = vadd.f32 %v6102, 1.0
  %v6108 = vadd.f32 %v6104, 1.0
  %v6109 = vrcp.pop %v6105
  %v6110 = vmul.f32 1.0, %v6109
  %v6111 = vrcp.pop %v6106
  %v6112 = vmul.f32 1.0, %v6111
  %v6113 = vrcp.pop %v6107
  %v6114 = vmul.f32 1.0, %v6113
  %v6115 = vrcp.pop %v6108
  %v6116 = vmul.f32 1.0, %v6115
  %v6117 = vxor.u32 %v6081, 2147483648
  %v6118 = vxor.u32 %v6082, 2147483648
  %v6119 = vxor.u32 %v6083, 2147483648
  %v6120 = vxor.u32 %v6084, 2147483648
  %v6121 = vmul.f32 %v6117, 1.442695
  %v6122 = vpow.pop %v6121
  %v6123 = vmul.f32 %v6118, 1.442695
  %v6124 = vpow.pop %v6123
  %v6125 = vmul.f32 %v6119, 1.442695
  %v6126 = vpow.pop %v6125
  %v6127 = vmul.f32 %v6120, 1.442695
  %v6128 = vpow.pop %v6127
  %v6129 = vadd.f32 %v6122, 1.0
  %v6130 = vadd.f32 %v6124, 1.0
  %v6131 = vadd.f32 %v6126, 1.0
  %v6132 = vadd.f32 %v6128, 1.0
  %v6133 = vrcp.pop %v6129
  %v6134 = vmul.f32 1.0, %v6133
  %v6135 = vrcp.pop %v6130
  %v6136 = vmul.f32 1.0, %v6135
  %v6137 = vrcp.pop %v6131
  %v6138 = vmul.f32 1.0, %v6137
  %v6139 = vrcp.pop %v6132
  %v6140 = vmul.f32 1.0, %v6139
  %v6141 = vtanh.pop %v6085
  %v6142 = vtanh.pop %v6086
  %v6143 = vtanh.pop %v6087
  %v6144 = vtanh.pop %v6088
  %v6145 = vxor.u32 %v6089, 2147483648
  %v6146 = vxor.u32 %v6090, 2147483648
  %v6147 = vxor.u32 %v6091, 2147483648
  %v6148 = vxor.u32 %v6092, 2147483648
  %v6149 = vmul.f32 %v6145, 1.442695
  %v6150 = vpow.pop %v6149
  %v6151 = vmul.f32 %v6146, 1.442695
  %v6152 = vpow.pop %v6151
  %v6153 = vmul.f32 %v6147, 1.442695
  %v6154 = vpow.pop %v6153
  %v6155 = vmul.f32 %v6148, 1.442695
  %v6156 = vpow.pop %v6155
  %v6157 = vadd.f32 %v6150, 1.0
  %v6158 = vadd.f32 %v6152, 1.0
  %v6159 = vadd.f32 %v6154, 1.0
  %v6160 = vadd.f32 %v6156, 1.0
  %v6161 = vrcp.pop %v6157
  %v6162 = vmul.f32 1.0, %v6161
  %v6163 = vrcp.pop %v6158
  %v6164 = vmul.f32 1.0, %v6163
  %v6165 = vrcp.pop %v6159
  %v6166 = vmul.f32 1.0, %v6165
  %v6167 = vrcp.pop %v6160
  %v6168 = vmul.f32 1.0, %v6167
  %v6169 = vmul.f32 %v6134, %v5771
  %v6170 = vmul.f32 %v6136, %v5772
  %v6171 = vmul.f32 %v6138, %v5773
  %v6172 = vmul.f32 %v6140, %v5774
  %v6173 = vmul.f32 %v6110, %v6141
  %v6174 = vmul.f32 %v6112, %v6142
  %v6175 = vmul.f32 %v6114, %v6143
  %v6176 = vmul.f32 %v6116, %v6144
  %v6177 = vadd.f32 %v6169, %v6173
  %v6178 = vadd.f32 %v6170, %v6174
  %v6179 = vadd.f32 %v6171, %v6175
  %v6180 = vadd.f32 %v6172, %v6176
  %v6181 = vtanh.pop %v6177
  %v6182 = vtanh.pop %v6178
  %v6183 = vtanh.pop %v6179
  %v6184 = vtanh.pop %v6180
  %v6185 = vmul.f32 %v6162, %v6181
  %v6186 = vmul.f32 %v6164, %v6182
  %v6187 = vmul.f32 %v6166, %v6183
  %v6188 = vmul.f32 %v6168, %v6184
  %v6189 = vld [vmem:[%s2950] sm:$0xff]
  %v6190 = vld [vmem:[%s2950 + $0x8] sm:$0xff]
  %v6191 = vld [vmem:[%s2950 + $0x10] sm:$0xff]
  %v6192 = vld [vmem:[%s2950 + $0x18] sm:$0xff]
  %6193 = vmatprep.subr.mxu0 0.0
  %6194 = vmatpush1.msra.mxu0 0.0
  %6195 = vmatprep.subr.mxu0 0.0
  %6196 = vmatpush1.msra.mxu0 0.0
  %6197 = vmatprep.subr.mxu0 0.0
  %6198 = vmatpush1.msra.mxu0 0.0
  %6199 = vmatprep.subr.mxu0 0.0
  %6200 = vmatpush1.msra.mxu0 0.0
  %6201 = vmatprep.subr.mxu0 0.0
  %6202 = vmatpush1.msra.mxu0 0.0
  %6203 = vmatprep.subr.mxu0 0.0
  %6204 = vmatpush1.msra.mxu0 0.0
  %6205 = vmatprep.subr.mxu0 0.0
  %6206 = vmatpush1.msra.mxu0 0.0
  %6207 = vmatprep.subr.mxu0 0.0
  %6208 = vmatpush1.msra.mxu0 0.0
  %6209 = vmatprep.subr.mxu0 0.0
  %6210 = vmatpush1.msra.mxu0 0.0
  %6211 = vmatprep.subr.mxu0 0.0
  %6212 = vmatpush1.msra.mxu0 0.0
  %6213 = vmatprep.subr.mxu0 0.0
  %6214 = vmatpush1.msra.mxu0 0.0
  %6215 = vmatprep.subr.mxu0 0.0
  %6216 = vmatpush1.msra.mxu0 0.0
  %6217 = vmatprep.subr.mxu0 0.0
  %6218 = vmatpush1.msra.mxu0 %v6188
  %6219 = vmatprep.subr.mxu0 0.0
  %6220 = vmatpush1.msra.mxu0 %v6187
  %6221 = vmatprep.subr.mxu0 0.0
  %6222 = vmatpush1.msra.mxu0 %v6186
  %6223 = vmatprep.subr.mxu0 0.0
  %6224 = vmatpush1.msra.mxu0 %v6185
  %6225 = vmatprep.subr.mxu0 0.0
  %6226 = vmatpush2.msra.mxu0 0.0
  %6227 = vmatprep.subr.mxu0 0.0
  %6228 = vmatpush2.msra.mxu0 0.0
  %6229 = vmatprep.subr.mxu0 0.0
  %6230 = vmatpush2.msra.mxu0 0.0
  %6231 = vmatprep.subr.mxu0 0.0
  %6232 = vmatpush2.msra.mxu0 0.0
  %6233 = vmatprep.subr.mxu0 0.0
  %6234 = vmatpush2.msra.mxu0 0.0
  %6235 = vmatprep.subr.mxu0 0.0
  %6236 = vmatpush2.msra.mxu0 0.0
  %6237 = vmatprep.subr.mxu0 0.0
  %6238 = vmatpush2.msra.mxu0 0.0
  %6239 = vmatprep.subr.mxu0 0.0
  %6240 = vmatpush2.msra.mxu0 0.0
  %6241 = vmatprep.subr.mxu0 0.0
  %6242 = vmatpush2.msra.mxu0 0.0
  %6243 = vmatprep.subr.mxu0 0.0
  %6244 = vmatpush2.msra.mxu0 0.0
  %6245 = vmatprep.subr.mxu0 0.0
  %6246 = vmatpush2.msra.mxu0 0.0
  %6247 = vmatprep.subr.mxu0 0.0
  %6248 = vmatpush2.msra.mxu0 0.0
  %6249 = vmatprep.subr.mxu0 0.0
  %6250 = vmatpush2.msra.mxu0 0.0
  %6251 = vmatprep.subr.mxu0 0.0
  %6252 = vmatpush2.msra.mxu0 0.0
  %6253 = vmatprep.subr.mxu0 0.0
  %6254 = vmatpush2.msra.mxu0 0.0
  %6255 = vmatprep.subr.mxu0 0.0
  %6256 = vmatpush2.msra.mxu0 0.0
  %6257 = vmatprep.mubr.f32.mxu0 0.0
  %6258 = vmatmul.mubr.f32.gmra.mxu0 %v4880
  %v6259 = vpop.f32.mrf.mxu0
  %v6260 = vadd.f32 0.0, %v6259
  %v6261 = vpop.f32.mrf.mxu0
  %6262 = vmatprep.mubr.f32.mxu0 0.0
  %6263 = vmatmul.mubr.f32.gmra.mxu0 %v4883
  %v6264 = vpop.f32.mrf.mxu0
  %v6265 = vadd.f32 0.0, %v6264
  %v6266 = vpop.f32.mrf.mxu0
  %6267 = vmatprep.mubr.f32.mxu0 0.0
  %6268 = vmatmul.mubr.f32.gmra.mxu0 %v4886
  %v6269 = vpop.f32.mrf.mxu0
  %v6270 = vadd.f32 0.0, %v6269
  %v6271 = vpop.f32.mrf.mxu0
  %6272 = vmatprep.mubr.f32.mxu0 0.0
  %6273 = vmatmul.mubr.f32.gmra.mxu0 %v4889
  %v6274 = vpop.f32.mrf.mxu0
  %v6275 = vadd.f32 0.0, %v6274
  %v6276 = vpop.f32.mrf.mxu0
  %6277 = vmatprep.mubr.f32.mxu0 0.0
  %6278 = vmatmul.mubr.f32.gmra.mxu0 %v4892
  %v6279 = vpop.f32.mrf.mxu0
  %v6280 = vadd.f32 0.0, %v6279
  %v6281 = vpop.f32.mrf.mxu0
  %6282 = vmatprep.mubr.f32.mxu0 0.0
  %6283 = vmatmul.mubr.f32.gmra.mxu0 %v4895
  %v6284 = vpop.f32.mrf.mxu0
  %v6285 = vadd.f32 0.0, %v6284
  %v6286 = vpop.f32.mrf.mxu0
  %6287 = vmatprep.mubr.f32.mxu0 0.0
  %6288 = vmatmul.mubr.f32.gmra.mxu0 %v4898
  %v6289 = vpop.f32.mrf.mxu0
  %v6290 = vadd.f32 0.0, %v6289
  %v6291 = vpop.f32.mrf.mxu0
  %6292 = vmatprep.mubr.f32.mxu0 0.0
  %6293 = vmatmul.mubr.f32.gmra.mxu0 %v4901
  %v6294 = vpop.f32.mrf.mxu0
  %v6295 = vadd.f32 0.0, %v6294
  %v6296 = vpop.f32.mrf.mxu0
  %6297 = vmatprep.mubr.f32.mxu0 0.0
  %6298 = vmatmul.mubr.f32.gmra.mxu0 %v4904
  %v6299 = vpop.f32.mrf.mxu0
  %v6300 = vadd.f32 0.0, %v6299
  %v6301 = vpop.f32.mrf.mxu0
  %6302 = vmatprep.mubr.f32.mxu0 0.0
  %6303 = vmatmul.mubr.f32.gmra.mxu0 %v4907
  %v6304 = vpop.f32.mrf.mxu0
  %v6305 = vadd.f32 0.0, %v6304
  %v6306 = vpop.f32.mrf.mxu0
  %6307 = vmatprep.mubr.f32.mxu0 0.0
  %6308 = vmatmul.mubr.f32.gmra.mxu0 %v4910
  %v6309 = vpop.f32.mrf.mxu0
  %v6310 = vadd.f32 0.0, %v6309
  %v6311 = vpop.f32.mrf.mxu0
  %6312 = vmatprep.mubr.f32.mxu0 0.0
  %6313 = vmatmul.mubr.f32.gmra.mxu0 %v4913
  %v6314 = vpop.f32.mrf.mxu0
  %v6315 = vadd.f32 0.0, %v6314
  %v6316 = vpop.f32.mrf.mxu0
  %6317 = vmatprep.mubr.f32.mxu0 0.0
  %6318 = vmatmul.mubr.f32.gmra.mxu0 %v4916
  %v6319 = vpop.f32.mrf.mxu0
  %v6320 = vadd.f32 0.0, %v6319
  %v6321 = vpop.f32.mrf.mxu0
  %6322 = vmatprep.mubr.f32.mxu0 0.0
  %6323 = vmatmul.mubr.f32.gmra.mxu0 %v4919
  %v6324 = vpop.f32.mrf.mxu0
  %v6325 = vadd.f32 0.0, %v6324
  %v6326 = vpop.f32.mrf.mxu0
  %6327 = vmatprep.mubr.f32.mxu0 0.0
  %6328 = vmatmul.mubr.f32.gmra.mxu0 %v4922
  %v6329 = vpop.f32.mrf.mxu0
  %v6330 = vadd.f32 0.0, %v6329
  %v6331 = vpop.f32.mrf.mxu0
  %6332 = vmatprep.mubr.f32.mxu0 0.0
  %6333 = vmatmul.mubr.f32.gmra.mxu0 %v4925
  %v6334 = vpop.f32.mrf.mxu0
  %v6335 = vadd.f32 0.0, %v6334
  %v6336 = vpop.f32.mrf.mxu0
  %6337 = vdwg.mxu0
  %6338 = vmatprep.subr.mxu0 0.0
  %6339 = vmatpush1.msra.mxu0 0.0
  %6340 = vmatprep.subr.mxu0 0.0
  %6341 = vmatpush1.msra.mxu0 0.0
  %6342 = vmatprep.subr.mxu0 0.0
  %6343 = vmatpush1.msra.mxu0 0.0
  %6344 = vmatprep.subr.mxu0 0.0
  %6345 = vmatpush1.msra.mxu0 0.0
  %6346 = vmatprep.subr.mxu0 0.0
  %6347 = vmatpush1.msra.mxu0 0.0
  %6348 = vmatprep.subr.mxu0 0.0
  %6349 = vmatpush1.msra.mxu0 0.0
  %6350 = vmatprep.subr.mxu0 0.0
  %6351 = vmatpush1.msra.mxu0 0.0
  %6352 = vmatprep.subr.mxu0 0.0
  %6353 = vmatpush1.msra.mxu0 0.0
  %6354 = vmatprep.subr.mxu0 0.0
  %6355 = vmatpush1.msra.mxu0 0.0
  %6356 = vmatprep.subr.mxu0 0.0
  %6357 = vmatpush1.msra.mxu0 0.0
  %6358 = vmatprep.subr.mxu0 0.0
  %6359 = vmatpush1.msra.mxu0 0.0
  %6360 = vmatprep.subr.mxu0 0.0
  %6361 = vmatpush1.msra.mxu0 0.0
  %6362 = vmatprep.subr.mxu0 0.0
  %6363 = vmatpush1.msra.mxu0 %v6192
  %6364 = vmatprep.subr.mxu0 0.0
  %6365 = vmatpush1.msra.mxu0 %v6191
  %6366 = vmatprep.subr.mxu0 0.0
  %6367 = vmatpush1.msra.mxu0 %v6190
  %6368 = vmatprep.subr.mxu0 0.0
  %6369 = vmatpush1.msra.mxu0 %v6189
  %6370 = vmatprep.subr.mxu0 0.0
  %6371 = vmatpush2.msra.mxu0 0.0
  %6372 = vmatprep.subr.mxu0 0.0
  %6373 = vmatpush2.msra.mxu0 0.0
  %6374 = vmatprep.subr.mxu0 0.0
  %6375 = vmatpush2.msra.mxu0 0.0
  %6376 = vmatprep.subr.mxu0 0.0
  %6377 = vmatpush2.msra.mxu0 0.0
  %6378 = vmatprep.subr.mxu0 0.0
  %6379 = vmatpush2.msra.mxu0 0.0
  %6380 = vmatprep.subr.mxu0 0.0
  %6381 = vmatpush2.msra.mxu0 0.0
  %6382 = vmatprep.subr.mxu0 0.0
  %6383 = vmatpush2.msra.mxu0 0.0
  %6384 = vmatprep.subr.mxu0 0.0
  %6385 = vmatpush2.msra.mxu0 0.0
  %6386 = vmatprep.subr.mxu0 0.0
  %6387 = vmatpush2.msra.mxu0 0.0
  %6388 = vmatprep.subr.mxu0 0.0
  %6389 = vmatpush2.msra.mxu0 0.0
  %6390 = vmatprep.subr.mxu0 0.0
  %6391 = vmatpush2.msra.mxu0 0.0
  %6392 = vmatprep.subr.mxu0 0.0
  %6393 = vmatpush2.msra.mxu0 0.0
  %6394 = vmatprep.subr.mxu0 0.0
  %6395 = vmatpush2.msra.mxu0 0.0
  %6396 = vmatprep.subr.mxu0 0.0
  %6397 = vmatpush2.msra.mxu0 0.0
  %6398 = vmatprep.subr.mxu0 0.0
  %6399 = vmatpush2.msra.mxu0 0.0
  %6400 = vmatprep.subr.mxu0 0.0
  %6401 = vmatpush2.msra.mxu0 0.0
  %6402 = vmatprep.mubr.f32.mxu0 0.0
  %6403 = vmatmul.mubr.f32.gmra.mxu0 %v5073
  %v6404 = vpop.f32.mrf.mxu0
  %v6405 = vadd.f32 %v6260, %v6404
  %v6406 = vpop.f32.mrf.mxu0
  %6407 = vmatprep.mubr.f32.mxu0 0.0
  %6408 = vmatmul.mubr.f32.gmra.mxu0 %v5076
  %v6409 = vpop.f32.mrf.mxu0
  %v6410 = vadd.f32 %v6265, %v6409
  %v6411 = vpop.f32.mrf.mxu0
  %6412 = vmatprep.mubr.f32.mxu0 0.0
  %6413 = vmatmul.mubr.f32.gmra.mxu0 %v5079
  %v6414 = vpop.f32.mrf.mxu0
  %v6415 = vadd.f32 %v6270, %v6414
  %v6416 = vpop.f32.mrf.mxu0
  %6417 = vmatprep.mubr.f32.mxu0 0.0
  %6418 = vmatmul.mubr.f32.gmra.mxu0 %v5082
  %v6419 = vpop.f32.mrf.mxu0
  %v6420 = vadd.f32 %v6275, %v6419
  %v6421 = vpop.f32.mrf.mxu0
  %6422 = vmatprep.mubr.f32.mxu0 0.0
  %6423 = vmatmul.mubr.f32.gmra.mxu0 %v5085
  %v6424 = vpop.f32.mrf.mxu0
  %v6425 = vadd.f32 %v6280, %v6424
  %v6426 = vpop.f32.mrf.mxu0
  %6427 = vmatprep.mubr.f32.mxu0 0.0
  %6428 = vmatmul.mubr.f32.gmra.mxu0 %v5088
  %v6429 = vpop.f32.mrf.mxu0
  %v6430 = vadd.f32 %v6285, %v6429
  %v6431 = vpop.f32.mrf.mxu0
  %6432 = vmatprep.mubr.f32.mxu0 0.0
  %6433 = vmatmul.mubr.f32.gmra.mxu0 %v5091
  %v6434 = vpop.f32.mrf.mxu0
  %v6435 = vadd.f32 %v6290, %v6434
  %v6436 = vpop.f32.mrf.mxu0
  %6437 = vmatprep.mubr.f32.mxu0 0.0
  %6438 = vmatmul.mubr.f32.gmra.mxu0 %v5094
  %v6439 = vpop.f32.mrf.mxu0
  %v6440 = vadd.f32 %v6295, %v6439
  %v6441 = vpop.f32.mrf.mxu0
  %6442 = vmatprep.mubr.f32.mxu0 0.0
  %6443 = vmatmul.mubr.f32.gmra.mxu0 %v5097
  %v6444 = vpop.f32.mrf.mxu0
  %v6445 = vadd.f32 %v6300, %v6444
  %v6446 = vpop.f32.mrf.mxu0
  %6447 = vmatprep.mubr.f32.mxu0 0.0
  %6448 = vmatmul.mubr.f32.gmra.mxu0 %v5100
  %v6449 = vpop.f32.mrf.mxu0
  %v6450 = vadd.f32 %v6305, %v6449
  %v6451 = vpop.f32.mrf.mxu0
  %6452 = vmatprep.mubr.f32.mxu0 0.0
  %6453 = vmatmul.mubr.f32.gmra.mxu0 %v5103
  %v6454 = vpop.f32.mrf.mxu0
  %v6455 = vadd.f32 %v6310, %v6454
  %v6456 = vpop.f32.mrf.mxu0
  %6457 = vmatprep.mubr.f32.mxu0 0.0
  %6458 = vmatmul.mubr.f32.gmra.mxu0 %v5106
  %v6459 = vpop.f32.mrf.mxu0
  %v6460 = vadd.f32 %v6315, %v6459
  %v6461 = vpop.f32.mrf.mxu0
  %6462 = vmatprep.mubr.f32.mxu0 0.0
  %6463 = vmatmul.mubr.f32.gmra.mxu0 %v5109
  %v6464 = vpop.f32.mrf.mxu0
  %v6465 = vadd.f32 %v6320, %v6464
  %v6466 = vpop.f32.mrf.mxu0
  %6467 = vmatprep.mubr.f32.mxu0 0.0
  %6468 = vmatmul.mubr.f32.gmra.mxu0 %v5112
  %v6469 = vpop.f32.mrf.mxu0
  %v6470 = vadd.f32 %v6325, %v6469
  %v6471 = vpop.f32.mrf.mxu0
  %6472 = vmatprep.mubr.f32.mxu0 0.0
  %6473 = vmatmul.mubr.f32.gmra.mxu0 %v5115
  %v6474 = vpop.f32.mrf.mxu0
  %v6475 = vadd.f32 %v6330, %v6474
  %v6476 = vpop.f32.mrf.mxu0
  %6477 = vmatprep.mubr.f32.mxu0 0.0
  %6478 = vmatmul.mubr.f32.gmra.mxu0 %v5118
  %v6479 = vpop.f32.mrf.mxu0
  %v6480 = vadd.f32 %v6335, %v6479
  %v6481 = vpop.f32.mrf.mxu0
  %6482 = vdwg.mxu0
  %v6483 = vadd.f32 %v6405, %v4798
  %v6484 = vadd.f32 %v6410, %v4803
  %v6485 = vadd.f32 %v6415, %v4808
  %v6486 = vadd.f32 %v6420, %v4813
  %v6487 = vadd.f32 %v6425, %v4818
  %v6488 = vadd.f32 %v6430, %v4823
  %v6489 = vadd.f32 %v6435, %v4828
  %v6490 = vadd.f32 %v6440, %v4833
  %v6491 = vadd.f32 %v6445, %v4838
  %v6492 = vadd.f32 %v6450, %v4843
  %v6493 = vadd.f32 %v6455, %v4848
  %v6494 = vadd.f32 %v6460, %v4853
  %v6495 = vadd.f32 %v6465, %v4858
  %v6496 = vadd.f32 %v6470, %v4863
  %v6497 = vadd.f32 %v6475, %v4868
  %v6498 = vadd.f32 %v6480, %v4873
  %v6499 = vxor.u32 %v6483, 2147483648
  %v6500 = vxor.u32 %v6484, 2147483648
  %v6501 = vxor.u32 %v6485, 2147483648
  %v6502 = vxor.u32 %v6486, 2147483648
  %v6503 = vmul.f32 %v6499, 1.442695
  %v6504 = vpow.pop %v6503
  %v6505 = vmul.f32 %v6500, 1.442695
  %v6506 = vpow.pop %v6505
  %v6507 = vmul.f32 %v6501, 1.442695
  %v6508 = vpow.pop %v6507
  %v6509 = vmul.f32 %v6502, 1.442695
  %v6510 = vpow.pop %v6509
  %v6511 = vadd.f32 %v6504, 1.0
  %v6512 = vadd.f32 %v6506, 1.0
  %v6513 = vadd.f32 %v6508, 1.0
  %v6514 = vadd.f32 %v6510, 1.0
  %v6515 = vrcp.pop %v6511
  %v6516 = vmul.f32 1.0, %v6515
  %v6517 = vrcp.pop %v6512
  %v6518 = vmul.f32 1.0, %v6517
  %v6519 = vrcp.pop %v6513
  %v6520 = vmul.f32 1.0, %v6519
  %v6521 = vrcp.pop %v6514
  %v6522 = vmul.f32 1.0, %v6521
  %v6523 = vxor.u32 %v6487, 2147483648
  %v6524 = vxor.u32 %v6488, 2147483648
  %v6525 = vxor.u32 %v6489, 2147483648
  %v6526 = vxor.u32 %v6490, 2147483648
  %v6527 = vmul.f32 %v6523, 1.442695
  %v6528 = vpow.pop %v6527
  %v6529 = vmul.f32 %v6524, 1.442695
  %v6530 = vpow.pop %v6529
  %v6531 = vmul.f32 %v6525, 1.442695
  %v6532 = vpow.pop %v6531
  %v6533 = vmul.f32 %v6526, 1.442695
  %v6534 = vpow.pop %v6533
  %v6535 = vadd.f32 %v6528, 1.0
  %v6536 = vadd.f32 %v6530, 1.0
  %v6537 = vadd.f32 %v6532, 1.0
  %v6538 = vadd.f32 %v6534, 1.0
  %v6539 = vrcp.pop %v6535
  %v6540 = vmul.f32 1.0, %v6539
  %v6541 = vrcp.pop %v6536
  %v6542 = vmul.f32 1.0, %v6541
  %v6543 = vrcp.pop %v6537
  %v6544 = vmul.f32 1.0, %v6543
  %v6545 = vrcp.pop %v6538
  %v6546 = vmul.f32 1.0, %v6545
  %v6547 = vtanh.pop %v6491
  %v6548 = vtanh.pop %v6492
  %v6549 = vtanh.pop %v6493
  %v6550 = vtanh.pop %v6494
  %v6551 = vxor.u32 %v6495, 2147483648
  %v6552 = vxor.u32 %v6496, 2147483648
  %v6553 = vxor.u32 %v6497, 2147483648
  %v6554 = vxor.u32 %v6498, 2147483648
  %v6555 = vmul.f32 %v6551, 1.442695
  %v6556 = vpow.pop %v6555
  %v6557 = vmul.f32 %v6552, 1.442695
  %v6558 = vpow.pop %v6557
  %v6559 = vmul.f32 %v6553, 1.442695
  %v6560 = vpow.pop %v6559
  %v6561 = vmul.f32 %v6554, 1.442695
  %v6562 = vpow.pop %v6561
  %v6563 = vadd.f32 %v6556, 1.0
  %v6564 = vadd.f32 %v6558, 1.0
  %v6565 = vadd.f32 %v6560, 1.0
  %v6566 = vadd.f32 %v6562, 1.0
  %v6567 = vrcp.pop %v6563
  %v6568 = vmul.f32 1.0, %v6567
  %v6569 = vrcp.pop %v6564
  %v6570 = vmul.f32 1.0, %v6569
  %v6571 = vrcp.pop %v6565
  %v6572 = vmul.f32 1.0, %v6571
  %v6573 = vrcp.pop %v6566
  %v6574 = vmul.f32 1.0, %v6573
  %v6575 = vmul.f32 %v6540, %v6177
  %v6576 = vmul.f32 %v6542, %v6178
  %v6577 = vmul.f32 %v6544, %v6179
  %v6578 = vmul.f32 %v6546, %v6180
  %v6579 = vmul.f32 %v6516, %v6547
  %v6580 = vmul.f32 %v6518, %v6548
  %v6581 = vmul.f32 %v6520, %v6549
  %v6582 = vmul.f32 %v6522, %v6550
  %v6583 = vadd.f32 %v6575, %v6579
  %v6584 = vadd.f32 %v6576, %v6580
  %v6585 = vadd.f32 %v6577, %v6581
  %v6586 = vadd.f32 %v6578, %v6582
  %v6587 = vtanh.pop %v6583
  %v6588 = vtanh.pop %v6584
  %v6589 = vtanh.pop %v6585
  %v6590 = vtanh.pop %v6586
  %v6591 = vmul.f32 %v6568, %v6587
  %v6592 = vmul.f32 %v6570, %v6588
  %v6593 = vmul.f32 %v6572, %v6589
  %v6594 = vmul.f32 %v6574, %v6590
  %v6595 = vld [vmem:[%s3362] sm:$0xff]
  %v6596 = vld [vmem:[%s3362 + $0x8] sm:$0xff]
  %v6597 = vld [vmem:[%s3362 + $0x10] sm:$0xff]
  %v6598 = vld [vmem:[%s3362 + $0x18] sm:$0xff]
  %6599 = vmatprep.subr.mxu0 0.0
  %6600 = vmatpush1.msra.mxu0 0.0
  %6601 = vmatprep.subr.mxu0 0.0
  %6602 = vmatpush1.msra.mxu0 0.0
  %6603 = vmatprep.subr.mxu0 0.0
  %6604 = vmatpush1.msra.mxu0 0.0
  %6605 = vmatprep.subr.mxu0 0.0
  %6606 = vmatpush1.msra.mxu0 0.0
  %6607 = vmatprep.subr.mxu0 0.0
  %6608 = vmatpush1.msra.mxu0 0.0
  %6609 = vmatprep.subr.mxu0 0.0
  %6610 = vmatpush1.msra.mxu0 0.0
  %6611 = vmatprep.subr.mxu0 0.0
  %6612 = vmatpush1.msra.mxu0 0.0
  %6613 = vmatprep.subr.mxu0 0.0
  %6614 = vmatpush1.msra.mxu0 0.0
  %6615 = vmatprep.subr.mxu0 0.0
  %6616 = vmatpush1.msra.mxu0 0.0
  %6617 = vmatprep.subr.mxu0 0.0
  %6618 = vmatpush1.msra.mxu0 0.0
  %6619 = vmatprep.subr.mxu0 0.0
  %6620 = vmatpush1.msra.mxu0 0.0
  %6621 = vmatprep.subr.mxu0 0.0
  %6622 = vmatpush1.msra.mxu0 0.0
  %6623 = vmatprep.subr.mxu0 0.0
  %6624 = vmatpush1.msra.mxu0 %v6594
  %6625 = vmatprep.subr.mxu0 0.0
  %6626 = vmatpush1.msra.mxu0 %v6593
  %6627 = vmatprep.subr.mxu0 0.0
  %6628 = vmatpush1.msra.mxu0 %v6592
  %6629 = vmatprep.subr.mxu0 0.0
  %6630 = vmatpush1.msra.mxu0 %v6591
  %6631 = vmatprep.subr.mxu0 0.0
  %6632 = vmatpush2.msra.mxu0 0.0
  %6633 = vmatprep.subr.mxu0 0.0
  %6634 = vmatpush2.msra.mxu0 0.0
  %6635 = vmatprep.subr.mxu0 0.0
  %6636 = vmatpush2.msra.mxu0 0.0
  %6637 = vmatprep.subr.mxu0 0.0
  %6638 = vmatpush2.msra.mxu0 0.0
  %6639 = vmatprep.subr.mxu0 0.0
  %6640 = vmatpush2.msra.mxu0 0.0
  %6641 = vmatprep.subr.mxu0 0.0
  %6642 = vmatpush2.msra.mxu0 0.0
  %6643 = vmatprep.subr.mxu0 0.0
  %6644 = vmatpush2.msra.mxu0 0.0
  %6645 = vmatprep.subr.mxu0 0.0
  %6646 = vmatpush2.msra.mxu0 0.0
  %6647 = vmatprep.subr.mxu0 0.0
  %6648 = vmatpush2.msra.mxu0 0.0
  %6649 = vmatprep.subr.mxu0 0.0
  %6650 = vmatpush2.msra.mxu0 0.0
  %6651 = vmatprep.subr.mxu0 0.0
  %6652 = vmatpush2.msra.mxu0 0.0
  %6653 = vmatprep.subr.mxu0 0.0
  %6654 = vmatpush2.msra.mxu0 0.0
  %6655 = vmatprep.subr.mxu0 0.0
  %6656 = vmatpush2.msra.mxu0 0.0
  %6657 = vmatprep.subr.mxu0 0.0
  %6658 = vmatpush2.msra.mxu0 0.0
  %6659 = vmatprep.subr.mxu0 0.0
  %6660 = vmatpush2.msra.mxu0 0.0
  %6661 = vmatprep.subr.mxu0 0.0
  %6662 = vmatpush2.msra.mxu0 0.0
  %6663 = vmatprep.mubr.f32.mxu0 0.0
  %6664 = vmatmul.mubr.f32.gmra.mxu0 %v4880
  %v6665 = vpop.f32.mrf.mxu0
  %v6666 = vadd.f32 0.0, %v6665
  %v6667 = vpop.f32.mrf.mxu0
  %6668 = vmatprep.mubr.f32.mxu0 0.0
  %6669 = vmatmul.mubr.f32.gmra.mxu0 %v4883
  %v6670 = vpop.f32.mrf.mxu0
  %v6671 = vadd.f32 0.0, %v6670
  %v6672 = vpop.f32.mrf.mxu0
  %6673 = vmatprep.mubr.f32.mxu0 0.0
  %6674 = vmatmul.mubr.f32.gmra.mxu0 %v4886
  %v6675 = vpop.f32.mrf.mxu0
  %v6676 = vadd.f32 0.0, %v6675
  %v6677 = vpop.f32.mrf.mxu0
  %6678 = vmatprep.mubr.f32.mxu0 0.0
  %6679 = vmatmul.mubr.f32.gmra.mxu0 %v4889
  %v6680 = vpop.f32.mrf.mxu0
  %v6681 = vadd.f32 0.0, %v6680
  %v6682 = vpop.f32.mrf.mxu0
  %6683 = vmatprep.mubr.f32.mxu0 0.0
  %6684 = vmatmul.mubr.f32.gmra.mxu0 %v4892
  %v6685 = vpop.f32.mrf.mxu0
  %v6686 = vadd.f32 0.0, %v6685
  %v6687 = vpop.f32.mrf.mxu0
  %6688 = vmatprep.mubr.f32.mxu0 0.0
  %6689 = vmatmul.mubr.f32.gmra.mxu0 %v4895
  %v6690 = vpop.f32.mrf.mxu0
  %v6691 = vadd.f32 0.0, %v6690
  %v6692 = vpop.f32.mrf.mxu0
  %6693 = vmatprep.mubr.f32.mxu0 0.0
  %6694 = vmatmul.mubr.f32.gmra.mxu0 %v4898
  %v6695 = vpop.f32.mrf.mxu0
  %v6696 = vadd.f32 0.0, %v6695
  %v6697 = vpop.f32.mrf.mxu0
  %6698 = vmatprep.mubr.f32.mxu0 0.0
  %6699 = vmatmul.mubr.f32.gmra.mxu0 %v4901
  %v6700 = vpop.f32.mrf.mxu0
  %v6701 = vadd.f32 0.0, %v6700
  %v6702 = vpop.f32.mrf.mxu0
  %6703 = vmatprep.mubr.f32.mxu0 0.0
  %6704 = vmatmul.mubr.f32.gmra.mxu0 %v4904
  %v6705 = vpop.f32.mrf.mxu0
  %v6706 = vadd.f32 0.0, %v6705
  %v6707 = vpop.f32.mrf.mxu0
  %6708 = vmatprep.mubr.f32.mxu0 0.0
  %6709 = vmatmul.mubr.f32.gmra.mxu0 %v4907
  %v6710 = vpop.f32.mrf.mxu0
  %v6711 = vadd.f32 0.0, %v6710
  %v6712 = vpop.f32.mrf.mxu0
  %6713 = vmatprep.mubr.f32.mxu0 0.0
  %6714 = vmatmul.mubr.f32.gmra.mxu0 %v4910
  %v6715 = vpop.f32.mrf.mxu0
  %v6716 = vadd.f32 0.0, %v6715
  %v6717 = vpop.f32.mrf.mxu0
  %6718 = vmatprep.mubr.f32.mxu0 0.0
  %6719 = vmatmul.mubr.f32.gmra.mxu0 %v4913
  %v6720 = vpop.f32.mrf.mxu0
  %v6721 = vadd.f32 0.0, %v6720
  %v6722 = vpop.f32.mrf.mxu0
  %6723 = vmatprep.mubr.f32.mxu0 0.0
  %6724 = vmatmul.mubr.f32.gmra.mxu0 %v4916
  %v6725 = vpop.f32.mrf.mxu0
  %v6726 = vadd.f32 0.0, %v6725
  %v6727 = vpop.f32.mrf.mxu0
  %6728 = vmatprep.mubr.f32.mxu0 0.0
  %6729 = vmatmul.mubr.f32.gmra.mxu0 %v4919
  %v6730 = vpop.f32.mrf.mxu0
  %v6731 = vadd.f32 0.0, %v6730
  %v6732 = vpop.f32.mrf.mxu0
  %6733 = vmatprep.mubr.f32.mxu0 0.0
  %6734 = vmatmul.mubr.f32.gmra.mxu0 %v4922
  %v6735 = vpop.f32.mrf.mxu0
  %v6736 = vadd.f32 0.0, %v6735
  %v6737 = vpop.f32.mrf.mxu0
  %6738 = vmatprep.mubr.f32.mxu0 0.0
  %6739 = vmatmul.mubr.f32.gmra.mxu0 %v4925
  %v6740 = vpop.f32.mrf.mxu0
  %v6741 = vadd.f32 0.0, %v6740
  %v6742 = vpop.f32.mrf.mxu0
  %6743 = vdwg.mxu0
  %6744 = vmatprep.subr.mxu0 0.0
  %6745 = vmatpush1.msra.mxu0 0.0
  %6746 = vmatprep.subr.mxu0 0.0
  %6747 = vmatpush1.msra.mxu0 0.0
  %6748 = vmatprep.subr.mxu0 0.0
  %6749 = vmatpush1.msra.mxu0 0.0
  %6750 = vmatprep.subr.mxu0 0.0
  %6751 = vmatpush1.msra.mxu0 0.0
  %6752 = vmatprep.subr.mxu0 0.0
  %6753 = vmatpush1.msra.mxu0 0.0
  %6754 = vmatprep.subr.mxu0 0.0
  %6755 = vmatpush1.msra.mxu0 0.0
  %6756 = vmatprep.subr.mxu0 0.0
  %6757 = vmatpush1.msra.mxu0 0.0
  %6758 = vmatprep.subr.mxu0 0.0
  %6759 = vmatpush1.msra.mxu0 0.0
  %6760 = vmatprep.subr.mxu0 0.0
  %6761 = vmatpush1.msra.mxu0 0.0
  %6762 = vmatprep.subr.mxu0 0.0
  %6763 = vmatpush1.msra.mxu0 0.0
  %6764 = vmatprep.subr.mxu0 0.0
  %6765 = vmatpush1.msra.mxu0 0.0
  %6766 = vmatprep.subr.mxu0 0.0
  %6767 = vmatpush1.msra.mxu0 0.0
  %6768 = vmatprep.subr.mxu0 0.0
  %6769 = vmatpush1.msra.mxu0 %v6598
  %6770 = vmatprep.subr.mxu0 0.0
  %6771 = vmatpush1.msra.mxu0 %v6597
  %6772 = vmatprep.subr.mxu0 0.0
  %6773 = vmatpush1.msra.mxu0 %v6596
  %6774 = vmatprep.subr.mxu0 0.0
  %6775 = vmatpush1.msra.mxu0 %v6595
  %6776 = vmatprep.subr.mxu0 0.0
  %6777 = vmatpush2.msra.mxu0 0.0
  %6778 = vmatprep.subr.mxu0 0.0
  %6779 = vmatpush2.msra.mxu0 0.0
  %6780 = vmatprep.subr.mxu0 0.0
  %6781 = vmatpush2.msra.mxu0 0.0
  %6782 = vmatprep.subr.mxu0 0.0
  %6783 = vmatpush2.msra.mxu0 0.0
  %6784 = vmatprep.subr.mxu0 0.0
  %6785 = vmatpush2.msra.mxu0 0.0
  %6786 = vmatprep.subr.mxu0 0.0
  %6787 = vmatpush2.msra.mxu0 0.0
  %6788 = vmatprep.subr.mxu0 0.0
  %6789 = vmatpush2.msra.mxu0 0.0
  %6790 = vmatprep.subr.mxu0 0.0
  %6791 = vmatpush2.msra.mxu0 0.0
  %6792 = vmatprep.subr.mxu0 0.0
  %6793 = vmatpush2.msra.mxu0 0.0
  %6794 = vmatprep.subr.mxu0 0.0
  %6795 = vmatpush2.msra.mxu0 0.0
  %6796 = vmatprep.subr.mxu0 0.0
  %6797 = vmatpush2.msra.mxu0 0.0
  %6798 = vmatprep.subr.mxu0 0.0
  %6799 = vmatpush2.msra.mxu0 0.0
  %6800 = vmatprep.subr.mxu0 0.0
  %6801 = vmatpush2.msra.mxu0 0.0
  %6802 = vmatprep.subr.mxu0 0.0
  %6803 = vmatpush2.msra.mxu0 0.0
  %6804 = vmatprep.subr.mxu0 0.0
  %6805 = vmatpush2.msra.mxu0 0.0
  %6806 = vmatprep.subr.mxu0 0.0
  %6807 = vmatpush2.msra.mxu0 0.0
  %6808 = vmatprep.mubr.f32.mxu0 0.0
  %6809 = vmatmul.mubr.f32.gmra.mxu0 %v5073
  %v6810 = vpop.f32.mrf.mxu0
  %v6811 = vadd.f32 %v6666, %v6810
  %v6812 = vpop.f32.mrf.mxu0
  %6813 = vmatprep.mubr.f32.mxu0 0.0
  %6814 = vmatmul.mubr.f32.gmra.mxu0 %v5076
  %v6815 = vpop.f32.mrf.mxu0
  %v6816 = vadd.f32 %v6671, %v6815
  %v6817 = vpop.f32.mrf.mxu0
  %6818 = vmatprep.mubr.f32.mxu0 0.0
  %6819 = vmatmul.mubr.f32.gmra.mxu0 %v5079
  %v6820 = vpop.f32.mrf.mxu0
  %v6821 = vadd.f32 %v6676, %v6820
  %v6822 = vpop.f32.mrf.mxu0
  %6823 = vmatprep.mubr.f32.mxu0 0.0
  %6824 = vmatmul.mubr.f32.gmra.mxu0 %v5082
  %v6825 = vpop.f32.mrf.mxu0
  %v6826 = vadd.f32 %v6681, %v6825
  %v6827 = vpop.f32.mrf.mxu0
  %6828 = vmatprep.mubr.f32.mxu0 0.0
  %6829 = vmatmul.mubr.f32.gmra.mxu0 %v5085
  %v6830 = vpop.f32.mrf.mxu0
  %v6831 = vadd.f32 %v6686, %v6830
  %v6832 = vpop.f32.mrf.mxu0
  %6833 = vmatprep.mubr.f32.mxu0 0.0
  %6834 = vmatmul.mubr.f32.gmra.mxu0 %v5088
  %v6835 = vpop.f32.mrf.mxu0
  %v6836 = vadd.f32 %v6691, %v6835
  %v6837 = vpop.f32.mrf.mxu0
  %6838 = vmatprep.mubr.f32.mxu0 0.0
  %6839 = vmatmul.mubr.f32.gmra.mxu0 %v5091
  %v6840 = vpop.f32.mrf.mxu0
  %v6841 = vadd.f32 %v6696, %v6840
  %v6842 = vpop.f32.mrf.mxu0
  %6843 = vmatprep.mubr.f32.mxu0 0.0
  %6844 = vmatmul.mubr.f32.gmra.mxu0 %v5094
  %v6845 = vpop.f32.mrf.mxu0
  %v6846 = vadd.f32 %v6701, %v6845
  %v6847 = vpop.f32.mrf.mxu0
  %6848 = vmatprep.mubr.f32.mxu0 0.0
  %6849 = vmatmul.mubr.f32.gmra.mxu0 %v5097
  %v6850 = vpop.f32.mrf.mxu0
  %v6851 = vadd.f32 %v6706, %v6850
  %v6852 = vpop.f32.mrf.mxu0
  %6853 = vmatprep.mubr.f32.mxu0 0.0
  %6854 = vmatmul.mubr.f32.gmra.mxu0 %v5100
  %v6855 = vpop.f32.mrf.mxu0
  %v6856 = vadd.f32 %v6711, %v6855
  %v6857 = vpop.f32.mrf.mxu0
  %6858 = vmatprep.mubr.f32.mxu0 0.0
  %6859 = vmatmul.mubr.f32.gmra.mxu0 %v5103
  %v6860 = vpop.f32.mrf.mxu0
  %v6861 = vadd.f32 %v6716, %v6860
  %v6862 = vpop.f32.mrf.mxu0
  %6863 = vmatprep.mubr.f32.mxu0 0.0
  %6864 = vmatmul.mubr.f32.gmra.mxu0 %v5106
  %v6865 = vpop.f32.mrf.mxu0
  %v6866 = vadd.f32 %v6721, %v6865
  %v6867 = vpop.f32.mrf.mxu0
  %6868 = vmatprep.mubr.f32.mxu0 0.0
  %6869 = vmatmul.mubr.f32.gmra.mxu0 %v5109
  %v6870 = vpop.f32.mrf.mxu0
  %v6871 = vadd.f32 %v6726, %v6870
  %v6872 = vpop.f32.mrf.mxu0
  %6873 = vmatprep.mubr.f32.mxu0 0.0
  %6874 = vmatmul.mubr.f32.gmra.mxu0 %v5112
  %v6875 = vpop.f32.mrf.mxu0
  %v6876 = vadd.f32 %v6731, %v6875
  %v6877 = vpop.f32.mrf.mxu0
  %6878 = vmatprep.mubr.f32.mxu0 0.0
  %6879 = vmatmul.mubr.f32.gmra.mxu0 %v5115
  %v6880 = vpop.f32.mrf.mxu0
  %v6881 = vadd.f32 %v6736, %v6880
  %v6882 = vpop.f32.mrf.mxu0
  %6883 = vmatprep.mubr.f32.mxu0 0.0
  %6884 = vmatmul.mubr.f32.gmra.mxu0 %v5118
  %v6885 = vpop.f32.mrf.mxu0
  %v6886 = vadd.f32 %v6741, %v6885
  %v6887 = vpop.f32.mrf.mxu0
  %6888 = vdwg.mxu0
  %v6889 = vadd.f32 %v6811, %v4798
  %v6890 = vadd.f32 %v6816, %v4803
  %v6891 = vadd.f32 %v6821, %v4808
  %v6892 = vadd.f32 %v6826, %v4813
  %v6893 = vadd.f32 %v6831, %v4818
  %v6894 = vadd.f32 %v6836, %v4823
  %v6895 = vadd.f32 %v6841, %v4828
  %v6896 = vadd.f32 %v6846, %v4833
  %v6897 = vadd.f32 %v6851, %v4838
  %v6898 = vadd.f32 %v6856, %v4843
  %v6899 = vadd.f32 %v6861, %v4848
  %v6900 = vadd.f32 %v6866, %v4853
  %v6901 = vadd.f32 %v6871, %v4858
  %v6902 = vadd.f32 %v6876, %v4863
  %v6903 = vadd.f32 %v6881, %v4868
  %v6904 = vadd.f32 %v6886, %v4873
  %v6905 = vxor.u32 %v6889, 2147483648
  %v6906 = vxor.u32 %v6890, 2147483648
  %v6907 = vxor.u32 %v6891, 2147483648
  %v6908 = vxor.u32 %v6892, 2147483648
  %v6909 = vmul.f32 %v6905, 1.442695
  %v6910 = vpow.pop %v6909
  %v6911 = vmul.f32 %v6906, 1.442695
  %v6912 = vpow.pop %v6911
  %v6913 = vmul.f32 %v6907, 1.442695
  %v6914 = vpow.pop %v6913
  %v6915 = vmul.f32 %v6908, 1.442695
  %v6916 = vpow.pop %v6915
  %v6917 = vadd.f32 %v6910, 1.0
  %v6918 = vadd.f32 %v6912, 1.0
  %v6919 = vadd.f32 %v6914, 1.0
  %v6920 = vadd.f32 %v6916, 1.0
  %v6921 = vrcp.pop %v6917
  %v6922 = vmul.f32 1.0, %v6921
  %v6923 = vrcp.pop %v6918
  %v6924 = vmul.f32 1.0, %v6923
  %v6925 = vrcp.pop %v6919
  %v6926 = vmul.f32 1.0, %v6925
  %v6927 = vrcp.pop %v6920
  %v6928 = vmul.f32 1.0, %v6927
  %v6929 = vxor.u32 %v6893, 2147483648
  %v6930 = vxor.u32 %v6894, 2147483648
  %v6931 = vxor.u32 %v6895, 2147483648
  %v6932 = vxor.u32 %v6896, 2147483648
  %v6933 = vmul.f32 %v6929, 1.442695
  %v6934 = vpow.pop %v6933
  %v6935 = vmul.f32 %v6930, 1.442695
  %v6936 = vpow.pop %v6935
  %v6937 = vmul.f32 %v6931, 1.442695
  %v6938 = vpow.pop %v6937
  %v6939 = vmul.f32 %v6932, 1.442695
  %v6940 = vpow.pop %v6939
  %v6941 = vadd.f32 %v6934, 1.0
  %v6942 = vadd.f32 %v6936, 1.0
  %v6943 = vadd.f32 %v6938, 1.0
  %v6944 = vadd.f32 %v6940, 1.0
  %v6945 = vrcp.pop %v6941
  %v6946 = vmul.f32 1.0, %v6945
  %v6947 = vrcp.pop %v6942
  %v6948 = vmul.f32 1.0, %v6947
  %v6949 = vrcp.pop %v6943
  %v6950 = vmul.f32 1.0, %v6949
  %v6951 = vrcp.pop %v6944
  %v6952 = vmul.f32 1.0, %v6951
  %v6953 = vtanh.pop %v6897
  %v6954 = vtanh.pop %v6898
  %v6955 = vtanh.pop %v6899
  %v6956 = vtanh.pop %v6900
  %v6957 = vxor.u32 %v6901, 2147483648
  %v6958 = vxor.u32 %v6902, 2147483648
  %v6959 = vxor.u32 %v6903, 2147483648
  %v6960 = vxor.u32 %v6904, 2147483648
  %v6961 = vmul.f32 %v6957, 1.442695
  %v6962 = vpow.pop %v6961
  %v6963 = vmul.f32 %v6958, 1.442695
  %v6964 = vpow.pop %v6963
  %v6965 = vmul.f32 %v6959, 1.442695
  %v6966 = vpow.pop %v6965
  %v6967 = vmul.f32 %v6960, 1.442695
  %v6968 = vpow.pop %v6967
  %v6969 = vadd.f32 %v6962, 1.0
  %v6970 = vadd.f32 %v6964, 1.0
  %v6971 = vadd.f32 %v6966, 1.0
  %v6972 = vadd.f32 %v6968, 1.0
  %v6973 = vrcp.pop %v6969
  %v6974 = vmul.f32 1.0, %v6973
  %v6975 = vrcp.pop %v6970
  %v6976 = vmul.f32 1.0, %v6975
  %v6977 = vrcp.pop %v6971
  %v6978 = vmul.f32 1.0, %v6977
  %v6979 = vrcp.pop %v6972
  %v6980 = vmul.f32 1.0, %v6979
  %v6981 = vmul.f32 %v6946, %v6583
  %v6982 = vmul.f32 %v6948, %v6584
  %v6983 = vmul.f32 %v6950, %v6585
  %v6984 = vmul.f32 %v6952, %v6586
  %v6985 = vmul.f32 %v6922, %v6953
  %v6986 = vmul.f32 %v6924, %v6954
  %v6987 = vmul.f32 %v6926, %v6955
  %v6988 = vmul.f32 %v6928, %v6956
  %v6989 = vadd.f32 %v6981, %v6985
  %v6990 = vadd.f32 %v6982, %v6986
  %v6991 = vadd.f32 %v6983, %v6987
  %v6992 = vadd.f32 %v6984, %v6988
  %v6993 = vtanh.pop %v6989
  %v6994 = vtanh.pop %v6990
  %v6995 = vtanh.pop %v6991
  %v6996 = vtanh.pop %v6992
  %v6997 = vmul.f32 %v6974, %v6993
  %v6998 = vmul.f32 %v6976, %v6994
  %v6999 = vmul.f32 %v6978, %v6995
  %v7000 = vmul.f32 %v6980, %v6996
  %v7001 = vld [vmem:[%s3774] sm:$0xff]
  %v7002 = vld [vmem:[%s3774 + $0x8] sm:$0xff]
  %v7003 = vld [vmem:[%s3774 + $0x10] sm:$0xff]
  %v7004 = vld [vmem:[%s3774 + $0x18] sm:$0xff]
  %7005 = vmatprep.subr.mxu0 0.0
  %7006 = vmatpush1.msra.mxu0 0.0
  %7007 = vmatprep.subr.mxu0 0.0
  %7008 = vmatpush1.msra.mxu0 0.0
  %7009 = vmatprep.subr.mxu0 0.0
  %7010 = vmatpush1.msra.mxu0 0.0
  %7011 = vmatprep.subr.mxu0 0.0
  %7012 = vmatpush1.msra.mxu0 0.0
  %7013 = vmatprep.subr.mxu0 0.0
  %7014 = vmatpush1.msra.mxu0 0.0
  %7015 = vmatprep.subr.mxu0 0.0
  %7016 = vmatpush1.msra.mxu0 0.0
  %7017 = vmatprep.subr.mxu0 0.0
  %7018 = vmatpush1.msra.mxu0 0.0
  %7019 = vmatprep.subr.mxu0 0.0
  %7020 = vmatpush1.msra.mxu0 0.0
  %7021 = vmatprep.subr.mxu0 0.0
  %7022 = vmatpush1.msra.mxu0 0.0
  %7023 = vmatprep.subr.mxu0 0.0
  %7024 = vmatpush1.msra.mxu0 0.0
  %7025 = vmatprep.subr.mxu0 0.0
  %7026 = vmatpush1.msra.mxu0 0.0
  %7027 = vmatprep.subr.mxu0 0.0
  %7028 = vmatpush1.msra.mxu0 0.0
  %7029 = vmatprep.subr.mxu0 0.0
  %7030 = vmatpush1.msra.mxu0 %v7000
  %7031 = vmatprep.subr.mxu0 0.0
  %7032 = vmatpush1.msra.mxu0 %v6999
  %7033 = vmatprep.subr.mxu0 0.0
  %7034 = vmatpush1.msra.mxu0 %v6998
  %7035 = vmatprep.subr.mxu0 0.0
  %7036 = vmatpush1.msra.mxu0 %v6997
  %7037 = vmatprep.subr.mxu0 0.0
  %7038 = vmatpush2.msra.mxu0 0.0
  %7039 = vmatprep.subr.mxu0 0.0
  %7040 = vmatpush2.msra.mxu0 0.0
  %7041 = vmatprep.subr.mxu0 0.0
  %7042 = vmatpush2.msra.mxu0 0.0
  %7043 = vmatprep.subr.mxu0 0.0
  %7044 = vmatpush2.msra.mxu0 0.0
  %7045 = vmatprep.subr.mxu0 0.0
  %7046 = vmatpush2.msra.mxu0 0.0
  %7047 = vmatprep.subr.mxu0 0.0
  %7048 = vmatpush2.msra.mxu0 0.0
  %7049 = vmatprep.subr.mxu0 0.0
  %7050 = vmatpush2.msra.mxu0 0.0
  %7051 = vmatprep.subr.mxu0 0.0
  %7052 = vmatpush2.msra.mxu0 0.0
  %7053 = vmatprep.subr.mxu0 0.0
  %7054 = vmatpush2.msra.mxu0 0.0
  %7055 = vmatprep.subr.mxu0 0.0
  %7056 = vmatpush2.msra.mxu0 0.0
  %7057 = vmatprep.subr.mxu0 0.0
  %7058 = vmatpush2.msra.mxu0 0.0
  %7059 = vmatprep.subr.mxu0 0.0
  %7060 = vmatpush2.msra.mxu0 0.0
  %7061 = vmatprep.subr.mxu0 0.0
  %7062 = vmatpush2.msra.mxu0 0.0
  %7063 = vmatprep.subr.mxu0 0.0
  %7064 = vmatpush2.msra.mxu0 0.0
  %7065 = vmatprep.subr.mxu0 0.0
  %7066 = vmatpush2.msra.mxu0 0.0
  %7067 = vmatprep.subr.mxu0 0.0
  %7068 = vmatpush2.msra.mxu0 0.0
  %7069 = vmatprep.mubr.f32.mxu0 0.0
  %7070 = vmatmul.mubr.f32.gmra.mxu0 %v4880
  %v7071 = vpop.f32.mrf.mxu0
  %v7072 = vadd.f32 0.0, %v7071
  %v7073 = vpop.f32.mrf.mxu0
  %7074 = vmatprep.mubr.f32.mxu0 0.0
  %7075 = vmatmul.mubr.f32.gmra.mxu0 %v4883
  %v7076 = vpop.f32.mrf.mxu0
  %v7077 = vadd.f32 0.0, %v7076
  %v7078 = vpop.f32.mrf.mxu0
  %7079 = vmatprep.mubr.f32.mxu0 0.0
  %7080 = vmatmul.mubr.f32.gmra.mxu0 %v4886
  %v7081 = vpop.f32.mrf.mxu0
  %v7082 = vadd.f32 0.0, %v7081
  %v7083 = vpop.f32.mrf.mxu0
  %7084 = vmatprep.mubr.f32.mxu0 0.0
  %7085 = vmatmul.mubr.f32.gmra.mxu0 %v4889
  %v7086 = vpop.f32.mrf.mxu0
  %v7087 = vadd.f32 0.0, %v7086
  %v7088 = vpop.f32.mrf.mxu0
  %7089 = vmatprep.mubr.f32.mxu0 0.0
  %7090 = vmatmul.mubr.f32.gmra.mxu0 %v4892
  %v7091 = vpop.f32.mrf.mxu0
  %v7092 = vadd.f32 0.0, %v7091
  %v7093 = vpop.f32.mrf.mxu0
  %7094 = vmatprep.mubr.f32.mxu0 0.0
  %7095 = vmatmul.mubr.f32.gmra.mxu0 %v4895
  %v7096 = vpop.f32.mrf.mxu0
  %v7097 = vadd.f32 0.0, %v7096
  %v7098 = vpop.f32.mrf.mxu0
  %7099 = vmatprep.mubr.f32.mxu0 0.0
  %7100 = vmatmul.mubr.f32.gmra.mxu0 %v4898
  %v7101 = vpop.f32.mrf.mxu0
  %v7102 = vadd.f32 0.0, %v7101
  %v7103 = vpop.f32.mrf.mxu0
  %7104 = vmatprep.mubr.f32.mxu0 0.0
  %7105 = vmatmul.mubr.f32.gmra.mxu0 %v4901
  %v7106 = vpop.f32.mrf.mxu0
  %v7107 = vadd.f32 0.0, %v7106
  %v7108 = vpop.f32.mrf.mxu0
  %7109 = vmatprep.mubr.f32.mxu0 0.0
  %7110 = vmatmul.mubr.f32.gmra.mxu0 %v4904
  %v7111 = vpop.f32.mrf.mxu0
  %v7112 = vadd.f32 0.0, %v7111
  %v7113 = vpop.f32.mrf.mxu0
  %7114 = vmatprep.mubr.f32.mxu0 0.0
  %7115 = vmatmul.mubr.f32.gmra.mxu0 %v4907
  %v7116 = vpop.f32.mrf.mxu0
  %v7117 = vadd.f32 0.0, %v7116
  %v7118 = vpop.f32.mrf.mxu0
  %7119 = vmatprep.mubr.f32.mxu0 0.0
  %7120 = vmatmul.mubr.f32.gmra.mxu0 %v4910
  %v7121 = vpop.f32.mrf.mxu0
  %v7122 = vadd.f32 0.0, %v7121
  %v7123 = vpop.f32.mrf.mxu0
  %7124 = vmatprep.mubr.f32.mxu0 0.0
  %7125 = vmatmul.mubr.f32.gmra.mxu0 %v4913
  %v7126 = vpop.f32.mrf.mxu0
  %v7127 = vadd.f32 0.0, %v7126
  %v7128 = vpop.f32.mrf.mxu0
  %7129 = vmatprep.mubr.f32.mxu0 0.0
  %7130 = vmatmul.mubr.f32.gmra.mxu0 %v4916
  %v7131 = vpop.f32.mrf.mxu0
  %v7132 = vadd.f32 0.0, %v7131
  %v7133 = vpop.f32.mrf.mxu0
  %7134 = vmatprep.mubr.f32.mxu0 0.0
  %7135 = vmatmul.mubr.f32.gmra.mxu0 %v4919
  %v7136 = vpop.f32.mrf.mxu0
  %v7137 = vadd.f32 0.0, %v7136
  %v7138 = vpop.f32.mrf.mxu0
  %7139 = vmatprep.mubr.f32.mxu0 0.0
  %7140 = vmatmul.mubr.f32.gmra.mxu0 %v4922
  %v7141 = vpop.f32.mrf.mxu0
  %v7142 = vadd.f32 0.0, %v7141
  %v7143 = vpop.f32.mrf.mxu0
  %7144 = vmatprep.mubr.f32.mxu0 0.0
  %7145 = vmatmul.mubr.f32.gmra.mxu0 %v4925
  %v7146 = vpop.f32.mrf.mxu0
  %v7147 = vadd.f32 0.0, %v7146
  %v7148 = vpop.f32.mrf.mxu0
  %7149 = vdwg.mxu0
  %7150 = vmatprep.subr.mxu0 0.0
  %7151 = vmatpush1.msra.mxu0 0.0
  %7152 = vmatprep.subr.mxu0 0.0
  %7153 = vmatpush1.msra.mxu0 0.0
  %7154 = vmatprep.subr.mxu0 0.0
  %7155 = vmatpush1.msra.mxu0 0.0
  %7156 = vmatprep.subr.mxu0 0.0
  %7157 = vmatpush1.msra.mxu0 0.0
  %7158 = vmatprep.subr.mxu0 0.0
  %7159 = vmatpush1.msra.mxu0 0.0
  %7160 = vmatprep.subr.mxu0 0.0
  %7161 = vmatpush1.msra.mxu0 0.0
  %7162 = vmatprep.subr.mxu0 0.0
  %7163 = vmatpush1.msra.mxu0 0.0
  %7164 = vmatprep.subr.mxu0 0.0
  %7165 = vmatpush1.msra.mxu0 0.0
  %7166 = vmatprep.subr.mxu0 0.0
  %7167 = vmatpush1.msra.mxu0 0.0
  %7168 = vmatprep.subr.mxu0 0.0
  %7169 = vmatpush1.msra.mxu0 0.0
  %7170 = vmatprep.subr.mxu0 0.0
  %7171 = vmatpush1.msra.mxu0 0.0
  %7172 = vmatprep.subr.mxu0 0.0
  %7173 = vmatpush1.msra.mxu0 0.0
  %7174 = vmatprep.subr.mxu0 0.0
  %7175 = vmatpush1.msra.mxu0 %v7004
  %7176 = vmatprep.subr.mxu0 0.0
  %7177 = vmatpush1.msra.mxu0 %v7003
  %7178 = vmatprep.subr.mxu0 0.0
  %7179 = vmatpush1.msra.mxu0 %v7002
  %7180 = vmatprep.subr.mxu0 0.0
  %7181 = vmatpush1.msra.mxu0 %v7001
  %7182 = vmatprep.subr.mxu0 0.0
  %7183 = vmatpush2.msra.mxu0 0.0
  %7184 = vmatprep.subr.mxu0 0.0
  %7185 = vmatpush2.msra.mxu0 0.0
  %7186 = vmatprep.subr.mxu0 0.0
  %7187 = vmatpush2.msra.mxu0 0.0
  %7188 = vmatprep.subr.mxu0 0.0
  %7189 = vmatpush2.msra.mxu0 0.0
  %7190 = vmatprep.subr.mxu0 0.0
  %7191 = vmatpush2.msra.mxu0 0.0
  %7192 = vmatprep.subr.mxu0 0.0
  %7193 = vmatpush2.msra.mxu0 0.0
  %7194 = vmatprep.subr.mxu0 0.0
  %7195 = vmatpush2.msra.mxu0 0.0
  %7196 = vmatprep.subr.mxu0 0.0
  %7197 = vmatpush2.msra.mxu0 0.0
  %7198 = vmatprep.subr.mxu0 0.0
  %7199 = vmatpush2.msra.mxu0 0.0
  %7200 = vmatprep.subr.mxu0 0.0
  %7201 = vmatpush2.msra.mxu0 0.0
  %7202 = vmatprep.subr.mxu0 0.0
  %7203 = vmatpush2.msra.mxu0 0.0
  %7204 = vmatprep.subr.mxu0 0.0
  %7205 = vmatpush2.msra.mxu0 0.0
  %7206 = vmatprep.subr.mxu0 0.0
  %7207 = vmatpush2.msra.mxu0 0.0
  %7208 = vmatprep.subr.mxu0 0.0
  %7209 = vmatpush2.msra.mxu0 0.0
  %7210 = vmatprep.subr.mxu0 0.0
  %7211 = vmatpush2.msra.mxu0 0.0
  %7212 = vmatprep.subr.mxu0 0.0
  %7213 = vmatpush2.msra.mxu0 0.0
  %7214 = vmatprep.mubr.f32.mxu0 0.0
  %7215 = vmatmul.mubr.f32.gmra.mxu0 %v5073
  %v7216 = vpop.f32.mrf.mxu0
  %v7217 = vadd.f32 %v7072, %v7216
  %v7218 = vpop.f32.mrf.mxu0
  %7219 = vmatprep.mubr.f32.mxu0 0.0
  %7220 = vmatmul.mubr.f32.gmra.mxu0 %v5076
  %v7221 = vpop.f32.mrf.mxu0
  %v7222 = vadd.f32 %v7077, %v7221
  %v7223 = vpop.f32.mrf.mxu0
  %7224 = vmatprep.mubr.f32.mxu0 0.0
  %7225 = vmatmul.mubr.f32.gmra.mxu0 %v5079
  %v7226 = vpop.f32.mrf.mxu0
  %v7227 = vadd.f32 %v7082, %v7226
  %v7228 = vpop.f32.mrf.mxu0
  %7229 = vmatprep.mubr.f32.mxu0 0.0
  %7230 = vmatmul.mubr.f32.gmra.mxu0 %v5082
  %v7231 = vpop.f32.mrf.mxu0
  %v7232 = vadd.f32 %v7087, %v7231
  %v7233 = vpop.f32.mrf.mxu0
  %7234 = vmatprep.mubr.f32.mxu0 0.0
  %7235 = vmatmul.mubr.f32.gmra.mxu0 %v5085
  %v7236 = vpop.f32.mrf.mxu0
  %v7237 = vadd.f32 %v7092, %v7236
  %v7238 = vpop.f32.mrf.mxu0
  %7239 = vmatprep.mubr.f32.mxu0 0.0
  %7240 = vmatmul.mubr.f32.gmra.mxu0 %v5088
  %v7241 = vpop.f32.mrf.mxu0
  %v7242 = vadd.f32 %v7097, %v7241
  %v7243 = vpop.f32.mrf.mxu0
  %7244 = vmatprep.mubr.f32.mxu0 0.0
  %7245 = vmatmul.mubr.f32.gmra.mxu0 %v5091
  %v7246 = vpop.f32.mrf.mxu0
  %v7247 = vadd.f32 %v7102, %v7246
  %v7248 = vpop.f32.mrf.mxu0
  %7249 = vmatprep.mubr.f32.mxu0 0.0
  %7250 = vmatmul.mubr.f32.gmra.mxu0 %v5094
  %v7251 = vpop.f32.mrf.mxu0
  %v7252 = vadd.f32 %v7107, %v7251
  %v7253 = vpop.f32.mrf.mxu0
  %7254 = vmatprep.mubr.f32.mxu0 0.0
  %7255 = vmatmul.mubr.f32.gmra.mxu0 %v5097
  %v7256 = vpop.f32.mrf.mxu0
  %v7257 = vadd.f32 %v7112, %v7256
  %v7258 = vpop.f32.mrf.mxu0
  %7259 = vmatprep.mubr.f32.mxu0 0.0
  %7260 = vmatmul.mubr.f32.gmra.mxu0 %v5100
  %v7261 = vpop.f32.mrf.mxu0
  %v7262 = vadd.f32 %v7117, %v7261
  %v7263 = vpop.f32.mrf.mxu0
  %7264 = vmatprep.mubr.f32.mxu0 0.0
  %7265 = vmatmul.mubr.f32.gmra.mxu0 %v5103
  %v7266 = vpop.f32.mrf.mxu0
  %v7267 = vadd.f32 %v7122, %v7266
  %v7268 = vpop.f32.mrf.mxu0
  %7269 = vmatprep.mubr.f32.mxu0 0.0
  %7270 = vmatmul.mubr.f32.gmra.mxu0 %v5106
  %v7271 = vpop.f32.mrf.mxu0
  %v7272 = vadd.f32 %v7127, %v7271
  %v7273 = vpop.f32.mrf.mxu0
  %7274 = vmatprep.mubr.f32.mxu0 0.0
  %7275 = vmatmul.mubr.f32.gmra.mxu0 %v5109
  %v7276 = vpop.f32.mrf.mxu0
  %v7277 = vadd.f32 %v7132, %v7276
  %v7278 = vpop.f32.mrf.mxu0
  %7279 = vmatprep.mubr.f32.mxu0 0.0
  %7280 = vmatmul.mubr.f32.gmra.mxu0 %v5112
  %v7281 = vpop.f32.mrf.mxu0
  %v7282 = vadd.f32 %v7137, %v7281
  %v7283 = vpop.f32.mrf.mxu0
  %7284 = vmatprep.mubr.f32.mxu0 0.0
  %7285 = vmatmul.mubr.f32.gmra.mxu0 %v5115
  %v7286 = vpop.f32.mrf.mxu0
  %v7287 = vadd.f32 %v7142, %v7286
  %v7288 = vpop.f32.mrf.mxu0
  %7289 = vmatprep.mubr.f32.mxu0 0.0
  %7290 = vmatmul.mubr.f32.gmra.mxu0 %v5118
  %v7291 = vpop.f32.mrf.mxu0
  %v7292 = vadd.f32 %v7147, %v7291
  %v7293 = vpop.f32.mrf.mxu0
  %7294 = vdwg.mxu0
  %v7295 = vadd.f32 %v7217, %v4798
  %v7296 = vadd.f32 %v7222, %v4803
  %v7297 = vadd.f32 %v7227, %v4808
  %v7298 = vadd.f32 %v7232, %v4813
  %v7299 = vadd.f32 %v7237, %v4818
  %v7300 = vadd.f32 %v7242, %v4823
  %v7301 = vadd.f32 %v7247, %v4828
  %v7302 = vadd.f32 %v7252, %v4833
  %v7303 = vadd.f32 %v7257, %v4838
  %v7304 = vadd.f32 %v7262, %v4843
  %v7305 = vadd.f32 %v7267, %v4848
  %v7306 = vadd.f32 %v7272, %v4853
  %v7307 = vadd.f32 %v7277, %v4858
  %v7308 = vadd.f32 %v7282, %v4863
  %v7309 = vadd.f32 %v7287, %v4868
  %v7310 = vadd.f32 %v7292, %v4873
  %v7311 = vxor.u32 %v7295, 2147483648
  %v7312 = vxor.u32 %v7296, 2147483648
  %v7313 = vxor.u32 %v7297, 2147483648
  %v7314 = vxor.u32 %v7298, 2147483648
  %v7315 = vmul.f32 %v7311, 1.442695
  %v7316 = vpow.pop %v7315
  %v7317 = vmul.f32 %v7312, 1.442695
  %v7318 = vpow.pop %v7317
  %v7319 = vmul.f32 %v7313, 1.442695
  %v7320 = vpow.pop %v7319
  %v7321 = vmul.f32 %v7314, 1.442695
  %v7322 = vpow.pop %v7321
  %v7323 = vadd.f32 %v7316, 1.0
  %v7324 = vadd.f32 %v7318, 1.0
  %v7325 = vadd.f32 %v7320, 1.0
  %v7326 = vadd.f32 %v7322, 1.0
  %v7327 = vrcp.pop %v7323
  %v7328 = vmul.f32 1.0, %v7327
  %v7329 = vrcp.pop %v7324
  %v7330 = vmul.f32 1.0, %v7329
  %v7331 = vrcp.pop %v7325
  %v7332 = vmul.f32 1.0, %v7331
  %v7333 = vrcp.pop %v7326
  %v7334 = vmul.f32 1.0, %v7333
  %v7335 = vxor.u32 %v7299, 2147483648
  %v7336 = vxor.u32 %v7300, 2147483648
  %v7337 = vxor.u32 %v7301, 2147483648
  %v7338 = vxor.u32 %v7302, 2147483648
  %v7339 = vmul.f32 %v7335, 1.442695
  %v7340 = vpow.pop %v7339
  %v7341 = vmul.f32 %v7336, 1.442695
  %v7342 = vpow.pop %v7341
  %v7343 = vmul.f32 %v7337, 1.442695
  %v7344 = vpow.pop %v7343
  %v7345 = vmul.f32 %v7338, 1.442695
  %v7346 = vpow.pop %v7345
  %v7347 = vadd.f32 %v7340, 1.0
  %v7348 = vadd.f32 %v7342, 1.0
  %v7349 = vadd.f32 %v7344, 1.0
  %v7350 = vadd.f32 %v7346, 1.0
  %v7351 = vrcp.pop %v7347
  %v7352 = vmul.f32 1.0, %v7351
  %v7353 = vrcp.pop %v7348
  %v7354 = vmul.f32 1.0, %v7353
  %v7355 = vrcp.pop %v7349
  %v7356 = vmul.f32 1.0, %v7355
  %v7357 = vrcp.pop %v7350
  %v7358 = vmul.f32 1.0, %v7357
  %v7359 = vtanh.pop %v7303
  %v7360 = vtanh.pop %v7304
  %v7361 = vtanh.pop %v7305
  %v7362 = vtanh.pop %v7306
  %v7363 = vxor.u32 %v7307, 2147483648
  %v7364 = vxor.u32 %v7308, 2147483648
  %v7365 = vxor.u32 %v7309, 2147483648
  %v7366 = vxor.u32 %v7310, 2147483648
  %v7367 = vmul.f32 %v7363, 1.442695
  %v7368 = vpow.pop %v7367
  %v7369 = vmul.f32 %v7364, 1.442695
  %v7370 = vpow.pop %v7369
  %v7371 = vmul.f32 %v7365, 1.442695
  %v7372 = vpow.pop %v7371
  %v7373 = vmul.f32 %v7366, 1.442695
  %v7374 = vpow.pop %v7373
  %v7375 = vadd.f32 %v7368, 1.0
  %v7376 = vadd.f32 %v7370, 1.0
  %v7377 = vadd.f32 %v7372, 1.0
  %v7378 = vadd.f32 %v7374, 1.0
  %v7379 = vrcp.pop %v7375
  %v7380 = vmul.f32 1.0, %v7379
  %v7381 = vrcp.pop %v7376
  %v7382 = vmul.f32 1.0, %v7381
  %v7383 = vrcp.pop %v7377
  %v7384 = vmul.f32 1.0, %v7383
  %v7385 = vrcp.pop %v7378
  %v7386 = vmul.f32 1.0, %v7385
  %v7387 = vmul.f32 %v7352, %v6989
  %v7388 = vmul.f32 %v7354, %v6990
  %v7389 = vmul.f32 %v7356, %v6991
  %v7390 = vmul.f32 %v7358, %v6992
  %v7391 = vmul.f32 %v7328, %v7359
  %v7392 = vmul.f32 %v7330, %v7360
  %v7393 = vmul.f32 %v7332, %v7361
  %v7394 = vmul.f32 %v7334, %v7362
  %v7395 = vadd.f32 %v7387, %v7391
  %v7396 = vadd.f32 %v7388, %v7392
  %v7397 = vadd.f32 %v7389, %v7393
  %v7398 = vadd.f32 %v7390, %v7394
  %v7399 = vtanh.pop %v7395
  %v7400 = vtanh.pop %v7396
  %v7401 = vtanh.pop %v7397
  %v7402 = vtanh.pop %v7398
  %v7403 = vmul.f32 %v7380, %v7399
  %v7404 = vmul.f32 %v7382, %v7400
  %v7405 = vmul.f32 %v7384, %v7401
  %v7406 = vmul.f32 %v7386, %v7402
  %v7407 = vld [vmem:[%s4186] sm:$0xff]
  %v7408 = vld [vmem:[%s4186 + $0x8] sm:$0xff]
  %v7409 = vld [vmem:[%s4186 + $0x10] sm:$0xff]
  %v7410 = vld [vmem:[%s4186 + $0x18] sm:$0xff]
  %7411 = vmatprep.subr.mxu0 0.0
  %7412 = vmatpush1.msra.mxu0 0.0
  %7413 = vmatprep.subr.mxu0 0.0
  %7414 = vmatpush1.msra.mxu0 0.0
  %7415 = vmatprep.subr.mxu0 0.0
  %7416 = vmatpush1.msra.mxu0 0.0
  %7417 = vmatprep.subr.mxu0 0.0
  %7418 = vmatpush1.msra.mxu0 0.0
  %7419 = vmatprep.subr.mxu0 0.0
  %7420 = vmatpush1.msra.mxu0 0.0
  %7421 = vmatprep.subr.mxu0 0.0
  %7422 = vmatpush1.msra.mxu0 0.0
  %7423 = vmatprep.subr.mxu0 0.0
  %7424 = vmatpush1.msra.mxu0 0.0
  %7425 = vmatprep.subr.mxu0 0.0
  %7426 = vmatpush1.msra.mxu0 0.0
  %7427 = vmatprep.subr.mxu0 0.0
  %7428 = vmatpush1.msra.mxu0 0.0
  %7429 = vmatprep.subr.mxu0 0.0
  %7430 = vmatpush1.msra.mxu0 0.0
  %7431 = vmatprep.subr.mxu0 0.0
  %7432 = vmatpush1.msra.mxu0 0.0
  %7433 = vmatprep.subr.mxu0 0.0
  %7434 = vmatpush1.msra.mxu0 0.0
  %7435 = vmatprep.subr.mxu0 0.0
  %7436 = vmatpush1.msra.mxu0 %v7406
  %7437 = vmatprep.subr.mxu0 0.0
  %7438 = vmatpush1.msra.mxu0 %v7405
  %7439 = vmatprep.subr.mxu0 0.0
  %7440 = vmatpush1.msra.mxu0 %v7404
  %7441 = vmatprep.subr.mxu0 0.0
  %7442 = vmatpush1.msra.mxu0 %v7403
  %7443 = vmatprep.subr.mxu0 0.0
  %7444 = vmatpush2.msra.mxu0 0.0
  %7445 = vmatprep.subr.mxu0 0.0
  %7446 = vmatpush2.msra.mxu0 0.0
  %7447 = vmatprep.subr.mxu0 0.0
  %7448 = vmatpush2.msra.mxu0 0.0
  %7449 = vmatprep.subr.mxu0 0.0
  %7450 = vmatpush2.msra.mxu0 0.0
  %7451 = vmatprep.subr.mxu0 0.0
  %7452 = vmatpush2.msra.mxu0 0.0
  %7453 = vmatprep.subr.mxu0 0.0
  %7454 = vmatpush2.msra.mxu0 0.0
  %7455 = vmatprep.subr.mxu0 0.0
  %7456 = vmatpush2.msra.mxu0 0.0
  %7457 = vmatprep.subr.mxu0 0.0
  %7458 = vmatpush2.msra.mxu0 0.0
  %7459 = vmatprep.subr.mxu0 0.0
  %7460 = vmatpush2.msra.mxu0 0.0
  %7461 = vmatprep.subr.mxu0 0.0
  %7462 = vmatpush2.msra.mxu0 0.0
  %7463 = vmatprep.subr.mxu0 0.0
  %7464 = vmatpush2.msra.mxu0 0.0
  %7465 = vmatprep.subr.mxu0 0.0
  %7466 = vmatpush2.msra.mxu0 0.0
  %7467 = vmatprep.subr.mxu0 0.0
  %7468 = vmatpush2.msra.mxu0 0.0
  %7469 = vmatprep.subr.mxu0 0.0
  %7470 = vmatpush2.msra.mxu0 0.0
  %7471 = vmatprep.subr.mxu0 0.0
  %7472 = vmatpush2.msra.mxu0 0.0
  %7473 = vmatprep.subr.mxu0 0.0
  %7474 = vmatpush2.msra.mxu0 0.0
  %7475 = vmatprep.mubr.f32.mxu0 0.0
  %7476 = vmatmul.mubr.f32.gmra.mxu0 %v4880
  %v7477 = vpop.f32.mrf.mxu0
  %v7478 = vadd.f32 0.0, %v7477
  %v7479 = vpop.f32.mrf.mxu0
  %7480 = vmatprep.mubr.f32.mxu0 0.0
  %7481 = vmatmul.mubr.f32.gmra.mxu0 %v4883
  %v7482 = vpop.f32.mrf.mxu0
  %v7483 = vadd.f32 0.0, %v7482
  %v7484 = vpop.f32.mrf.mxu0
  %7485 = vmatprep.mubr.f32.mxu0 0.0
  %7486 = vmatmul.mubr.f32.gmra.mxu0 %v4886
  %v7487 = vpop.f32.mrf.mxu0
  %v7488 = vadd.f32 0.0, %v7487
  %v7489 = vpop.f32.mrf.mxu0
  %7490 = vmatprep.mubr.f32.mxu0 0.0
  %7491 = vmatmul.mubr.f32.gmra.mxu0 %v4889
  %v7492 = vpop.f32.mrf.mxu0
  %v7493 = vadd.f32 0.0, %v7492
  %v7494 = vpop.f32.mrf.mxu0
  %7495 = vmatprep.mubr.f32.mxu0 0.0
  %7496 = vmatmul.mubr.f32.gmra.mxu0 %v4892
  %v7497 = vpop.f32.mrf.mxu0
  %v7498 = vadd.f32 0.0, %v7497
  %v7499 = vpop.f32.mrf.mxu0
  %7500 = vmatprep.mubr.f32.mxu0 0.0
  %7501 = vmatmul.mubr.f32.gmra.mxu0 %v4895
  %v7502 = vpop.f32.mrf.mxu0
  %v7503 = vadd.f32 0.0, %v7502
  %v7504 = vpop.f32.mrf.mxu0
  %7505 = vmatprep.mubr.f32.mxu0 0.0
  %7506 = vmatmul.mubr.f32.gmra.mxu0 %v4898
  %v7507 = vpop.f32.mrf.mxu0
  %v7508 = vadd.f32 0.0, %v7507
  %v7509 = vpop.f32.mrf.mxu0
  %7510 = vmatprep.mubr.f32.mxu0 0.0
  %7511 = vmatmul.mubr.f32.gmra.mxu0 %v4901
  %v7512 = vpop.f32.mrf.mxu0
  %v7513 = vadd.f32 0.0, %v7512
  %v7514 = vpop.f32.mrf.mxu0
  %7515 = vmatprep.mubr.f32.mxu0 0.0
  %7516 = vmatmul.mubr.f32.gmra.mxu0 %v4904
  %v7517 = vpop.f32.mrf.mxu0
  %v7518 = vadd.f32 0.0, %v7517
  %v7519 = vpop.f32.mrf.mxu0
  %7520 = vmatprep.mubr.f32.mxu0 0.0
  %7521 = vmatmul.mubr.f32.gmra.mxu0 %v4907
  %v7522 = vpop.f32.mrf.mxu0
  %v7523 = vadd.f32 0.0, %v7522
  %v7524 = vpop.f32.mrf.mxu0
  %7525 = vmatprep.mubr.f32.mxu0 0.0
  %7526 = vmatmul.mubr.f32.gmra.mxu0 %v4910
  %v7527 = vpop.f32.mrf.mxu0
  %v7528 = vadd.f32 0.0, %v7527
  %v7529 = vpop.f32.mrf.mxu0
  %7530 = vmatprep.mubr.f32.mxu0 0.0
  %7531 = vmatmul.mubr.f32.gmra.mxu0 %v4913
  %v7532 = vpop.f32.mrf.mxu0
  %v7533 = vadd.f32 0.0, %v7532
  %v7534 = vpop.f32.mrf.mxu0
  %7535 = vmatprep.mubr.f32.mxu0 0.0
  %7536 = vmatmul.mubr.f32.gmra.mxu0 %v4916
  %v7537 = vpop.f32.mrf.mxu0
  %v7538 = vadd.f32 0.0, %v7537
  %v7539 = vpop.f32.mrf.mxu0
  %7540 = vmatprep.mubr.f32.mxu0 0.0
  %7541 = vmatmul.mubr.f32.gmra.mxu0 %v4919
  %v7542 = vpop.f32.mrf.mxu0
  %v7543 = vadd.f32 0.0, %v7542
  %v7544 = vpop.f32.mrf.mxu0
  %7545 = vmatprep.mubr.f32.mxu0 0.0
  %7546 = vmatmul.mubr.f32.gmra.mxu0 %v4922
  %v7547 = vpop.f32.mrf.mxu0
  %v7548 = vadd.f32 0.0, %v7547
  %v7549 = vpop.f32.mrf.mxu0
  %7550 = vmatprep.mubr.f32.mxu0 0.0
  %7551 = vmatmul.mubr.f32.gmra.mxu0 %v4925
  %v7552 = vpop.f32.mrf.mxu0
  %v7553 = vadd.f32 0.0, %v7552
  %v7554 = vpop.f32.mrf.mxu0
  %7555 = vdwg.mxu0
  %7556 = vmatprep.subr.mxu0 0.0
  %7557 = vmatpush1.msra.mxu0 0.0
  %7558 = vmatprep.subr.mxu0 0.0
  %7559 = vmatpush1.msra.mxu0 0.0
  %7560 = vmatprep.subr.mxu0 0.0
  %7561 = vmatpush1.msra.mxu0 0.0
  %7562 = vmatprep.subr.mxu0 0.0
  %7563 = vmatpush1.msra.mxu0 0.0
  %7564 = vmatprep.subr.mxu0 0.0
  %7565 = vmatpush1.msra.mxu0 0.0
  %7566 = vmatprep.subr.mxu0 0.0
  %7567 = vmatpush1.msra.mxu0 0.0
  %7568 = vmatprep.subr.mxu0 0.0
  %7569 = vmatpush1.msra.mxu0 0.0
  %7570 = vmatprep.subr.mxu0 0.0
  %7571 = vmatpush1.msra.mxu0 0.0
  %7572 = vmatprep.subr.mxu0 0.0
  %7573 = vmatpush1.msra.mxu0 0.0
  %7574 = vmatprep.subr.mxu0 0.0
  %7575 = vmatpush1.msra.mxu0 0.0
  %7576 = vmatprep.subr.mxu0 0.0
  %7577 = vmatpush1.msra.mxu0 0.0
  %7578 = vmatprep.subr.mxu0 0.0
  %7579 = vmatpush1.msra.mxu0 0.0
  %7580 = vmatprep.subr.mxu0 0.0
  %7581 = vmatpush1.msra.mxu0 %v7410
  %7582 = vmatprep.subr.mxu0 0.0
  %7583 = vmatpush1.msra.mxu0 %v7409
  %7584 = vmatprep.subr.mxu0 0.0
  %7585 = vmatpush1.msra.mxu0 %v7408
  %7586 = vmatprep.subr.mxu0 0.0
  %7587 = vmatpush1.msra.mxu0 %v7407
  %7588 = vmatprep.subr.mxu0 0.0
  %7589 = vmatpush2.msra.mxu0 0.0
  %7590 = vmatprep.subr.mxu0 0.0
  %7591 = vmatpush2.msra.mxu0 0.0
  %7592 = vmatprep.subr.mxu0 0.0
  %7593 = vmatpush2.msra.mxu0 0.0
  %7594 = vmatprep.subr.mxu0 0.0
  %7595 = vmatpush2.msra.mxu0 0.0
  %7596 = vmatprep.subr.mxu0 0.0
  %7597 = vmatpush2.msra.mxu0 0.0
  %7598 = vmatprep.subr.mxu0 0.0
  %7599 = vmatpush2.msra.mxu0 0.0
  %7600 = vmatprep.subr.mxu0 0.0
  %7601 = vmatpush2.msra.mxu0 0.0
  %7602 = vmatprep.subr.mxu0 0.0
  %7603 = vmatpush2.msra.mxu0 0.0
  %7604 = vmatprep.subr.mxu0 0.0
  %7605 = vmatpush2.msra.mxu0 0.0
  %7606 = vmatprep.subr.mxu0 0.0
  %7607 = vmatpush2.msra.mxu0 0.0
  %7608 = vmatprep.subr.mxu0 0.0
  %7609 = vmatpush2.msra.mxu0 0.0
  %7610 = vmatprep.subr.mxu0 0.0
  %7611 = vmatpush2.msra.mxu0 0.0
  %7612 = vmatprep.subr.mxu0 0.0
  %7613 = vmatpush2.msra.mxu0 0.0
  %7614 = vmatprep.subr.mxu0 0.0
  %7615 = vmatpush2.msra.mxu0 0.0
  %7616 = vmatprep.subr.mxu0 0.0
  %7617 = vmatpush2.msra.mxu0 0.0
  %7618 = vmatprep.subr.mxu0 0.0
  %7619 = vmatpush2.msra.mxu0 0.0
  %7620 = vmatprep.mubr.f32.mxu0 0.0
  %7621 = vmatmul.mubr.f32.gmra.mxu0 %v5073
  %v7622 = vpop.f32.mrf.mxu0
  %v7623 = vadd.f32 %v7478, %v7622
  %v7624 = vpop.f32.mrf.mxu0
  %7625 = vmatprep.mubr.f32.mxu0 0.0
  %7626 = vmatmul.mubr.f32.gmra.mxu0 %v5076
  %v7627 = vpop.f32.mrf.mxu0
  %v7628 = vadd.f32 %v7483, %v7627
  %v7629 = vpop.f32.mrf.mxu0
  %7630 = vmatprep.mubr.f32.mxu0 0.0
  %7631 = vmatmul.mubr.f32.gmra.mxu0 %v5079
  %v7632 = vpop.f32.mrf.mxu0
  %v7633 = vadd.f32 %v7488, %v7632
  %v7634 = vpop.f32.mrf.mxu0
  %7635 = vmatprep.mubr.f32.mxu0 0.0
  %7636 = vmatmul.mubr.f32.gmra.mxu0 %v5082
  %v7637 = vpop.f32.mrf.mxu0
  %v7638 = vadd.f32 %v7493, %v7637
  %v7639 = vpop.f32.mrf.mxu0
  %7640 = vmatprep.mubr.f32.mxu0 0.0
  %7641 = vmatmul.mubr.f32.gmra.mxu0 %v5085
  %v7642 = vpop.f32.mrf.mxu0
  %v7643 = vadd.f32 %v7498, %v7642
  %v7644 = vpop.f32.mrf.mxu0
  %7645 = vmatprep.mubr.f32.mxu0 0.0
  %7646 = vmatmul.mubr.f32.gmra.mxu0 %v5088
  %v7647 = vpop.f32.mrf.mxu0
  %v7648 = vadd.f32 %v7503, %v7647
  %v7649 = vpop.f32.mrf.mxu0
  %7650 = vmatprep.mubr.f32.mxu0 0.0
  %7651 = vmatmul.mubr.f32.gmra.mxu0 %v5091
  %v7652 = vpop.f32.mrf.mxu0
  %v7653 = vadd.f32 %v7508, %v7652
  %v7654 = vpop.f32.mrf.mxu0
  %7655 = vmatprep.mubr.f32.mxu0 0.0
  %7656 = vmatmul.mubr.f32.gmra.mxu0 %v5094
  %v7657 = vpop.f32.mrf.mxu0
  %v7658 = vadd.f32 %v7513, %v7657
  %v7659 = vpop.f32.mrf.mxu0
  %7660 = vmatprep.mubr.f32.mxu0 0.0
  %7661 = vmatmul.mubr.f32.gmra.mxu0 %v5097
  %v7662 = vpop.f32.mrf.mxu0
  %v7663 = vadd.f32 %v7518, %v7662
  %v7664 = vpop.f32.mrf.mxu0
  %7665 = vmatprep.mubr.f32.mxu0 0.0
  %7666 = vmatmul.mubr.f32.gmra.mxu0 %v5100
  %v7667 = vpop.f32.mrf.mxu0
  %v7668 = vadd.f32 %v7523, %v7667
  %v7669 = vpop.f32.mrf.mxu0
  %7670 = vmatprep.mubr.f32.mxu0 0.0
  %7671 = vmatmul.mubr.f32.gmra.mxu0 %v5103
  %v7672 = vpop.f32.mrf.mxu0
  %v7673 = vadd.f32 %v7528, %v7672
  %v7674 = vpop.f32.mrf.mxu0
  %7675 = vmatprep.mubr.f32.mxu0 0.0
  %7676 = vmatmul.mubr.f32.gmra.mxu0 %v5106
  %v7677 = vpop.f32.mrf.mxu0
  %v7678 = vadd.f32 %v7533, %v7677
  %v7679 = vpop.f32.mrf.mxu0
  %7680 = vmatprep.mubr.f32.mxu0 0.0
  %7681 = vmatmul.mubr.f32.gmra.mxu0 %v5109
  %v7682 = vpop.f32.mrf.mxu0
  %v7683 = vadd.f32 %v7538, %v7682
  %v7684 = vpop.f32.mrf.mxu0
  %7685 = vmatprep.mubr.f32.mxu0 0.0
  %7686 = vmatmul.mubr.f32.gmra.mxu0 %v5112
  %v7687 = vpop.f32.mrf.mxu0
  %v7688 = vadd.f32 %v7543, %v7687
  %v7689 = vpop.f32.mrf.mxu0
  %7690 = vmatprep.mubr.f32.mxu0 0.0
  %7691 = vmatmul.mubr.f32.gmra.mxu0 %v5115
  %v7692 = vpop.f32.mrf.mxu0
  %v7693 = vadd.f32 %v7548, %v7692
  %v7694 = vpop.f32.mrf.mxu0
  %7695 = vmatprep.mubr.f32.mxu0 0.0
  %7696 = vmatmul.mubr.f32.gmra.mxu0 %v5118
  %v7697 = vpop.f32.mrf.mxu0
  %v7698 = vadd.f32 %v7553, %v7697
  %v7699 = vpop.f32.mrf.mxu0
  %7700 = vdwg.mxu0
  %v7701 = vadd.f32 %v7623, %v4798
  %v7702 = vadd.f32 %v7628, %v4803
  %v7703 = vadd.f32 %v7633, %v4808
  %v7704 = vadd.f32 %v7638, %v4813
  %v7705 = vadd.f32 %v7643, %v4818
  %v7706 = vadd.f32 %v7648, %v4823
  %v7707 = vadd.f32 %v7653, %v4828
  %v7708 = vadd.f32 %v7658, %v4833
  %v7709 = vadd.f32 %v7663, %v4838
  %v7710 = vadd.f32 %v7668, %v4843
  %v7711 = vadd.f32 %v7673, %v4848
  %v7712 = vadd.f32 %v7678, %v4853
  %v7713 = vadd.f32 %v7683, %v4858
  %v7714 = vadd.f32 %v7688, %v4863
  %v7715 = vadd.f32 %v7693, %v4868
  %v7716 = vadd.f32 %v7698, %v4873
  %v7717 = vxor.u32 %v7701, 2147483648
  %v7718 = vxor.u32 %v7702, 2147483648
  %v7719 = vxor.u32 %v7703, 2147483648
  %v7720 = vxor.u32 %v7704, 2147483648
  %v7721 = vmul.f32 %v7717, 1.442695
  %v7722 = vpow.pop %v7721
  %v7723 = vmul.f32 %v7718, 1.442695
  %v7724 = vpow.pop %v7723
  %v7725 = vmul.f32 %v7719, 1.442695
  %v7726 = vpow.pop %v7725
  %v7727 = vmul.f32 %v7720, 1.442695
  %v7728 = vpow.pop %v7727
  %v7729 = vadd.f32 %v7722, 1.0
  %v7730 = vadd.f32 %v7724, 1.0
  %v7731 = vadd.f32 %v7726, 1.0
  %v7732 = vadd.f32 %v7728, 1.0
  %v7733 = vrcp.pop %v7729
  %v7734 = vmul.f32 1.0, %v7733
  %v7735 = vrcp.pop %v7730
  %v7736 = vmul.f32 1.0, %v7735
  %v7737 = vrcp.pop %v7731
  %v7738 = vmul.f32 1.0, %v7737
  %v7739 = vrcp.pop %v7732
  %v7740 = vmul.f32 1.0, %v7739
  %v7741 = vxor.u32 %v7705, 2147483648
  %v7742 = vxor.u32 %v7706, 2147483648
  %v7743 = vxor.u32 %v7707, 2147483648
  %v7744 = vxor.u32 %v7708, 2147483648
  %v7745 = vmul.f32 %v7741, 1.442695
  %v7746 = vpow.pop %v7745
  %v7747 = vmul.f32 %v7742, 1.442695
  %v7748 = vpow.pop %v7747
  %v7749 = vmul.f32 %v7743, 1.442695
  %v7750 = vpow.pop %v7749
  %v7751 = vmul.f32 %v7744, 1.442695
  %v7752 = vpow.pop %v7751
  %v7753 = vadd.f32 %v7746, 1.0
  %v7754 = vadd.f32 %v7748, 1.0
  %v7755 = vadd.f32 %v7750, 1.0
  %v7756 = vadd.f32 %v7752, 1.0
  %v7757 = vrcp.pop %v7753
  %v7758 = vmul.f32 1.0, %v7757
  %v7759 = vrcp.pop %v7754
  %v7760 = vmul.f32 1.0, %v7759
  %v7761 = vrcp.pop %v7755
  %v7762 = vmul.f32 1.0, %v7761
  %v7763 = vrcp.pop %v7756
  %v7764 = vmul.f32 1.0, %v7763
  %v7765 = vtanh.pop %v7709
  %v7766 = vtanh.pop %v7710
  %v7767 = vtanh.pop %v7711
  %v7768 = vtanh.pop %v7712
  %v7769 = vxor.u32 %v7713, 2147483648
  %v7770 = vxor.u32 %v7714, 2147483648
  %v7771 = vxor.u32 %v7715, 2147483648
  %v7772 = vxor.u32 %v7716, 2147483648
  %v7773 = vmul.f32 %v7769, 1.442695
  %v7774 = vpow.pop %v7773
  %v7775 = vmul.f32 %v7770, 1.442695
  %v7776 = vpow.pop %v7775
  %v7777 = vmul.f32 %v7771, 1.442695
  %v7778 = vpow.pop %v7777
  %v7779 = vmul.f32 %v7772, 1.442695
  %v7780 = vpow.pop %v7779
  %v7781 = vadd.f32 %v7774, 1.0
  %v7782 = vadd.f32 %v7776, 1.0
  %v7783 = vadd.f32 %v7778, 1.0
  %v7784 = vadd.f32 %v7780, 1.0
  %v7785 = vrcp.pop %v7781
  %v7786 = vmul.f32 1.0, %v7785
  %v7787 = vrcp.pop %v7782
  %v7788 = vmul.f32 1.0, %v7787
  %v7789 = vrcp.pop %v7783
  %v7790 = vmul.f32 1.0, %v7789
  %v7791 = vrcp.pop %v7784
  %v7792 = vmul.f32 1.0, %v7791
  %v7793 = vmul.f32 %v7758, %v7395
  %v7794 = vmul.f32 %v7760, %v7396
  %v7795 = vmul.f32 %v7762, %v7397
  %v7796 = vmul.f32 %v7764, %v7398
  %v7797 = vmul.f32 %v7734, %v7765
  %v7798 = vmul.f32 %v7736, %v7766
  %v7799 = vmul.f32 %v7738, %v7767
  %v7800 = vmul.f32 %v7740, %v7768
  %v7801 = vadd.f32 %v7793, %v7797
  %v7802 = vadd.f32 %v7794, %v7798
  %v7803 = vadd.f32 %v7795, %v7799
  %v7804 = vadd.f32 %v7796, %v7800
  %v7805 = vtanh.pop %v7801
  %v7806 = vtanh.pop %v7802
  %v7807 = vtanh.pop %v7803
  %v7808 = vtanh.pop %v7804
  %v7809 = vmul.f32 %v7786, %v7805
  %v7810 = vmul.f32 %v7788, %v7806
  %v7811 = vmul.f32 %v7790, %v7807
  %v7812 = vmul.f32 %v7792, %v7808
  %v7813 = vld [vmem:[%s4598] sm:$0xff]
  %v7814 = vld [vmem:[%s4598 + $0x8] sm:$0xff]
  %v7815 = vld [vmem:[%s4598 + $0x10] sm:$0xff]
  %v7816 = vld [vmem:[%s4598 + $0x18] sm:$0xff]
  %7817 = vmatprep.subr.mxu0 0.0
  %7818 = vmatpush1.msra.mxu0 0.0
  %7819 = vmatprep.subr.mxu0 0.0
  %7820 = vmatpush1.msra.mxu0 0.0
  %7821 = vmatprep.subr.mxu0 0.0
  %7822 = vmatpush1.msra.mxu0 0.0
  %7823 = vmatprep.subr.mxu0 0.0
  %7824 = vmatpush1.msra.mxu0 0.0
  %7825 = vmatprep.subr.mxu0 0.0
  %7826 = vmatpush1.msra.mxu0 0.0
  %7827 = vmatprep.subr.mxu0 0.0
  %7828 = vmatpush1.msra.mxu0 0.0
  %7829 = vmatprep.subr.mxu0 0.0
  %7830 = vmatpush1.msra.mxu0 0.0
  %7831 = vmatprep.subr.mxu0 0.0
  %7832 = vmatpush1.msra.mxu0 0.0
  %7833 = vmatprep.subr.mxu0 0.0
  %7834 = vmatpush1.msra.mxu0 0.0
  %7835 = vmatprep.subr.mxu0 0.0
  %7836 = vmatpush1.msra.mxu0 0.0
  %7837 = vmatprep.subr.mxu0 0.0
  %7838 = vmatpush1.msra.mxu0 0.0
  %7839 = vmatprep.subr.mxu0 0.0
  %7840 = vmatpush1.msra.mxu0 0.0
  %7841 = vmatprep.subr.mxu0 0.0
  %7842 = vmatpush1.msra.mxu0 %v7812
  %7843 = vmatprep.subr.mxu0 0.0
  %7844 = vmatpush1.msra.mxu0 %v7811
  %7845 = vmatprep.subr.mxu0 0.0
  %7846 = vmatpush1.msra.mxu0 %v7810
  %7847 = vmatprep.subr.mxu0 0.0
  %7848 = vmatpush1.msra.mxu0 %v7809
  %7849 = vmatprep.subr.mxu0 0.0
  %7850 = vmatpush2.msra.mxu0 0.0
  %7851 = vmatprep.subr.mxu0 0.0
  %7852 = vmatpush2.msra.mxu0 0.0
  %7853 = vmatprep.subr.mxu0 0.0
  %7854 = vmatpush2.msra.mxu0 0.0
  %7855 = vmatprep.subr.mxu0 0.0
  %7856 = vmatpush2.msra.mxu0 0.0
  %7857 = vmatprep.subr.mxu0 0.0
  %7858 = vmatpush2.msra.mxu0 0.0
  %7859 = vmatprep.subr.mxu0 0.0
  %7860 = vmatpush2.msra.mxu0 0.0
  %7861 = vmatprep.subr.mxu0 0.0
  %7862 = vmatpush2.msra.mxu0 0.0
  %7863 = vmatprep.subr.mxu0 0.0
  %7864 = vmatpush2.msra.mxu0 0.0
  %7865 = vmatprep.subr.mxu0 0.0
  %7866 = vmatpush2.msra.mxu0 0.0
  %7867 = vmatprep.subr.mxu0 0.0
  %7868 = vmatpush2.msra.mxu0 0.0
  %7869 = vmatprep.subr.mxu0 0.0
  %7870 = vmatpush2.msra.mxu0 0.0
  %7871 = vmatprep.subr.mxu0 0.0
  %7872 = vmatpush2.msra.mxu0 0.0
  %7873 = vmatprep.subr.mxu0 0.0
  %7874 = vmatpush2.msra.mxu0 0.0
  %7875 = vmatprep.subr.mxu0 0.0
  %7876 = vmatpush2.msra.mxu0 0.0
  %7877 = vmatprep.subr.mxu0 0.0
  %7878 = vmatpush2.msra.mxu0 0.0
  %7879 = vmatprep.subr.mxu0 0.0
  %7880 = vmatpush2.msra.mxu0 0.0
  %7881 = vmatprep.mubr.f32.mxu0 0.0
  %7882 = vmatmul.mubr.f32.gmra.mxu0 %v4880
  %v7883 = vpop.f32.mrf.mxu0
  %v7884 = vadd.f32 0.0, %v7883
  %v7885 = vpop.f32.mrf.mxu0
  %7886 = vmatprep.mubr.f32.mxu0 0.0
  %7887 = vmatmul.mubr.f32.gmra.mxu0 %v4883
  %v7888 = vpop.f32.mrf.mxu0
  %v7889 = vadd.f32 0.0, %v7888
  %v7890 = vpop.f32.mrf.mxu0
  %7891 = vmatprep.mubr.f32.mxu0 0.0
  %7892 = vmatmul.mubr.f32.gmra.mxu0 %v4886
  %v7893 = vpop.f32.mrf.mxu0
  %v7894 = vadd.f32 0.0, %v7893
  %v7895 = vpop.f32.mrf.mxu0
  %7896 = vmatprep.mubr.f32.mxu0 0.0
  %7897 = vmatmul.mubr.f32.gmra.mxu0 %v4889
  %v7898 = vpop.f32.mrf.mxu0
  %v7899 = vadd.f32 0.0, %v7898
  %v7900 = vpop.f32.mrf.mxu0
  %7901 = vmatprep.mubr.f32.mxu0 0.0
  %7902 = vmatmul.mubr.f32.gmra.mxu0 %v4892
  %v7903 = vpop.f32.mrf.mxu0
  %v7904 = vadd.f32 0.0, %v7903
  %v7905 = vpop.f32.mrf.mxu0
  %7906 = vmatprep.mubr.f32.mxu0 0.0
  %7907 = vmatmul.mubr.f32.gmra.mxu0 %v4895
  %v7908 = vpop.f32.mrf.mxu0
  %v7909 = vadd.f32 0.0, %v7908
  %v7910 = vpop.f32.mrf.mxu0
  %7911 = vmatprep.mubr.f32.mxu0 0.0
  %7912 = vmatmul.mubr.f32.gmra.mxu0 %v4898
  %v7913 = vpop.f32.mrf.mxu0
  %v7914 = vadd.f32 0.0, %v7913
  %v7915 = vpop.f32.mrf.mxu0
  %7916 = vmatprep.mubr.f32.mxu0 0.0
  %7917 = vmatmul.mubr.f32.gmra.mxu0 %v4901
  %v7918 = vpop.f32.mrf.mxu0
  %v7919 = vadd.f32 0.0, %v7918
  %v7920 = vpop.f32.mrf.mxu0
  %7921 = vmatprep.mubr.f32.mxu0 0.0
  %7922 = vmatmul.mubr.f32.gmra.mxu0 %v4904
  %v7923 = vpop.f32.mrf.mxu0
  %v7924 = vadd.f32 0.0, %v7923
  %v7925 = vpop.f32.mrf.mxu0
  %7926 = vmatprep.mubr.f32.mxu0 0.0
  %7927 = vmatmul.mubr.f32.gmra.mxu0 %v4907
  %v7928 = vpop.f32.mrf.mxu0
  %v7929 = vadd.f32 0.0, %v7928
  %v7930 = vpop.f32.mrf.mxu0
  %7931 = vmatprep.mubr.f32.mxu0 0.0
  %7932 = vmatmul.mubr.f32.gmra.mxu0 %v4910
  %v7933 = vpop.f32.mrf.mxu0
  %v7934 = vadd.f32 0.0, %v7933
  %v7935 = vpop.f32.mrf.mxu0
  %7936 = vmatprep.mubr.f32.mxu0 0.0
  %7937 = vmatmul.mubr.f32.gmra.mxu0 %v4913
  %v7938 = vpop.f32.mrf.mxu0
  %v7939 = vadd.f32 0.0, %v7938
  %v7940 = vpop.f32.mrf.mxu0
  %7941 = vmatprep.mubr.f32.mxu0 0.0
  %7942 = vmatmul.mubr.f32.gmra.mxu0 %v4916
  %v7943 = vpop.f32.mrf.mxu0
  %v7944 = vadd.f32 0.0, %v7943
  %v7945 = vpop.f32.mrf.mxu0
  %7946 = vmatprep.mubr.f32.mxu0 0.0
  %7947 = vmatmul.mubr.f32.gmra.mxu0 %v4919
  %v7948 = vpop.f32.mrf.mxu0
  %v7949 = vadd.f32 0.0, %v7948
  %v7950 = vpop.f32.mrf.mxu0
  %7951 = vmatprep.mubr.f32.mxu0 0.0
  %7952 = vmatmul.mubr.f32.gmra.mxu0 %v4922
  %v7953 = vpop.f32.mrf.mxu0
  %v7954 = vadd.f32 0.0, %v7953
  %v7955 = vpop.f32.mrf.mxu0
  %7956 = vmatprep.mubr.f32.mxu0 0.0
  %7957 = vmatmul.mubr.f32.gmra.mxu0 %v4925
  %v7958 = vpop.f32.mrf.mxu0
  %v7959 = vadd.f32 0.0, %v7958
  %v7960 = vpop.f32.mrf.mxu0
  %7961 = vdwg.mxu0
  %7962 = vmatprep.subr.mxu0 0.0
  %7963 = vmatpush1.msra.mxu0 0.0
  %7964 = vmatprep.subr.mxu0 0.0
  %7965 = vmatpush1.msra.mxu0 0.0
  %7966 = vmatprep.subr.mxu0 0.0
  %7967 = vmatpush1.msra.mxu0 0.0
  %7968 = vmatprep.subr.mxu0 0.0
  %7969 = vmatpush1.msra.mxu0 0.0
  %7970 = vmatprep.subr.mxu0 0.0
  %7971 = vmatpush1.msra.mxu0 0.0
  %7972 = vmatprep.subr.mxu0 0.0
  %7973 = vmatpush1.msra.mxu0 0.0
  %7974 = vmatprep.subr.mxu0 0.0
  %7975 = vmatpush1.msra.mxu0 0.0
  %7976 = vmatprep.subr.mxu0 0.0
  %7977 = vmatpush1.msra.mxu0 0.0
  %7978 = vmatprep.subr.mxu0 0.0
  %7979 = vmatpush1.msra.mxu0 0.0
  %7980 = vmatprep.subr.mxu0 0.0
  %7981 = vmatpush1.msra.mxu0 0.0
  %7982 = vmatprep.subr.mxu0 0.0
  %7983 = vmatpush1.msra.mxu0 0.0
  %7984 = vmatprep.subr.mxu0 0.0
  %7985 = vmatpush1.msra.mxu0 0.0
  %7986 = vmatprep.subr.mxu0 0.0
  %7987 = vmatpush1.msra.mxu0 %v7816
  %7988 = vmatprep.subr.mxu0 0.0
  %7989 = vmatpush1.msra.mxu0 %v7815
  %7990 = vmatprep.subr.mxu0 0.0
  %7991 = vmatpush1.msra.mxu0 %v7814
  %7992 = vmatprep.subr.mxu0 0.0
  %7993 = vmatpush1.msra.mxu0 %v7813
  %7994 = vmatprep.subr.mxu0 0.0
  %7995 = vmatpush2.msra.mxu0 0.0
  %7996 = vmatprep.subr.mxu0 0.0
  %7997 = vmatpush2.msra.mxu0 0.0
  %7998 = vmatprep.subr.mxu0 0.0
  %7999 = vmatpush2.msra.mxu0 0.0
  %8000 = vmatprep.subr.mxu0 0.0
  %8001 = vmatpush2.msra.mxu0 0.0
  %8002 = vmatprep.subr.mxu0 0.0
  %8003 = vmatpush2.msra.mxu0 0.0
  %8004 = vmatprep.subr.mxu0 0.0
  %8005 = vmatpush2.msra.mxu0 0.0
  %8006 = vmatprep.subr.mxu0 0.0
  %8007 = vmatpush2.msra.mxu0 0.0
  %8008 = vmatprep.subr.mxu0 0.0
  %8009 = vmatpush2.msra.mxu0 0.0
  %8010 = vmatprep.subr.mxu0 0.0
  %8011 = vmatpush2.msra.mxu0 0.0
  %8012 = vmatprep.subr.mxu0 0.0
  %8013 = vmatpush2.msra.mxu0 0.0
  %8014 = vmatprep.subr.mxu0 0.0
  %8015 = vmatpush2.msra.mxu0 0.0
  %8016 = vmatprep.subr.mxu0 0.0
  %8017 = vmatpush2.msra.mxu0 0.0
  %8018 = vmatprep.subr.mxu0 0.0
  %8019 = vmatpush2.msra.mxu0 0.0
  %8020 = vmatprep.subr.mxu0 0.0
  %8021 = vmatpush2.msra.mxu0 0.0
  %8022 = vmatprep.subr.mxu0 0.0
  %8023 = vmatpush2.msra.mxu0 0.0
  %8024 = vmatprep.subr.mxu0 0.0
  %8025 = vmatpush2.msra.mxu0 0.0
  %8026 = vmatprep.mubr.f32.mxu0 0.0
  %8027 = vmatmul.mubr.f32.gmra.mxu0 %v5073
  %v8028 = vpop.f32.mrf.mxu0
  %v8029 = vadd.f32 %v7884, %v8028
  %v8030 = vpop.f32.mrf.mxu0
  %8031 = vmatprep.mubr.f32.mxu0 0.0
  %8032 = vmatmul.mubr.f32.gmra.mxu0 %v5076
  %v8033 = vpop.f32.mrf.mxu0
  %v8034 = vadd.f32 %v7889, %v8033
  %v8035 = vpop.f32.mrf.mxu0
  %8036 = vmatprep.mubr.f32.mxu0 0.0
  %8037 = vmatmul.mubr.f32.gmra.mxu0 %v5079
  %v8038 = vpop.f32.mrf.mxu0
  %v8039 = vadd.f32 %v7894, %v8038
  %v8040 = vpop.f32.mrf.mxu0
  %8041 = vmatprep.mubr.f32.mxu0 0.0
  %8042 = vmatmul.mubr.f32.gmra.mxu0 %v5082
  %v8043 = vpop.f32.mrf.mxu0
  %v8044 = vadd.f32 %v7899, %v8043
  %v8045 = vpop.f32.mrf.mxu0
  %8046 = vmatprep.mubr.f32.mxu0 0.0
  %8047 = vmatmul.mubr.f32.gmra.mxu0 %v5085
  %v8048 = vpop.f32.mrf.mxu0
  %v8049 = vadd.f32 %v7904, %v8048
  %v8050 = vpop.f32.mrf.mxu0
  %8051 = vmatprep.mubr.f32.mxu0 0.0
  %8052 = vmatmul.mubr.f32.gmra.mxu0 %v5088
  %v8053 = vpop.f32.mrf.mxu0
  %v8054 = vadd.f32 %v7909, %v8053
  %v8055 = vpop.f32.mrf.mxu0
  %8056 = vmatprep.mubr.f32.mxu0 0.0
  %8057 = vmatmul.mubr.f32.gmra.mxu0 %v5091
  %v8058 = vpop.f32.mrf.mxu0
  %v8059 = vadd.f32 %v7914, %v8058
  %v8060 = vpop.f32.mrf.mxu0
  %8061 = vmatprep.mubr.f32.mxu0 0.0
  %8062 = vmatmul.mubr.f32.gmra.mxu0 %v5094
  %v8063 = vpop.f32.mrf.mxu0
  %v8064 = vadd.f32 %v7919, %v8063
  %v8065 = vpop.f32.mrf.mxu0
  %8066 = vmatprep.mubr.f32.mxu0 0.0
  %8067 = vmatmul.mubr.f32.gmra.mxu0 %v5097
  %v8068 = vpop.f32.mrf.mxu0
  %v8069 = vadd.f32 %v7924, %v8068
  %v8070 = vpop.f32.mrf.mxu0
  %8071 = vmatprep.mubr.f32.mxu0 0.0
  %8072 = vmatmul.mubr.f32.gmra.mxu0 %v5100
  %v8073 = vpop.f32.mrf.mxu0
  %v8074 = vadd.f32 %v7929, %v8073
  %v8075 = vpop.f32.mrf.mxu0
  %8076 = vmatprep.mubr.f32.mxu0 0.0
  %8077 = vmatmul.mubr.f32.gmra.mxu0 %v5103
  %v8078 = vpop.f32.mrf.mxu0
  %v8079 = vadd.f32 %v7934, %v8078
  %v8080 = vpop.f32.mrf.mxu0
  %8081 = vmatprep.mubr.f32.mxu0 0.0
  %8082 = vmatmul.mubr.f32.gmra.mxu0 %v5106
  %v8083 = vpop.f32.mrf.mxu0
  %v8084 = vadd.f32 %v7939, %v8083
  %v8085 = vpop.f32.mrf.mxu0
  %8086 = vmatprep.mubr.f32.mxu0 0.0
  %8087 = vmatmul.mubr.f32.gmra.mxu0 %v5109
  %v8088 = vpop.f32.mrf.mxu0
  %v8089 = vadd.f32 %v7944, %v8088
  %v8090 = vpop.f32.mrf.mxu0
  %8091 = vmatprep.mubr.f32.mxu0 0.0
  %8092 = vmatmul.mubr.f32.gmra.mxu0 %v5112
  %v8093 = vpop.f32.mrf.mxu0
  %v8094 = vadd.f32 %v7949, %v8093
  %v8095 = vpop.f32.mrf.mxu0
  %8096 = vmatprep.mubr.f32.mxu0 0.0
  %8097 = vmatmul.mubr.f32.gmra.mxu0 %v5115
  %v8098 = vpop.f32.mrf.mxu0
  %v8099 = vadd.f32 %v7954, %v8098
  %v8100 = vpop.f32.mrf.mxu0
  %8101 = vmatprep.mubr.f32.mxu0 0.0
  %8102 = vmatmul.mubr.f32.gmra.mxu0 %v5118
  %v8103 = vpop.f32.mrf.mxu0
  %v8104 = vadd.f32 %v7959, %v8103
  %v8105 = vpop.f32.mrf.mxu0
  %8106 = vdwg.mxu0
  %v8107 = vadd.f32 %v8029, %v4798
  %v8108 = vadd.f32 %v8034, %v4803
  %v8109 = vadd.f32 %v8039, %v4808
  %v8110 = vadd.f32 %v8044, %v4813
  %v8111 = vadd.f32 %v8049, %v4818
  %v8112 = vadd.f32 %v8054, %v4823
  %v8113 = vadd.f32 %v8059, %v4828
  %v8114 = vadd.f32 %v8064, %v4833
  %v8115 = vadd.f32 %v8069, %v4838
  %v8116 = vadd.f32 %v8074, %v4843
  %v8117 = vadd.f32 %v8079, %v4848
  %v8118 = vadd.f32 %v8084, %v4853
  %v8119 = vadd.f32 %v8089, %v4858
  %v8120 = vadd.f32 %v8094, %v4863
  %v8121 = vadd.f32 %v8099, %v4868
  %v8122 = vadd.f32 %v8104, %v4873
  %v8123 = vxor.u32 %v8107, 2147483648
  %v8124 = vxor.u32 %v8108, 2147483648
  %v8125 = vxor.u32 %v8109, 2147483648
  %v8126 = vxor.u32 %v8110, 2147483648
  %v8127 = vmul.f32 %v8123, 1.442695
  %v8128 = vpow.pop %v8127
  %v8129 = vmul.f32 %v8124, 1.442695
  %v8130 = vpow.pop %v8129
  %v8131 = vmul.f32 %v8125, 1.442695
  %v8132 = vpow.pop %v8131
  %v8133 = vmul.f32 %v8126, 1.442695
  %v8134 = vpow.pop %v8133
  %v8135 = vadd.f32 %v8128, 1.0
  %v8136 = vadd.f32 %v8130, 1.0
  %v8137 = vadd.f32 %v8132, 1.0
  %v8138 = vadd.f32 %v8134, 1.0
  %v8139 = vrcp.pop %v8135
  %v8140 = vmul.f32 1.0, %v8139
  %v8141 = vrcp.pop %v8136
  %v8142 = vmul.f32 1.0, %v8141
  %v8143 = vrcp.pop %v8137
  %v8144 = vmul.f32 1.0, %v8143
  %v8145 = vrcp.pop %v8138
  %v8146 = vmul.f32 1.0, %v8145
  %v8147 = vxor.u32 %v8111, 2147483648
  %v8148 = vxor.u32 %v8112, 2147483648
  %v8149 = vxor.u32 %v8113, 2147483648
  %v8150 = vxor.u32 %v8114, 2147483648
  %v8151 = vmul.f32 %v8147, 1.442695
  %v8152 = vpow.pop %v8151
  %v8153 = vmul.f32 %v8148, 1.442695
  %v8154 = vpow.pop %v8153
  %v8155 = vmul.f32 %v8149, 1.442695
  %v8156 = vpow.pop %v8155
  %v8157 = vmul.f32 %v8150, 1.442695
  %v8158 = vpow.pop %v8157
  %v8159 = vadd.f32 %v8152, 1.0
  %v8160 = vadd.f32 %v8154, 1.0
  %v8161 = vadd.f32 %v8156, 1.0
  %v8162 = vadd.f32 %v8158, 1.0
  %v8163 = vrcp.pop %v8159
  %v8164 = vmul.f32 1.0, %v8163
  %v8165 = vrcp.pop %v8160
  %v8166 = vmul.f32 1.0, %v8165
  %v8167 = vrcp.pop %v8161
  %v8168 = vmul.f32 1.0, %v8167
  %v8169 = vrcp.pop %v8162
  %v8170 = vmul.f32 1.0, %v8169
  %v8171 = vtanh.pop %v8115
  %v8172 = vtanh.pop %v8116
  %v8173 = vtanh.pop %v8117
  %v8174 = vtanh.pop %v8118
  %v8175 = vxor.u32 %v8119, 2147483648
  %v8176 = vxor.u32 %v8120, 2147483648
  %v8177 = vxor.u32 %v8121, 2147483648
  %v8178 = vxor.u32 %v8122, 2147483648
  %v8179 = vmul.f32 %v8175, 1.442695
  %v8180 = vpow.pop %v8179
  %v8181 = vmul.f32 %v8176, 1.442695
  %v8182 = vpow.pop %v8181
  %v8183 = vmul.f32 %v8177, 1.442695
  %v8184 = vpow.pop %v8183
  %v8185 = vmul.f32 %v8178, 1.442695
  %v8186 = vpow.pop %v8185
  %v8187 = vadd.f32 %v8180, 1.0
  %v8188 = vadd.f32 %v8182, 1.0
  %v8189 = vadd.f32 %v8184, 1.0
  %v8190 = vadd.f32 %v8186, 1.0
  %v8191 = vrcp.pop %v8187
  %v8192 = vmul.f32 1.0, %v8191
  %v8193 = vrcp.pop %v8188
  %v8194 = vmul.f32 1.0, %v8193
  %v8195 = vrcp.pop %v8189
  %v8196 = vmul.f32 1.0, %v8195
  %v8197 = vrcp.pop %v8190
  %v8198 = vmul.f32 1.0, %v8197
  %v8199 = vmul.f32 %v8164, %v7801
  %v8200 = vmul.f32 %v8166, %v7802
  %v8201 = vmul.f32 %v8168, %v7803
  %v8202 = vmul.f32 %v8170, %v7804
  %v8203 = vmul.f32 %v8140, %v8171
  %v8204 = vmul.f32 %v8142, %v8172
  %v8205 = vmul.f32 %v8144, %v8173
  %v8206 = vmul.f32 %v8146, %v8174
  %v8207 = vadd.f32 %v8199, %v8203
  %v8208 = vadd.f32 %v8200, %v8204
  %v8209 = vadd.f32 %v8201, %v8205
  %v8210 = vadd.f32 %v8202, %v8206
  %v8211 = vtanh.pop %v8207
  %v8212 = vtanh.pop %v8208
  %v8213 = vtanh.pop %v8209
  %v8214 = vtanh.pop %v8210
  %v8215 = vmul.f32 %v8192, %v8211
  %v8216 = vmul.f32 %v8194, %v8212
  %v8217 = vmul.f32 %v8196, %v8213
  %v8218 = vmul.f32 %v8198, %v8214
  %v8219 = vsel %vm1043, %v8215, 0.0
  %v8220 = vsel %vm1043, %v8216, 0.0
  %v8221 = vadd.f32 %v8219, %v8220
  %v8222 = vsel %vm1043, %v8217, 0.0
  %v8223 = vadd.f32 %v8221, %v8222
  %v8224 = vsel %vm1043, %v8218, 0.0
  %v8225 = vadd.f32 %v8223, %v8224
  %v8226 = vrot.slane %v8225, 4
  %v8227 = vadd.f32 %v8225, %v8226
  %v8228 = vrot.slane %v8227, 2
  %v8229 = vadd.f32 %v8227, %v8228
  %v8230 = vrot.slane %v8229, 1
  %v8231 = vadd.f32 %v8229, %v8230
  %v8232 = vmul.f32 %v8231, %v4616
  %v8233 = vsub.f32 %v8215, %v8232
  %v8234 = vsub.f32 %v8216, %v8232
  %v8235 = vsub.f32 %v8217, %v8232
  %v8236 = vsub.f32 %v8218, %v8232
  %v8237 = vmul.f32 %v8233, %v8233
  %v8238 = vmul.f32 %v8234, %v8234
  %v8239 = vmul.f32 %v8235, %v8235
  %v8240 = vmul.f32 %v8236, %v8236
  %v8241 = vsel %vm1043, %v8237, 0.0
  %v8242 = vsel %vm1043, %v8238, 0.0
  %v8243 = vadd.f32 %v8241, %v8242
  %v8244 = vsel %vm1043, %v8239, 0.0
  %v8245 = vadd.f32 %v8243, %v8244
  %v8246 = vsel %vm1043, %v8240, 0.0
  %v8247 = vadd.f32 %v8245, %v8246
  %v8248 = vrot.slane %v8247, 4
  %v8249 = vadd.f32 %v8247, %v8248
  %v8250 = vrot.slane %v8249, 2
  %v8251 = vadd.f32 %v8249, %v8250
  %v8252 = vrot.slane %v8251, 1
  %v8253 = vadd.f32 %v8251, %v8252
  %v8254 = vmul.f32 %v8253, %v4616
  %v8255 = vadd.f32 %v8254, 1e-05
  %v8256 = vrsqrt.pop %v8255
  %v8257 = vmul.f32 %v8233, %v8256
  %v8258 = vmul.f32 %v8234, %v8256
  %v8259 = vmul.f32 %v8235, %v8256
  %v8260 = vmul.f32 %v8236, %v8256
  %v8261 = vmul.f32 %v8257, %v4649
  %v8262 = vmul.f32 %v8258, %v4654
  %v8263 = vmul.f32 %v8259, %v4659
  %v8264 = vmul.f32 %v8260, %v4664
  %v8265 = vadd.f32 %v8261, %v4673
  %v8266 = vadd.f32 %v8262, %v4678
  %v8267 = vadd.f32 %v8263, %v4683
  %v8268 = vadd.f32 %v8264, %v4688
  %v8269 = vsel %vm1043, %v8207, 0.0
  %v8270 = vsel %vm1043, %v8208, 0.0
  %v8271 = vadd.f32 %v8269, %v8270
  %v8272 = vsel %vm1043, %v8209, 0.0
  %v8273 = vadd.f32 %v8271, %v8272
  %v8274 = vsel %vm1043, %v8210, 0.0
  %v8275 = vadd.f32 %v8273, %v8274
  %v8276 = vrot.slane %v8275, 4
  %v8277 = vadd.f32 %v8275, %v8276
  %v8278 = vrot.slane %v8277, 2
  %v8279 = vadd.f32 %v8277, %v8278
  %v8280 = vrot.slane %v8279, 1
  %v8281 = vadd.f32 %v8279, %v8280
  %v8282 = vmul.f32 %v8281, %v4616
  %v8283 = vsub.f32 %v8207, %v8282
  %v8284 = vsub.f32 %v8208, %v8282
  %v8285 = vsub.f32 %v8209, %v8282
  %v8286 = vsub.f32 %v8210, %v8282
  %v8287 = vmul.f32 %v8283, %v8283
  %v8288 = vmul.f32 %v8284, %v8284
  %v8289 = vmul.f32 %v8285, %v8285
  %v8290 = vmul.f32 %v8286, %v8286
  %v8291 = vsel %vm1043, %v8287, 0.0
  %v8292 = vsel %vm1043, %v8288, 0.0
  %v8293 = vadd.f32 %v8291, %v8292
  %v8294 = vsel %vm1043, %v8289, 0.0
  %v8295 = vadd.f32 %v8293, %v8294
  %v8296 = vsel %vm1043, %v8290, 0.0
  %v8297 = vadd.f32 %v8295, %v8296
  %v8298 = vrot.slane %v8297, 4
  %v8299 = vadd.f32 %v8297, %v8298
  %v8300 = vrot.slane %v8299, 2
  %v8301 = vadd.f32 %v8299, %v8300
  %v8302 = vrot.slane %v8301, 1
  %v8303 = vadd.f32 %v8301, %v8302
  %v8304 = vmul.f32 %v8303, %v4616
  %v8305 = vadd.f32 %v8304, 1e-05
  %v8306 = vrsqrt.pop %v8305
  %v8307 = vmul.f32 %v8283, %v8306
  %v8308 = vmul.f32 %v8284, %v8306
  %v8309 = vmul.f32 %v8285, %v8306
  %v8310 = vmul.f32 %v8286, %v8306
  %v8311 = vmul.f32 %v8307, %v4649
  %v8312 = vmul.f32 %v8308, %v4654
  %v8313 = vmul.f32 %v8309, %v4659
  %v8314 = vmul.f32 %v8310, %v4664
  %v8315 = vadd.f32 %v8311, %v4673
  %v8316 = vadd.f32 %v8312, %v4678
  %v8317 = vadd.f32 %v8313, %v4683
  %v8318 = vadd.f32 %v8314, %v4688
  %8319 = vst.msk [vmem:[%s8] sm:$0xff] %vm1043, %v4690
  %8320 = vst.msk [vmem:[%s8 + $0x8] sm:$0xff] %vm1043, %v4691
  %8321 = vst.msk [vmem:[%s8 + $0x10] sm:$0xff] %vm1043, %v4692
  %8322 = vst.msk [vmem:[%s8 + $0x18] sm:$0xff] %vm1043, %v4693
  %8323 = vst.msk [vmem:[%s8 + $0x20] sm:$0xff] %vm1043, %v8265
  %8324 = vst.msk [vmem:[%s8 + $0x28] sm:$0xff] %vm1043, %v8266
  %8325 = vst.msk [vmem:[%s8 + $0x30] sm:$0xff] %vm1043, %v8267
  %8326 = vst.msk [vmem:[%s8 + $0x38] sm:$0xff] %vm1043, %v8268
  %8327 = vst.msk [vmem:[%s8 + $0x40] sm:$0xff] %vm1043, %v4740
  %8328 = vst.msk [vmem:[%s8 + $0x48] sm:$0xff] %vm1043, %v4741
  %8329 = vst.msk [vmem:[%s8 + $0x50] sm:$0xff] %vm1043, %v4742
  %8330 = vst.msk [vmem:[%s8 + $0x58] sm:$0xff] %vm1043, %v4743
  %8331 = vst.msk [vmem:[%s8 + $0x60] sm:$0xff] %vm1043, %v8315
  %8332 = vst.msk [vmem:[%s8 + $0x68] sm:$0xff] %vm1043, %v8316
  %8333 = vst.msk [vmem:[%s8 + $0x70] sm:$0xff] %vm1043, %v8317
  %8334 = vst.msk [vmem:[%s8 + $0x78] sm:$0xff] %vm1043, %v8318
  // Predicated region
  $region34: #{tpu_custom_call.1} parent=0 // pred_check
    _
  $region35: #{tpu_custom_call.1} parent=0 // pred_check_branch
    %8336 = sbr.rel (0) target = $region37
  $region36: #{tpu_custom_call.1} parent=0 // pred_region
    _
  $region37: #{tpu_custom_call.1} parent=0 // pred_fallthru
    _
  // Predicated region
  $region38: #{tpu_custom_call.1} parent=0 // pred_check
    _
  $region39: #{tpu_custom_call.1} parent=0 // pred_check_branch
    %8338 = sbr.rel (0) target = $region41
  $region40: #{tpu_custom_call.1} parent=0 // pred_region
    _
  $region41: #{tpu_custom_call.1} parent=0 // pred_fallthru
    _

</llo_original>
